<compile_context>
chip_gen: v5e
topology: v5e:2x2
jax: 0.10.0
libtpu: 0.0.40
codegen_flags: <defaults>
</compile_context>

<pallas_src>
import functools

import jax
import jax.numpy as jnp
from jax.experimental import pallas as pl
from jax.experimental.pallas import tpu as pltpu

_VMEM_LIMIT = 32 * 1024 * 1024   # explicit scoped-VMEM budget (>= v5e 16 MiB default)
_NEG = -1e9                      # finite mask value (no -inf -> NaN on fully-masked rows)


def _sigmoid(x):
    # exp (EUP) + approximate reciprocal (EUP): no VPU divide on the recurrent
    # critical path.
    return pl.reciprocal(1.0 + jnp.exp(-x), approx=True)


# ---------------------------------------------------------------------------
# Kernel 1/2: fused char-CNN word embedding + hoisted input->hidden projection
#   grid = (word_tiles,) "parallel".  One (TILE, W*C) block per step; conv
#   positions are an in-body unrolled loop with a running max-pool; highway;
#   the epilogue emits  emb @ W_ih  (encoder fwd|bwd 8H, or decoder 4H) so the
#   serial RNN loops never see the (E,4H) weights.
# ---------------------------------------------------------------------------
def _char_cnn_kernel(x_ref, cw_ref, cb_ref, wp_ref, bp_ref, wg_ref, bg_ref,
                     xw_ref, g_ref, *, c_dim):
    tile = x_ref.shape[0]
    kc, e = cw_ref.shape
    n_pos = (x_ref.shape[1] - kc) // c_dim + 1          # L = W - K + 1

    cw = cw_ref[...]                                     # (K*C, E) bf16
    cb = cb_ref[...]                                     # (1, E)  f32

    pooled = jnp.full((tile, e), -jnp.inf, dtype=jnp.float32)
    for l in range(n_pos):                               # static unroll, L small
        win = x_ref[:, l * c_dim:l * c_dim + kc].astype(jnp.bfloat16)
        conv = jnp.maximum(
            jnp.dot(win, cw, preferred_element_type=jnp.float32) + cb, 0.0)
        pooled = jnp.maximum(pooled, conv)               # running max-pool

    pb = pooled.astype(jnp.bfloat16)
    proj = jnp.maximum(
        jnp.dot(pb, wp_ref[...], preferred_element_type=jnp.float32)
        + bp_ref[...], 0.0)
    gate = _sigmoid(
        jnp.dot(pb, wg_ref[...], preferred_element_type=jnp.float32)
        + bg_ref[...])
    emb = gate * proj + (1.0 - gate) * pooled            # highway; dropout = id (eval)

    # hoisted input->hidden projection for the downstream LSTM(s)
    g_ref[...] = jnp.dot(emb.astype(jnp.bfloat16), xw_ref[...],
                         preferred_element_type=jnp.float32)


def char_cnn_gates(chars, emb_p, proj_w, cfg, tile=128):
    """chars (S, B, W) int32 -> hoisted gate pre-activations (S, B, G)."""
    S, B, W = chars.shape
    C = cfg["char_embed"]
    G = proj_w.shape[-1]
    N = S * B

    # char-embedding lookup (cheap gather) + flatten chars-in-word into lanes
    x = jnp.take(emb_p["char_emb"], chars.reshape(-1), axis=0).reshape(N, W * C)

    n_pad = ((N + tile - 1) // tile) * tile
    if n_pad != N:
        x = jnp.pad(x, ((0, n_pad - N), (0, 0)))

    gates = pl.pallas_call(
        functools.partial(_char_cnn_kernel, c_dim=C),
        grid=(n_pad // tile,),
        in_specs=[
            pl.BlockSpec((tile, W * C), lambda i: (i, 0)),
            pl.BlockSpec(emb_p["conv_w"].shape, lambda i: (0, 0)),
            pl.BlockSpec(emb_p["conv_b"].shape, lambda i: (0, 0)),
            pl.BlockSpec(emb_p["hw_proj_w"].shape, lambda i: (0, 0)),
            pl.BlockSpec(emb_p["hw_proj_b"].shape, lambda i: (0, 0)),
            pl.BlockSpec(emb_p["hw_gate_w"].shape, lambda i: (0, 0)),
            pl.BlockSpec(emb_p["hw_gate_b"].shape, lambda i: (0, 0)),
            pl.BlockSpec(proj_w.shape, lambda i: (0, 0)),
        ],
        out_specs=pl.BlockSpec((tile, G), lambda i: (i, 0)),
        out_shape=jax.ShapeDtypeStruct((n_pad, G), jnp.float32),
        compiler_params=pltpu.CompilerParams(
            dimension_semantics=("parallel",),
            vmem_limit_bytes=_VMEM_LIMIT),
    )(x, emb_p["conv_w"], emb_p["conv_b"],
      emb_p["hw_proj_w"], emb_p["hw_proj_b"],
      emb_p["hw_gate_w"], emb_p["hw_gate_b"], proj_w)

    return gates[:N].reshape(S, B, G)


# ---------------------------------------------------------------------------
# Kernel 3: fused bidirectional encoder LSTM (pack_padded_sequence semantics)
#   grid = (S,) "arbitrary"; fwd/bwd h,c in VMEM scratch; x @ W_ih is
#   precomputed (char-CNN epilogue) and streamed as (1,B,4H) blocks; the bwd
#   direction reads/writes at time S-1-t via index_maps (no reversal gather);
#   dec-init projections fused into the final step with pre-split weights.
# ---------------------------------------------------------------------------
def _enc_bilstm_kernel(xgf_ref, xgb_ref, vf_ref, vb_ref,
                       whhf_ref, whhb_ref, bf_ref, bb_ref,
                       hpf_ref, hpb_ref, cpf_ref, cpb_ref,
                       fwd_out_ref, bwd_out_ref, h0_ref, c0_ref,
                       hf_sc, cf_sc, hb_sc, cb_sc):
    t = pl.program_id(0)
    H = hf_sc.shape[-1]

    @pl.when(t == 0)
    def _():
        for sc in (hf_sc, cf_sc, hb_sc, cb_sc):
            sc[...] = jnp.zeros_like(sc)

    def cell(xg, h, c, whh, b):
        # PyTorch LSTM gate order: i, f, g, o
        gates = xg + jnp.dot(h, whh, preferred_element_type=jnp.float32) + b
        i = _sigmoid(gates[:, 0 * H:1 * H])
        f = _sigmoid(gates[:, 1 * H:2 * H])
        g = jnp.tanh(gates[:, 2 * H:3 * H])
        o = _sigmoid(gates[:, 3 * H:4 * H])
        c_new = f * c + i * g
        h_new = o * jnp.tanh(c_new)
        return h_new, c_new

    vf = vf_ref[0]                       # (B,1): 1.0 where this step is a real token
    vb = vb_ref[0]
    hf_new, cf_new = cell(xgf_ref[0], hf_sc[...], cf_sc[...], whhf_ref[...], bf_ref[...])
    hb_new, cb_new = cell(xgb_ref[0], hb_sc[...], cb_sc[...], whhb_ref[...], bb_ref[...])

    hf_sc[...] = jnp.where(vf > 0.0, hf_new, hf_sc[...])
    cf_sc[...] = jnp.where(vf > 0.0, cf_new, cf_sc[...])
    hb_sc[...] = jnp.where(vb > 0.0, hb_new, hb_sc[...])
    cb_sc[...] = jnp.where(vb > 0.0, cb_new, cb_sc[...])

    # pad_packed_sequence zero-pads beyond each row's valid length
    fwd_out_ref[0] = jnp.where(vf > 0.0, hf_new, 0.0)
    bwd_out_ref[0] = jnp.where(vb > 0.0, hb_new, 0.0)

    @pl.when(t == pl.num_programs(0) - 1)
    def _():
        # dec_init = Linear(2H->H, no bias) of [h_fwd ; h_bwd] (pre-split weights)
        h0_ref[...] = (
            jnp.dot(hf_sc[...], hpf_ref[...], preferred_element_type=jnp.float32)
            + jnp.dot(hb_sc[...], hpb_ref[...], preferred_element_type=jnp.float32))
        c0_ref[...] = (
            jnp.dot(cf_sc[...], cpf_ref[...], preferred_element_type=jnp.float32)
            + jnp.dot(cb_sc[...], cpb_ref[...], preferred_element_type=jnp.float32))


def encode(src_chars, lengths, p, cfg):
    """-> eh_fwd (B,S,H), eh_bwd (B,S,H), (dec_init_h, dec_init_c)."""
    H = cfg["hidden"]
    S, B, _ = src_chars.shape

    # fused char-CNN + hoisted x @ W_ih for both directions ([fwd|bwd] -> 8H)
    xg = char_cnn_gates(src_chars, p["src_emb"], p["enc_wih_x"], cfg)        # (S,B,8H)
    valid = (jnp.arange(S)[:, None] < lengths[None, :]).astype(jnp.float32)[:, :, None]

    def wspec(shape):
        return pl.BlockSpec(shape, lambda t: (0, 0))

    fwd_out, bwd_out, h0, c0 = pl.pallas_call(
        _enc_bilstm_kernel,
        grid=(S,),
        in_specs=[
            pl.BlockSpec((1, B, 4 * H), lambda t: (t, 0, 0)),            # x-gates fwd
            pl.BlockSpec((1, B, 4 * H), lambda t: (S - 1 - t, 0, 1)),    # x-gates bwd
            pl.BlockSpec((1, B, 1), lambda t: (t, 0, 0)),                # valid fwd
            pl.BlockSpec((1, B, 1), lambda t: (S - 1 - t, 0, 0)),        # valid bwd
            wspec((H, 4 * H)), wspec((H, 4 * H)),
            wspec((1, 4 * H)), wspec((1, 4 * H)),
            wspec((H, H)), wspec((H, H)), wspec((H, H)), wspec((H, H)),
        ],
        out_specs=(
            pl.BlockSpec((1, B, H), lambda t: (t, 0, 0)),
            pl.BlockSpec((1, B, H), lambda t: (S - 1 - t, 0, 0)),        # un-reversal in index_map
            pl.BlockSpec((B, H), lambda t: (0, 0)),
            pl.BlockSpec((B, H), lambda t: (0, 0)),
        ),
        out_shape=(
            jax.ShapeDtypeStruct((S, B, H), jnp.float32),
            jax.ShapeDtypeStruct((S, B, H), jnp.float32),
            jax.ShapeDtypeStruct((B, H), jnp.float32),
            jax.ShapeDtypeStruct((B, H), jnp.float32),
        ),
        scratch_shapes=[pltpu.VMEM((B, H), jnp.float32)] * 4,
        compiler_params=pltpu.CompilerParams(
            dimension_semantics=("arbitrary",),
            vmem_limit_bytes=_VMEM_LIMIT),
    )(xg, xg, valid, valid,
      p["enc_f_whh"], p["enc_b_whh"], p["enc_f_b"], p["enc_b_b"],
      p["hidden_proj_w_f"], p["hidden_proj_w_b"],
      p["cell_proj_w_f"], p["cell_proj_w_b"])

    # batch-major for the decoder; fwd/bwd stay separate (no concat round-trip).
    # (Writing (B,1,H) blocks directly would leave a size-1 sublane block; the
    # single transpose here is cheap layout plumbing.)
    eh_f = jnp.transpose(fwd_out, (1, 0, 2))
    eh_b = jnp.transpose(bwd_out, (1, 0, 2))
    return eh_f, eh_b, (h0, c0)


# ---------------------------------------------------------------------------
# Kernel 4: fused decoder step loop
#   grid = (T-1,) "arbitrary"; h/c/o_prev in VMEM scratch; only the recurrent
#   matmuls (o_prev, h) stay per step; attention scores/context as batched MXU
#   einsums with an EUP reciprocal softmax; pre-split combined-output weights.
# ---------------------------------------------------------------------------
def _decoder_step_kernel(xg_ref, ehf_ref, ehb_ref, mask_ref, h0_ref, c0_ref,
                         attw_ref, wo_ref, whh_ref, b_ref,
                         caf_ref, cab_ref, ch_ref,
                         out_ref, h_sc, c_sc, o_sc):
    t = pl.program_id(0)
    H = h_sc.shape[-1]

    @pl.when(t == 0)
    def _():
        h_sc[...] = h0_ref[...]
        c_sc[...] = c0_ref[...]
        o_sc[...] = jnp.zeros_like(o_sc)

    # LSTMCell on [emb ; o_prev]; emb @ W_ih precomputed (char-CNN epilogue)
    gates = (xg_ref[0]
             + jnp.dot(o_sc[...], wo_ref[...], preferred_element_type=jnp.float32)
             + jnp.dot(h_sc[...], whh_ref[...], preferred_element_type=jnp.float32)
             + b_ref[...])
    i = _sigmoid(gates[:, 0 * H:1 * H])
    f = _sigmoid(gates[:, 1 * H:2 * H])
    g = jnp.tanh(gates[:, 2 * H:3 * H])
    o = _sigmoid(gates[:, 3 * H:4 * H])
    c_new = f * c_sc[...] + i * g
    h_new = o * jnp.tanh(c_new)
    h_sc[...] = h_new
    c_sc[...] = c_new

    # attention: (E W^T) h == E (W^T h); masked softmax over source positions
    ehf = ehf_ref[...]
    ehb = ehb_ref[...]
    hp = jnp.dot(h_new, attw_ref[...], preferred_element_type=jnp.float32)   # (B,2H)
    e = (jnp.einsum('bqh,bsh->bqs', hp[:, None, 0:H], ehf,
                    preferred_element_type=jnp.float32)
         + jnp.einsum('bqh,bsh->bqs', hp[:, None, H:2 * H], ehb,
                      preferred_element_type=jnp.float32))                   # (B,1,S)
    e = jnp.where(mask_ref[...][:, None, :] > 0.0, _NEG, e)
    m = jnp.max(e, axis=-1, keepdims=True)
    pexp = jnp.exp(e - m)
    alpha = pexp * pl.reciprocal(jnp.sum(pexp, axis=-1, keepdims=True), approx=True)
    a_f = jnp.einsum('bqs,bsh->bqh', alpha, ehf,
                     preferred_element_type=jnp.float32)[:, 0, :]            # (B,H)
    a_b = jnp.einsum('bqs,bsh->bqh', alpha, ehb,
                     preferred_element_type=jnp.float32)[:, 0, :]

    # combined-output projection of [a_t ; h_new]; tanh; dropout = id (eval)
    o_t = jnp.tanh(
        jnp.dot(a_f, caf_ref[...], preferred_element_type=jnp.float32)
        + jnp.dot(a_b, cab_ref[...], preferred_element_type=jnp.float32)
        + jnp.dot(h_new, ch_ref[...], preferred_element_type=jnp.float32))
    o_sc[...] = o_t
    out_ref[0] = o_t


def decode(eh_f, eh_b, dec_init, tgt_chars, enc_masks, p, cfg):
    H = cfg["hidden"]
    B, S, _ = eh_f.shape
    h0, c0 = dec_init

    # fused char-CNN + hoisted emb @ W_ih[:E] for every decoder step
    emb_gates = char_cnn_gates(tgt_chars[:-1], p["tgt_emb"], p["dec_wih_x"], cfg)
    T1 = emb_gates.shape[0]

    combined = pl.pallas_call(
        _decoder_step_kernel,
        grid=(T1,),
        in_specs=[
            pl.BlockSpec((1, B, 4 * H), lambda t: (t, 0, 0)),
            pl.BlockSpec((B, S, H), lambda t: (0, 0, 0)),
            pl.BlockSpec((B, S, H), lambda t: (0, 0, 0)),
            pl.BlockSpec((B, S), lambda t: (0, 0)),
            pl.BlockSpec((B, H), lambda t: (0, 0)),
            pl.BlockSpec((B, H), lambda t: (0, 0)),
            pl.BlockSpec((H, 2 * H), lambda t: (0, 0)),
            pl.BlockSpec((H, 4 * H), lambda t: (0, 0)),
            pl.BlockSpec((H, 4 * H), lambda t: (0, 0)),
            pl.BlockSpec((1, 4 * H), lambda t: (0, 0)),
            pl.BlockSpec((H, H), lambda t: (0, 0)),
            pl.BlockSpec((H, H), lambda t: (0, 0)),
            pl.BlockSpec((H, H), lambda t: (0, 0)),
        ],
        out_specs=pl.BlockSpec((1, B, H), lambda t: (t, 0, 0)),
        out_shape=jax.ShapeDtypeStruct((T1, B, H), jnp.float32),
        scratch_shapes=[pltpu.VMEM((B, H), jnp.float32)] * 3,
        compiler_params=pltpu.CompilerParams(
            dimension_semantics=("arbitrary",),
            vmem_limit_bytes=_VMEM_LIMIT),
        # TODO(synk): on v7x, mark the constant-index blocks (enc hiddens, masks,
        # weights) with pipeline_mode=pl.Buffered(1) to halve their VMEM.
    )(emb_gates, eh_f, eh_b, enc_masks, h0, c0,
      p["att_proj_w"], p["dec_wih_o"], p["dec_whh"], p["dec_b"],
      p["comb_af"], p["comb_ab"], p["comb_h"])
    return combined                                                           # (T-1,B,H)


# ---------------------------------------------------------------------------
# Kernel 5: tiled vocab projection + online log-softmax + gold gather + mask
#   grid = (row tiles "parallel", vocab tiles "arbitrary"); running max/sum
#   and gold accumulator in VMEM scratch; per-row masked logp written on the
#   last vocab tile; final sum in XLA.  Never materializes (N,V).
# ---------------------------------------------------------------------------
def _score_kernel(x_ref, w_ref, ids_ref, mask_ref, o_ref, m_sc, l_sc, g_sc,
                  *, v_total, tv):
    j = pl.program_id(1)

    @pl.when(j == 0)
    def _():
        m_sc[...] = jnp.full_like(m_sc, -1e30)
        l_sc[...] = jnp.zeros_like(l_sc)
        g_sc[...] = jnp.zeros_like(g_sc)

    logits = jnp.dot(x_ref[...].astype(jnp.bfloat16), w_ref[...],
                     preferred_element_type=jnp.float32)                      # (TN,TV)
    col = jax.lax.broadcasted_iota(jnp.int32, logits.shape, 1) + j * tv
    logits = jnp.where(col < v_total, logits, -1e30)                          # pad cols

    # gold logit if its column lands in this vocab tile
    hit = (col == ids_ref[...]).astype(jnp.float32)
    g_sc[...] += jnp.sum(logits * hit, axis=1, keepdims=True)

    # online (flash-style) logsumexp across vocab tiles
    m_new = jnp.maximum(m_sc[...], jnp.max(logits, axis=1, keepdims=True))
    l_sc[...] = (l_sc[...] * jnp.exp(m_sc[...] - m_new)
                 + jnp.sum(jnp.exp(logits - m_new), axis=1, keepdims=True))
    m_sc[...] = m_new

    @pl.when(j == pl.num_programs(1) - 1)
    def _():
        logp = g_sc[...] - (m_sc[...] + jnp.log(l_sc[...]))
        o_ref[...] = logp * mask_ref[...]


def gold_score(combined, tgt_words, wv, tn=128, tv=128):
    """Sum over non-pad target positions of log P(gold word)."""
    T1, B, H = combined.shape
    V = wv.shape[1]
    x = combined.reshape(T1 * B, H)
    ids = tgt_words[1:].reshape(-1, 1).astype(jnp.int32)
    mask = (tgt_words[1:] != 0).astype(jnp.float32).reshape(-1, 1)            # <pad> = 0

    n = x.shape[0]
    n_pad = ((n + tn - 1) // tn) * tn
    v_pad = ((V + tv - 1) // tv) * tv
    x = jnp.pad(x, ((0, n_pad - n), (0, 0)))
    ids = jnp.pad(ids, ((0, n_pad - n), (0, 0)))
    mask = jnp.pad(mask, ((0, n_pad - n), (0, 0)))
    wv = jnp.pad(wv, ((0, 0), (0, v_pad - V)))

    per_row = pl.pallas_call(
        functools.partial(_score_kernel, v_total=V, tv=tv),
        grid=(n_pad // tn, v_pad // tv),
        in_specs=[
            pl.BlockSpec((tn, H), lambda i, j: (i, 0)),
            pl.BlockSpec((H, tv), lambda i, j: (0, j)),
            pl.BlockSpec((tn, 1), lambda i, j: (i, 0)),
            pl.BlockSpec((tn, 1), lambda i, j: (i, 0)),
        ],
        out_specs=pl.BlockSpec((tn, 1), lambda i, j: (i, 0)),
        out_shape=jax.ShapeDtypeStruct((n_pad, 1), jnp.float32),
        scratch_shapes=[pltpu.VMEM((tn, 1), jnp.float32)] * 3,
        compiler_params=pltpu.CompilerParams(
            dimension_semantics=("parallel", "arbitrary"),
            vmem_limit_bytes=_VMEM_LIMIT),
    )(x, wv, ids, mask)
    return jnp.sum(per_row)


# ---------------------------------------------------------------------------
# Forward pass
# ---------------------------------------------------------------------------
def nmt_forward(src_chars, src_lengths, tgt_words, tgt_chars, params, cfg):
    # pad batch to a multiple of 8 (sublane density); padded rows carry length
    # 0 / word-id 0 and are zeroed out of the loss by the target mask.
    B = src_chars.shape[1]
    b_pad = ((B + 7) // 8) * 8 - B
    if b_pad:
        src_chars = jnp.pad(src_chars, ((0, 0), (0, b_pad), (0, 0)))
        tgt_chars = jnp.pad(tgt_chars, ((0, 0), (0, b_pad), (0, 0)))
        tgt_words = jnp.pad(tgt_words, ((0, 0), (0, b_pad)))
        src_lengths = jnp.pad(src_lengths, ((0, b_pad),))

    eh_f, eh_b, dec_init = encode(src_chars, src_lengths, params, cfg)
    S = eh_f.shape[1]
    enc_masks = (jnp.arange(S)[None, :] >= src_lengths[:, None]).astype(jnp.float32)
    combined = decode(eh_f, eh_b, dec_init, tgt_chars, enc_masks, params, cfg)
    # TODO(synk): CharDecoder auxiliary loss omitted (use_char_decoder=False).
    return gold_score(combined, tgt_words, params["tgt_vocab_proj_w"])


# ---------------------------------------------------------------------------
# Deterministic parameter init.  Big, matmul-only weights are stored in bf16
# (MXU operands, f32 accumulate); recurrent / per-step weights stay f32.
# All projections are stored (in, out) and pre-split so kernels never
# load-then-slice; the encoder W_ih is [fwd | bwd] along an 8H axis.
# ---------------------------------------------------------------------------
def init_params(key, cfg):
    E, H, C, K = cfg["word_embed"], cfg["hidden"], cfg["char_embed"], cfg["kernel"]
    Vt, Vc = cfg["tgt_vocab"], cfg["char_vocab"]
    keys = jax.random.split(key, 24)

    def nrm(k, shape, dtype=jnp.float32, scale=0.1):
        return (scale * jax.random.normal(k, shape, dtype=jnp.float32)).astype(dtype)

    def emb_params(k):
        ks = jax.random.split(k, 5)
        char_emb = nrm(ks[0], (Vc, C)).at[0].set(0.0)        # padding_idx = 0
        return dict(
            char_emb=char_emb,
            conv_w=nrm(ks[1], (K * C, E), jnp.bfloat16),     # Conv1d weight, im2col (in,out)
            conv_b=nrm(ks[2], (1, E)),
            hw_proj_w=nrm(ks[3], (E, E), jnp.bfloat16),
            hw_proj_b=jnp.zeros((1, E), jnp.float32),
            hw_gate_w=nrm(ks[4], (E, E), jnp.bfloat16),
            hw_gate_b=jnp.zeros((1, E), jnp.float32),
        )

    return dict(
        src_emb=emb_params(keys[0]),
        tgt_emb=emb_params(keys[1]),
        enc_wih_x=nrm(keys[2], (E, 8 * H), jnp.bfloat16),    # hoisted [fwd|bwd] x->gates
        enc_f_whh=nrm(keys[3], (H, 4 * H)), enc_b_whh=nrm(keys[4], (H, 4 * H)),
        enc_f_b=nrm(keys[5], (1, 4 * H)), enc_b_b=nrm(keys[6], (1, 4 * H)),
        hidden_proj_w_f=nrm(keys[7], (H, H)), hidden_proj_w_b=nrm(keys[8], (H, H)),
        cell_proj_w_f=nrm(keys[9], (H, H)), cell_proj_w_b=nrm(keys[10], (H, H)),
        dec_wih_x=nrm(keys[11], (E, 4 * H), jnp.bfloat16),   # hoisted emb->gates
        dec_wih_o=nrm(keys[12], (H, 4 * H)),                 # o_prev->gates (in-loop)
        dec_whh=nrm(keys[13], (H, 4 * H)), dec_b=nrm(keys[14], (1, 4 * H)),
        att_proj_w=nrm(keys[15], (H, 2 * H)),                # PyTorch (out,in); used as h @ W
        comb_af=nrm(keys[16], (H, H)), comb_ab=nrm(keys[17], (H, H)),
        comb_h=nrm(keys[18], (H, H)),
        tgt_vocab_proj_w=nrm(keys[19], (H, Vt), jnp.bfloat16),
    )


if __name__ == "__main__":
    cfg = dict(word_embed=32, hidden=32, char_embed=16, kernel=5,
               max_word_len=8, tgt_vocab=40, char_vocab=30)
    B, S_src, S_tgt = 2, 8, 7

    key = jax.random.PRNGKey(0)
    k_data, k_param = jax.random.split(key)
    params = init_params(k_param, cfg)

    # source lengths sorted descending (pack_padded_sequence requirement)
    src_lengths = jnp.array([8, 6], dtype=jnp.int32)
    tgt_lengths = jnp.array([7, 5], dtype=jnp.int32)

    ks = jax.random.split(k_data, 3)
    src_chars = jax.random.randint(ks[0], (S_src, B, cfg["max_word_len"]), 1, cfg["char_vocab"])
    tgt_chars = jax.random.randint(ks[1], (S_tgt, B, cfg["max_word_len"]), 1, cfg["char_vocab"])
    tgt_words = jax.random.randint(ks[2], (S_tgt, B), 2, cfg["tgt_vocab"])
    tgt_words = tgt_words.at[0, :].set(1)                    # <s> token id = 1

    # apply word-level padding (word <pad> = 0 -> all-zero chars)
    src_valid = jnp.arange(S_src)[:, None] < src_lengths[None, :]
    tgt_valid = jnp.arange(S_tgt)[:, None] < tgt_lengths[None, :]
    src_chars = jnp.where(src_valid[:, :, None], src_chars, 0).astype(jnp.int32)
    tgt_chars = jnp.where(tgt_valid[:, :, None], tgt_chars, 0).astype(jnp.int32)
    tgt_words = jnp.where(tgt_valid, tgt_words, 0).astype(jnp.int32)

    fwd = jax.jit(functools.partial(nmt_forward, cfg=cfg))
    score = fwd(src_chars, src_lengths, tgt_words, tgt_chars, params)
    score = jax.block_until_ready(score)
    assert score.shape == () and bool(jnp.isfinite(score))
    print("KERNEL_OK")
</pallas_src>

<mosaic_0001>
module attributes {stable_mosaic.version = 11 : i64} {
  func.func @_char_cnn_kernel(%arg0: i32, %arg1: memref<128x128xf32, #tpu.memory_space<vmem>>, %arg2: memref<80x32xbf16, #tpu.memory_space<vmem>>, %arg3: memref<1x32xf32, #tpu.memory_space<vmem>>, %arg4: memref<32x32xbf16, #tpu.memory_space<vmem>>, %arg5: memref<1x32xf32, #tpu.memory_space<vmem>>, %arg6: memref<32x32xbf16, #tpu.memory_space<vmem>>, %arg7: memref<1x32xf32, #tpu.memory_space<vmem>>, %arg8: memref<32x128xbf16, #tpu.memory_space<vmem>>, %arg9: memref<128x128xf32, #tpu.memory_space<vmem>>) attributes {dimension_semantics = [#tpu.dimension_semantics<parallel>], iteration_bounds = array<i64: 1>, scalar_prefetch = 0 : i64, scratch_operands = 0 : i64, tpu.core_type = #tpu.core_type<tc>, window_params = [{transform_indices = @transform_0, window_bounds = array<i64: 128, 128>}, {pipeline_mode = #tpu.pipeline_mode<synchronous>, transform_indices = @transform_1, window_bounds = array<i64: 80, 32>}, {pipeline_mode = #tpu.pipeline_mode<synchronous>, transform_indices = @transform_2, window_bounds = array<i64: 1, 32>}, {pipeline_mode = #tpu.pipeline_mode<synchronous>, transform_indices = @transform_3, window_bounds = array<i64: 32, 32>}, {pipeline_mode = #tpu.pipeline_mode<synchronous>, transform_indices = @transform_4, window_bounds = array<i64: 1, 32>}, {pipeline_mode = #tpu.pipeline_mode<synchronous>, transform_indices = @transform_5, window_bounds = array<i64: 32, 32>}, {pipeline_mode = #tpu.pipeline_mode<synchronous>, transform_indices = @transform_6, window_bounds = array<i64: 1, 32>}, {pipeline_mode = #tpu.pipeline_mode<synchronous>, transform_indices = @transform_7, window_bounds = array<i64: 32, 128>}, {transform_indices = @transform_8, window_bounds = array<i64: 128, 128>}]} {
    %c0 = arith.constant 0 : index
    %c0_0 = arith.constant 0 : index
    %0 = vector.load %arg2[%c0, %c0_0] : memref<80x32xbf16, #tpu.memory_space<vmem>>, vector<80x32xbf16>
    %c0_1 = arith.constant 0 : index
    %c0_2 = arith.constant 0 : index
    %1 = vector.load %arg3[%c0_1, %c0_2] : memref<1x32xf32, #tpu.memory_space<vmem>>, vector<1x32xf32>
    %cst = arith.constant 0xFF800000 : f32
    %2 = vector.broadcast %cst : f32 to vector<128x32xf32>
    %c0_3 = arith.constant 0 : index
    %c0_4 = arith.constant 0 : index
    %3 = vector.load %arg1[%c0_3, %c0_4] : memref<128x128xf32, #tpu.memory_space<vmem>>, vector<128x80xf32>
    %4 = arith.truncf %3 : vector<128x80xf32> to vector<128x80xbf16>
    %cst_5 = arith.constant dense<0.000000e+00> : vector<128x32xf32>
    %5 = tpu.matmul %4, %0, %cst_5 {dimension_numbers = #tpu.dot_dimension_numbers<[1], [0], [0], [1], [0, 0, 1, 1], [], []>} : vector<128x80xbf16>, vector<80x32xbf16>, vector<128x32xf32> -> vector<128x32xf32>
    %6 = vector.broadcast %1 : vector<1x32xf32> to vector<128x32xf32>
    %7 = arith.addf %5, %6 : vector<128x32xf32>
    %cst_6 = arith.constant 0.000000e+00 : f32
    %8 = vector.broadcast %cst_6 : f32 to vector<128x32xf32>
    %9 = arith.maximumf %7, %8 : vector<128x32xf32>
    %10 = arith.maximumf %2, %9 : vector<128x32xf32>
    %c0_7 = arith.constant 0 : index
    %c16 = arith.constant 16 : index
    %11 = vector.load %arg1[%c0_7, %c16] : memref<128x128xf32, #tpu.memory_space<vmem>>, vector<128x80xf32>
    %12 = arith.truncf %11 : vector<128x80xf32> to vector<128x80xbf16>
    %cst_8 = arith.constant dense<0.000000e+00> : vector<128x32xf32>
    %13 = tpu.matmul %12, %0, %cst_8 {dimension_numbers = #tpu.dot_dimension_numbers<[1], [0], [0], [1], [0, 0, 1, 1], [], []>} : vector<128x80xbf16>, vector<80x32xbf16>, vector<128x32xf32> -> vector<128x32xf32>
    %14 = vector.broadcast %1 : vector<1x32xf32> to vector<128x32xf32>
    %15 = arith.addf %13, %14 : vector<128x32xf32>
    %cst_9 = arith.constant 0.000000e+00 : f32
    %16 = vector.broadcast %cst_9 : f32 to vector<128x32xf32>
    %17 = arith.maximumf %15, %16 : vector<128x32xf32>
    %18 = arith.maximumf %10, %17 : vector<128x32xf32>
    %c0_10 = arith.constant 0 : index
    %c32 = arith.constant 32 : index
    %19 = vector.load %arg1[%c0_10, %c32] : memref<128x128xf32, #tpu.memory_space<vmem>>, vector<128x80xf32>
    %20 = arith.truncf %19 : vector<128x80xf32> to vector<128x80xbf16>
    %cst_11 = arith.constant dense<0.000000e+00> : vector<128x32xf32>
    %21 = tpu.matmul %20, %0, %cst_11 {dimension_numbers = #tpu.dot_dimension_numbers<[1], [0], [0], [1], [0, 0, 1, 1], [], []>} : vector<128x80xbf16>, vector<80x32xbf16>, vector<128x32xf32> -> vector<128x32xf32>
    %22 = vector.broadcast %1 : vector<1x32xf32> to vector<128x32xf32>
    %23 = arith.addf %21, %22 : vector<128x32xf32>
    %cst_12 = arith.constant 0.000000e+00 : f32
    %24 = vector.broadcast %cst_12 : f32 to vector<128x32xf32>
    %25 = arith.maximumf %23, %24 : vector<128x32xf32>
    %26 = arith.maximumf %18, %25 : vector<128x32xf32>
    %c0_13 = arith.constant 0 : index
    %c48 = arith.constant 48 : index
    %27 = vector.load %arg1[%c0_13, %c48] : memref<128x128xf32, #tpu.memory_space<vmem>>, vector<128x80xf32>
    %28 = arith.truncf %27 : vector<128x80xf32> to vector<128x80xbf16>
    %cst_14 = arith.constant dense<0.000000e+00> : vector<128x32xf32>
    %29 = tpu.matmul %28, %0, %cst_14 {dimension_numbers = #tpu.dot_dimension_numbers<[1], [0], [0], [1], [0, 0, 1, 1], [], []>} : vector<128x80xbf16>, vector<80x32xbf16>, vector<128x32xf32> -> vector<128x32xf32>
    %30 = vector.broadcast %1 : vector<1x32xf32> to vector<128x32xf32>
    %31 = arith.addf %29, %30 : vector<128x32xf32>
    %cst_15 = arith.constant 0.000000e+00 : f32
    %32 = vector.broadcast %cst_15 : f32 to vector<128x32xf32>
    %33 = arith.maximumf %31, %32 : vector<128x32xf32>
    %34 = arith.maximumf %26, %33 : vector<128x32xf32>
    %35 = arith.truncf %34 : vector<128x32xf32> to vector<128x32xbf16>
    %c0_16 = arith.constant 0 : index
    %c0_17 = arith.constant 0 : index
    %36 = vector.load %arg4[%c0_16, %c0_17] : memref<32x32xbf16, #tpu.memory_space<vmem>>, vector<32x32xbf16>
    %cst_18 = arith.constant dense<0.000000e+00> : vector<128x32xf32>
    %37 = tpu.matmul %35, %36, %cst_18 {dimension_numbers = #tpu.dot_dimension_numbers<[1], [0], [0], [1], [0, 0, 1, 1], [], []>} : vector<128x32xbf16>, vector<32x32xbf16>, vector<128x32xf32> -> vector<128x32xf32>
    %c0_19 = arith.constant 0 : index
    %c0_20 = arith.constant 0 : index
    %38 = vector.load %arg5[%c0_19, %c0_20] : memref<1x32xf32, #tpu.memory_space<vmem>>, vector<1x32xf32>
    %39 = vector.broadcast %38 : vector<1x32xf32> to vector<128x32xf32>
    %40 = arith.addf %37, %39 : vector<128x32xf32>
    %cst_21 = arith.constant 0.000000e+00 : f32
    %41 = vector.broadcast %cst_21 : f32 to vector<128x32xf32>
    %42 = arith.maximumf %40, %41 : vector<128x32xf32>
    %c0_22 = arith.constant 0 : index
    %c0_23 = arith.constant 0 : index
    %43 = vector.load %arg6[%c0_22, %c0_23] : memref<32x32xbf16, #tpu.memory_space<vmem>>, vector<32x32xbf16>
    %cst_24 = arith.constant dense<0.000000e+00> : vector<128x32xf32>
    %44 = tpu.matmul %35, %43, %cst_24 {dimension_numbers = #tpu.dot_dimension_numbers<[1], [0], [0], [1], [0, 0, 1, 1], [], []>} : vector<128x32xbf16>, vector<32x32xbf16>, vector<128x32xf32> -> vector<128x32xf32>
    %c0_25 = arith.constant 0 : index
    %c0_26 = arith.constant 0 : index
    %45 = vector.load %arg7[%c0_25, %c0_26] : memref<1x32xf32, #tpu.memory_space<vmem>>, vector<1x32xf32>
    %46 = vector.broadcast %45 : vector<1x32xf32> to vector<128x32xf32>
    %47 = arith.addf %44, %46 : vector<128x32xf32>
    %cst_27 = arith.constant 0.000000e+00 : f32
    %48 = vector.broadcast %cst_27 : f32 to vector<128x32xf32>
    %49 = arith.subf %48, %47 : vector<128x32xf32>
    %50 = math.exp %49 : vector<128x32xf32>
    %cst_28 = arith.constant 1.000000e+00 : f32
    %51 = vector.broadcast %cst_28 : f32 to vector<128x32xf32>
    %52 = arith.addf %51, %50 : vector<128x32xf32>
    %53 = tpu.reciprocal %52 {approx = true} : vector<128x32xf32> -> vector<128x32xf32>
    %54 = arith.mulf %53, %42 : vector<128x32xf32>
    %cst_29 = arith.constant 1.000000e+00 : f32
    %55 = vector.broadcast %cst_29 : f32 to vector<128x32xf32>
    %56 = arith.subf %55, %53 : vector<128x32xf32>
    %57 = arith.mulf %56, %34 : vector<128x32xf32>
    %58 = arith.addf %54, %57 : vector<128x32xf32>
    %59 = arith.truncf %58 : vector<128x32xf32> to vector<128x32xbf16>
    %c0_30 = arith.constant 0 : index
    %c0_31 = arith.constant 0 : index
    %60 = vector.load %arg8[%c0_30, %c0_31] : memref<32x128xbf16, #tpu.memory_space<vmem>>, vector<32x128xbf16>
    %cst_32 = arith.constant dense<0.000000e+00> : vector<128x128xf32>
    %61 = tpu.matmul %59, %60, %cst_32 {dimension_numbers = #tpu.dot_dimension_numbers<[1], [0], [0], [1], [0, 0, 1, 1], [], []>} : vector<128x32xbf16>, vector<32x128xbf16>, vector<128x128xf32> -> vector<128x128xf32>
    %c0_33 = arith.constant 0 : index
    %c0_34 = arith.constant 0 : index
    %62 = vector.load %arg9[%c0_33, %c0_34] : memref<128x128xf32, #tpu.memory_space<vmem>>, vector<128x128xf32>
    tpu.vector_store %arg9[%c0_33, %c0_34], %61 {strides = array<i32>} : memref<128x128xf32, #tpu.memory_space<vmem>>, vector<128x128xf32>,
    return
  }
  func.func @transform_0(%arg0: i32) -> (i32, i32) {
    %c0_i32 = arith.constant 0 : i32
    %c0_i32_0 = arith.constant 0 : i32
    return %arg0, %c0_i32 : i32, i32
  }
  func.func @transform_1(%arg0: i32) -> (i32, i32) {
    %c0_i32 = arith.constant 0 : i32
    %c0_i32_0 = arith.constant 0 : i32
    %c0_i32_1 = arith.constant 0 : i32
    return %c0_i32, %c0_i32_0 : i32, i32
  }
  func.func @transform_2(%arg0: i32) -> (i32, i32) {
    %c0_i32 = arith.constant 0 : i32
    %c0_i32_0 = arith.constant 0 : i32
    %c0_i32_1 = arith.constant 0 : i32
    return %c0_i32, %c0_i32_0 : i32, i32
  }
  func.func @transform_3(%arg0: i32) -> (i32, i32) {
    %c0_i32 = arith.constant 0 : i32
    %c0_i32_0 = arith.constant 0 : i32
    %c0_i32_1 = arith.constant 0 : i32
    return %c0_i32, %c0_i32_0 : i32, i32
  }
  func.func @transform_4(%arg0: i32) -> (i32, i32) {
    %c0_i32 = arith.constant 0 : i32
    %c0_i32_0 = arith.constant 0 : i32
    %c0_i32_1 = arith.constant 0 : i32
    return %c0_i32, %c0_i32_0 : i32, i32
  }
  func.func @transform_5(%arg0: i32) -> (i32, i32) {
    %c0_i32 = arith.constant 0 : i32
    %c0_i32_0 = arith.constant 0 : i32
    %c0_i32_1 = arith.constant 0 : i32
    return %c0_i32, %c0_i32_0 : i32, i32
  }
  func.func @transform_6(%arg0: i32) -> (i32, i32) {
    %c0_i32 = arith.constant 0 : i32
    %c0_i32_0 = arith.constant 0 : i32
    %c0_i32_1 = arith.constant 0 : i32
    return %c0_i32, %c0_i32_0 : i32, i32
  }
  func.func @transform_7(%arg0: i32) -> (i32, i32) {
    %c0_i32 = arith.constant 0 : i32
    %c0_i32_0 = arith.constant 0 : i32
    %c0_i32_1 = arith.constant 0 : i32
    return %c0_i32, %c0_i32_0 : i32, i32
  }
  func.func @transform_8(%arg0: i32) -> (i32, i32) {
    %c0_i32 = arith.constant 0 : i32
    %c0_i32_0 = arith.constant 0 : i32
    return %arg0, %c0_i32 : i32, i32
  }
}

module attributes {stable_mosaic.version = 11 : i64} {
  func.func @_char_cnn_kernel(%arg0: i32, %arg1: memref<128x128xf32, #tpu.memory_space<vmem>>, %arg2: memref<80x32xbf16, #tpu.memory_space<vmem>>, %arg3: memref<1x32xf32, #tpu.memory_space<vmem>>, %arg4: memref<32x32xbf16, #tpu.memory_space<vmem>>, %arg5: memref<1x32xf32, #tpu.memory_space<vmem>>, %arg6: memref<32x32xbf16, #tpu.memory_space<vmem>>, %arg7: memref<1x32xf32, #tpu.memory_space<vmem>>, %arg8: memref<32x256xbf16, #tpu.memory_space<vmem>>, %arg9: memref<128x256xf32, #tpu.memory_space<vmem>>) attributes {dimension_semantics = [#tpu.dimension_semantics<parallel>], iteration_bounds = array<i64: 1>, scalar_prefetch = 0 : i64, scratch_operands = 0 : i64, tpu.core_type = #tpu.core_type<tc>, window_params = [{transform_indices = @transform_0, window_bounds = array<i64: 128, 128>}, {pipeline_mode = #tpu.pipeline_mode<synchronous>, transform_indices = @transform_1, window_bounds = array<i64: 80, 32>}, {pipeline_mode = #tpu.pipeline_mode<synchronous>, transform_indices = @transform_2, window_bounds = array<i64: 1, 32>}, {pipeline_mode = #tpu.pipeline_mode<synchronous>, transform_indices = @transform_3, window_bounds = array<i64: 32, 32>}, {pipeline_mode = #tpu.pipeline_mode<synchronous>, transform_indices = @transform_4, window_bounds = array<i64: 1, 32>}, {pipeline_mode = #tpu.pipeline_mode<synchronous>, transform_indices = @transform_5, window_bounds = array<i64: 32, 32>}, {pipeline_mode = #tpu.pipeline_mode<synchronous>, transform_indices = @transform_6, window_bounds = array<i64: 1, 32>}, {pipeline_mode = #tpu.pipeline_mode<synchronous>, transform_indices = @transform_7, window_bounds = array<i64: 32, 256>}, {transform_indices = @transform_8, window_bounds = array<i64: 128, 256>}]} {
    %c0 = arith.constant 0 : index
    %c0_0 = arith.constant 0 : index
    %0 = vector.load %arg2[%c0, %c0_0] : memref<80x32xbf16, #tpu.memory_space<vmem>>, vector<80x32xbf16>
    %c0_1 = arith.constant 0 : index
    %c0_2 = arith.constant 0 : index
    %1 = vector.load %arg3[%c0_1, %c0_2] : memref<1x32xf32, #tpu.memory_space<vmem>>, vector<1x32xf32>
    %cst = arith.constant 0xFF800000 : f32
    %2 = vector.broadcast %cst : f32 to vector<128x32xf32>
    %c0_3 = arith.constant 0 : index
    %c0_4 = arith.constant 0 : index
    %3 = vector.load %arg1[%c0_3, %c0_4] : memref<128x128xf32, #tpu.memory_space<vmem>>, vector<128x80xf32>
    %4 = arith.truncf %3 : vector<128x80xf32> to vector<128x80xbf16>
    %cst_5 = arith.constant dense<0.000000e+00> : vector<128x32xf32>
    %5 = tpu.matmul %4, %0, %cst_5 {dimension_numbers = #tpu.dot_dimension_numbers<[1], [0], [0], [1], [0, 0, 1, 1], [], []>} : vector<128x80xbf16>, vector<80x32xbf16>, vector<128x32xf32> -> vector<128x32xf32>
    %6 = vector.broadcast %1 : vector<1x32xf32> to vector<128x32xf32>
    %7 = arith.addf %5, %6 : vector<128x32xf32>
    %cst_6 = arith.constant 0.000000e+00 : f32
    %8 = vector.broadcast %cst_6 : f32 to vector<128x32xf32>
    %9 = arith.maximumf %7, %8 : vector<128x32xf32>
    %10 = arith.maximumf %2, %9 : vector<128x32xf32>
    %c0_7 = arith.constant 0 : index
    %c16 = arith.constant 16 : index
    %11 = vector.load %arg1[%c0_7, %c16] : memref<128x128xf32, #tpu.memory_space<vmem>>, vector<128x80xf32>
    %12 = arith.truncf %11 : vector<128x80xf32> to vector<128x80xbf16>
    %cst_8 = arith.constant dense<0.000000e+00> : vector<128x32xf32>
    %13 = tpu.matmul %12, %0, %cst_8 {dimension_numbers = #tpu.dot_dimension_numbers<[1], [0], [0], [1], [0, 0, 1, 1], [], []>} : vector<128x80xbf16>, vector<80x32xbf16>, vector<128x32xf32> -> vector<128x32xf32>
    %14 = vector.broadcast %1 : vector<1x32xf32> to vector<128x32xf32>
    %15 = arith.addf %13, %14 : vector<128x32xf32>
    %cst_9 = arith.constant 0.000000e+00 : f32
    %16 = vector.broadcast %cst_9 : f32 to vector<128x32xf32>
    %17 = arith.maximumf %15, %16 : vector<128x32xf32>
    %18 = arith.maximumf %10, %17 : vector<128x32xf32>
    %c0_10 = arith.constant 0 : index
    %c32 = arith.constant 32 : index
    %19 = vector.load %arg1[%c0_10, %c32] : memref<128x128xf32, #tpu.memory_space<vmem>>, vector<128x80xf32>
    %20 = arith.truncf %19 : vector<128x80xf32> to vector<128x80xbf16>
    %cst_11 = arith.constant dense<0.000000e+00> : vector<128x32xf32>
    %21 = tpu.matmul %20, %0, %cst_11 {dimension_numbers = #tpu.dot_dimension_numbers<[1], [0], [0], [1], [0, 0, 1, 1], [], []>} : vector<128x80xbf16>, vector<80x32xbf16>, vector<128x32xf32> -> vector<128x32xf32>
    %22 = vector.broadcast %1 : vector<1x32xf32> to vector<128x32xf32>
    %23 = arith.addf %21, %22 : vector<128x32xf32>
    %cst_12 = arith.constant 0.000000e+00 : f32
    %24 = vector.broadcast %cst_12 : f32 to vector<128x32xf32>
    %25 = arith.maximumf %23, %24 : vector<128x32xf32>
    %26 = arith.maximumf %18, %25 : vector<128x32xf32>
    %c0_13 = arith.constant 0 : index
    %c48 = arith.constant 48 : index
    %27 = vector.load %arg1[%c0_13, %c48] : memref<128x128xf32, #tpu.memory_space<vmem>>, vector<128x80xf32>
    %28 = arith.truncf %27 : vector<128x80xf32> to vector<128x80xbf16>
    %cst_14 = arith.constant dense<0.000000e+00> : vector<128x32xf32>
    %29 = tpu.matmul %28, %0, %cst_14 {dimension_numbers = #tpu.dot_dimension_numbers<[1], [0], [0], [1], [0, 0, 1, 1], [], []>} : vector<128x80xbf16>, vector<80x32xbf16>, vector<128x32xf32> -> vector<128x32xf32>
    %30 = vector.broadcast %1 : vector<1x32xf32> to vector<128x32xf32>
    %31 = arith.addf %29, %30 : vector<128x32xf32>
    %cst_15 = arith.constant 0.000000e+00 : f32
    %32 = vector.broadcast %cst_15 : f32 to vector<128x32xf32>
    %33 = arith.maximumf %31, %32 : vector<128x32xf32>
    %34 = arith.maximumf %26, %33 : vector<128x32xf32>
    %35 = arith.truncf %34 : vector<128x32xf32> to vector<128x32xbf16>
    %c0_16 = arith.constant 0 : index
    %c0_17 = arith.constant 0 : index
    %36 = vector.load %arg4[%c0_16, %c0_17] : memref<32x32xbf16, #tpu.memory_space<vmem>>, vector<32x32xbf16>
    %cst_18 = arith.constant dense<0.000000e+00> : vector<128x32xf32>
    %37 = tpu.matmul %35, %36, %cst_18 {dimension_numbers = #tpu.dot_dimension_numbers<[1], [0], [0], [1], [0, 0, 1, 1], [], []>} : vector<128x32xbf16>, vector<32x32xbf16>, vector<128x32xf32> -> vector<128x32xf32>
    %c0_19 = arith.constant 0 : index
    %c0_20 = arith.constant 0 : index
    %38 = vector.load %arg5[%c0_19, %c0_20] : memref<1x32xf32, #tpu.memory_space<vmem>>, vector<1x32xf32>
    %39 = vector.broadcast %38 : vector<1x32xf32> to vector<128x32xf32>
    %40 = arith.addf %37, %39 : vector<128x32xf32>
    %cst_21 = arith.constant 0.000000e+00 : f32
    %41 = vector.broadcast %cst_21 : f32 to vector<128x32xf32>
    %42 = arith.maximumf %40, %41 : vector<128x32xf32>
    %c0_22 = arith.constant 0 : index
    %c0_23 = arith.constant 0 : index
    %43 = vector.load %arg6[%c0_22, %c0_23] : memref<32x32xbf16, #tpu.memory_space<vmem>>, vector<32x32xbf16>
    %cst_24 = arith.constant dense<0.000000e+00> : vector<128x32xf32>
    %44 = tpu.matmul %35, %43, %cst_24 {dimension_numbers = #tpu.dot_dimension_numbers<[1], [0], [0], [1], [0, 0, 1, 1], [], []>} : vector<128x32xbf16>, vector<32x32xbf16>, vector<128x32xf32> -> vector<128x32xf32>
    %c0_25 = arith.constant 0 : index
    %c0_26 = arith.constant 0 : index
    %45 = vector.load %arg7[%c0_25, %c0_26] : memref<1x32xf32, #tpu.memory_space<vmem>>, vector<1x32xf32>
    %46 = vector.broadcast %45 : vector<1x32xf32> to vector<128x32xf32>
    %47 = arith.addf %44, %46 : vector<128x32xf32>
    %cst_27 = arith.constant 0.000000e+00 : f32
    %48 = vector.broadcast %cst_27 : f32 to vector<128x32xf32>
    %49 = arith.subf %48, %47 : vector<128x32xf32>
    %50 = math.exp %49 : vector<128x32xf32>
    %cst_28 = arith.constant 1.000000e+00 : f32
    %51 = vector.broadcast %cst_28 : f32 to vector<128x32xf32>
    %52 = arith.addf %51, %50 : vector<128x32xf32>
    %53 = tpu.reciprocal %52 {approx = true} : vector<128x32xf32> -> vector<128x32xf32>
    %54 = arith.mulf %53, %42 : vector<128x32xf32>
    %cst_29 = arith.constant 1.000000e+00 : f32
    %55 = vector.broadcast %cst_29 : f32 to vector<128x32xf32>
    %56 = arith.subf %55, %53 : vector<128x32xf32>
    %57 = arith.mulf %56, %34 : vector<128x32xf32>
    %58 = arith.addf %54, %57 : vector<128x32xf32>
    %59 = arith.truncf %58 : vector<128x32xf32> to vector<128x32xbf16>
    %c0_30 = arith.constant 0 : index
    %c0_31 = arith.constant 0 : index
    %60 = vector.load %arg8[%c0_30, %c0_31] : memref<32x256xbf16, #tpu.memory_space<vmem>>, vector<32x256xbf16>
    %cst_32 = arith.constant dense<0.000000e+00> : vector<128x256xf32>
    %61 = tpu.matmul %59, %60, %cst_32 {dimension_numbers = #tpu.dot_dimension_numbers<[1], [0], [0], [1], [0, 0, 1, 1], [], []>} : vector<128x32xbf16>, vector<32x256xbf16>, vector<128x256xf32> -> vector<128x256xf32>
    %c0_33 = arith.constant 0 : index
    %c0_34 = arith.constant 0 : index
    %62 = vector.load %arg9[%c0_33, %c0_34] : memref<128x256xf32, #tpu.memory_space<vmem>>, vector<128x256xf32>
    tpu.vector_store %arg9[%c0_33, %c0_34], %61 {strides = array<i32>} : memref<128x256xf32, #tpu.memory_space<vmem>>, vector<128x256xf32>,
    return
  }
  func.func @transform_0(%arg0: i32) -> (i32, i32) {
    %c0_i32 = arith.constant 0 : i32
    %c0_i32_0 = arith.constant 0 : i32
    return %arg0, %c0_i32 : i32, i32
  }
  func.func @transform_1(%arg0: i32) -> (i32, i32) {
    %c0_i32 = arith.constant 0 : i32
    %c0_i32_0 = arith.constant 0 : i32
    %c0_i32_1 = arith.constant 0 : i32
    return %c0_i32, %c0_i32_0 : i32, i32
  }
  func.func @transform_2(%arg0: i32) -> (i32, i32) {
    %c0_i32 = arith.constant 0 : i32
    %c0_i32_0 = arith.constant 0 : i32
    %c0_i32_1 = arith.constant 0 : i32
    return %c0_i32, %c0_i32_0 : i32, i32
  }
  func.func @transform_3(%arg0: i32) -> (i32, i32) {
    %c0_i32 = arith.constant 0 : i32
    %c0_i32_0 = arith.constant 0 : i32
    %c0_i32_1 = arith.constant 0 : i32
    return %c0_i32, %c0_i32_0 : i32, i32
  }
  func.func @transform_4(%arg0: i32) -> (i32, i32) {
    %c0_i32 = arith.constant 0 : i32
    %c0_i32_0 = arith.constant 0 : i32
    %c0_i32_1 = arith.constant 0 : i32
    return %c0_i32, %c0_i32_0 : i32, i32
  }
  func.func @transform_5(%arg0: i32) -> (i32, i32) {
    %c0_i32 = arith.constant 0 : i32
    %c0_i32_0 = arith.constant 0 : i32
    %c0_i32_1 = arith.constant 0 : i32
    return %c0_i32, %c0_i32_0 : i32, i32
  }
  func.func @transform_6(%arg0: i32) -> (i32, i32) {
    %c0_i32 = arith.constant 0 : i32
    %c0_i32_0 = arith.constant 0 : i32
    %c0_i32_1 = arith.constant 0 : i32
    return %c0_i32, %c0_i32_0 : i32, i32
  }
  func.func @transform_7(%arg0: i32) -> (i32, i32) {
    %c0_i32 = arith.constant 0 : i32
    %c0_i32_0 = arith.constant 0 : i32
    %c0_i32_1 = arith.constant 0 : i32
    return %c0_i32, %c0_i32_0 : i32, i32
  }
  func.func @transform_8(%arg0: i32) -> (i32, i32) {
    %c0_i32 = arith.constant 0 : i32
    %c0_i32_0 = arith.constant 0 : i32
    return %arg0, %c0_i32 : i32, i32
  }
}

module attributes {stable_mosaic.version = 11 : i64} {
  func.func @_enc_bilstm_kernel(%arg0: i32, %arg1: memref<1x8x128xf32, #tpu.memory_space<vmem>>, %arg2: memref<1x8x128xf32, #tpu.memory_space<vmem>>, %arg3: memref<1x8x1xf32, #tpu.memory_space<vmem>>, %arg4: memref<1x8x1xf32, #tpu.memory_space<vmem>>, %arg5: memref<32x128xf32, #tpu.memory_space<vmem>>, %arg6: memref<32x128xf32, #tpu.memory_space<vmem>>, %arg7: memref<1x128xf32, #tpu.memory_space<vmem>>, %arg8: memref<1x128xf32, #tpu.memory_space<vmem>>, %arg9: memref<32x32xf32, #tpu.memory_space<vmem>>, %arg10: memref<32x32xf32, #tpu.memory_space<vmem>>, %arg11: memref<32x32xf32, #tpu.memory_space<vmem>>, %arg12: memref<32x32xf32, #tpu.memory_space<vmem>>, %arg13: memref<1x8x32xf32, #tpu.memory_space<vmem>>, %arg14: memref<1x8x32xf32, #tpu.memory_space<vmem>>, %arg15: memref<8x32xf32, #tpu.memory_space<vmem>>, %arg16: memref<8x32xf32, #tpu.memory_space<vmem>>, %arg17: memref<8x32xf32, #tpu.memory_space<vmem>>, %arg18: memref<8x32xf32, #tpu.memory_space<vmem>>, %arg19: memref<8x32xf32, #tpu.memory_space<vmem>>, %arg20: memref<8x32xf32, #tpu.memory_space<vmem>>) attributes {dimension_semantics = [#tpu.dimension_semantics<arbitrary>], iteration_bounds = array<i64: 8>, scalar_prefetch = 0 : i64, scratch_operands = 4 : i64, tpu.core_type = #tpu.core_type<tc>, window_params = [{transform_indices = @transform_0, window_bounds = array<i64: 1, 8, 128>}, {transform_indices = @transform_1, window_bounds = array<i64: 1, 8, 128>}, {transform_indices = @transform_2, window_bounds = array<i64: 1, 8, 1>}, {transform_indices = @transform_3, window_bounds = array<i64: 1, 8, 1>}, {pipeline_mode = #tpu.pipeline_mode<synchronous>, transform_indices = @transform_4, window_bounds = array<i64: 32, 128>}, {pipeline_mode = #tpu.pipeline_mode<synchronous>, transform_indices = @transform_5, window_bounds = array<i64: 32, 128>}, {pipeline_mode = #tpu.pipeline_mode<synchronous>, transform_indices = @transform_6, window_bounds = array<i64: 1, 128>}, {pipeline_mode = #tpu.pipeline_mode<synchronous>, transform_indices = @transform_7, window_bounds = array<i64: 1, 128>}, {pipeline_mode = #tpu.pipeline_mode<synchronous>, transform_indices = @transform_8, window_bounds = array<i64: 32, 32>}, {pipeline_mode = #tpu.pipeline_mode<synchronous>, transform_indices = @transform_9, window_bounds = array<i64: 32, 32>}, {pipeline_mode = #tpu.pipeline_mode<synchronous>, transform_indices = @transform_10, window_bounds = array<i64: 32, 32>}, {pipeline_mode = #tpu.pipeline_mode<synchronous>, transform_indices = @transform_11, window_bounds = array<i64: 32, 32>}, {transform_indices = @transform_12, window_bounds = array<i64: 1, 8, 32>}, {transform_indices = @transform_13, window_bounds = array<i64: 1, 8, 32>}, {pipeline_mode = #tpu.pipeline_mode<synchronous>, transform_indices = @transform_14, window_bounds = array<i64: 8, 32>}, {pipeline_mode = #tpu.pipeline_mode<synchronous>, transform_indices = @transform_15, window_bounds = array<i64: 8, 32>}]} {
    %c0_i32 = arith.constant 0 : i32
    %0 = arith.cmpi eq, %arg0, %c0_i32 : i32
    %1 = arith.extui %0 : i1 to i32
    %c0_i32_0 = arith.constant 0 : i32
    %2 = arith.cmpi ne, %1, %c0_i32_0 : i32
    scf.if %2 {
      %cst_72 = arith.constant 0.000000e+00 : f32
      %132 = vector.broadcast %cst_72 : f32 to vector<8x32xf32>
      %c0_73 = arith.constant 0 : index
      %c0_74 = arith.constant 0 : index
      %133 = vector.load %arg17[%c0_73, %c0_74] : memref<8x32xf32, #tpu.memory_space<vmem>>, vector<8x32xf32>
      tpu.vector_store %arg17[%c0_73, %c0_74], %132 {strides = array<i32>} : memref<8x32xf32, #tpu.memory_space<vmem>>, vector<8x32xf32>,
      %cst_75 = arith.constant 0.000000e+00 : f32
      %134 = vector.broadcast %cst_75 : f32 to vector<8x32xf32>
      %c0_76 = arith.constant 0 : index
      %c0_77 = arith.constant 0 : index
      %135 = vector.load %arg18[%c0_76, %c0_77] : memref<8x32xf32, #tpu.memory_space<vmem>>, vector<8x32xf32>
      tpu.vector_store %arg18[%c0_76, %c0_77], %134 {strides = array<i32>} : memref<8x32xf32, #tpu.memory_space<vmem>>, vector<8x32xf32>,
      %cst_78 = arith.constant 0.000000e+00 : f32
      %136 = vector.broadcast %cst_78 : f32 to vector<8x32xf32>
      %c0_79 = arith.constant 0 : index
      %c0_80 = arith.constant 0 : index
      %137 = vector.load %arg19[%c0_79, %c0_80] : memref<8x32xf32, #tpu.memory_space<vmem>>, vector<8x32xf32>
      tpu.vector_store %arg19[%c0_79, %c0_80], %136 {strides = array<i32>} : memref<8x32xf32, #tpu.memory_space<vmem>>, vector<8x32xf32>,
      %cst_81 = arith.constant 0.000000e+00 : f32
      %138 = vector.broadcast %cst_81 : f32 to vector<8x32xf32>
      %c0_82 = arith.constant 0 : index
      %c0_83 = arith.constant 0 : index
      %139 = vector.load %arg20[%c0_82, %c0_83] : memref<8x32xf32, #tpu.memory_space<vmem>>, vector<8x32xf32>
      tpu.vector_store %arg20[%c0_82, %c0_83], %138 {strides = array<i32>} : memref<8x32xf32, #tpu.memory_space<vmem>>, vector<8x32xf32>,
    } else {
    }
    %c0 = arith.constant 0 : index
    %c0_1 = arith.constant 0 : index
    %c0_2 = arith.constant 0 : index
    %3 = vector.load %arg3[%c0, %c0_1, %c0_2] : memref<1x8x1xf32, #tpu.memory_space<vmem>>, vector<1x8x1xf32>
    %4 = vector.shape_cast %3 : vector<1x8x1xf32> to vector<8x1xf32>
    %c0_3 = arith.constant 0 : index
    %c0_4 = arith.constant 0 : index
    %c0_5 = arith.constant 0 : index
    %5 = vector.load %arg4[%c0_3, %c0_4, %c0_5] : memref<1x8x1xf32, #tpu.memory_space<vmem>>, vector<1x8x1xf32>
    %6 = vector.shape_cast %5 : vector<1x8x1xf32> to vector<8x1xf32>
    %c0_6 = arith.constant 0 : index
    %c0_7 = arith.constant 0 : index
    %c0_8 = arith.constant 0 : index
    %7 = vector.load %arg1[%c0_6, %c0_7, %c0_8] : memref<1x8x128xf32, #tpu.memory_space<vmem>>, vector<1x8x128xf32>
    %8 = vector.shape_cast %7 : vector<1x8x128xf32> to vector<8x128xf32>
    %c0_9 = arith.constant 0 : index
    %c0_10 = arith.constant 0 : index
    %9 = vector.load %arg17[%c0_9, %c0_10] : memref<8x32xf32, #tpu.memory_space<vmem>>, vector<8x32xf32>
    %c0_11 = arith.constant 0 : index
    %c0_12 = arith.constant 0 : index
    %10 = vector.load %arg18[%c0_11, %c0_12] : memref<8x32xf32, #tpu.memory_space<vmem>>, vector<8x32xf32>
    %c0_13 = arith.constant 0 : index
    %c0_14 = arith.constant 0 : index
    %11 = vector.load %arg5[%c0_13, %c0_14] : memref<32x128xf32, #tpu.memory_space<vmem>>, vector<32x128xf32>
    %c0_15 = arith.constant 0 : index
    %c0_16 = arith.constant 0 : index
    %12 = vector.load %arg7[%c0_15, %c0_16] : memref<1x128xf32, #tpu.memory_space<vmem>>, vector<1x128xf32>
    %cst = arith.constant dense<0.000000e+00> : vector<8x128xf32>
    %13 = tpu.matmul %9, %11, %cst {dimension_numbers = #tpu.dot_dimension_numbers<[1], [0], [0], [1], [0, 0, 1, 1], [], []>} : vector<8x32xf32>, vector<32x128xf32>, vector<8x128xf32> -> vector<8x128xf32>
    %14 = arith.addf %8, %13 : vector<8x128xf32>
    %15 = vector.broadcast %12 : vector<1x128xf32> to vector<8x128xf32>
    %16 = arith.addf %14, %15 : vector<8x128xf32>
    %17 = vector.extract_strided_slice %16 {offsets = [0, 0], sizes = [8, 32], strides = [1, 1]} : vector<8x128xf32> to vector<8x32xf32>
    %cst_17 = arith.constant 0.000000e+00 : f32
    %18 = vector.broadcast %cst_17 : f32 to vector<8x32xf32>
    %19 = arith.subf %18, %17 : vector<8x32xf32>
    %20 = math.exp %19 : vector<8x32xf32>
    %cst_18 = arith.constant 1.000000e+00 : f32
    %21 = vector.broadcast %cst_18 : f32 to vector<8x32xf32>
    %22 = arith.addf %21, %20 : vector<8x32xf32>
    %23 = tpu.reciprocal %22 {approx = true} : vector<8x32xf32> -> vector<8x32xf32>
    %24 = vector.extract_strided_slice %16 {offsets = [0, 32], sizes = [8, 32], strides = [1, 1]} : vector<8x128xf32> to vector<8x32xf32>
    %cst_19 = arith.constant 0.000000e+00 : f32
    %25 = vector.broadcast %cst_19 : f32 to vector<8x32xf32>
    %26 = arith.subf %25, %24 : vector<8x32xf32>
    %27 = math.exp %26 : vector<8x32xf32>
    %cst_20 = arith.constant 1.000000e+00 : f32
    %28 = vector.broadcast %cst_20 : f32 to vector<8x32xf32>
    %29 = arith.addf %28, %27 : vector<8x32xf32>
    %30 = tpu.reciprocal %29 {approx = true} : vector<8x32xf32> -> vector<8x32xf32>
    %31 = vector.extract_strided_slice %16 {offsets = [0, 64], sizes = [8, 32], strides = [1, 1]} : vector<8x128xf32> to vector<8x32xf32>
    %32 = math.tanh %31 : vector<8x32xf32>
    %33 = vector.extract_strided_slice %16 {offsets = [0, 96], sizes = [8, 32], strides = [1, 1]} : vector<8x128xf32> to vector<8x32xf32>
    %cst_21 = arith.constant 0.000000e+00 : f32
    %34 = vector.broadcast %cst_21 : f32 to vector<8x32xf32>
    %35 = arith.subf %34, %33 : vector<8x32xf32>
    %36 = math.exp %35 : vector<8x32xf32>
    %cst_22 = arith.constant 1.000000e+00 : f32
    %37 = vector.broadcast %cst_22 : f32 to vector<8x32xf32>
    %38 = arith.addf %37, %36 : vector<8x32xf32>
    %39 = tpu.reciprocal %38 {approx = true} : vector<8x32xf32> -> vector<8x32xf32>
    %40 = arith.mulf %30, %10 : vector<8x32xf32>
    %41 = arith.mulf %23, %32 : vector<8x32xf32>
    %42 = arith.addf %40, %41 : vector<8x32xf32>
    %43 = math.tanh %42 : vector<8x32xf32>
    %44 = arith.mulf %39, %43 : vector<8x32xf32>
    %c0_23 = arith.constant 0 : index
    %c0_24 = arith.constant 0 : index
    %c0_25 = arith.constant 0 : index
    %45 = vector.load %arg2[%c0_23, %c0_24, %c0_25] : memref<1x8x128xf32, #tpu.memory_space<vmem>>, vector<1x8x128xf32>
    %46 = vector.shape_cast %45 : vector<1x8x128xf32> to vector<8x128xf32>
    %c0_26 = arith.constant 0 : index
    %c0_27 = arith.constant 0 : index
    %47 = vector.load %arg19[%c0_26, %c0_27] : memref<8x32xf32, #tpu.memory_space<vmem>>, vector<8x32xf32>
    %c0_28 = arith.constant 0 : index
    %c0_29 = arith.constant 0 : index
    %48 = vector.load %arg20[%c0_28, %c0_29] : memref<8x32xf32, #tpu.memory_space<vmem>>, vector<8x32xf32>
    %c0_30 = arith.constant 0 : index
    %c0_31 = arith.constant 0 : index
    %49 = vector.load %arg6[%c0_30, %c0_31] : memref<32x128xf32, #tpu.memory_space<vmem>>, vector<32x128xf32>
    %c0_32 = arith.constant 0 : index
    %c0_33 = arith.constant 0 : index
    %50 = vector.load %arg8[%c0_32, %c0_33] : memref<1x128xf32, #tpu.memory_space<vmem>>, vector<1x128xf32>
    %cst_34 = arith.constant dense<0.000000e+00> : vector<8x128xf32>
    %51 = tpu.matmul %47, %49, %cst_34 {dimension_numbers = #tpu.dot_dimension_numbers<[1], [0], [0], [1], [0, 0, 1, 1], [], []>} : vector<8x32xf32>, vector<32x128xf32>, vector<8x128xf32> -> vector<8x128xf32>
    %52 = arith.addf %46, %51 : vector<8x128xf32>
    %53 = vector.broadcast %50 : vector<1x128xf32> to vector<8x128xf32>
    %54 = arith.addf %52, %53 : vector<8x128xf32>
    %55 = vector.extract_strided_slice %54 {offsets = [0, 0], sizes = [8, 32], strides = [1, 1]} : vector<8x128xf32> to vector<8x32xf32>
    %cst_35 = arith.constant 0.000000e+00 : f32
    %56 = vector.broadcast %cst_35 : f32 to vector<8x32xf32>
    %57 = arith.subf %56, %55 : vector<8x32xf32>
    %58 = math.exp %57 : vector<8x32xf32>
    %cst_36 = arith.constant 1.000000e+00 : f32
    %59 = vector.broadcast %cst_36 : f32 to vector<8x32xf32>
    %60 = arith.addf %59, %58 : vector<8x32xf32>
    %61 = tpu.reciprocal %60 {approx = true} : vector<8x32xf32> -> vector<8x32xf32>
    %62 = vector.extract_strided_slice %54 {offsets = [0, 32], sizes = [8, 32], strides = [1, 1]} : vector<8x128xf32> to vector<8x32xf32>
    %cst_37 = arith.constant 0.000000e+00 : f32
    %63 = vector.broadcast %cst_37 : f32 to vector<8x32xf32>
    %64 = arith.subf %63, %62 : vector<8x32xf32>
    %65 = math.exp %64 : vector<8x32xf32>
    %cst_38 = arith.constant 1.000000e+00 : f32
    %66 = vector.broadcast %cst_38 : f32 to vector<8x32xf32>
    %67 = arith.addf %66, %65 : vector<8x32xf32>
    %68 = tpu.reciprocal %67 {approx = true} : vector<8x32xf32> -> vector<8x32xf32>
    %69 = vector.extract_strided_slice %54 {offsets = [0, 64], sizes = [8, 32], strides = [1, 1]} : vector<8x128xf32> to vector<8x32xf32>
    %70 = math.tanh %69 : vector<8x32xf32>
    %71 = vector.extract_strided_slice %54 {offsets = [0, 96], sizes = [8, 32], strides = [1, 1]} : vector<8x128xf32> to vector<8x32xf32>
    %cst_39 = arith.constant 0.000000e+00 : f32
    %72 = vector.broadcast %cst_39 : f32 to vector<8x32xf32>
    %73 = arith.subf %72, %71 : vector<8x32xf32>
    %74 = math.exp %73 : vector<8x32xf32>
    %cst_40 = arith.constant 1.000000e+00 : f32
    %75 = vector.broadcast %cst_40 : f32 to vector<8x32xf32>
    %76 = arith.addf %75, %74 : vector<8x32xf32>
    %77 = tpu.reciprocal %76 {approx = true} : vector<8x32xf32> -> vector<8x32xf32>
    %78 = arith.mulf %68, %48 : vector<8x32xf32>
    %79 = arith.mulf %61, %70 : vector<8x32xf32>
    %80 = arith.addf %78, %79 : vector<8x32xf32>
    %81 = math.tanh %80 : vector<8x32xf32>
    %82 = arith.mulf %77, %81 : vector<8x32xf32>
    %cst_41 = arith.constant 0.000000e+00 : f32
    %83 = vector.broadcast %cst_41 : f32 to vector<8x1xf32>
    %84 = arith.cmpf ogt, %4, %83 : vector<8x1xf32>
    %c0_42 = arith.constant 0 : index
    %c0_43 = arith.constant 0 : index
    %85 = vector.load %arg17[%c0_42, %c0_43] : memref<8x32xf32, #tpu.memory_space<vmem>>, vector<8x32xf32>
    %86 = vector.shape_cast %84 : vector<8x1xi1> to vector<8x1xi1>
    %87 = vector.broadcast %86 : vector<8x1xi1> to vector<8x32xi1>
    %88 = arith.select %87, %44, %85 : vector<8x32xi1>, vector<8x32xf32>
    %c0_44 = arith.constant 0 : index
    %c0_45 = arith.constant 0 : index
    %89 = vector.load %arg17[%c0_44, %c0_45] : memref<8x32xf32, #tpu.memory_space<vmem>>, vector<8x32xf32>
    tpu.vector_store %arg17[%c0_44, %c0_45], %88 {strides = array<i32>} : memref<8x32xf32, #tpu.memory_space<vmem>>, vector<8x32xf32>,
    %cst_46 = arith.constant 0.000000e+00 : f32
    %90 = vector.broadcast %cst_46 : f32 to vector<8x1xf32>
    %91 = arith.cmpf ogt, %4, %90 : vector<8x1xf32>
    %c0_47 = arith.constant 0 : index
    %c0_48 = arith.constant 0 : index
    %92 = vector.load %arg18[%c0_47, %c0_48] : memref<8x32xf32, #tpu.memory_space<vmem>>, vector<8x32xf32>
    %93 = vector.shape_cast %91 : vector<8x1xi1> to vector<8x1xi1>
    %94 = vector.broadcast %93 : vector<8x1xi1> to vector<8x32xi1>
    %95 = arith.select %94, %42, %92 : vector<8x32xi1>, vector<8x32xf32>
    %c0_49 = arith.constant 0 : index
    %c0_50 = arith.constant 0 : index
    %96 = vector.load %arg18[%c0_49, %c0_50] : memref<8x32xf32, #tpu.memory_space<vmem>>, vector<8x32xf32>
    tpu.vector_store %arg18[%c0_49, %c0_50], %95 {strides = array<i32>} : memref<8x32xf32, #tpu.memory_space<vmem>>, vector<8x32xf32>,
    %cst_51 = arith.constant 0.000000e+00 : f32
    %97 = vector.broadcast %cst_51 : f32 to vector<8x1xf32>
    %98 = arith.cmpf ogt, %6, %97 : vector<8x1xf32>
    %c0_52 = arith.constant 0 : index
    %c0_53 = arith.constant 0 : index
    %99 = vector.load %arg19[%c0_52, %c0_53] : memref<8x32xf32, #tpu.memory_space<vmem>>, vector<8x32xf32>
    %100 = vector.shape_cast %98 : vector<8x1xi1> to vector<8x1xi1>
    %101 = vector.broadcast %100 : vector<8x1xi1> to vector<8x32xi1>
    %102 = arith.select %101, %82, %99 : vector<8x32xi1>, vector<8x32xf32>
    %c0_54 = arith.constant 0 : index
    %c0_55 = arith.constant 0 : index
    %103 = vector.load %arg19[%c0_54, %c0_55] : memref<8x32xf32, #tpu.memory_space<vmem>>, vector<8x32xf32>
    tpu.vector_store %arg19[%c0_54, %c0_55], %102 {strides = array<i32>} : memref<8x32xf32, #tpu.memory_space<vmem>>, vector<8x32xf32>,
    %cst_56 = arith.constant 0.000000e+00 : f32
    %104 = vector.broadcast %cst_56 : f32 to vector<8x1xf32>
    %105 = arith.cmpf ogt, %6, %104 : vector<8x1xf32>
    %c0_57 = arith.constant 0 : index
    %c0_58 = arith.constant 0 : index
    %106 = vector.load %arg20[%c0_57, %c0_58] : memref<8x32xf32, #tpu.memory_space<vmem>>, vector<8x32xf32>
    %107 = vector.shape_cast %105 : vector<8x1xi1> to vector<8x1xi1>
    %108 = vector.broadcast %107 : vector<8x1xi1> to vector<8x32xi1>
    %109 = arith.select %108, %80, %106 : vector<8x32xi1>, vector<8x32xf32>
    %c0_59 = arith.constant 0 : index
    %c0_60 = arith.constant 0 : index
    %110 = vector.load %arg20[%c0_59, %c0_60] : memref<8x32xf32, #tpu.memory_space<vmem>>, vector<8x32xf32>
    tpu.vector_store %arg20[%c0_59, %c0_60], %109 {strides = array<i32>} : memref<8x32xf32, #tpu.memory_space<vmem>>, vector<8x32xf32>,
    %cst_61 = arith.constant 0.000000e+00 : f32
    %111 = vector.broadcast %cst_61 : f32 to vector<8x1xf32>
    %112 = arith.cmpf ogt, %4, %111 : vector<8x1xf32>
    %cst_62 = arith.constant 0.000000e+00 : f32
    %113 = vector.shape_cast %112 : vector<8x1xi1> to vector<8x1xi1>
    %114 = vector.broadcast %113 : vector<8x1xi1> to vector<8x32xi1>
    %115 = vector.broadcast %cst_62 : f32 to vector<8x32xf32>
    %116 = arith.select %114, %44, %115 : vector<8x32xi1>, vector<8x32xf32>
    %c0_63 = arith.constant 0 : index
    %c0_64 = arith.constant 0 : index
    %c0_65 = arith.constant 0 : index
    %117 = vector.load %arg13[%c0_63, %c0_64, %c0_65] : memref<1x8x32xf32, #tpu.memory_space<vmem>>, vector<1x8x32xf32>
    %118 = vector.shape_cast %117 : vector<1x8x32xf32> to vector<8x32xf32>
    %119 = vector.shape_cast %116 : vector<8x32xf32> to vector<1x8x32xf32>
    tpu.vector_store %arg13[%c0_63, %c0_64, %c0_65], %119 {strides = array<i32>} : memref<1x8x32xf32, #tpu.memory_space<vmem>>, vector<1x8x32xf32>,
    %cst_66 = arith.constant 0.000000e+00 : f32
    %120 = vector.broadcast %cst_66 : f32 to vector<8x1xf32>
    %121 = arith.cmpf ogt, %6, %120 : vector<8x1xf32>
    %cst_67 = arith.constant 0.000000e+00 : f32
    %122 = vector.shape_cast %121 : vector<8x1xi1> to vector<8x1xi1>
    %123 = vector.broadcast %122 : vector<8x1xi1> to vector<8x32xi1>
    %124 = vector.broadcast %cst_67 : f32 to vector<8x32xf32>
    %125 = arith.select %123, %82, %124 : vector<8x32xi1>, vector<8x32xf32>
    %c0_68 = arith.constant 0 : index
    %c0_69 = arith.constant 0 : index
    %c0_70 = arith.constant 0 : index
    %126 = vector.load %arg14[%c0_68, %c0_69, %c0_70] : memref<1x8x32xf32, #tpu.memory_space<vmem>>, vector<1x8x32xf32>
    %127 = vector.shape_cast %126 : vector<1x8x32xf32> to vector<8x32xf32>
    %128 = vector.shape_cast %125 : vector<8x32xf32> to vector<1x8x32xf32>
    tpu.vector_store %arg14[%c0_68, %c0_69, %c0_70], %128 {strides = array<i32>} : memref<1x8x32xf32, #tpu.memory_space<vmem>>, vector<1x8x32xf32>,
    %c7_i32 = arith.constant 7 : i32
    %129 = arith.cmpi eq, %arg0, %c7_i32 : i32
    %130 = arith.extui %129 : i1 to i32
    %c0_i32_71 = arith.constant 0 : i32
    %131 = arith.cmpi ne, %130, %c0_i32_71 : i32
    scf.if %131 {
      %c0_72 = arith.constant 0 : index
      %c0_73 = arith.constant 0 : index
      %132 = vector.load %arg17[%c0_72, %c0_73] : memref<8x32xf32, #tpu.memory_space<vmem>>, vector<8x32xf32>
      %c0_74 = arith.constant 0 : index
      %c0_75 = arith.constant 0 : index
      %133 = vector.load %arg9[%c0_74, %c0_75] : memref<32x32xf32, #tpu.memory_space<vmem>>, vector<32x32xf32>
      %cst_76 = arith.constant dense<0.000000e+00> : vector<8x32xf32>
      %134 = tpu.matmul %132, %133, %cst_76 {dimension_numbers = #tpu.dot_dimension_numbers<[1], [0], [0], [1], [0, 0, 1, 1], [], []>} : vector<8x32xf32>, vector<32x32xf32>, vector<8x32xf32> -> vector<8x32xf32>
      %c0_77 = arith.constant 0 : index
      %c0_78 = arith.constant 0 : index
      %135 = vector.load %arg19[%c0_77, %c0_78] : memref<8x32xf32, #tpu.memory_space<vmem>>, vector<8x32xf32>
      %c0_79 = arith.constant 0 : index
      %c0_80 = arith.constant 0 : index
      %136 = vector.load %arg10[%c0_79, %c0_80] : memref<32x32xf32, #tpu.memory_space<vmem>>, vector<32x32xf32>
      %cst_81 = arith.constant dense<0.000000e+00> : vector<8x32xf32>
      %137 = tpu.matmul %135, %136, %cst_81 {dimension_numbers = #tpu.dot_dimension_numbers<[1], [0], [0], [1], [0, 0, 1, 1], [], []>} : vector<8x32xf32>, vector<32x32xf32>, vector<8x32xf32> -> vector<8x32xf32>
      %138 = arith.addf %134, %137 : vector<8x32xf32>
      %c0_82 = arith.constant 0 : index
      %c0_83 = arith.constant 0 : index
      %139 = vector.load %arg15[%c0_82, %c0_83] : memref<8x32xf32, #tpu.memory_space<vmem>>, vector<8x32xf32>
      tpu.vector_store %arg15[%c0_82, %c0_83], %138 {strides = array<i32>} : memref<8x32xf32, #tpu.memory_space<vmem>>, vector<8x32xf32>,
      %c0_84 = arith.constant 0 : index
      %c0_85 = arith.constant 0 : index
      %140 = vector.load %arg18[%c0_84, %c0_85] : memref<8x32xf32, #tpu.memory_space<vmem>>, vector<8x32xf32>
      %c0_86 = arith.constant 0 : index
      %c0_87 = arith.constant 0 : index
      %141 = vector.load %arg11[%c0_86, %c0_87] : memref<32x32xf32, #tpu.memory_space<vmem>>, vector<32x32xf32>
      %cst_88 = arith.constant dense<0.000000e+00> : vector<8x32xf32>
      %142 = tpu.matmul %140, %141, %cst_88 {dimension_numbers = #tpu.dot_dimension_numbers<[1], [0], [0], [1], [0, 0, 1, 1], [], []>} : vector<8x32xf32>, vector<32x32xf32>, vector<8x32xf32> -> vector<8x32xf32>
      %c0_89 = arith.constant 0 : index
      %c0_90 = arith.constant 0 : index
      %143 = vector.load %arg20[%c0_89, %c0_90] : memref<8x32xf32, #tpu.memory_space<vmem>>, vector<8x32xf32>
      %c0_91 = arith.constant 0 : index
      %c0_92 = arith.constant 0 : index
      %144 = vector.load %arg12[%c0_91, %c0_92] : memref<32x32xf32, #tpu.memory_space<vmem>>, vector<32x32xf32>
      %cst_93 = arith.constant dense<0.000000e+00> : vector<8x32xf32>
      %145 = tpu.matmul %143, %144, %cst_93 {dimension_numbers = #tpu.dot_dimension_numbers<[1], [0], [0], [1], [0, 0, 1, 1], [], []>} : vector<8x32xf32>, vector<32x32xf32>, vector<8x32xf32> -> vector<8x32xf32>
      %146 = arith.addf %142, %145 : vector<8x32xf32>
      %c0_94 = arith.constant 0 : index
      %c0_95 = arith.constant 0 : index
      %147 = vector.load %arg16[%c0_94, %c0_95] : memref<8x32xf32, #tpu.memory_space<vmem>>, vector<8x32xf32>
      tpu.vector_store %arg16[%c0_94, %c0_95], %146 {strides = array<i32>} : memref<8x32xf32, #tpu.memory_space<vmem>>, vector<8x32xf32>,
    } else {
    }
    return
  }
  func.func @transform_0(%arg0: i32) -> (i32, i32, i32) {
    %c0_i32 = arith.constant 0 : i32
    %c0_i32_0 = arith.constant 0 : i32
    %c0_i32_1 = arith.constant 0 : i32
    return %arg0, %c0_i32, %c0_i32_0 : i32, i32, i32
  }
  func.func @transform_1(%arg0: i32) -> (i32, i32, i32) {
    %c7_i32 = arith.constant 7 : i32
    %0 = arith.subi %c7_i32, %arg0 : i32
    %c0_i32 = arith.constant 0 : i32
    %c1_i32 = arith.constant 1 : i32
    %c0_i32_0 = arith.constant 0 : i32
    return %0, %c0_i32, %c1_i32 : i32, i32, i32
  }
  func.func @transform_2(%arg0: i32) -> (i32, i32, i32) {
    %c0_i32 = arith.constant 0 : i32
    %c0_i32_0 = arith.constant 0 : i32
    %c0_i32_1 = arith.constant 0 : i32
    return %arg0, %c0_i32, %c0_i32_0 : i32, i32, i32
  }
  func.func @transform_3(%arg0: i32) -> (i32, i32, i32) {
    %c7_i32 = arith.constant 7 : i32
    %0 = arith.subi %c7_i32, %arg0 : i32
    %c0_i32 = arith.constant 0 : i32
    %c0_i32_0 = arith.constant 0 : i32
    %c0_i32_1 = arith.constant 0 : i32
    return %0, %c0_i32, %c0_i32_0 : i32, i32, i32
  }
  func.func @transform_4(%arg0: i32) -> (i32, i32) {
    %c0_i32 = arith.constant 0 : i32
    %c0_i32_0 = arith.constant 0 : i32
    %c0_i32_1 = arith.constant 0 : i32
    return %c0_i32, %c0_i32_0 : i32, i32
  }
  func.func @transform_5(%arg0: i32) -> (i32, i32) {
    %c0_i32 = arith.constant 0 : i32
    %c0_i32_0 = arith.constant 0 : i32
    %c0_i32_1 = arith.constant 0 : i32
    return %c0_i32, %c0_i32_0 : i32, i32
  }
  func.func @transform_6(%arg0: i32) -> (i32, i32) {
    %c0_i32 = arith.constant 0 : i32
    %c0_i32_0 = arith.constant 0 : i32
    %c0_i32_1 = arith.constant 0 : i32
    return %c0_i32, %c0_i32_0 : i32, i32
  }
  func.func @transform_7(%arg0: i32) -> (i32, i32) {
    %c0_i32 = arith.constant 0 : i32
    %c0_i32_0 = arith.constant 0 : i32
    %c0_i32_1 = arith.constant 0 : i32
    return %c0_i32, %c0_i32_0 : i32, i32
  }
  func.func @transform_8(%arg0: i32) -> (i32, i32) {
    %c0_i32 = arith.constant 0 : i32
    %c0_i32_0 = arith.constant 0 : i32
    %c0_i32_1 = arith.constant 0 : i32
    return %c0_i32, %c0_i32_0 : i32, i32
  }
  func.func @transform_9(%arg0: i32) -> (i32, i32) {
    %c0_i32 = arith.constant 0 : i32
    %c0_i32_0 = arith.constant 0 : i32
    %c0_i32_1 = arith.constant 0 : i32
    return %c0_i32, %c0_i32_0 : i32, i32
  }
  func.func @transform_10(%arg0: i32) -> (i32, i32) {
    %c0_i32 = arith.constant 0 : i32
    %c0_i32_0 = arith.constant 0 : i32
    %c0_i32_1 = arith.constant 0 : i32
    return %c0_i32, %c0_i32_0 : i32, i32
  }
  func.func @transform_11(%arg0: i32) -> (i32, i32) {
    %c0_i32 = arith.constant 0 : i32
    %c0_i32_0 = arith.constant 0 : i32
    %c0_i32_1 = arith.constant 0 : i32
    return %c0_i32, %c0_i32_0 : i32, i32
  }
  func.func @transform_12(%arg0: i32) -> (i32, i32, i32) {
    %c0_i32 = arith.constant 0 : i32
    %c0_i32_0 = arith.constant 0 : i32
    %c0_i32_1 = arith.constant 0 : i32
    return %arg0, %c0_i32, %c0_i32_0 : i32, i32, i32
  }
  func.func @transform_13(%arg0: i32) -> (i32, i32, i32) {
    %c7_i32 = arith.constant 7 : i32
    %0 = arith.subi %c7_i32, %arg0 : i32
    %c0_i32 = arith.constant 0 : i32
    %c0_i32_0 = arith.constant 0 : i32
    %c0_i32_1 = arith.constant 0 : i32
    return %0, %c0_i32, %c0_i32_0 : i32, i32, i32
  }
  func.func @transform_14(%arg0: i32) -> (i32, i32) {
    %c0_i32 = arith.constant 0 : i32
    %c0_i32_0 = arith.constant 0 : i32
    %c0_i32_1 = arith.constant 0 : i32
    return %c0_i32, %c0_i32_0 : i32, i32
  }
  func.func @transform_15(%arg0: i32) -> (i32, i32) {
    %c0_i32 = arith.constant 0 : i32
    %c0_i32_0 = arith.constant 0 : i32
    %c0_i32_1 = arith.constant 0 : i32
    return %c0_i32, %c0_i32_0 : i32, i32
  }
}

module attributes {stable_mosaic.version = 11 : i64} {
  func.func @_decoder_step_kernel(%arg0: i32, %arg1: memref<1x8x128xf32, #tpu.memory_space<vmem>>, %arg2: memref<8x8x32xf32, #tpu.memory_space<vmem>>, %arg3: memref<8x8x32xf32, #tpu.memory_space<vmem>>, %arg4: memref<8x8xf32, #tpu.memory_space<vmem>>, %arg5: memref<8x32xf32, #tpu.memory_space<vmem>>, %arg6: memref<8x32xf32, #tpu.memory_space<vmem>>, %arg7: memref<32x64xf32, #tpu.memory_space<vmem>>, %arg8: memref<32x128xf32, #tpu.memory_space<vmem>>, %arg9: memref<32x128xf32, #tpu.memory_space<vmem>>, %arg10: memref<1x128xf32, #tpu.memory_space<vmem>>, %arg11: memref<32x32xf32, #tpu.memory_space<vmem>>, %arg12: memref<32x32xf32, #tpu.memory_space<vmem>>, %arg13: memref<32x32xf32, #tpu.memory_space<vmem>>, %arg14: memref<1x8x32xf32, #tpu.memory_space<vmem>>, %arg15: memref<8x32xf32, #tpu.memory_space<vmem>>, %arg16: memref<8x32xf32, #tpu.memory_space<vmem>>, %arg17: memref<8x32xf32, #tpu.memory_space<vmem>>) attributes {dimension_semantics = [#tpu.dimension_semantics<arbitrary>], iteration_bounds = array<i64: 6>, scalar_prefetch = 0 : i64, scratch_operands = 3 : i64, tpu.core_type = #tpu.core_type<tc>, window_params = [{transform_indices = @transform_0, window_bounds = array<i64: 1, 8, 128>}, {pipeline_mode = #tpu.pipeline_mode<synchronous>, transform_indices = @transform_1, window_bounds = array<i64: 8, 8, 32>}, {pipeline_mode = #tpu.pipeline_mode<synchronous>, transform_indices = @transform_2, window_bounds = array<i64: 8, 8, 32>}, {pipeline_mode = #tpu.pipeline_mode<synchronous>, transform_indices = @transform_3, window_bounds = array<i64: 8, 8>}, {pipeline_mode = #tpu.pipeline_mode<synchronous>, transform_indices = @transform_4, window_bounds = array<i64: 8, 32>}, {pipeline_mode = #tpu.pipeline_mode<synchronous>, transform_indices = @transform_5, window_bounds = array<i64: 8, 32>}, {pipeline_mode = #tpu.pipeline_mode<synchronous>, transform_indices = @transform_6, window_bounds = array<i64: 32, 64>}, {pipeline_mode = #tpu.pipeline_mode<synchronous>, transform_indices = @transform_7, window_bounds = array<i64: 32, 128>}, {pipeline_mode = #tpu.pipeline_mode<synchronous>, transform_indices = @transform_8, window_bounds = array<i64: 32, 128>}, {pipeline_mode = #tpu.pipeline_mode<synchronous>, transform_indices = @transform_9, window_bounds = array<i64: 1, 128>}, {pipeline_mode = #tpu.pipeline_mode<synchronous>, transform_indices = @transform_10, window_bounds = array<i64: 32, 32>}, {pipeline_mode = #tpu.pipeline_mode<synchronous>, transform_indices = @transform_11, window_bounds = array<i64: 32, 32>}, {pipeline_mode = #tpu.pipeline_mode<synchronous>, transform_indices = @transform_12, window_bounds = array<i64: 32, 32>}, {transform_indices = @transform_13, window_bounds = array<i64: 1, 8, 32>}]} {
    %c0_i32 = arith.constant 0 : i32
    %0 = arith.cmpi eq, %arg0, %c0_i32 : i32
    %1 = arith.extui %0 : i1 to i32
    %c0_i32_0 = arith.constant 0 : i32
    %2 = arith.cmpi ne, %1, %c0_i32_0 : i32
    scf.if %2 {
      %c0_59 = arith.constant 0 : index
      %c0_60 = arith.constant 0 : index
      %91 = vector.load %arg5[%c0_59, %c0_60] : memref<8x32xf32, #tpu.memory_space<vmem>>, vector<8x32xf32>
      %c0_61 = arith.constant 0 : index
      %c0_62 = arith.constant 0 : index
      %92 = vector.load %arg15[%c0_61, %c0_62] : memref<8x32xf32, #tpu.memory_space<vmem>>, vector<8x32xf32>
      tpu.vector_store %arg15[%c0_61, %c0_62], %91 {strides = array<i32>} : memref<8x32xf32, #tpu.memory_space<vmem>>, vector<8x32xf32>,
      %c0_63 = arith.constant 0 : index
      %c0_64 = arith.constant 0 : index
      %93 = vector.load %arg6[%c0_63, %c0_64] : memref<8x32xf32, #tpu.memory_space<vmem>>, vector<8x32xf32>
      %c0_65 = arith.constant 0 : index
      %c0_66 = arith.constant 0 : index
      %94 = vector.load %arg16[%c0_65, %c0_66] : memref<8x32xf32, #tpu.memory_space<vmem>>, vector<8x32xf32>
      tpu.vector_store %arg16[%c0_65, %c0_66], %93 {strides = array<i32>} : memref<8x32xf32, #tpu.memory_space<vmem>>, vector<8x32xf32>,
      %cst_67 = arith.constant 0.000000e+00 : f32
      %95 = vector.broadcast %cst_67 : f32 to vector<8x32xf32>
      %c0_68 = arith.constant 0 : index
      %c0_69 = arith.constant 0 : index
      %96 = vector.load %arg17[%c0_68, %c0_69] : memref<8x32xf32, #tpu.memory_space<vmem>>, vector<8x32xf32>
      tpu.vector_store %arg17[%c0_68, %c0_69], %95 {strides = array<i32>} : memref<8x32xf32, #tpu.memory_space<vmem>>, vector<8x32xf32>,
    } else {
    }
    %c0 = arith.constant 0 : index
    %c0_1 = arith.constant 0 : index
    %c0_2 = arith.constant 0 : index
    %3 = vector.load %arg1[%c0, %c0_1, %c0_2] : memref<1x8x128xf32, #tpu.memory_space<vmem>>, vector<1x8x128xf32>
    %4 = vector.shape_cast %3 : vector<1x8x128xf32> to vector<8x128xf32>
    %c0_3 = arith.constant 0 : index
    %c0_4 = arith.constant 0 : index
    %5 = vector.load %arg17[%c0_3, %c0_4] : memref<8x32xf32, #tpu.memory_space<vmem>>, vector<8x32xf32>
    %c0_5 = arith.constant 0 : index
    %c0_6 = arith.constant 0 : index
    %6 = vector.load %arg8[%c0_5, %c0_6] : memref<32x128xf32, #tpu.memory_space<vmem>>, vector<32x128xf32>
    %cst = arith.constant dense<0.000000e+00> : vector<8x128xf32>
    %7 = tpu.matmul %5, %6, %cst {dimension_numbers = #tpu.dot_dimension_numbers<[1], [0], [0], [1], [0, 0, 1, 1], [], []>} : vector<8x32xf32>, vector<32x128xf32>, vector<8x128xf32> -> vector<8x128xf32>
    %8 = arith.addf %4, %7 : vector<8x128xf32>
    %c0_7 = arith.constant 0 : index
    %c0_8 = arith.constant 0 : index
    %9 = vector.load %arg15[%c0_7, %c0_8] : memref<8x32xf32, #tpu.memory_space<vmem>>, vector<8x32xf32>
    %c0_9 = arith.constant 0 : index
    %c0_10 = arith.constant 0 : index
    %10 = vector.load %arg9[%c0_9, %c0_10] : memref<32x128xf32, #tpu.memory_space<vmem>>, vector<32x128xf32>
    %cst_11 = arith.constant dense<0.000000e+00> : vector<8x128xf32>
    %11 = tpu.matmul %9, %10, %cst_11 {dimension_numbers = #tpu.dot_dimension_numbers<[1], [0], [0], [1], [0, 0, 1, 1], [], []>} : vector<8x32xf32>, vector<32x128xf32>, vector<8x128xf32> -> vector<8x128xf32>
    %12 = arith.addf %8, %11 : vector<8x128xf32>
    %c0_12 = arith.constant 0 : index
    %c0_13 = arith.constant 0 : index
    %13 = vector.load %arg10[%c0_12, %c0_13] : memref<1x128xf32, #tpu.memory_space<vmem>>, vector<1x128xf32>
    %14 = vector.broadcast %13 : vector<1x128xf32> to vector<8x128xf32>
    %15 = arith.addf %12, %14 : vector<8x128xf32>
    %16 = vector.extract_strided_slice %15 {offsets = [0, 0], sizes = [8, 32], strides = [1, 1]} : vector<8x128xf32> to vector<8x32xf32>
    %cst_14 = arith.constant 0.000000e+00 : f32
    %17 = vector.broadcast %cst_14 : f32 to vector<8x32xf32>
    %18 = arith.subf %17, %16 : vector<8x32xf32>
    %19 = math.exp %18 : vector<8x32xf32>
    %cst_15 = arith.constant 1.000000e+00 : f32
    %20 = vector.broadcast %cst_15 : f32 to vector<8x32xf32>
    %21 = arith.addf %20, %19 : vector<8x32xf32>
    %22 = tpu.reciprocal %21 {approx = true} : vector<8x32xf32> -> vector<8x32xf32>
    %23 = vector.extract_strided_slice %15 {offsets = [0, 32], sizes = [8, 32], strides = [1, 1]} : vector<8x128xf32> to vector<8x32xf32>
    %cst_16 = arith.constant 0.000000e+00 : f32
    %24 = vector.broadcast %cst_16 : f32 to vector<8x32xf32>
    %25 = arith.subf %24, %23 : vector<8x32xf32>
    %26 = math.exp %25 : vector<8x32xf32>
    %cst_17 = arith.constant 1.000000e+00 : f32
    %27 = vector.broadcast %cst_17 : f32 to vector<8x32xf32>
    %28 = arith.addf %27, %26 : vector<8x32xf32>
    %29 = tpu.reciprocal %28 {approx = true} : vector<8x32xf32> -> vector<8x32xf32>
    %30 = vector.extract_strided_slice %15 {offsets = [0, 64], sizes = [8, 32], strides = [1, 1]} : vector<8x128xf32> to vector<8x32xf32>
    %31 = math.tanh %30 : vector<8x32xf32>
    %32 = vector.extract_strided_slice %15 {offsets = [0, 96], sizes = [8, 32], strides = [1, 1]} : vector<8x128xf32> to vector<8x32xf32>
    %cst_18 = arith.constant 0.000000e+00 : f32
    %33 = vector.broadcast %cst_18 : f32 to vector<8x32xf32>
    %34 = arith.subf %33, %32 : vector<8x32xf32>
    %35 = math.exp %34 : vector<8x32xf32>
    %cst_19 = arith.constant 1.000000e+00 : f32
    %36 = vector.broadcast %cst_19 : f32 to vector<8x32xf32>
    %37 = arith.addf %36, %35 : vector<8x32xf32>
    %38 = tpu.reciprocal %37 {approx = true} : vector<8x32xf32> -> vector<8x32xf32>
    %c0_20 = arith.constant 0 : index
    %c0_21 = arith.constant 0 : index
    %39 = vector.load %arg16[%c0_20, %c0_21] : memref<8x32xf32, #tpu.memory_space<vmem>>, vector<8x32xf32>
    %40 = arith.mulf %29, %39 : vector<8x32xf32>
    %41 = arith.mulf %22, %31 : vector<8x32xf32>
    %42 = arith.addf %40, %41 : vector<8x32xf32>
    %43 = math.tanh %42 : vector<8x32xf32>
    %44 = arith.mulf %38, %43 : vector<8x32xf32>
    %c0_22 = arith.constant 0 : index
    %c0_23 = arith.constant 0 : index
    %45 = vector.load %arg15[%c0_22, %c0_23] : memref<8x32xf32, #tpu.memory_space<vmem>>, vector<8x32xf32>
    tpu.vector_store %arg15[%c0_22, %c0_23], %44 {strides = array<i32>} : memref<8x32xf32, #tpu.memory_space<vmem>>, vector<8x32xf32>,
    %c0_24 = arith.constant 0 : index
    %c0_25 = arith.constant 0 : index
    %46 = vector.load %arg16[%c0_24, %c0_25] : memref<8x32xf32, #tpu.memory_space<vmem>>, vector<8x32xf32>
    tpu.vector_store %arg16[%c0_24, %c0_25], %42 {strides = array<i32>} : memref<8x32xf32, #tpu.memory_space<vmem>>, vector<8x32xf32>,
    %c0_26 = arith.constant 0 : index
    %c0_27 = arith.constant 0 : index
    %c0_28 = arith.constant 0 : index
    %47 = vector.load %arg2[%c0_26, %c0_27, %c0_28] : memref<8x8x32xf32, #tpu.memory_space<vmem>>, vector<8x8x32xf32>
    %c0_29 = arith.constant 0 : index
    %c0_30 = arith.constant 0 : index
    %c0_31 = arith.constant 0 : index
    %48 = vector.load %arg3[%c0_29, %c0_30, %c0_31] : memref<8x8x32xf32, #tpu.memory_space<vmem>>, vector<8x8x32xf32>
    %c0_32 = arith.constant 0 : index
    %c0_33 = arith.constant 0 : index
    %49 = vector.load %arg7[%c0_32, %c0_33] : memref<32x64xf32, #tpu.memory_space<vmem>>, vector<32x64xf32>
    %cst_34 = arith.constant dense<0.000000e+00> : vector<8x64xf32>
    %50 = tpu.matmul %44, %49, %cst_34 {dimension_numbers = #tpu.dot_dimension_numbers<[1], [0], [0], [1], [0, 0, 1, 1], [], []>} : vector<8x32xf32>, vector<32x64xf32>, vector<8x64xf32> -> vector<8x64xf32>
    %51 = vector.extract_strided_slice %50 {offsets = [0, 0], sizes = [8, 32], strides = [1, 1]} : vector<8x64xf32> to vector<8x32xf32>
    %52 = vector.shape_cast %51 : vector<8x32xf32> to vector<8x1x32xf32>
    "tpu.trace_start"() <{level = 10 : i32, message = "bqh,bsh->bqs"}> : () -> ()
    %cst_35 = arith.constant dense<0.000000e+00> : vector<8x1x8xf32>
    %53 = tpu.matmul %52, %47, %cst_35 {dimension_numbers = #tpu.dot_dimension_numbers<[2], [2], [1], [1], [0, 0, 0, 1, 1, 1], [0], [0]>} : vector<8x1x32xf32>, vector<8x8x32xf32>, vector<8x1x8xf32> -> vector<8x1x8xf32>
    "tpu.trace_stop"() : () -> ()
    %54 = vector.extract_strided_slice %50 {offsets = [0, 32], sizes = [8, 32], strides = [1, 1]} : vector<8x64xf32> to vector<8x32xf32>
    %55 = vector.shape_cast %54 : vector<8x32xf32> to vector<8x1x32xf32>
    "tpu.trace_start"() <{level = 10 : i32, message = "bqh,bsh->bqs"}> : () -> ()
    %cst_36 = arith.constant dense<0.000000e+00> : vector<8x1x8xf32>
    %56 = tpu.matmul %55, %48, %cst_36 {dimension_numbers = #tpu.dot_dimension_numbers<[2], [2], [1], [1], [0, 0, 0, 1, 1, 1], [0], [0]>} : vector<8x1x32xf32>, vector<8x8x32xf32>, vector<8x1x8xf32> -> vector<8x1x8xf32>
    "tpu.trace_stop"() : () -> ()
    %57 = arith.addf %53, %56 : vector<8x1x8xf32>
    %c0_37 = arith.constant 0 : index
    %c0_38 = arith.constant 0 : index
    %58 = vector.load %arg4[%c0_37, %c0_38] : memref<8x8xf32, #tpu.memory_space<vmem>>, vector<8x8xf32>
    %59 = vector.shape_cast %58 : vector<8x8xf32> to vector<8x1x8xf32>
    %cst_39 = arith.constant 0.000000e+00 : f32
    %60 = vector.broadcast %cst_39 : f32 to vector<8x1x8xf32>
    %61 = arith.cmpf ogt, %59, %60 : vector<8x1x8xf32>
    %cst_40 = arith.constant -1.000000e+09 : f32
    %62 = vector.broadcast %cst_40 : f32 to vector<8x1x8xf32>
    %63 = arith.select %61, %62, %57 : vector<8x1x8xi1>, vector<8x1x8xf32>
    %cst_41 = arith.constant dense<0xFF800000> : vector<8x1xf32>
    %64 = vector.multi_reduction <maximumf>, %63, %cst_41 [2] : vector<8x1x8xf32> to vector<8x1xf32>
    %65 = vector.shape_cast %64 : vector<8x1xf32> to vector<8x1x1xf32>
    %66 = vector.broadcast %65 : vector<8x1x1xf32> to vector<8x1x8xf32>
    %67 = arith.subf %63, %66 : vector<8x1x8xf32>
    %68 = math.exp %67 : vector<8x1x8xf32>
    %cst_42 = arith.constant dense<0.000000e+00> : vector<8x1xf32>
    %69 = vector.multi_reduction <add>, %68, %cst_42 [2] : vector<8x1x8xf32> to vector<8x1xf32>
    %70 = vector.shape_cast %69 : vector<8x1xf32> to vector<8x1x1xf32>
    %71 = tpu.reciprocal %70 {approx = true} : vector<8x1x1xf32> -> vector<8x1x1xf32>
    %72 = vector.broadcast %71 : vector<8x1x1xf32> to vector<8x1x8xf32>
    %73 = arith.mulf %68, %72 : vector<8x1x8xf32>
    "tpu.trace_start"() <{level = 10 : i32, message = "bqs,bsh->bqh"}> : () -> ()
    %cst_43 = arith.constant dense<0.000000e+00> : vector<8x1x32xf32>
    %74 = tpu.matmul %73, %47, %cst_43 {dimension_numbers = #tpu.dot_dimension_numbers<[2], [1], [1], [2], [0, 0, 0, 1, 1, 2], [0], [0]>} : vector<8x1x8xf32>, vector<8x8x32xf32>, vector<8x1x32xf32> -> vector<8x1x32xf32>
    "tpu.trace_stop"() : () -> ()
    %75 = vector.shape_cast %74 : vector<8x1x32xf32> to vector<8x32xf32>
    "tpu.trace_start"() <{level = 10 : i32, message = "bqs,bsh->bqh"}> : () -> ()
    %cst_44 = arith.constant dense<0.000000e+00> : vector<8x1x32xf32>
    %76 = tpu.matmul %73, %48, %cst_44 {dimension_numbers = #tpu.dot_dimension_numbers<[2], [1], [1], [2], [0, 0, 0, 1, 1, 2], [0], [0]>} : vector<8x1x8xf32>, vector<8x8x32xf32>, vector<8x1x32xf32> -> vector<8x1x32xf32>
    "tpu.trace_stop"() : () -> ()
    %77 = vector.shape_cast %76 : vector<8x1x32xf32> to vector<8x32xf32>
    %c0_45 = arith.constant 0 : index
    %c0_46 = arith.constant 0 : index
    %78 = vector.load %arg11[%c0_45, %c0_46] : memref<32x32xf32, #tpu.memory_space<vmem>>, vector<32x32xf32>
    %cst_47 = arith.constant dense<0.000000e+00> : vector<8x32xf32>
    %79 = tpu.matmul %75, %78, %cst_47 {dimension_numbers = #tpu.dot_dimension_numbers<[1], [0], [0], [1], [0, 0, 1, 1], [], []>} : vector<8x32xf32>, vector<32x32xf32>, vector<8x32xf32> -> vector<8x32xf32>
    %c0_48 = arith.constant 0 : index
    %c0_49 = arith.constant 0 : index
    %80 = vector.load %arg12[%c0_48, %c0_49] : memref<32x32xf32, #tpu.memory_space<vmem>>, vector<32x32xf32>
    %cst_50 = arith.constant dense<0.000000e+00> : vector<8x32xf32>
    %81 = tpu.matmul %77, %80, %cst_50 {dimension_numbers = #tpu.dot_dimension_numbers<[1], [0], [0], [1], [0, 0, 1, 1], [], []>} : vector<8x32xf32>, vector<32x32xf32>, vector<8x32xf32> -> vector<8x32xf32>
    %82 = arith.addf %79, %81 : vector<8x32xf32>
    %c0_51 = arith.constant 0 : index
    %c0_52 = arith.constant 0 : index
    %83 = vector.load %arg13[%c0_51, %c0_52] : memref<32x32xf32, #tpu.memory_space<vmem>>, vector<32x32xf32>
    %cst_53 = arith.constant dense<0.000000e+00> : vector<8x32xf32>
    %84 = tpu.matmul %44, %83, %cst_53 {dimension_numbers = #tpu.dot_dimension_numbers<[1], [0], [0], [1], [0, 0, 1, 1], [], []>} : vector<8x32xf32>, vector<32x32xf32>, vector<8x32xf32> -> vector<8x32xf32>
    %85 = arith.addf %82, %84 : vector<8x32xf32>
    %86 = math.tanh %85 : vector<8x32xf32>
    %c0_54 = arith.constant 0 : index
    %c0_55 = arith.constant 0 : index
    %87 = vector.load %arg17[%c0_54, %c0_55] : memref<8x32xf32, #tpu.memory_space<vmem>>, vector<8x32xf32>
    tpu.vector_store %arg17[%c0_54, %c0_55], %86 {strides = array<i32>} : memref<8x32xf32, #tpu.memory_space<vmem>>, vector<8x32xf32>,
    %c0_56 = arith.constant 0 : index
    %c0_57 = arith.constant 0 : index
    %c0_58 = arith.constant 0 : index
    %88 = vector.load %arg14[%c0_56, %c0_57, %c0_58] : memref<1x8x32xf32, #tpu.memory_space<vmem>>, vector<1x8x32xf32>
    %89 = vector.shape_cast %88 : vector<1x8x32xf32> to vector<8x32xf32>
    %90 = vector.shape_cast %86 : vector<8x32xf32> to vector<1x8x32xf32>
    tpu.vector_store %arg14[%c0_56, %c0_57, %c0_58], %90 {strides = array<i32>} : memref<1x8x32xf32, #tpu.memory_space<vmem>>, vector<1x8x32xf32>,
    return
  }
  func.func @transform_0(%arg0: i32) -> (i32, i32, i32) {
    %c0_i32 = arith.constant 0 : i32
    %c0_i32_0 = arith.constant 0 : i32
    %c0_i32_1 = arith.constant 0 : i32
    return %arg0, %c0_i32, %c0_i32_0 : i32, i32, i32
  }
  func.func @transform_1(%arg0: i32) -> (i32, i32, i32) {
    %c0_i32 = arith.constant 0 : i32
    %c0_i32_0 = arith.constant 0 : i32
    %c0_i32_1 = arith.constant 0 : i32
    %c0_i32_2 = arith.constant 0 : i32
    return %c0_i32, %c0_i32_0, %c0_i32_1 : i32, i32, i32
  }
  func.func @transform_2(%arg0: i32) -> (i32, i32, i32) {
    %c0_i32 = arith.constant 0 : i32
    %c0_i32_0 = arith.constant 0 : i32
    %c0_i32_1 = arith.constant 0 : i32
    %c0_i32_2 = arith.constant 0 : i32
    return %c0_i32, %c0_i32_0, %c0_i32_1 : i32, i32, i32
  }
  func.func @transform_3(%arg0: i32) -> (i32, i32) {
    %c0_i32 = arith.constant 0 : i32
    %c0_i32_0 = arith.constant 0 : i32
    %c0_i32_1 = arith.constant 0 : i32
    return %c0_i32, %c0_i32_0 : i32, i32
  }
  func.func @transform_4(%arg0: i32) -> (i32, i32) {
    %c0_i32 = arith.constant 0 : i32
    %c0_i32_0 = arith.constant 0 : i32
    %c0_i32_1 = arith.constant 0 : i32
    return %c0_i32, %c0_i32_0 : i32, i32
  }
  func.func @transform_5(%arg0: i32) -> (i32, i32) {
    %c0_i32 = arith.constant 0 : i32
    %c0_i32_0 = arith.constant 0 : i32
    %c0_i32_1 = arith.constant 0 : i32
    return %c0_i32, %c0_i32_0 : i32, i32
  }
  func.func @transform_6(%arg0: i32) -> (i32, i32) {
    %c0_i32 = arith.constant 0 : i32
    %c0_i32_0 = arith.constant 0 : i32
    %c0_i32_1 = arith.constant 0 : i32
    return %c0_i32, %c0_i32_0 : i32, i32
  }
  func.func @transform_7(%arg0: i32) -> (i32, i32) {
    %c0_i32 = arith.constant 0 : i32
    %c0_i32_0 = arith.constant 0 : i32
    %c0_i32_1 = arith.constant 0 : i32
    return %c0_i32, %c0_i32_0 : i32, i32
  }
  func.func @transform_8(%arg0: i32) -> (i32, i32) {
    %c0_i32 = arith.constant 0 : i32
    %c0_i32_0 = arith.constant 0 : i32
    %c0_i32_1 = arith.constant 0 : i32
    return %c0_i32, %c0_i32_0 : i32, i32
  }
  func.func @transform_9(%arg0: i32) -> (i32, i32) {
    %c0_i32 = arith.constant 0 : i32
    %c0_i32_0 = arith.constant 0 : i32
    %c0_i32_1 = arith.constant 0 : i32
    return %c0_i32, %c0_i32_0 : i32, i32
  }
  func.func @transform_10(%arg0: i32) -> (i32, i32) {
    %c0_i32 = arith.constant 0 : i32
    %c0_i32_0 = arith.constant 0 : i32
    %c0_i32_1 = arith.constant 0 : i32
    return %c0_i32, %c0_i32_0 : i32, i32
  }
  func.func @transform_11(%arg0: i32) -> (i32, i32) {
    %c0_i32 = arith.constant 0 : i32
    %c0_i32_0 = arith.constant 0 : i32
    %c0_i32_1 = arith.constant 0 : i32
    return %c0_i32, %c0_i32_0 : i32, i32
  }
  func.func @transform_12(%arg0: i32) -> (i32, i32) {
    %c0_i32 = arith.constant 0 : i32
    %c0_i32_0 = arith.constant 0 : i32
    %c0_i32_1 = arith.constant 0 : i32
    return %c0_i32, %c0_i32_0 : i32, i32
  }
  func.func @transform_13(%arg0: i32) -> (i32, i32, i32) {
    %c0_i32 = arith.constant 0 : i32
    %c0_i32_0 = arith.constant 0 : i32
    %c0_i32_1 = arith.constant 0 : i32
    return %arg0, %c0_i32, %c0_i32_0 : i32, i32, i32
  }
}

module attributes {stable_mosaic.version = 11 : i64} {
  func.func @_score_kernel(%arg0: i32, %arg1: i32, %arg2: memref<128x32xf32, #tpu.memory_space<vmem>>, %arg3: memref<32x128xbf16, #tpu.memory_space<vmem>>, %arg4: memref<128x1xi32, #tpu.memory_space<vmem>>, %arg5: memref<128x1xf32, #tpu.memory_space<vmem>>, %arg6: memref<128x1xf32, #tpu.memory_space<vmem>>, %arg7: memref<128x1xf32, #tpu.memory_space<vmem>>, %arg8: memref<128x1xf32, #tpu.memory_space<vmem>>, %arg9: memref<128x1xf32, #tpu.memory_space<vmem>>) attributes {dimension_semantics = [#tpu.dimension_semantics<parallel>, #tpu.dimension_semantics<arbitrary>], iteration_bounds = array<i64: 1, 1>, scalar_prefetch = 0 : i64, scratch_operands = 3 : i64, tpu.core_type = #tpu.core_type<tc>, window_params = [{transform_indices = @transform_0, window_bounds = array<i64: 128, 32>}, {transform_indices = @transform_1, window_bounds = array<i64: 32, 128>}, {transform_indices = @transform_2, window_bounds = array<i64: 128, 1>}, {transform_indices = @transform_3, window_bounds = array<i64: 128, 1>}, {transform_indices = @transform_4, window_bounds = array<i64: 128, 1>}]} {
    %c0_i32 = arith.constant 0 : i32
    %0 = arith.cmpi eq, %arg1, %c0_i32 : i32
    %1 = arith.extui %0 : i1 to i32
    %c0_i32_0 = arith.constant 0 : i32
    %2 = arith.cmpi ne, %1, %c0_i32_0 : i32
    scf.if %2 {
      %cst_26 = arith.constant -1.000000e+30 : f32
      %46 = vector.broadcast %cst_26 : f32 to vector<128x1xf32>
      %c0_27 = arith.constant 0 : index
      %c0_28 = arith.constant 0 : index
      %47 = vector.load %arg7[%c0_27, %c0_28] : memref<128x1xf32, #tpu.memory_space<vmem>>, vector<128x1xf32>
      tpu.vector_store %arg7[%c0_27, %c0_28], %46 {strides = array<i32>} : memref<128x1xf32, #tpu.memory_space<vmem>>, vector<128x1xf32>,
      %cst_29 = arith.constant 0.000000e+00 : f32
      %48 = vector.broadcast %cst_29 : f32 to vector<128x1xf32>
      %c0_30 = arith.constant 0 : index
      %c0_31 = arith.constant 0 : index
      %49 = vector.load %arg8[%c0_30, %c0_31] : memref<128x1xf32, #tpu.memory_space<vmem>>, vector<128x1xf32>
      tpu.vector_store %arg8[%c0_30, %c0_31], %48 {strides = array<i32>} : memref<128x1xf32, #tpu.memory_space<vmem>>, vector<128x1xf32>,
      %cst_32 = arith.constant 0.000000e+00 : f32
      %50 = vector.broadcast %cst_32 : f32 to vector<128x1xf32>
      %c0_33 = arith.constant 0 : index
      %c0_34 = arith.constant 0 : index
      %51 = vector.load %arg9[%c0_33, %c0_34] : memref<128x1xf32, #tpu.memory_space<vmem>>, vector<128x1xf32>
      tpu.vector_store %arg9[%c0_33, %c0_34], %50 {strides = array<i32>} : memref<128x1xf32, #tpu.memory_space<vmem>>, vector<128x1xf32>,
    } else {
    }
    %c0 = arith.constant 0 : index
    %c0_1 = arith.constant 0 : index
    %3 = vector.load %arg2[%c0, %c0_1] : memref<128x32xf32, #tpu.memory_space<vmem>>, vector<128x32xf32>
    %4 = arith.truncf %3 : vector<128x32xf32> to vector<128x32xbf16>
    %c0_2 = arith.constant 0 : index
    %c0_3 = arith.constant 0 : index
    %5 = vector.load %arg3[%c0_2, %c0_3] : memref<32x128xbf16, #tpu.memory_space<vmem>>, vector<32x128xbf16>
    %cst = arith.constant dense<0.000000e+00> : vector<128x128xf32>
    %6 = tpu.matmul %4, %5, %cst {dimension_numbers = #tpu.dot_dimension_numbers<[1], [0], [0], [1], [0, 0, 1, 1], [], []>} : vector<128x32xbf16>, vector<32x128xbf16>, vector<128x128xf32> -> vector<128x128xf32>
    %7 = tpu.iota {dimensions = array<i32: 1>} : vector<128x128xi32>
    %c128_i32 = arith.constant 128 : i32
    %8 = arith.muli %arg1, %c128_i32 : i32
    %9 = vector.broadcast %8 : i32 to vector<128x128xi32>
    %10 = arith.addi %7, %9 : vector<128x128xi32>
    %c40_i32 = arith.constant 40 : i32
    %11 = vector.broadcast %c40_i32 : i32 to vector<128x128xi32>
    %12 = arith.cmpi slt, %10, %11 : vector<128x128xi32>
    %cst_4 = arith.constant -1.000000e+30 : f32
    %13 = vector.broadcast %cst_4 : f32 to vector<128x128xf32>
    %14 = arith.select %12, %6, %13 : vector<128x128xi1>, vector<128x128xf32>
    %c0_5 = arith.constant 0 : index
    %c0_6 = arith.constant 0 : index
    %15 = vector.load %arg4[%c0_5, %c0_6] : memref<128x1xi32, #tpu.memory_space<vmem>>, vector<128x1xi32>
    %16 = vector.broadcast %15 : vector<128x1xi32> to vector<128x128xi32>
    %17 = arith.cmpi eq, %10, %16 : vector<128x128xi32>
    %18 = arith.extui %17 : vector<128x128xi1> to vector<128x128xi32>
    %19 = arith.sitofp %18 : vector<128x128xi32> to vector<128x128xf32>
    %c0_7 = arith.constant 0 : index
    %c0_8 = arith.constant 0 : index
    %20 = vector.load %arg9[%c0_7, %c0_8] : memref<128x1xf32, #tpu.memory_space<vmem>>, vector<128x1xf32>
    %21 = arith.mulf %14, %19 : vector<128x128xf32>
    %cst_9 = arith.constant dense<0.000000e+00> : vector<128xf32>
    %22 = vector.multi_reduction <add>, %21, %cst_9 [1] : vector<128x128xf32> to vector<128xf32>
    %23 = vector.shape_cast %22 : vector<128xf32> to vector<128x1xf32>
    %24 = arith.addf %20, %23 : vector<128x1xf32>
    %c0_10 = arith.constant 0 : index
    %c0_11 = arith.constant 0 : index
    %25 = vector.load %arg9[%c0_10, %c0_11] : memref<128x1xf32, #tpu.memory_space<vmem>>, vector<128x1xf32>
    tpu.vector_store %arg9[%c0_10, %c0_11], %24 {strides = array<i32>} : memref<128x1xf32, #tpu.memory_space<vmem>>, vector<128x1xf32>,
    %c0_12 = arith.constant 0 : index
    %c0_13 = arith.constant 0 : index
    %26 = vector.load %arg7[%c0_12, %c0_13] : memref<128x1xf32, #tpu.memory_space<vmem>>, vector<128x1xf32>
    %cst_14 = arith.constant dense<0xFF800000> : vector<128xf32>
    %27 = vector.multi_reduction <maximumf>, %14, %cst_14 [1] : vector<128x128xf32> to vector<128xf32>
    %28 = vector.shape_cast %27 : vector<128xf32> to vector<128x1xf32>
    %29 = arith.maximumf %26, %28 : vector<128x1xf32>
    %c0_15 = arith.constant 0 : index
    %c0_16 = arith.constant 0 : index
    %30 = vector.load %arg8[%c0_15, %c0_16] : memref<128x1xf32, #tpu.memory_space<vmem>>, vector<128x1xf32>
    %c0_17 = arith.constant 0 : index
    %c0_18 = arith.constant 0 : index
    %31 = vector.load %arg7[%c0_17, %c0_18] : memref<128x1xf32, #tpu.memory_space<vmem>>, vector<128x1xf32>
    %32 = arith.subf %31, %29 : vector<128x1xf32>
    %33 = math.exp %32 : vector<128x1xf32>
    %34 = arith.mulf %30, %33 : vector<128x1xf32>
    %35 = vector.broadcast %29 : vector<128x1xf32> to vector<128x128xf32>
    %36 = arith.subf %14, %35 : vector<128x128xf32>
    %37 = math.exp %36 : vector<128x128xf32>
    %cst_19 = arith.constant dense<0.000000e+00> : vector<128xf32>
    %38 = vector.multi_reduction <add>, %37, %cst_19 [1] : vector<128x128xf32> to vector<128xf32>
    %39 = vector.shape_cast %38 : vector<128xf32> to vector<128x1xf32>
    %40 = arith.addf %34, %39 : vector<128x1xf32>
    %c0_20 = arith.constant 0 : index
    %c0_21 = arith.constant 0 : index
    %41 = vector.load %arg8[%c0_20, %c0_21] : memref<128x1xf32, #tpu.memory_space<vmem>>, vector<128x1xf32>
    tpu.vector_store %arg8[%c0_20, %c0_21], %40 {strides = array<i32>} : memref<128x1xf32, #tpu.memory_space<vmem>>, vector<128x1xf32>,
    %c0_22 = arith.constant 0 : index
    %c0_23 = arith.constant 0 : index
    %42 = vector.load %arg7[%c0_22, %c0_23] : memref<128x1xf32, #tpu.memory_space<vmem>>, vector<128x1xf32>
    tpu.vector_store %arg7[%c0_22, %c0_23], %29 {strides = array<i32>} : memref<128x1xf32, #tpu.memory_space<vmem>>, vector<128x1xf32>,
    %c0_i32_24 = arith.constant 0 : i32
    %43 = arith.cmpi eq, %arg1, %c0_i32_24 : i32
    %44 = arith.extui %43 : i1 to i32
    %c0_i32_25 = arith.constant 0 : i32
    %45 = arith.cmpi ne, %44, %c0_i32_25 : i32
    scf.if %45 {
      %c0_26 = arith.constant 0 : index
      %c0_27 = arith.constant 0 : index
      %46 = vector.load %arg9[%c0_26, %c0_27] : memref<128x1xf32, #tpu.memory_space<vmem>>, vector<128x1xf32>
      %c0_28 = arith.constant 0 : index
      %c0_29 = arith.constant 0 : index
      %47 = vector.load %arg7[%c0_28, %c0_29] : memref<128x1xf32, #tpu.memory_space<vmem>>, vector<128x1xf32>
      %c0_30 = arith.constant 0 : index
      %c0_31 = arith.constant 0 : index
      %48 = vector.load %arg8[%c0_30, %c0_31] : memref<128x1xf32, #tpu.memory_space<vmem>>, vector<128x1xf32>
      %49 = math.log %48 : vector<128x1xf32>
      %50 = arith.addf %47, %49 : vector<128x1xf32>
      %51 = arith.subf %46, %50 : vector<128x1xf32>
      %c0_32 = arith.constant 0 : index
      %c0_33 = arith.constant 0 : index
      %52 = vector.load %arg5[%c0_32, %c0_33] : memref<128x1xf32, #tpu.memory_space<vmem>>, vector<128x1xf32>
      %53 = arith.mulf %51, %52 : vector<128x1xf32>
      %c0_34 = arith.constant 0 : index
      %c0_35 = arith.constant 0 : index
      %54 = vector.load %arg6[%c0_34, %c0_35] : memref<128x1xf32, #tpu.memory_space<vmem>>, vector<128x1xf32>
      tpu.vector_store %arg6[%c0_34, %c0_35], %53 {strides = array<i32>} : memref<128x1xf32, #tpu.memory_space<vmem>>, vector<128x1xf32>,
    } else {
    }
    return
  }
  func.func @transform_0(%arg0: i32, %arg1: i32) -> (i32, i32) {
    %c0_i32 = arith.constant 0 : i32
    %c0_i32_0 = arith.constant 0 : i32
    return %arg0, %c0_i32 : i32, i32
  }
  func.func @transform_1(%arg0: i32, %arg1: i32) -> (i32, i32) {
    %c0_i32 = arith.constant 0 : i32
    %c0_i32_0 = arith.constant 0 : i32
    return %c0_i32, %arg1 : i32, i32
  }
  func.func @transform_2(%arg0: i32, %arg1: i32) -> (i32, i32) {
    %c0_i32 = arith.constant 0 : i32
    %c0_i32_0 = arith.constant 0 : i32
    return %arg0, %c0_i32 : i32, i32
  }
  func.func @transform_3(%arg0: i32, %arg1: i32) -> (i32, i32) {
    %c0_i32 = arith.constant 0 : i32
    %c0_i32_0 = arith.constant 0 : i32
    return %arg0, %c0_i32 : i32, i32
  }
  func.func @transform_4(%arg0: i32, %arg1: i32) -> (i32, i32) {
    %c0_i32 = arith.constant 0 : i32
    %c0_i32_0 = arith.constant 0 : i32
    return %arg0, %c0_i32 : i32, i32
  }
}

</mosaic_0001>

<llo_original>
// kernel: nmt_forward.7
$region0: #{nmt_forward.7}
  #allocation0 [shape = 'u32[]', space=smem, size = 0x4, offset = 0x4, fixed_abs, tag = 'smem constant byte address 0x4 - core index']
  #allocation1 [shape = 'u32[72,128]{1,0:T(1,128)}', space=vmem, size = 0x9000, scoped, tag = 'internal scratch']
  %s0 = inlined_call_operand.vmem [shape: f32[128,128], index: 0, kind: input, shape index: {}]
  %s1 = inlined_call_operand.vmem [shape: bf16[80,32], index: 1, kind: input, shape index: {}]
  %s2 = inlined_call_operand.vmem [shape: f32[1,32], index: 2, kind: input, shape index: {}]
  %s3 = inlined_call_operand.vmem [shape: bf16[32,32], index: 3, kind: input, shape index: {}]
  %s4 = inlined_call_operand.vmem [shape: f32[1,32], index: 4, kind: input, shape index: {}]
  %s5 = inlined_call_operand.vmem [shape: bf16[32,32], index: 5, kind: input, shape index: {}]
  %s6 = inlined_call_operand.vmem [shape: f32[1,32], index: 6, kind: input, shape index: {}]
  %s7 = inlined_call_operand.vmem [shape: bf16[32,128], index: 7, kind: input, shape index: {}]
  %s8 = inlined_call_operand.vmem [shape: f32[128,128], index: 8, kind: output, shape index: {}]
  %s9 = sld [smem:[#allocation0]]
  $region42: #{nmt_forward.7} parent=0
    _
  %s11 = ssub.s32 1, %s9
  %s12 = scalar_select 0, %s11, %s9
  // Predicated region
  $region2: #{nmt_forward.7} parent=0 // pred_check
    _
  $region3: #{nmt_forward.7} parent=0 // pred_check_branch
    %14 = sbr.rel (0) target = $region5
  $region4: #{nmt_forward.7} parent=0 // pred_region
    _
  $region5: #{nmt_forward.7} parent=0 // pred_fallthru
    _
  // Predicated region
  $region6: #{nmt_forward.7} parent=0 // pred_check
    _
  $region7: #{nmt_forward.7} parent=0 // pred_check_branch
    %16 = sbr.rel (0) target = $region9
  $region8: #{nmt_forward.7} parent=0 // pred_region
    _
  $region9: #{nmt_forward.7} parent=0 // pred_fallthru
    _
  // Predicated region
  $region10: #{nmt_forward.7} parent=0 // pred_check
    _
  $region11: #{nmt_forward.7} parent=0 // pred_check_branch
    %18 = sbr.rel (0) target = $region13
  $region12: #{nmt_forward.7} parent=0 // pred_region
    _
  $region13: #{nmt_forward.7} parent=0 // pred_fallthru
    _
  // Predicated region
  $region14: #{nmt_forward.7} parent=0 // pred_check
    _
  $region15: #{nmt_forward.7} parent=0 // pred_check_branch
    %20 = sbr.rel (0) target = $region17
  $region16: #{nmt_forward.7} parent=0 // pred_region
    _
  $region17: #{nmt_forward.7} parent=0 // pred_fallthru
    _
  // Predicated region
  $region18: #{nmt_forward.7} parent=0 // pred_check
    _
  $region19: #{nmt_forward.7} parent=0 // pred_check_branch
    %22 = sbr.rel (0) target = $region21
  $region20: #{nmt_forward.7} parent=0 // pred_region
    _
  $region21: #{nmt_forward.7} parent=0 // pred_fallthru
    _
  // Predicated region
  $region22: #{nmt_forward.7} parent=0 // pred_check
    _
  $region23: #{nmt_forward.7} parent=0 // pred_check_branch
    %24 = sbr.rel (0) target = $region25
  $region24: #{nmt_forward.7} parent=0 // pred_region
    _
  $region25: #{nmt_forward.7} parent=0 // pred_fallthru
    _
  // Predicated region
  $region26: #{nmt_forward.7} parent=0 // pred_check
    _
  $region27: #{nmt_forward.7} parent=0 // pred_check_branch
    %26 = sbr.rel (0) target = $region29
  $region28: #{nmt_forward.7} parent=0 // pred_region
    _
  $region29: #{nmt_forward.7} parent=0 // pred_fallthru
    _
  // Predicated region
  $region30: #{nmt_forward.7} parent=0 // pred_check
    _
  $region31: #{nmt_forward.7} parent=0 // pred_check_branch
    %28 = sbr.rel (0) target = $region33
  $region32: #{nmt_forward.7} parent=0 // pred_region
    _
  $region33: #{nmt_forward.7} parent=0 // pred_fallthru
    _
  %v30 = vld [vmem:[%s1] sm:$0xf]
  %v31 = vld [vmem:[%s1 + $0x4] sm:$0xf]
  %v32 = vld [vmem:[%s1 + $0x8] sm:$0xf]
  %v33 = vld [vmem:[%s1 + $0xc] sm:$0xf]
  %v34 = vld [vmem:[%s1 + $0x10] sm:$0xf]
  %v35 = vld [vmem:[%s1 + $0x14] sm:$0xf]
  %v36 = vld [vmem:[%s1 + $0x18] sm:$0xf]
  %v37 = vld [vmem:[%s1 + $0x1c] sm:$0xf]
  %v38 = vld [vmem:[%s1 + $0x20] sm:$0xf]
  %v39 = vld [vmem:[%s1 + $0x24] sm:$0xf]
  %v40 = vld [vmem:[%s2] sm:$0x1]
  %v41 = vld [vmem:[%s0] sm:$0xff]
  %v42 = vld [vmem:[%s0 + $0x8] sm:$0xff]
  %v43 = vld [vmem:[%s0 + $0x10] sm:$0xff]
  %v44 = vld [vmem:[%s0 + $0x18] sm:$0xff]
  %v45 = vld [vmem:[%s0 + $0x20] sm:$0xff]
  %v46 = vld [vmem:[%s0 + $0x28] sm:$0xff]
  %v47 = vld [vmem:[%s0 + $0x30] sm:$0xff]
  %v48 = vld [vmem:[%s0 + $0x38] sm:$0xff]
  %v49 = vld [vmem:[%s0 + $0x40] sm:$0xff]
  %v50 = vld [vmem:[%s0 + $0x48] sm:$0xff]
  %v51 = vld [vmem:[%s0 + $0x50] sm:$0xff]
  %v52 = vld [vmem:[%s0 + $0x58] sm:$0xff]
  %v53 = vld [vmem:[%s0 + $0x60] sm:$0xff]
  %v54 = vld [vmem:[%s0 + $0x68] sm:$0xff]
  %v55 = vld [vmem:[%s0 + $0x70] sm:$0xff]
  %v56 = vld [vmem:[%s0 + $0x78] sm:$0xff]
  %v57 = vpack.c.bf16 %v42, %v41
  %v58 = vpack.c.bf16 %v44, %v43
  %v59 = vpack.c.bf16 %v46, %v45
  %v60 = vpack.c.bf16 %v48, %v47
  %v61 = vpack.c.bf16 %v50, %v49
  %v62 = vpack.c.bf16 %v52, %v51
  %v63 = vpack.c.bf16 %v54, %v53
  %v64 = vpack.c.bf16 %v56, %v55
  %v66 = vperm.slane %v40, 0
  %v78 = vunpack.c.l.b16 %v30
  %v79 = vunpack.c.l.b16 %v31
  %v80 = vunpack.c.l.b16 %v32
  %v81 = vunpack.c.l.b16 %v33
  %v82 = vunpack.c.l.b16 %v34
  %v83 = vunpack.c.l.b16 %v35
  %v84 = vunpack.c.l.b16 %v36
  %v85 = vunpack.c.l.b16 %v37
  %v86 = vunpack.c.l.b16 %v38
  %v87 = vunpack.c.l.b16 %v39
  %v88 = vpack.c.b16 %v79, %v78
  %v89 = vpack.c.b16 %v81, %v80
  %v90 = vpack.c.b16 %v83, %v82
  %v91 = vpack.c.b16 %v85, %v84
  %v92 = vpack.c.b16 %v87, %v86
  %vm98 = vcmask 654336
  %v100 = vsel %vm98, %v57, 0
  %v103 = vsel %vm98, %v58, 0
  %v106 = vsel %vm98, %v59, 0
  %v109 = vsel %vm98, %v60, 0
  %v112 = vsel %vm98, %v61, 0
  %v115 = vsel %vm98, %v62, 0
  %v118 = vsel %vm98, %v63, 0
  %v121 = vsel %vm98, %v64, 0
  %123 = vmatpush.bf16.msra.mxu0 0
  %124 = vmatpush.bf16.msra.mxu0 0
  %125 = vmatpush.bf16.msra.mxu0 0
  %126 = vmatpush.bf16.msra.mxu0 %v92
  %127 = vmatpush.bf16.msra.mxu0 %v91
  %128 = vmatpush.bf16.msra.mxu0 %v90
  %129 = vmatpush.bf16.msra.mxu0 %v89
  %130 = vmatpush.bf16.msra.mxu0 %v88
  %131 = vmatmul.bf16.gmra.mxu0 %v100
  %v132 = vpop.f32.mrf.mxu0
  %v133 = vadd.f32 %v66, %v132
  %v134 = vpop.f32.mrf.mxu0
  %v135 = vadd.f32 %v66, %v134
  %136 = vmatmul.bf16.gmra.mxu0 %v103
  %v137 = vpop.f32.mrf.mxu0
  %v138 = vadd.f32 %v66, %v137
  %v139 = vpop.f32.mrf.mxu0
  %v140 = vadd.f32 %v66, %v139
  %141 = vmatmul.bf16.gmra.mxu0 %v106
  %v142 = vpop.f32.mrf.mxu0
  %v143 = vadd.f32 %v66, %v142
  %v144 = vpop.f32.mrf.mxu0
  %v145 = vadd.f32 %v66, %v144
  %146 = vmatmul.bf16.gmra.mxu0 %v109
  %v147 = vpop.f32.mrf.mxu0
  %v148 = vadd.f32 %v66, %v147
  %v149 = vpop.f32.mrf.mxu0
  %v150 = vadd.f32 %v66, %v149
  %151 = vmatmul.bf16.gmra.mxu0 %v112
  %v152 = vpop.f32.mrf.mxu0
  %v153 = vadd.f32 %v66, %v152
  %v154 = vpop.f32.mrf.mxu0
  %v155 = vadd.f32 %v66, %v154
  %156 = vmatmul.bf16.gmra.mxu0 %v115
  %v157 = vpop.f32.mrf.mxu0
  %v158 = vadd.f32 %v66, %v157
  %v159 = vpop.f32.mrf.mxu0
  %v160 = vadd.f32 %v66, %v159
  %161 = vmatmul.bf16.gmra.mxu0 %v118
  %v162 = vpop.f32.mrf.mxu0
  %v163 = vadd.f32 %v66, %v162
  %v164 = vpop.f32.mrf.mxu0
  %v165 = vadd.f32 %v66, %v164
  %166 = vmatmul.bf16.gmra.mxu0 %v121
  %v167 = vpop.f32.mrf.mxu0
  %v168 = vadd.f32 %v66, %v167
  %v169 = vpop.f32.mrf.mxu0
  %v170 = vadd.f32 %v66, %v169
  %171 = vdwg.mxu0
  %v172 = vmax.f32 %v133, 0.0
  %v173 = vmax.f32 %v135, 0.0
  %v174 = vmax.f32 %v138, 0.0
  %v175 = vmax.f32 %v140, 0.0
  %v176 = vmax.f32 %v143, 0.0
  %v177 = vmax.f32 %v145, 0.0
  %v178 = vmax.f32 %v148, 0.0
  %v179 = vmax.f32 %v150, 0.0
  %v180 = vmax.f32 %v153, 0.0
  %v181 = vmax.f32 %v155, 0.0
  %v182 = vmax.f32 %v158, 0.0
  %v183 = vmax.f32 %v160, 0.0
  %v184 = vmax.f32 %v163, 0.0
  %v185 = vmax.f32 %v165, 0.0
  %v186 = vmax.f32 %v168, 0.0
  %v187 = vmax.f32 %v170, 0.0
  %196 = vrot.lane.b32.xlu0 %v57, 112
  %v197 = vpop.permute.xlu0 %196
  %198 = vrot.lane.b32.xlu0 %v58, 112
  %v199 = vpop.permute.xlu0 %198
  %200 = vrot.lane.b32.xlu0 %v59, 112
  %v201 = vpop.permute.xlu0 %200
  %202 = vrot.lane.b32.xlu0 %v60, 112
  %v203 = vpop.permute.xlu0 %202
  %204 = vrot.lane.b32.xlu0 %v61, 112
  %v205 = vpop.permute.xlu0 %204
  %206 = vrot.lane.b32.xlu0 %v62, 112
  %v207 = vpop.permute.xlu0 %206
  %208 = vrot.lane.b32.xlu0 %v63, 112
  %v209 = vpop.permute.xlu0 %208
  %210 = vrot.lane.b32.xlu0 %v64, 112
  %v211 = vpop.permute.xlu0 %210
  %v213 = vsel %vm98, %v197, 0
  %v216 = vsel %vm98, %v199, 0
  %v219 = vsel %vm98, %v201, 0
  %v222 = vsel %vm98, %v203, 0
  %v225 = vsel %vm98, %v205, 0
  %v228 = vsel %vm98, %v207, 0
  %v231 = vsel %vm98, %v209, 0
  %v234 = vsel %vm98, %v211, 0
  %236 = vmatpush.bf16.msra.mxu0 0
  %237 = vmatpush.bf16.msra.mxu0 0
  %238 = vmatpush.bf16.msra.mxu0 0
  %239 = vmatpush.bf16.msra.mxu0 %v92
  %240 = vmatpush.bf16.msra.mxu0 %v91
  %241 = vmatpush.bf16.msra.mxu0 %v90
  %242 = vmatpush.bf16.msra.mxu0 %v89
  %243 = vmatpush.bf16.msra.mxu0 %v88
  %244 = vmatmul.bf16.gmra.mxu0 %v213
  %v245 = vpop.f32.mrf.mxu0
  %v246 = vadd.f32 %v66, %v245
  %v247 = vpop.f32.mrf.mxu0
  %v248 = vadd.f32 %v66, %v247
  %249 = vmatmul.bf16.gmra.mxu0 %v216
  %v250 = vpop.f32.mrf.mxu0
  %v251 = vadd.f32 %v66, %v250
  %v252 = vpop.f32.mrf.mxu0
  %v253 = vadd.f32 %v66, %v252
  %254 = vmatmul.bf16.gmra.mxu0 %v219
  %v255 = vpop.f32.mrf.mxu0
  %v256 = vadd.f32 %v66, %v255
  %v257 = vpop.f32.mrf.mxu0
  %v258 = vadd.f32 %v66, %v257
  %259 = vmatmul.bf16.gmra.mxu0 %v222
  %v260 = vpop.f32.mrf.mxu0
  %v261 = vadd.f32 %v66, %v260
  %v262 = vpop.f32.mrf.mxu0
  %v263 = vadd.f32 %v66, %v262
  %264 = vmatmul.bf16.gmra.mxu0 %v225
  %v265 = vpop.f32.mrf.mxu0
  %v266 = vadd.f32 %v66, %v265
  %v267 = vpop.f32.mrf.mxu0
  %v268 = vadd.f32 %v66, %v267
  %269 = vmatmul.bf16.gmra.mxu0 %v228
  %v270 = vpop.f32.mrf.mxu0
  %v271 = vadd.f32 %v66, %v270
  %v272 = vpop.f32.mrf.mxu0
  %v273 = vadd.f32 %v66, %v272
  %274 = vmatmul.bf16.gmra.mxu0 %v231
  %v275 = vpop.f32.mrf.mxu0
  %v276 = vadd.f32 %v66, %v275
  %v277 = vpop.f32.mrf.mxu0
  %v278 = vadd.f32 %v66, %v277
  %279 = vmatmul.bf16.gmra.mxu0 %v234
  %v280 = vpop.f32.mrf.mxu0
  %v281 = vadd.f32 %v66, %v280
  %v282 = vpop.f32.mrf.mxu0
  %v283 = vadd.f32 %v66, %v282
  %284 = vdwg.mxu0
  %v285 = vmax.f32 %v246, 0.0
  %v286 = vmax.f32 %v248, 0.0
  %v287 = vmax.f32 %v251, 0.0
  %v288 = vmax.f32 %v253, 0.0
  %v289 = vmax.f32 %v256, 0.0
  %v290 = vmax.f32 %v258, 0.0
  %v291 = vmax.f32 %v261, 0.0
  %v292 = vmax.f32 %v263, 0.0
  %v293 = vmax.f32 %v266, 0.0
  %v294 = vmax.f32 %v268, 0.0
  %v295 = vmax.f32 %v271, 0.0
  %v296 = vmax.f32 %v273, 0.0
  %v297 = vmax.f32 %v276, 0.0
  %v298 = vmax.f32 %v278, 0.0
  %v299 = vmax.f32 %v281, 0.0
  %v300 = vmax.f32 %v283, 0.0
  %v301 = vmax.f32 %v172, %v285
  %v302 = vmax.f32 %v173, %v286
  %v303 = vmax.f32 %v174, %v287
  %v304 = vmax.f32 %v175, %v288
  %v305 = vmax.f32 %v176, %v289
  %v306 = vmax.f32 %v177, %v290
  %v307 = vmax.f32 %v178, %v291
  %v308 = vmax.f32 %v179, %v292
  %v309 = vmax.f32 %v180, %v293
  %v310 = vmax.f32 %v181, %v294
  %v311 = vmax.f32 %v182, %v295
  %v312 = vmax.f32 %v183, %v296
  %v313 = vmax.f32 %v184, %v297
  %v314 = vmax.f32 %v185, %v298
  %v315 = vmax.f32 %v186, %v299
  %v316 = vmax.f32 %v187, %v300
  %317 = vrot.lane.b32.xlu0 %v57, 96
  %v318 = vpop.permute.xlu0 %317
  %319 = vrot.lane.b32.xlu0 %v58, 96
  %v320 = vpop.permute.xlu0 %319
  %321 = vrot.lane.b32.xlu0 %v59, 96
  %v322 = vpop.permute.xlu0 %321
  %323 = vrot.lane.b32.xlu0 %v60, 96
  %v324 = vpop.permute.xlu0 %323
  %325 = vrot.lane.b32.xlu0 %v61, 96
  %v326 = vpop.permute.xlu0 %325
  %327 = vrot.lane.b32.xlu0 %v62, 96
  %v328 = vpop.permute.xlu0 %327
  %329 = vrot.lane.b32.xlu0 %v63, 96
  %v330 = vpop.permute.xlu0 %329
  %331 = vrot.lane.b32.xlu0 %v64, 96
  %v332 = vpop.permute.xlu0 %331
  %v334 = vsel %vm98, %v318, 0
  %v337 = vsel %vm98, %v320, 0
  %v340 = vsel %vm98, %v322, 0
  %v343 = vsel %vm98, %v324, 0
  %v346 = vsel %vm98, %v326, 0
  %v349 = vsel %vm98, %v328, 0
  %v352 = vsel %vm98, %v330, 0
  %v355 = vsel %vm98, %v332, 0
  %357 = vmatpush.bf16.msra.mxu0 0
  %358 = vmatpush.bf16.msra.mxu0 0
  %359 = vmatpush.bf16.msra.mxu0 0
  %360 = vmatpush.bf16.msra.mxu0 %v92
  %361 = vmatpush.bf16.msra.mxu0 %v91
  %362 = vmatpush.bf16.msra.mxu0 %v90
  %363 = vmatpush.bf16.msra.mxu0 %v89
  %364 = vmatpush.bf16.msra.mxu0 %v88
  %365 = vmatmul.bf16.gmra.mxu0 %v334
  %v366 = vpop.f32.mrf.mxu0
  %v367 = vadd.f32 %v66, %v366
  %v368 = vpop.f32.mrf.mxu0
  %v369 = vadd.f32 %v66, %v368
  %370 = vmatmul.bf16.gmra.mxu0 %v337
  %v371 = vpop.f32.mrf.mxu0
  %v372 = vadd.f32 %v66, %v371
  %v373 = vpop.f32.mrf.mxu0
  %v374 = vadd.f32 %v66, %v373
  %375 = vmatmul.bf16.gmra.mxu0 %v340
  %v376 = vpop.f32.mrf.mxu0
  %v377 = vadd.f32 %v66, %v376
  %v378 = vpop.f32.mrf.mxu0
  %v379 = vadd.f32 %v66, %v378
  %380 = vmatmul.bf16.gmra.mxu0 %v343
  %v381 = vpop.f32.mrf.mxu0
  %v382 = vadd.f32 %v66, %v381
  %v383 = vpop.f32.mrf.mxu0
  %v384 = vadd.f32 %v66, %v383
  %385 = vmatmul.bf16.gmra.mxu0 %v346
  %v386 = vpop.f32.mrf.mxu0
  %v387 = vadd.f32 %v66, %v386
  %v388 = vpop.f32.mrf.mxu0
  %v389 = vadd.f32 %v66, %v388
  %390 = vmatmul.bf16.gmra.mxu0 %v349
  %v391 = vpop.f32.mrf.mxu0
  %v392 = vadd.f32 %v66, %v391
  %v393 = vpop.f32.mrf.mxu0
  %v394 = vadd.f32 %v66, %v393
  %395 = vmatmul.bf16.gmra.mxu0 %v352
  %v396 = vpop.f32.mrf.mxu0
  %v397 = vadd.f32 %v66, %v396
  %v398 = vpop.f32.mrf.mxu0
  %v399 = vadd.f32 %v66, %v398
  %400 = vmatmul.bf16.gmra.mxu0 %v355
  %v401 = vpop.f32.mrf.mxu0
  %v402 = vadd.f32 %v66, %v401
  %v403 = vpop.f32.mrf.mxu0
  %v404 = vadd.f32 %v66, %v403
  %405 = vdwg.mxu0
  %v406 = vmax.f32 %v367, 0.0
  %v407 = vmax.f32 %v369, 0.0
  %v408 = vmax.f32 %v372, 0.0
  %v409 = vmax.f32 %v374, 0.0
  %v410 = vmax.f32 %v377, 0.0
  %v411 = vmax.f32 %v379, 0.0
  %v412 = vmax.f32 %v382, 0.0
  %v413 = vmax.f32 %v384, 0.0
  %v414 = vmax.f32 %v387, 0.0
  %v415 = vmax.f32 %v389, 0.0
  %v416 = vmax.f32 %v392, 0.0
  %v417 = vmax.f32 %v394, 0.0
  %v418 = vmax.f32 %v397, 0.0
  %v419 = vmax.f32 %v399, 0.0
  %v420 = vmax.f32 %v402, 0.0
  %v421 = vmax.f32 %v404, 0.0
  %v422 = vmax.f32 %v301, %v406
  %v423 = vmax.f32 %v302, %v407
  %v424 = vmax.f32 %v303, %v408
  %v425 = vmax.f32 %v304, %v409
  %v426 = vmax.f32 %v305, %v410
  %v427 = vmax.f32 %v306, %v411
  %v428 = vmax.f32 %v307, %v412
  %v429 = vmax.f32 %v308, %v413
  %v430 = vmax.f32 %v309, %v414
  %v431 = vmax.f32 %v310, %v415
  %v432 = vmax.f32 %v311, %v416
  %v433 = vmax.f32 %v312, %v417
  %v434 = vmax.f32 %v313, %v418
  %v435 = vmax.f32 %v314, %v419
  %v436 = vmax.f32 %v315, %v420
  %v437 = vmax.f32 %v316, %v421
  %438 = vrot.lane.b32.xlu0 %v57, 80
  %v439 = vpop.permute.xlu0 %438
  %440 = vrot.lane.b32.xlu0 %v58, 80
  %v441 = vpop.permute.xlu0 %440
  %442 = vrot.lane.b32.xlu0 %v59, 80
  %v443 = vpop.permute.xlu0 %442
  %444 = vrot.lane.b32.xlu0 %v60, 80
  %v445 = vpop.permute.xlu0 %444
  %446 = vrot.lane.b32.xlu0 %v61, 80
  %v447 = vpop.permute.xlu0 %446
  %448 = vrot.lane.b32.xlu0 %v62, 80
  %v449 = vpop.permute.xlu0 %448
  %450 = vrot.lane.b32.xlu0 %v63, 80
  %v451 = vpop.permute.xlu0 %450
  %452 = vrot.lane.b32.xlu0 %v64, 80
  %v453 = vpop.permute.xlu0 %452
  %v455 = vsel %vm98, %v439, 0
  %v458 = vsel %vm98, %v441, 0
  %v461 = vsel %vm98, %v443, 0
  %v464 = vsel %vm98, %v445, 0
  %v467 = vsel %vm98, %v447, 0
  %v470 = vsel %vm98, %v449, 0
  %v473 = vsel %vm98, %v451, 0
  %v476 = vsel %vm98, %v453, 0
  %478 = vmatpush.bf16.msra.mxu0 0
  %479 = vmatpush.bf16.msra.mxu0 0
  %480 = vmatpush.bf16.msra.mxu0 0
  %481 = vmatpush.bf16.msra.mxu0 %v92
  %482 = vmatpush.bf16.msra.mxu0 %v91
  %483 = vmatpush.bf16.msra.mxu0 %v90
  %484 = vmatpush.bf16.msra.mxu0 %v89
  %485 = vmatpush.bf16.msra.mxu0 %v88
  %486 = vmatmul.bf16.gmra.mxu0 %v455
  %v487 = vpop.f32.mrf.mxu0
  %v488 = vadd.f32 %v66, %v487
  %v489 = vpop.f32.mrf.mxu0
  %v490 = vadd.f32 %v66, %v489
  %491 = vmatmul.bf16.gmra.mxu0 %v458
  %v492 = vpop.f32.mrf.mxu0
  %v493 = vadd.f32 %v66, %v492
  %v494 = vpop.f32.mrf.mxu0
  %v495 = vadd.f32 %v66, %v494
  %496 = vmatmul.bf16.gmra.mxu0 %v461
  %v497 = vpop.f32.mrf.mxu0
  %v498 = vadd.f32 %v66, %v497
  %v499 = vpop.f32.mrf.mxu0
  %v500 = vadd.f32 %v66, %v499
  %501 = vmatmul.bf16.gmra.mxu0 %v464
  %v502 = vpop.f32.mrf.mxu0
  %v503 = vadd.f32 %v66, %v502
  %v504 = vpop.f32.mrf.mxu0
  %v505 = vadd.f32 %v66, %v504
  %506 = vmatmul.bf16.gmra.mxu0 %v467
  %v507 = vpop.f32.mrf.mxu0
  %v508 = vadd.f32 %v66, %v507
  %v509 = vpop.f32.mrf.mxu0
  %v510 = vadd.f32 %v66, %v509
  %511 = vmatmul.bf16.gmra.mxu0 %v470
  %v512 = vpop.f32.mrf.mxu0
  %v513 = vadd.f32 %v66, %v512
  %v514 = vpop.f32.mrf.mxu0
  %v515 = vadd.f32 %v66, %v514
  %516 = vmatmul.bf16.gmra.mxu0 %v473
  %v517 = vpop.f32.mrf.mxu0
  %v518 = vadd.f32 %v66, %v517
  %v519 = vpop.f32.mrf.mxu0
  %v520 = vadd.f32 %v66, %v519
  %521 = vmatmul.bf16.gmra.mxu0 %v476
  %v522 = vpop.f32.mrf.mxu0
  %v523 = vadd.f32 %v66, %v522
  %v524 = vpop.f32.mrf.mxu0
  %v525 = vadd.f32 %v66, %v524
  %526 = vdwg.mxu0
  %v527 = vmax.f32 %v488, 0.0
  %v528 = vmax.f32 %v490, 0.0
  %v529 = vmax.f32 %v493, 0.0
  %v530 = vmax.f32 %v495, 0.0
  %v531 = vmax.f32 %v498, 0.0
  %v532 = vmax.f32 %v500, 0.0
  %v533 = vmax.f32 %v503, 0.0
  %v534 = vmax.f32 %v505, 0.0
  %v535 = vmax.f32 %v508, 0.0
  %v536 = vmax.f32 %v510, 0.0
  %v537 = vmax.f32 %v513, 0.0
  %v538 = vmax.f32 %v515, 0.0
  %v539 = vmax.f32 %v518, 0.0
  %v540 = vmax.f32 %v520, 0.0
  %v541 = vmax.f32 %v523, 0.0
  %v542 = vmax.f32 %v525, 0.0
  %v543 = vmax.f32 %v422, %v527
  %v544 = vmax.f32 %v423, %v528
  %v545 = vmax.f32 %v424, %v529
  %v546 = vmax.f32 %v425, %v530
  %v547 = vmax.f32 %v426, %v531
  %v548 = vmax.f32 %v427, %v532
  %v549 = vmax.f32 %v428, %v533
  %v550 = vmax.f32 %v429, %v534
  %v551 = vmax.f32 %v430, %v535
  %v552 = vmax.f32 %v431, %v536
  %v553 = vmax.f32 %v432, %v537
  %v554 = vmax.f32 %v433, %v538
  %v555 = vmax.f32 %v434, %v539
  %v556 = vmax.f32 %v435, %v540
  %v557 = vmax.f32 %v436, %v541
  %v558 = vmax.f32 %v437, %v542
  %v559 = vpack.c.bf16 %v544, %v543
  %v560 = vpack.c.bf16 %v546, %v545
  %v561 = vpack.c.bf16 %v548, %v547
  %v562 = vpack.c.bf16 %v550, %v549
  %v563 = vpack.c.bf16 %v552, %v551
  %v564 = vpack.c.bf16 %v554, %v553
  %v565 = vpack.c.bf16 %v556, %v555
  %v566 = vpack.c.bf16 %v558, %v557
  %v567 = vld [vmem:[%s3] sm:$0xf]
  %v568 = vld [vmem:[%s3 + $0x4] sm:$0xf]
  %v569 = vld [vmem:[%s3 + $0x8] sm:$0xf]
  %v570 = vld [vmem:[%s3 + $0xc] sm:$0xf]
  %v571 = vld [vmem:[%s4] sm:$0x1]
  %v573 = vperm.slane %v571, 0
  %v579 = vunpack.c.l.b16 %v567
  %v580 = vunpack.c.l.b16 %v568
  %v581 = vunpack.c.l.b16 %v569
  %v582 = vunpack.c.l.b16 %v570
  %v583 = vpack.c.b16 %v580, %v579
  %v584 = vpack.c.b16 %v582, %v581
  %vm587 = vcmask 261120
  %v589 = vsel %vm587, %v559, 0
  %v592 = vsel %vm587, %v560, 0
  %v595 = vsel %vm587, %v561, 0
  %v598 = vsel %vm587, %v562, 0
  %v601 = vsel %vm587, %v563, 0
  %v604 = vsel %vm587, %v564, 0
  %v607 = vsel %vm587, %v565, 0
  %v610 = vsel %vm587, %v566, 0
  %612 = vmatpush.bf16.msra.mxu0 0
  %613 = vmatpush.bf16.msra.mxu0 0
  %614 = vmatpush.bf16.msra.mxu0 0
  %615 = vmatpush.bf16.msra.mxu0 0
  %616 = vmatpush.bf16.msra.mxu0 0
  %617 = vmatpush.bf16.msra.mxu0 0
  %618 = vmatpush.bf16.msra.mxu0 %v584
  %619 = vmatpush.bf16.msra.mxu0 %v583
  %620 = vmatmul.bf16.gmra.mxu0 %v589
  %v621 = vpop.f32.mrf.mxu0
  %v622 = vadd.f32 %v573, %v621
  %v623 = vpop.f32.mrf.mxu0
  %v624 = vadd.f32 %v573, %v623
  %625 = vmatmul.bf16.gmra.mxu0 %v592
  %v626 = vpop.f32.mrf.mxu0
  %v627 = vadd.f32 %v573, %v626
  %v628 = vpop.f32.mrf.mxu0
  %v629 = vadd.f32 %v573, %v628
  %630 = vmatmul.bf16.gmra.mxu0 %v595
  %v631 = vpop.f32.mrf.mxu0
  %v632 = vadd.f32 %v573, %v631
  %v633 = vpop.f32.mrf.mxu0
  %v634 = vadd.f32 %v573, %v633
  %635 = vmatmul.bf16.gmra.mxu0 %v598
  %v636 = vpop.f32.mrf.mxu0
  %v637 = vadd.f32 %v573, %v636
  %v638 = vpop.f32.mrf.mxu0
  %v639 = vadd.f32 %v573, %v638
  %640 = vmatmul.bf16.gmra.mxu0 %v601
  %v641 = vpop.f32.mrf.mxu0
  %v642 = vadd.f32 %v573, %v641
  %v643 = vpop.f32.mrf.mxu0
  %v644 = vadd.f32 %v573, %v643
  %645 = vmatmul.bf16.gmra.mxu0 %v604
  %v646 = vpop.f32.mrf.mxu0
  %v647 = vadd.f32 %v573, %v646
  %v648 = vpop.f32.mrf.mxu0
  %v649 = vadd.f32 %v573, %v648
  %650 = vmatmul.bf16.gmra.mxu0 %v607
  %v651 = vpop.f32.mrf.mxu0
  %v652 = vadd.f32 %v573, %v651
  %v653 = vpop.f32.mrf.mxu0
  %v654 = vadd.f32 %v573, %v653
  %655 = vmatmul.bf16.gmra.mxu0 %v610
  %v656 = vpop.f32.mrf.mxu0
  %v657 = vadd.f32 %v573, %v656
  %v658 = vpop.f32.mrf.mxu0
  %v659 = vadd.f32 %v573, %v658
  %660 = vdwg.mxu0
  %v661 = vmax.f32 %v622, 0.0
  %v662 = vmax.f32 %v624, 0.0
  %v663 = vmax.f32 %v627, 0.0
  %v664 = vmax.f32 %v629, 0.0
  %v665 = vmax.f32 %v632, 0.0
  %v666 = vmax.f32 %v634, 0.0
  %v667 = vmax.f32 %v637, 0.0
  %v668 = vmax.f32 %v639, 0.0
  %v669 = vmax.f32 %v642, 0.0
  %v670 = vmax.f32 %v644, 0.0
  %v671 = vmax.f32 %v647, 0.0
  %v672 = vmax.f32 %v649, 0.0
  %v673 = vmax.f32 %v652, 0.0
  %v674 = vmax.f32 %v654, 0.0
  %v675 = vmax.f32 %v657, 0.0
  %v676 = vmax.f32 %v659, 0.0
  %v677 = vld [vmem:[%s5] sm:$0xf]
  %v678 = vld [vmem:[%s5 + $0x4] sm:$0xf]
  %v679 = vld [vmem:[%s5 + $0x8] sm:$0xf]
  %v680 = vld [vmem:[%s5 + $0xc] sm:$0xf]
  %v681 = vld [vmem:[%s6] sm:$0x1]
  %v683 = vperm.slane %v681, 0
  %v689 = vunpack.c.l.b16 %v677
  %v690 = vunpack.c.l.b16 %v678
  %v691 = vunpack.c.l.b16 %v679
  %v692 = vunpack.c.l.b16 %v680
  %v693 = vpack.c.b16 %v690, %v689
  %v694 = vpack.c.b16 %v692, %v691
  %697 = vmatpush.bf16.msra.mxu0 0
  %698 = vmatpush.bf16.msra.mxu0 0
  %699 = vmatpush.bf16.msra.mxu0 0
  %700 = vmatpush.bf16.msra.mxu0 0
  %701 = vmatpush.bf16.msra.mxu0 0
  %702 = vmatpush.bf16.msra.mxu0 0
  %703 = vmatpush.bf16.msra.mxu0 %v694
  %704 = vmatpush.bf16.msra.mxu0 %v693
  %705 = vmatmul.bf16.gmra.mxu0 %v589
  %v706 = vpop.f32.mrf.mxu0
  %v707 = vadd.f32 %v683, %v706
  %v708 = vpop.f32.mrf.mxu0
  %v709 = vadd.f32 %v683, %v708
  %710 = vmatmul.bf16.gmra.mxu0 %v592
  %v711 = vpop.f32.mrf.mxu0
  %v712 = vadd.f32 %v683, %v711
  %v713 = vpop.f32.mrf.mxu0
  %v714 = vadd.f32 %v683, %v713
  %715 = vmatmul.bf16.gmra.mxu0 %v595
  %v716 = vpop.f32.mrf.mxu0
  %v717 = vadd.f32 %v683, %v716
  %v718 = vpop.f32.mrf.mxu0
  %v719 = vadd.f32 %v683, %v718
  %720 = vmatmul.bf16.gmra.mxu0 %v598
  %v721 = vpop.f32.mrf.mxu0
  %v722 = vadd.f32 %v683, %v721
  %v723 = vpop.f32.mrf.mxu0
  %v724 = vadd.f32 %v683, %v723
  %725 = vmatmul.bf16.gmra.mxu0 %v601
  %v726 = vpop.f32.mrf.mxu0
  %v727 = vadd.f32 %v683, %v726
  %v728 = vpop.f32.mrf.mxu0
  %v729 = vadd.f32 %v683, %v728
  %730 = vmatmul.bf16.gmra.mxu0 %v604
  %v731 = vpop.f32.mrf.mxu0
  %v732 = vadd.f32 %v683, %v731
  %v733 = vpop.f32.mrf.mxu0
  %v734 = vadd.f32 %v683, %v733
  %735 = vmatmul.bf16.gmra.mxu0 %v607
  %v736 = vpop.f32.mrf.mxu0
  %v737 = vadd.f32 %v683, %v736
  %v738 = vpop.f32.mrf.mxu0
  %v739 = vadd.f32 %v683, %v738
  %740 = vmatmul.bf16.gmra.mxu0 %v610
  %v741 = vpop.f32.mrf.mxu0
  %v742 = vadd.f32 %v683, %v741
  %v743 = vpop.f32.mrf.mxu0
  %v744 = vadd.f32 %v683, %v743
  %745 = vdwg.mxu0
  %v746 = vsub.f32 0.0, %v707
  %v747 = vsub.f32 0.0, %v709
  %v748 = vsub.f32 0.0, %v712
  %v749 = vsub.f32 0.0, %v714
  %v750 = vsub.f32 0.0, %v717
  %v751 = vsub.f32 0.0, %v719
  %v752 = vsub.f32 0.0, %v722
  %v753 = vsub.f32 0.0, %v724
  %v754 = vsub.f32 0.0, %v727
  %v755 = vsub.f32 0.0, %v729
  %v756 = vsub.f32 0.0, %v732
  %v757 = vsub.f32 0.0, %v734
  %v758 = vsub.f32 0.0, %v737
  %v759 = vsub.f32 0.0, %v739
  %v760 = vsub.f32 0.0, %v742
  %v761 = vsub.f32 0.0, %v744
  %v762 = vmul.f32 %v746, 1.442695
  %v763 = vpow.pop %v762
  %v764 = vmul.f32 %v747, 1.442695
  %v765 = vpow.pop %v764
  %v766 = vmul.f32 %v748, 1.442695
  %v767 = vpow.pop %v766
  %v768 = vmul.f32 %v749, 1.442695
  %v769 = vpow.pop %v768
  %v770 = vmul.f32 %v750, 1.442695
  %v771 = vpow.pop %v770
  %v772 = vmul.f32 %v751, 1.442695
  %v773 = vpow.pop %v772
  %v774 = vmul.f32 %v752, 1.442695
  %v775 = vpow.pop %v774
  %v776 = vmul.f32 %v753, 1.442695
  %v777 = vpow.pop %v776
  %v778 = vmul.f32 %v754, 1.442695
  %v779 = vpow.pop %v778
  %v780 = vmul.f32 %v755, 1.442695
  %v781 = vpow.pop %v780
  %v782 = vmul.f32 %v756, 1.442695
  %v783 = vpow.pop %v782
  %v784 = vmul.f32 %v757, 1.442695
  %v785 = vpow.pop %v784
  %v786 = vmul.f32 %v758, 1.442695
  %v787 = vpow.pop %v786
  %v788 = vmul.f32 %v759, 1.442695
  %v789 = vpow.pop %v788
  %v790 = vmul.f32 %v760, 1.442695
  %v791 = vpow.pop %v790
  %v792 = vmul.f32 %v761, 1.442695
  %v793 = vpow.pop %v792
  %v794 = vadd.f32 %v763, 1.0
  %v795 = vadd.f32 %v765, 1.0
  %v796 = vadd.f32 %v767, 1.0
  %v797 = vadd.f32 %v769, 1.0
  %v798 = vadd.f32 %v771, 1.0
  %v799 = vadd.f32 %v773, 1.0
  %v800 = vadd.f32 %v775, 1.0
  %v801 = vadd.f32 %v777, 1.0
  %v802 = vadd.f32 %v779, 1.0
  %v803 = vadd.f32 %v781, 1.0
  %v804 = vadd.f32 %v783, 1.0
  %v805 = vadd.f32 %v785, 1.0
  %v806 = vadd.f32 %v787, 1.0
  %v807 = vadd.f32 %v789, 1.0
  %v808 = vadd.f32 %v791, 1.0
  %v809 = vadd.f32 %v793, 1.0
  %v810 = vrcp.pop %v794
  %v811 = vrcp.pop %v795
  %v812 = vrcp.pop %v796
  %v813 = vrcp.pop %v797
  %v814 = vrcp.pop %v798
  %v815 = vrcp.pop %v799
  %v816 = vrcp.pop %v800
  %v817 = vrcp.pop %v801
  %v818 = vrcp.pop %v802
  %v819 = vrcp.pop %v803
  %v820 = vrcp.pop %v804
  %v821 = vrcp.pop %v805
  %v822 = vrcp.pop %v806
  %v823 = vrcp.pop %v807
  %v824 = vrcp.pop %v808
  %v825 = vrcp.pop %v809
  %v826 = vmul.f32 %v810, %v661
  %v827 = vmul.f32 %v811, %v662
  %v828 = vmul.f32 %v812, %v663
  %v829 = vmul.f32 %v813, %v664
  %v830 = vmul.f32 %v814, %v665
  %v831 = vmul.f32 %v815, %v666
  %v832 = vmul.f32 %v816, %v667
  %v833 = vmul.f32 %v817, %v668
  %v834 = vmul.f32 %v818, %v669
  %v835 = vmul.f32 %v819, %v670
  %v836 = vmul.f32 %v820, %v671
  %v837 = vmul.f32 %v821, %v672
  %v838 = vmul.f32 %v822, %v673
  %v839 = vmul.f32 %v823, %v674
  %v840 = vmul.f32 %v824, %v675
  %v841 = vmul.f32 %v825, %v676
  %v842 = vsub.f32 1.0, %v810
  %v843 = vsub.f32 1.0, %v811
  %v844 = vsub.f32 1.0, %v812
  %v845 = vsub.f32 1.0, %v813
  %v846 = vsub.f32 1.0, %v814
  %v847 = vsub.f32 1.0, %v815
  %v848 = vsub.f32 1.0, %v816
  %v849 = vsub.f32 1.0, %v817
  %v850 = vsub.f32 1.0, %v818
  %v851 = vsub.f32 1.0, %v819
  %v852 = vsub.f32 1.0, %v820
  %v853 = vsub.f32 1.0, %v821
  %v854 = vsub.f32 1.0, %v822
  %v855 = vsub.f32 1.0, %v823
  %v856 = vsub.f32 1.0, %v824
  %v857 = vsub.f32 1.0, %v825
  %v858 = vmul.f32 %v842, %v543
  %v859 = vmul.f32 %v843, %v544
  %v860 = vmul.f32 %v844, %v545
  %v861 = vmul.f32 %v845, %v546
  %v862 = vmul.f32 %v846, %v547
  %v863 = vmul.f32 %v847, %v548
  %v864 = vmul.f32 %v848, %v549
  %v865 = vmul.f32 %v849, %v550
  %v866 = vmul.f32 %v850, %v551
  %v867 = vmul.f32 %v851, %v552
  %v868 = vmul.f32 %v852, %v553
  %v869 = vmul.f32 %v853, %v554
  %v870 = vmul.f32 %v854, %v555
  %v871 = vmul.f32 %v855, %v556
  %v872 = vmul.f32 %v856, %v557
  %v873 = vmul.f32 %v857, %v558
  %v874 = vadd.f32 %v826, %v858
  %v875 = vadd.f32 %v827, %v859
  %v876 = vadd.f32 %v828, %v860
  %v877 = vadd.f32 %v829, %v861
  %v878 = vadd.f32 %v830, %v862
  %v879 = vadd.f32 %v831, %v863
  %v880 = vadd.f32 %v832, %v864
  %v881 = vadd.f32 %v833, %v865
  %v882 = vadd.f32 %v834, %v866
  %v883 = vadd.f32 %v835, %v867
  %v884 = vadd.f32 %v836, %v868
  %v885 = vadd.f32 %v837, %v869
  %v886 = vadd.f32 %v838, %v870
  %v887 = vadd.f32 %v839, %v871
  %v888 = vadd.f32 %v840, %v872
  %v889 = vadd.f32 %v841, %v873
  %v890 = vpack.c.bf16 %v875, %v874
  %v891 = vpack.c.bf16 %v877, %v876
  %v892 = vpack.c.bf16 %v879, %v878
  %v893 = vpack.c.bf16 %v881, %v880
  %v894 = vpack.c.bf16 %v883, %v882
  %v895 = vpack.c.bf16 %v885, %v884
  %v896 = vpack.c.bf16 %v887, %v886
  %v897 = vpack.c.bf16 %v889, %v888
  %v898 = vld [vmem:[%s7] sm:$0xf]
  %v899 = vld [vmem:[%s7 + $0x4] sm:$0xf]
  %v900 = vld [vmem:[%s7 + $0x8] sm:$0xf]
  %v901 = vld [vmem:[%s7 + $0xc] sm:$0xf]
  %v906 = vunpack.c.l.b16 %v898
  %v907 = vunpack.c.l.b16 %v899
  %v908 = vunpack.c.l.b16 %v900
  %v909 = vunpack.c.l.b16 %v901
  %v910 = vpack.c.b16 %v907, %v906
  %v911 = vpack.c.b16 %v909, %v908
  %v915 = vsel %vm587, %v890, 0
  %v918 = vsel %vm587, %v891, 0
  %v921 = vsel %vm587, %v892, 0
  %v924 = vsel %vm587, %v893, 0
  %v927 = vsel %vm587, %v894, 0
  %v930 = vsel %vm587, %v895, 0
  %v933 = vsel %vm587, %v896, 0
  %v936 = vsel %vm587, %v897, 0
  %938 = vmatpush.bf16.msra.mxu0 0
  %939 = vmatpush.bf16.msra.mxu0 0
  %940 = vmatpush.bf16.msra.mxu0 0
  %941 = vmatpush.bf16.msra.mxu0 0
  %942 = vmatpush.bf16.msra.mxu0 0
  %943 = vmatpush.bf16.msra.mxu0 0
  %944 = vmatpush.bf16.msra.mxu0 %v911
  %945 = vmatpush.bf16.msra.mxu0 %v910
  %946 = vmatmul.bf16.gmra.mxu0 %v915
  %v947 = vpop.f32.mrf.mxu0
  %v948 = vadd.f32 0.0, %v947
  %v949 = vpop.f32.mrf.mxu0
  %v950 = vadd.f32 0.0, %v949
  %951 = vmatmul.bf16.gmra.mxu0 %v918
  %v952 = vpop.f32.mrf.mxu0
  %v953 = vadd.f32 0.0, %v952
  %v954 = vpop.f32.mrf.mxu0
  %v955 = vadd.f32 0.0, %v954
  %956 = vmatmul.bf16.gmra.mxu0 %v921
  %v957 = vpop.f32.mrf.mxu0
  %v958 = vadd.f32 0.0, %v957
  %v959 = vpop.f32.mrf.mxu0
  %v960 = vadd.f32 0.0, %v959
  %961 = vmatmul.bf16.gmra.mxu0 %v924
  %v962 = vpop.f32.mrf.mxu0
  %v963 = vadd.f32 0.0, %v962
  %v964 = vpop.f32.mrf.mxu0
  %v965 = vadd.f32 0.0, %v964
  %966 = vmatmul.bf16.gmra.mxu0 %v927
  %v967 = vpop.f32.mrf.mxu0
  %v968 = vadd.f32 0.0, %v967
  %v969 = vpop.f32.mrf.mxu0
  %v970 = vadd.f32 0.0, %v969
  %971 = vmatmul.bf16.gmra.mxu0 %v930
  %v972 = vpop.f32.mrf.mxu0
  %v973 = vadd.f32 0.0, %v972
  %v974 = vpop.f32.mrf.mxu0
  %v975 = vadd.f32 0.0, %v974
  %976 = vmatmul.bf16.gmra.mxu0 %v933
  %v977 = vpop.f32.mrf.mxu0
  %v978 = vadd.f32 0.0, %v977
  %v979 = vpop.f32.mrf.mxu0
  %v980 = vadd.f32 0.0, %v979
  %981 = vmatmul.bf16.gmra.mxu0 %v936
  %v982 = vpop.f32.mrf.mxu0
  %v983 = vadd.f32 0.0, %v982
  %v984 = vpop.f32.mrf.mxu0
  %v985 = vadd.f32 0.0, %v984
  %986 = vdwg.mxu0
  %987 = vst [vmem:[%s8] sm:$0xff] %v948
  %988 = vst [vmem:[%s8 + $0x8] sm:$0xff] %v950
  %989 = vst [vmem:[%s8 + $0x10] sm:$0xff] %v953
  %990 = vst [vmem:[%s8 + $0x18] sm:$0xff] %v955
  %991 = vst [vmem:[%s8 + $0x20] sm:$0xff] %v958
  %992 = vst [vmem:[%s8 + $0x28] sm:$0xff] %v960
  %993 = vst [vmem:[%s8 + $0x30] sm:$0xff] %v963
  %994 = vst [vmem:[%s8 + $0x38] sm:$0xff] %v965
  %995 = vst [vmem:[%s8 + $0x40] sm:$0xff] %v968
  %996 = vst [vmem:[%s8 + $0x48] sm:$0xff] %v970
  %997 = vst [vmem:[%s8 + $0x50] sm:$0xff] %v973
  %998 = vst [vmem:[%s8 + $0x58] sm:$0xff] %v975
  %999 = vst [vmem:[%s8 + $0x60] sm:$0xff] %v978
  %1000 = vst [vmem:[%s8 + $0x68] sm:$0xff] %v980
  %1001 = vst [vmem:[%s8 + $0x70] sm:$0xff] %v983
  %1002 = vst [vmem:[%s8 + $0x78] sm:$0xff] %v985
  // Predicated region
  $region34: #{nmt_forward.7} parent=0 // pred_check
    _
  $region35: #{nmt_forward.7} parent=0 // pred_check_branch
    %1004 = sbr.rel (0) target = $region37
  $region36: #{nmt_forward.7} parent=0 // pred_region
    _
  $region37: #{nmt_forward.7} parent=0 // pred_fallthru
    _
  // Predicated region
  $region38: #{nmt_forward.7} parent=0 // pred_check
    _
  $region39: #{nmt_forward.7} parent=0 // pred_check_branch
    %1006 = sbr.rel (0) target = $region41
  $region40: #{nmt_forward.7} parent=0 // pred_region
    _
  $region41: #{nmt_forward.7} parent=0 // pred_fallthru
    _

// kernel: nmt_forward.5
$region0: #{nmt_forward.5}
  #allocation0 [shape = 'u32[]', space=smem, size = 0x4, offset = 0x4, fixed_abs, tag = 'smem constant byte address 0x4 - core index']
  #allocation1 [shape = 'u32[72,128]{1,0:T(1,128)}', space=vmem, size = 0x9000, scoped, tag = 'internal scratch']
  %s0 = inlined_call_operand.vmem [shape: f32[128,128], index: 0, kind: input, shape index: {}]
  %s1 = inlined_call_operand.vmem [shape: bf16[80,32], index: 1, kind: input, shape index: {}]
  %s2 = inlined_call_operand.vmem [shape: f32[1,32], index: 2, kind: input, shape index: {}]
  %s3 = inlined_call_operand.vmem [shape: bf16[32,32], index: 3, kind: input, shape index: {}]
  %s4 = inlined_call_operand.vmem [shape: f32[1,32], index: 4, kind: input, shape index: {}]
  %s5 = inlined_call_operand.vmem [shape: bf16[32,32], index: 5, kind: input, shape index: {}]
  %s6 = inlined_call_operand.vmem [shape: f32[1,32], index: 6, kind: input, shape index: {}]
  %s7 = inlined_call_operand.vmem [shape: bf16[32,256], index: 7, kind: input, shape index: {}]
  %s8 = inlined_call_operand.vmem [shape: f32[128,256], index: 8, kind: output, shape index: {}]
  %s9 = sld [smem:[#allocation0]]
  $region42: #{nmt_forward.5} parent=0
    _
  %s11 = ssub.s32 1, %s9
  %s12 = scalar_select 0, %s11, %s9
  // Predicated region
  $region2: #{nmt_forward.5} parent=0 // pred_check
    _
  $region3: #{nmt_forward.5} parent=0 // pred_check_branch
    %14 = sbr.rel (0) target = $region5
  $region4: #{nmt_forward.5} parent=0 // pred_region
    _
  $region5: #{nmt_forward.5} parent=0 // pred_fallthru
    _
  // Predicated region
  $region6: #{nmt_forward.5} parent=0 // pred_check
    _
  $region7: #{nmt_forward.5} parent=0 // pred_check_branch
    %16 = sbr.rel (0) target = $region9
  $region8: #{nmt_forward.5} parent=0 // pred_region
    _
  $region9: #{nmt_forward.5} parent=0 // pred_fallthru
    _
  // Predicated region
  $region10: #{nmt_forward.5} parent=0 // pred_check
    _
  $region11: #{nmt_forward.5} parent=0 // pred_check_branch
    %18 = sbr.rel (0) target = $region13
  $region12: #{nmt_forward.5} parent=0 // pred_region
    _
  $region13: #{nmt_forward.5} parent=0 // pred_fallthru
    _
  // Predicated region
  $region14: #{nmt_forward.5} parent=0 // pred_check
    _
  $region15: #{nmt_forward.5} parent=0 // pred_check_branch
    %20 = sbr.rel (0) target = $region17
  $region16: #{nmt_forward.5} parent=0 // pred_region
    _
  $region17: #{nmt_forward.5} parent=0 // pred_fallthru
    _
  // Predicated region
  $region18: #{nmt_forward.5} parent=0 // pred_check
    _
  $region19: #{nmt_forward.5} parent=0 // pred_check_branch
    %22 = sbr.rel (0) target = $region21
  $region20: #{nmt_forward.5} parent=0 // pred_region
    _
  $region21: #{nmt_forward.5} parent=0 // pred_fallthru
    _
  // Predicated region
  $region22: #{nmt_forward.5} parent=0 // pred_check
    _
  $region23: #{nmt_forward.5} parent=0 // pred_check_branch
    %24 = sbr.rel (0) target = $region25
  $region24: #{nmt_forward.5} parent=0 // pred_region
    _
  $region25: #{nmt_forward.5} parent=0 // pred_fallthru
    _
  // Predicated region
  $region26: #{nmt_forward.5} parent=0 // pred_check
    _
  $region27: #{nmt_forward.5} parent=0 // pred_check_branch
    %26 = sbr.rel (0) target = $region29
  $region28: #{nmt_forward.5} parent=0 // pred_region
    _
  $region29: #{nmt_forward.5} parent=0 // pred_fallthru
    _
  // Predicated region
  $region30: #{nmt_forward.5} parent=0 // pred_check
    _
  $region31: #{nmt_forward.5} parent=0 // pred_check_branch
    %28 = sbr.rel (0) target = $region33
  $region32: #{nmt_forward.5} parent=0 // pred_region
    _
  $region33: #{nmt_forward.5} parent=0 // pred_fallthru
    _
  %v30 = vld [vmem:[%s1] sm:$0xf]
  %v31 = vld [vmem:[%s1 + $0x4] sm:$0xf]
  %v32 = vld [vmem:[%s1 + $0x8] sm:$0xf]
  %v33 = vld [vmem:[%s1 + $0xc] sm:$0xf]
  %v34 = vld [vmem:[%s1 + $0x10] sm:$0xf]
  %v35 = vld [vmem:[%s1 + $0x14] sm:$0xf]
  %v36 = vld [vmem:[%s1 + $0x18] sm:$0xf]
  %v37 = vld [vmem:[%s1 + $0x1c] sm:$0xf]
  %v38 = vld [vmem:[%s1 + $0x20] sm:$0xf]
  %v39 = vld [vmem:[%s1 + $0x24] sm:$0xf]
  %v40 = vld [vmem:[%s2] sm:$0x1]
  %v41 = vld [vmem:[%s0] sm:$0xff]
  %v42 = vld [vmem:[%s0 + $0x8] sm:$0xff]
  %v43 = vld [vmem:[%s0 + $0x10] sm:$0xff]
  %v44 = vld [vmem:[%s0 + $0x18] sm:$0xff]
  %v45 = vld [vmem:[%s0 + $0x20] sm:$0xff]
  %v46 = vld [vmem:[%s0 + $0x28] sm:$0xff]
  %v47 = vld [vmem:[%s0 + $0x30] sm:$0xff]
  %v48 = vld [vmem:[%s0 + $0x38] sm:$0xff]
  %v49 = vld [vmem:[%s0 + $0x40] sm:$0xff]
  %v50 = vld [vmem:[%s0 + $0x48] sm:$0xff]
  %v51 = vld [vmem:[%s0 + $0x50] sm:$0xff]
  %v52 = vld [vmem:[%s0 + $0x58] sm:$0xff]
  %v53 = vld [vmem:[%s0 + $0x60] sm:$0xff]
  %v54 = vld [vmem:[%s0 + $0x68] sm:$0xff]
  %v55 = vld [vmem:[%s0 + $0x70] sm:$0xff]
  %v56 = vld [vmem:[%s0 + $0x78] sm:$0xff]
  %v57 = vpack.c.bf16 %v42, %v41
  %v58 = vpack.c.bf16 %v44, %v43
  %v59 = vpack.c.bf16 %v46, %v45
  %v60 = vpack.c.bf16 %v48, %v47
  %v61 = vpack.c.bf16 %v50, %v49
  %v62 = vpack.c.bf16 %v52, %v51
  %v63 = vpack.c.bf16 %v54, %v53
  %v64 = vpack.c.bf16 %v56, %v55
  %v66 = vperm.slane %v40, 0
  %v78 = vunpack.c.l.b16 %v30
  %v79 = vunpack.c.l.b16 %v31
  %v80 = vunpack.c.l.b16 %v32
  %v81 = vunpack.c.l.b16 %v33
  %v82 = vunpack.c.l.b16 %v34
  %v83 = vunpack.c.l.b16 %v35
  %v84 = vunpack.c.l.b16 %v36
  %v85 = vunpack.c.l.b16 %v37
  %v86 = vunpack.c.l.b16 %v38
  %v87 = vunpack.c.l.b16 %v39
  %v88 = vpack.c.b16 %v79, %v78
  %v89 = vpack.c.b16 %v81, %v80
  %v90 = vpack.c.b16 %v83, %v82
  %v91 = vpack.c.b16 %v85, %v84
  %v92 = vpack.c.b16 %v87, %v86
  %vm98 = vcmask 654336
  %v100 = vsel %vm98, %v57, 0
  %v103 = vsel %vm98, %v58, 0
  %v106 = vsel %vm98, %v59, 0
  %v109 = vsel %vm98, %v60, 0
  %v112 = vsel %vm98, %v61, 0
  %v115 = vsel %vm98, %v62, 0
  %v118 = vsel %vm98, %v63, 0
  %v121 = vsel %vm98, %v64, 0
  %123 = vmatpush.bf16.msra.mxu0 0
  %124 = vmatpush.bf16.msra.mxu0 0
  %125 = vmatpush.bf16.msra.mxu0 0
  %126 = vmatpush.bf16.msra.mxu0 %v92
  %127 = vmatpush.bf16.msra.mxu0 %v91
  %128 = vmatpush.bf16.msra.mxu0 %v90
  %129 = vmatpush.bf16.msra.mxu0 %v89
  %130 = vmatpush.bf16.msra.mxu0 %v88
  %131 = vmatmul.bf16.gmra.mxu0 %v100
  %v132 = vpop.f32.mrf.mxu0
  %v133 = vadd.f32 %v66, %v132
  %v134 = vpop.f32.mrf.mxu0
  %v135 = vadd.f32 %v66, %v134
  %136 = vmatmul.bf16.gmra.mxu0 %v103
  %v137 = vpop.f32.mrf.mxu0
  %v138 = vadd.f32 %v66, %v137
  %v139 = vpop.f32.mrf.mxu0
  %v140 = vadd.f32 %v66, %v139
  %141 = vmatmul.bf16.gmra.mxu0 %v106
  %v142 = vpop.f32.mrf.mxu0
  %v143 = vadd.f32 %v66, %v142
  %v144 = vpop.f32.mrf.mxu0
  %v145 = vadd.f32 %v66, %v144
  %146 = vmatmul.bf16.gmra.mxu0 %v109
  %v147 = vpop.f32.mrf.mxu0
  %v148 = vadd.f32 %v66, %v147
  %v149 = vpop.f32.mrf.mxu0
  %v150 = vadd.f32 %v66, %v149
  %151 = vmatmul.bf16.gmra.mxu0 %v112
  %v152 = vpop.f32.mrf.mxu0
  %v153 = vadd.f32 %v66, %v152
  %v154 = vpop.f32.mrf.mxu0
  %v155 = vadd.f32 %v66, %v154
  %156 = vmatmul.bf16.gmra.mxu0 %v115
  %v157 = vpop.f32.mrf.mxu0
  %v158 = vadd.f32 %v66, %v157
  %v159 = vpop.f32.mrf.mxu0
  %v160 = vadd.f32 %v66, %v159
  %161 = vmatmul.bf16.gmra.mxu0 %v118
  %v162 = vpop.f32.mrf.mxu0
  %v163 = vadd.f32 %v66, %v162
  %v164 = vpop.f32.mrf.mxu0
  %v165 = vadd.f32 %v66, %v164
  %166 = vmatmul.bf16.gmra.mxu0 %v121
  %v167 = vpop.f32.mrf.mxu0
  %v168 = vadd.f32 %v66, %v167
  %v169 = vpop.f32.mrf.mxu0
  %v170 = vadd.f32 %v66, %v169
  %171 = vdwg.mxu0
  %v172 = vmax.f32 %v133, 0.0
  %v173 = vmax.f32 %v135, 0.0
  %v174 = vmax.f32 %v138, 0.0
  %v175 = vmax.f32 %v140, 0.0
  %v176 = vmax.f32 %v143, 0.0
  %v177 = vmax.f32 %v145, 0.0
  %v178 = vmax.f32 %v148, 0.0
  %v179 = vmax.f32 %v150, 0.0
  %v180 = vmax.f32 %v153, 0.0
  %v181 = vmax.f32 %v155, 0.0
  %v182 = vmax.f32 %v158, 0.0
  %v183 = vmax.f32 %v160, 0.0
  %v184 = vmax.f32 %v163, 0.0
  %v185 = vmax.f32 %v165, 0.0
  %v186 = vmax.f32 %v168, 0.0
  %v187 = vmax.f32 %v170, 0.0
  %196 = vrot.lane.b32.xlu0 %v57, 112
  %v197 = vpop.permute.xlu0 %196
  %198 = vrot.lane.b32.xlu0 %v58, 112
  %v199 = vpop.permute.xlu0 %198
  %200 = vrot.lane.b32.xlu0 %v59, 112
  %v201 = vpop.permute.xlu0 %200
  %202 = vrot.lane.b32.xlu0 %v60, 112
  %v203 = vpop.permute.xlu0 %202
  %204 = vrot.lane.b32.xlu0 %v61, 112
  %v205 = vpop.permute.xlu0 %204
  %206 = vrot.lane.b32.xlu0 %v62, 112
  %v207 = vpop.permute.xlu0 %206
  %208 = vrot.lane.b32.xlu0 %v63, 112
  %v209 = vpop.permute.xlu0 %208
  %210 = vrot.lane.b32.xlu0 %v64, 112
  %v211 = vpop.permute.xlu0 %210
  %v213 = vsel %vm98, %v197, 0
  %v216 = vsel %vm98, %v199, 0
  %v219 = vsel %vm98, %v201, 0
  %v222 = vsel %vm98, %v203, 0
  %v225 = vsel %vm98, %v205, 0
  %v228 = vsel %vm98, %v207, 0
  %v231 = vsel %vm98, %v209, 0
  %v234 = vsel %vm98, %v211, 0
  %236 = vmatpush.bf16.msra.mxu0 0
  %237 = vmatpush.bf16.msra.mxu0 0
  %238 = vmatpush.bf16.msra.mxu0 0
  %239 = vmatpush.bf16.msra.mxu0 %v92
  %240 = vmatpush.bf16.msra.mxu0 %v91
  %241 = vmatpush.bf16.msra.mxu0 %v90
  %242 = vmatpush.bf16.msra.mxu0 %v89
  %243 = vmatpush.bf16.msra.mxu0 %v88
  %244 = vmatmul.bf16.gmra.mxu0 %v213
  %v245 = vpop.f32.mrf.mxu0
  %v246 = vadd.f32 %v66, %v245
  %v247 = vpop.f32.mrf.mxu0
  %v248 = vadd.f32 %v66, %v247
  %249 = vmatmul.bf16.gmra.mxu0 %v216
  %v250 = vpop.f32.mrf.mxu0
  %v251 = vadd.f32 %v66, %v250
  %v252 = vpop.f32.mrf.mxu0
  %v253 = vadd.f32 %v66, %v252
  %254 = vmatmul.bf16.gmra.mxu0 %v219
  %v255 = vpop.f32.mrf.mxu0
  %v256 = vadd.f32 %v66, %v255
  %v257 = vpop.f32.mrf.mxu0
  %v258 = vadd.f32 %v66, %v257
  %259 = vmatmul.bf16.gmra.mxu0 %v222
  %v260 = vpop.f32.mrf.mxu0
  %v261 = vadd.f32 %v66, %v260
  %v262 = vpop.f32.mrf.mxu0
  %v263 = vadd.f32 %v66, %v262
  %264 = vmatmul.bf16.gmra.mxu0 %v225
  %v265 = vpop.f32.mrf.mxu0
  %v266 = vadd.f32 %v66, %v265
  %v267 = vpop.f32.mrf.mxu0
  %v268 = vadd.f32 %v66, %v267
  %269 = vmatmul.bf16.gmra.mxu0 %v228
  %v270 = vpop.f32.mrf.mxu0
  %v271 = vadd.f32 %v66, %v270
  %v272 = vpop.f32.mrf.mxu0
  %v273 = vadd.f32 %v66, %v272
  %274 = vmatmul.bf16.gmra.mxu0 %v231
  %v275 = vpop.f32.mrf.mxu0
  %v276 = vadd.f32 %v66, %v275
  %v277 = vpop.f32.mrf.mxu0
  %v278 = vadd.f32 %v66, %v277
  %279 = vmatmul.bf16.gmra.mxu0 %v234
  %v280 = vpop.f32.mrf.mxu0
  %v281 = vadd.f32 %v66, %v280
  %v282 = vpop.f32.mrf.mxu0
  %v283 = vadd.f32 %v66, %v282
  %284 = vdwg.mxu0
  %v285 = vmax.f32 %v246, 0.0
  %v286 = vmax.f32 %v248, 0.0
  %v287 = vmax.f32 %v251, 0.0
  %v288 = vmax.f32 %v253, 0.0
  %v289 = vmax.f32 %v256, 0.0
  %v290 = vmax.f32 %v258, 0.0
  %v291 = vmax.f32 %v261, 0.0
  %v292 = vmax.f32 %v263, 0.0
  %v293 = vmax.f32 %v266, 0.0
  %v294 = vmax.f32 %v268, 0.0
  %v295 = vmax.f32 %v271, 0.0
  %v296 = vmax.f32 %v273, 0.0
  %v297 = vmax.f32 %v276, 0.0
  %v298 = vmax.f32 %v278, 0.0
  %v299 = vmax.f32 %v281, 0.0
  %v300 = vmax.f32 %v283, 0.0
  %v301 = vmax.f32 %v172, %v285
  %v302 = vmax.f32 %v173, %v286
  %v303 = vmax.f32 %v174, %v287
  %v304 = vmax.f32 %v175, %v288
  %v305 = vmax.f32 %v176, %v289
  %v306 = vmax.f32 %v177, %v290
  %v307 = vmax.f32 %v178, %v291
  %v308 = vmax.f32 %v179, %v292
  %v309 = vmax.f32 %v180, %v293
  %v310 = vmax.f32 %v181, %v294
  %v311 = vmax.f32 %v182, %v295
  %v312 = vmax.f32 %v183, %v296
  %v313 = vmax.f32 %v184, %v297
  %v314 = vmax.f32 %v185, %v298
  %v315 = vmax.f32 %v186, %v299
  %v316 = vmax.f32 %v187, %v300
  %317 = vrot.lane.b32.xlu0 %v57, 96
  %v318 = vpop.permute.xlu0 %317
  %319 = vrot.lane.b32.xlu0 %v58, 96
  %v320 = vpop.permute.xlu0 %319
  %321 = vrot.lane.b32.xlu0 %v59, 96
  %v322 = vpop.permute.xlu0 %321
  %323 = vrot.lane.b32.xlu0 %v60, 96
  %v324 = vpop.permute.xlu0 %323
  %325 = vrot.lane.b32.xlu0 %v61, 96
  %v326 = vpop.permute.xlu0 %325
  %327 = vrot.lane.b32.xlu0 %v62, 96
  %v328 = vpop.permute.xlu0 %327
  %329 = vrot.lane.b32.xlu0 %v63, 96
  %v330 = vpop.permute.xlu0 %329
  %331 = vrot.lane.b32.xlu0 %v64, 96
  %v332 = vpop.permute.xlu0 %331
  %v334 = vsel %vm98, %v318, 0
  %v337 = vsel %vm98, %v320, 0
  %v340 = vsel %vm98, %v322, 0
  %v343 = vsel %vm98, %v324, 0
  %v346 = vsel %vm98, %v326, 0
  %v349 = vsel %vm98, %v328, 0
  %v352 = vsel %vm98, %v330, 0
  %v355 = vsel %vm98, %v332, 0
  %357 = vmatpush.bf16.msra.mxu0 0
  %358 = vmatpush.bf16.msra.mxu0 0
  %359 = vmatpush.bf16.msra.mxu0 0
  %360 = vmatpush.bf16.msra.mxu0 %v92
  %361 = vmatpush.bf16.msra.mxu0 %v91
  %362 = vmatpush.bf16.msra.mxu0 %v90
  %363 = vmatpush.bf16.msra.mxu0 %v89
  %364 = vmatpush.bf16.msra.mxu0 %v88
  %365 = vmatmul.bf16.gmra.mxu0 %v334
  %v366 = vpop.f32.mrf.mxu0
  %v367 = vadd.f32 %v66, %v366
  %v368 = vpop.f32.mrf.mxu0
  %v369 = vadd.f32 %v66, %v368
  %370 = vmatmul.bf16.gmra.mxu0 %v337
  %v371 = vpop.f32.mrf.mxu0
  %v372 = vadd.f32 %v66, %v371
  %v373 = vpop.f32.mrf.mxu0
  %v374 = vadd.f32 %v66, %v373
  %375 = vmatmul.bf16.gmra.mxu0 %v340
  %v376 = vpop.f32.mrf.mxu0
  %v377 = vadd.f32 %v66, %v376
  %v378 = vpop.f32.mrf.mxu0
  %v379 = vadd.f32 %v66, %v378
  %380 = vmatmul.bf16.gmra.mxu0 %v343
  %v381 = vpop.f32.mrf.mxu0
  %v382 = vadd.f32 %v66, %v381
  %v383 = vpop.f32.mrf.mxu0
  %v384 = vadd.f32 %v66, %v383
  %385 = vmatmul.bf16.gmra.mxu0 %v346
  %v386 = vpop.f32.mrf.mxu0
  %v387 = vadd.f32 %v66, %v386
  %v388 = vpop.f32.mrf.mxu0
  %v389 = vadd.f32 %v66, %v388
  %390 = vmatmul.bf16.gmra.mxu0 %v349
  %v391 = vpop.f32.mrf.mxu0
  %v392 = vadd.f32 %v66, %v391
  %v393 = vpop.f32.mrf.mxu0
  %v394 = vadd.f32 %v66, %v393
  %395 = vmatmul.bf16.gmra.mxu0 %v352
  %v396 = vpop.f32.mrf.mxu0
  %v397 = vadd.f32 %v66, %v396
  %v398 = vpop.f32.mrf.mxu0
  %v399 = vadd.f32 %v66, %v398
  %400 = vmatmul.bf16.gmra.mxu0 %v355
  %v401 = vpop.f32.mrf.mxu0
  %v402 = vadd.f32 %v66, %v401
  %v403 = vpop.f32.mrf.mxu0
  %v404 = vadd.f32 %v66, %v403
  %405 = vdwg.mxu0
  %v406 = vmax.f32 %v367, 0.0
  %v407 = vmax.f32 %v369, 0.0
  %v408 = vmax.f32 %v372, 0.0
  %v409 = vmax.f32 %v374, 0.0
  %v410 = vmax.f32 %v377, 0.0
  %v411 = vmax.f32 %v379, 0.0
  %v412 = vmax.f32 %v382, 0.0
  %v413 = vmax.f32 %v384, 0.0
  %v414 = vmax.f32 %v387, 0.0
  %v415 = vmax.f32 %v389, 0.0
  %v416 = vmax.f32 %v392, 0.0
  %v417 = vmax.f32 %v394, 0.0
  %v418 = vmax.f32 %v397, 0.0
  %v419 = vmax.f32 %v399, 0.0
  %v420 = vmax.f32 %v402, 0.0
  %v421 = vmax.f32 %v404, 0.0
  %v422 = vmax.f32 %v301, %v406
  %v423 = vmax.f32 %v302, %v407
  %v424 = vmax.f32 %v303, %v408
  %v425 = vmax.f32 %v304, %v409
  %v426 = vmax.f32 %v305, %v410
  %v427 = vmax.f32 %v306, %v411
  %v428 = vmax.f32 %v307, %v412
  %v429 = vmax.f32 %v308, %v413
  %v430 = vmax.f32 %v309, %v414
  %v431 = vmax.f32 %v310, %v415
  %v432 = vmax.f32 %v311, %v416
  %v433 = vmax.f32 %v312, %v417
  %v434 = vmax.f32 %v313, %v418
  %v435 = vmax.f32 %v314, %v419
  %v436 = vmax.f32 %v315, %v420
  %v437 = vmax.f32 %v316, %v421
  %438 = vrot.lane.b32.xlu0 %v57, 80
  %v439 = vpop.permute.xlu0 %438
  %440 = vrot.lane.b32.xlu0 %v58, 80
  %v441 = vpop.permute.xlu0 %440
  %442 = vrot.lane.b32.xlu0 %v59, 80
  %v443 = vpop.permute.xlu0 %442
  %444 = vrot.lane.b32.xlu0 %v60, 80
  %v445 = vpop.permute.xlu0 %444
  %446 = vrot.lane.b32.xlu0 %v61, 80
  %v447 = vpop.permute.xlu0 %446
  %448 = vrot.lane.b32.xlu0 %v62, 80
  %v449 = vpop.permute.xlu0 %448
  %450 = vrot.lane.b32.xlu0 %v63, 80
  %v451 = vpop.permute.xlu0 %450
  %452 = vrot.lane.b32.xlu0 %v64, 80
  %v453 = vpop.permute.xlu0 %452
  %v455 = vsel %vm98, %v439, 0
  %v458 = vsel %vm98, %v441, 0
  %v461 = vsel %vm98, %v443, 0
  %v464 = vsel %vm98, %v445, 0
  %v467 = vsel %vm98, %v447, 0
  %v470 = vsel %vm98, %v449, 0
  %v473 = vsel %vm98, %v451, 0
  %v476 = vsel %vm98, %v453, 0
  %478 = vmatpush.bf16.msra.mxu0 0
  %479 = vmatpush.bf16.msra.mxu0 0
  %480 = vmatpush.bf16.msra.mxu0 0
  %481 = vmatpush.bf16.msra.mxu0 %v92
  %482 = vmatpush.bf16.msra.mxu0 %v91
  %483 = vmatpush.bf16.msra.mxu0 %v90
  %484 = vmatpush.bf16.msra.mxu0 %v89
  %485 = vmatpush.bf16.msra.mxu0 %v88
  %486 = vmatmul.bf16.gmra.mxu0 %v455
  %v487 = vpop.f32.mrf.mxu0
  %v488 = vadd.f32 %v66, %v487
  %v489 = vpop.f32.mrf.mxu0
  %v490 = vadd.f32 %v66, %v489
  %491 = vmatmul.bf16.gmra.mxu0 %v458
  %v492 = vpop.f32.mrf.mxu0
  %v493 = vadd.f32 %v66, %v492
  %v494 = vpop.f32.mrf.mxu0
  %v495 = vadd.f32 %v66, %v494
  %496 = vmatmul.bf16.gmra.mxu0 %v461
  %v497 = vpop.f32.mrf.mxu0
  %v498 = vadd.f32 %v66, %v497
  %v499 = vpop.f32.mrf.mxu0
  %v500 = vadd.f32 %v66, %v499
  %501 = vmatmul.bf16.gmra.mxu0 %v464
  %v502 = vpop.f32.mrf.mxu0
  %v503 = vadd.f32 %v66, %v502
  %v504 = vpop.f32.mrf.mxu0
  %v505 = vadd.f32 %v66, %v504
  %506 = vmatmul.bf16.gmra.mxu0 %v467
  %v507 = vpop.f32.mrf.mxu0
  %v508 = vadd.f32 %v66, %v507
  %v509 = vpop.f32.mrf.mxu0
  %v510 = vadd.f32 %v66, %v509
  %511 = vmatmul.bf16.gmra.mxu0 %v470
  %v512 = vpop.f32.mrf.mxu0
  %v513 = vadd.f32 %v66, %v512
  %v514 = vpop.f32.mrf.mxu0
  %v515 = vadd.f32 %v66, %v514
  %516 = vmatmul.bf16.gmra.mxu0 %v473
  %v517 = vpop.f32.mrf.mxu0
  %v518 = vadd.f32 %v66, %v517
  %v519 = vpop.f32.mrf.mxu0
  %v520 = vadd.f32 %v66, %v519
  %521 = vmatmul.bf16.gmra.mxu0 %v476
  %v522 = vpop.f32.mrf.mxu0
  %v523 = vadd.f32 %v66, %v522
  %v524 = vpop.f32.mrf.mxu0
  %v525 = vadd.f32 %v66, %v524
  %526 = vdwg.mxu0
  %v527 = vmax.f32 %v488, 0.0
  %v528 = vmax.f32 %v490, 0.0
  %v529 = vmax.f32 %v493, 0.0
  %v530 = vmax.f32 %v495, 0.0
  %v531 = vmax.f32 %v498, 0.0
  %v532 = vmax.f32 %v500, 0.0
  %v533 = vmax.f32 %v503, 0.0
  %v534 = vmax.f32 %v505, 0.0
  %v535 = vmax.f32 %v508, 0.0
  %v536 = vmax.f32 %v510, 0.0
  %v537 = vmax.f32 %v513, 0.0
  %v538 = vmax.f32 %v515, 0.0
  %v539 = vmax.f32 %v518, 0.0
  %v540 = vmax.f32 %v520, 0.0
  %v541 = vmax.f32 %v523, 0.0
  %v542 = vmax.f32 %v525, 0.0
  %v543 = vmax.f32 %v422, %v527
  %v544 = vmax.f32 %v423, %v528
  %v545 = vmax.f32 %v424, %v529
  %v546 = vmax.f32 %v425, %v530
  %v547 = vmax.f32 %v426, %v531
  %v548 = vmax.f32 %v427, %v532
  %v549 = vmax.f32 %v428, %v533
  %v550 = vmax.f32 %v429, %v534
  %v551 = vmax.f32 %v430, %v535
  %v552 = vmax.f32 %v431, %v536
  %v553 = vmax.f32 %v432, %v537
  %v554 = vmax.f32 %v433, %v538
  %v555 = vmax.f32 %v434, %v539
  %v556 = vmax.f32 %v435, %v540
  %v557 = vmax.f32 %v436, %v541
  %v558 = vmax.f32 %v437, %v542
  %v559 = vpack.c.bf16 %v544, %v543
  %v560 = vpack.c.bf16 %v546, %v545
  %v561 = vpack.c.bf16 %v548, %v547
  %v562 = vpack.c.bf16 %v550, %v549
  %v563 = vpack.c.bf16 %v552, %v551
  %v564 = vpack.c.bf16 %v554, %v553
  %v565 = vpack.c.bf16 %v556, %v555
  %v566 = vpack.c.bf16 %v558, %v557
  %v567 = vld [vmem:[%s3] sm:$0xf]
  %v568 = vld [vmem:[%s3 + $0x4] sm:$0xf]
  %v569 = vld [vmem:[%s3 + $0x8] sm:$0xf]
  %v570 = vld [vmem:[%s3 + $0xc] sm:$0xf]
  %v571 = vld [vmem:[%s4] sm:$0x1]
  %v573 = vperm.slane %v571, 0
  %v579 = vunpack.c.l.b16 %v567
  %v580 = vunpack.c.l.b16 %v568
  %v581 = vunpack.c.l.b16 %v569
  %v582 = vunpack.c.l.b16 %v570
  %v583 = vpack.c.b16 %v580, %v579
  %v584 = vpack.c.b16 %v582, %v581
  %vm587 = vcmask 261120
  %v589 = vsel %vm587, %v559, 0
  %v592 = vsel %vm587, %v560, 0
  %v595 = vsel %vm587, %v561, 0
  %v598 = vsel %vm587, %v562, 0
  %v601 = vsel %vm587, %v563, 0
  %v604 = vsel %vm587, %v564, 0
  %v607 = vsel %vm587, %v565, 0
  %v610 = vsel %vm587, %v566, 0
  %612 = vmatpush.bf16.msra.mxu0 0
  %613 = vmatpush.bf16.msra.mxu0 0
  %614 = vmatpush.bf16.msra.mxu0 0
  %615 = vmatpush.bf16.msra.mxu0 0
  %616 = vmatpush.bf16.msra.mxu0 0
  %617 = vmatpush.bf16.msra.mxu0 0
  %618 = vmatpush.bf16.msra.mxu0 %v584
  %619 = vmatpush.bf16.msra.mxu0 %v583
  %620 = vmatmul.bf16.gmra.mxu0 %v589
  %v621 = vpop.f32.mrf.mxu0
  %v622 = vadd.f32 %v573, %v621
  %v623 = vpop.f32.mrf.mxu0
  %v624 = vadd.f32 %v573, %v623
  %625 = vmatmul.bf16.gmra.mxu0 %v592
  %v626 = vpop.f32.mrf.mxu0
  %v627 = vadd.f32 %v573, %v626
  %v628 = vpop.f32.mrf.mxu0
  %v629 = vadd.f32 %v573, %v628
  %630 = vmatmul.bf16.gmra.mxu0 %v595
  %v631 = vpop.f32.mrf.mxu0
  %v632 = vadd.f32 %v573, %v631
  %v633 = vpop.f32.mrf.mxu0
  %v634 = vadd.f32 %v573, %v633
  %635 = vmatmul.bf16.gmra.mxu0 %v598
  %v636 = vpop.f32.mrf.mxu0
  %v637 = vadd.f32 %v573, %v636
  %v638 = vpop.f32.mrf.mxu0
  %v639 = vadd.f32 %v573, %v638
  %640 = vmatmul.bf16.gmra.mxu0 %v601
  %v641 = vpop.f32.mrf.mxu0
  %v642 = vadd.f32 %v573, %v641
  %v643 = vpop.f32.mrf.mxu0
  %v644 = vadd.f32 %v573, %v643
  %645 = vmatmul.bf16.gmra.mxu0 %v604
  %v646 = vpop.f32.mrf.mxu0
  %v647 = vadd.f32 %v573, %v646
  %v648 = vpop.f32.mrf.mxu0
  %v649 = vadd.f32 %v573, %v648
  %650 = vmatmul.bf16.gmra.mxu0 %v607
  %v651 = vpop.f32.mrf.mxu0
  %v652 = vadd.f32 %v573, %v651
  %v653 = vpop.f32.mrf.mxu0
  %v654 = vadd.f32 %v573, %v653
  %655 = vmatmul.bf16.gmra.mxu0 %v610
  %v656 = vpop.f32.mrf.mxu0
  %v657 = vadd.f32 %v573, %v656
  %v658 = vpop.f32.mrf.mxu0
  %v659 = vadd.f32 %v573, %v658
  %660 = vdwg.mxu0
  %v661 = vmax.f32 %v622, 0.0
  %v662 = vmax.f32 %v624, 0.0
  %v663 = vmax.f32 %v627, 0.0
  %v664 = vmax.f32 %v629, 0.0
  %v665 = vmax.f32 %v632, 0.0
  %v666 = vmax.f32 %v634, 0.0
  %v667 = vmax.f32 %v637, 0.0
  %v668 = vmax.f32 %v639, 0.0
  %v669 = vmax.f32 %v642, 0.0
  %v670 = vmax.f32 %v644, 0.0
  %v671 = vmax.f32 %v647, 0.0
  %v672 = vmax.f32 %v649, 0.0
  %v673 = vmax.f32 %v652, 0.0
  %v674 = vmax.f32 %v654, 0.0
  %v675 = vmax.f32 %v657, 0.0
  %v676 = vmax.f32 %v659, 0.0
  %v677 = vld [vmem:[%s5] sm:$0xf]
  %v678 = vld [vmem:[%s5 + $0x4] sm:$0xf]
  %v679 = vld [vmem:[%s5 + $0x8] sm:$0xf]
  %v680 = vld [vmem:[%s5 + $0xc] sm:$0xf]
  %v681 = vld [vmem:[%s6] sm:$0x1]
  %v683 = vperm.slane %v681, 0
  %v689 = vunpack.c.l.b16 %v677
  %v690 = vunpack.c.l.b16 %v678
  %v691 = vunpack.c.l.b16 %v679
  %v692 = vunpack.c.l.b16 %v680
  %v693 = vpack.c.b16 %v690, %v689
  %v694 = vpack.c.b16 %v692, %v691
  %697 = vmatpush.bf16.msra.mxu0 0
  %698 = vmatpush.bf16.msra.mxu0 0
  %699 = vmatpush.bf16.msra.mxu0 0
  %700 = vmatpush.bf16.msra.mxu0 0
  %701 = vmatpush.bf16.msra.mxu0 0
  %702 = vmatpush.bf16.msra.mxu0 0
  %703 = vmatpush.bf16.msra.mxu0 %v694
  %704 = vmatpush.bf16.msra.mxu0 %v693
  %705 = vmatmul.bf16.gmra.mxu0 %v589
  %v706 = vpop.f32.mrf.mxu0
  %v707 = vadd.f32 %v683, %v706
  %v708 = vpop.f32.mrf.mxu0
  %v709 = vadd.f32 %v683, %v708
  %710 = vmatmul.bf16.gmra.mxu0 %v592
  %v711 = vpop.f32.mrf.mxu0
  %v712 = vadd.f32 %v683, %v711
  %v713 = vpop.f32.mrf.mxu0
  %v714 = vadd.f32 %v683, %v713
  %715 = vmatmul.bf16.gmra.mxu0 %v595
  %v716 = vpop.f32.mrf.mxu0
  %v717 = vadd.f32 %v683, %v716
  %v718 = vpop.f32.mrf.mxu0
  %v719 = vadd.f32 %v683, %v718
  %720 = vmatmul.bf16.gmra.mxu0 %v598
  %v721 = vpop.f32.mrf.mxu0
  %v722 = vadd.f32 %v683, %v721
  %v723 = vpop.f32.mrf.mxu0
  %v724 = vadd.f32 %v683, %v723
  %725 = vmatmul.bf16.gmra.mxu0 %v601
  %v726 = vpop.f32.mrf.mxu0
  %v727 = vadd.f32 %v683, %v726
  %v728 = vpop.f32.mrf.mxu0
  %v729 = vadd.f32 %v683, %v728
  %730 = vmatmul.bf16.gmra.mxu0 %v604
  %v731 = vpop.f32.mrf.mxu0
  %v732 = vadd.f32 %v683, %v731
  %v733 = vpop.f32.mrf.mxu0
  %v734 = vadd.f32 %v683, %v733
  %735 = vmatmul.bf16.gmra.mxu0 %v607
  %v736 = vpop.f32.mrf.mxu0
  %v737 = vadd.f32 %v683, %v736
  %v738 = vpop.f32.mrf.mxu0
  %v739 = vadd.f32 %v683, %v738
  %740 = vmatmul.bf16.gmra.mxu0 %v610
  %v741 = vpop.f32.mrf.mxu0
  %v742 = vadd.f32 %v683, %v741
  %v743 = vpop.f32.mrf.mxu0
  %v744 = vadd.f32 %v683, %v743
  %745 = vdwg.mxu0
  %v746 = vsub.f32 0.0, %v707
  %v747 = vsub.f32 0.0, %v709
  %v748 = vsub.f32 0.0, %v712
  %v749 = vsub.f32 0.0, %v714
  %v750 = vsub.f32 0.0, %v717
  %v751 = vsub.f32 0.0, %v719
  %v752 = vsub.f32 0.0, %v722
  %v753 = vsub.f32 0.0, %v724
  %v754 = vsub.f32 0.0, %v727
  %v755 = vsub.f32 0.0, %v729
  %v756 = vsub.f32 0.0, %v732
  %v757 = vsub.f32 0.0, %v734
  %v758 = vsub.f32 0.0, %v737
  %v759 = vsub.f32 0.0, %v739
  %v760 = vsub.f32 0.0, %v742
  %v761 = vsub.f32 0.0, %v744
  %v762 = vmul.f32 %v746, 1.442695
  %v763 = vpow.pop %v762
  %v764 = vmul.f32 %v747, 1.442695
  %v765 = vpow.pop %v764
  %v766 = vmul.f32 %v748, 1.442695
  %v767 = vpow.pop %v766
  %v768 = vmul.f32 %v749, 1.442695
  %v769 = vpow.pop %v768
  %v770 = vmul.f32 %v750, 1.442695
  %v771 = vpow.pop %v770
  %v772 = vmul.f32 %v751, 1.442695
  %v773 = vpow.pop %v772
  %v774 = vmul.f32 %v752, 1.442695
  %v775 = vpow.pop %v774
  %v776 = vmul.f32 %v753, 1.442695
  %v777 = vpow.pop %v776
  %v778 = vmul.f32 %v754, 1.442695
  %v779 = vpow.pop %v778
  %v780 = vmul.f32 %v755, 1.442695
  %v781 = vpow.pop %v780
  %v782 = vmul.f32 %v756, 1.442695
  %v783 = vpow.pop %v782
  %v784 = vmul.f32 %v757, 1.442695
  %v785 = vpow.pop %v784
  %v786 = vmul.f32 %v758, 1.442695
  %v787 = vpow.pop %v786
  %v788 = vmul.f32 %v759, 1.442695
  %v789 = vpow.pop %v788
  %v790 = vmul.f32 %v760, 1.442695
  %v791 = vpow.pop %v790
  %v792 = vmul.f32 %v761, 1.442695
  %v793 = vpow.pop %v792
  %v794 = vadd.f32 %v763, 1.0
  %v795 = vadd.f32 %v765, 1.0
  %v796 = vadd.f32 %v767, 1.0
  %v797 = vadd.f32 %v769, 1.0
  %v798 = vadd.f32 %v771, 1.0
  %v799 = vadd.f32 %v773, 1.0
  %v800 = vadd.f32 %v775, 1.0
  %v801 = vadd.f32 %v777, 1.0
  %v802 = vadd.f32 %v779, 1.0
  %v803 = vadd.f32 %v781, 1.0
  %v804 = vadd.f32 %v783, 1.0
  %v805 = vadd.f32 %v785, 1.0
  %v806 = vadd.f32 %v787, 1.0
  %v807 = vadd.f32 %v789, 1.0
  %v808 = vadd.f32 %v791, 1.0
  %v809 = vadd.f32 %v793, 1.0
  %v810 = vrcp.pop %v794
  %v811 = vrcp.pop %v795
  %v812 = vrcp.pop %v796
  %v813 = vrcp.pop %v797
  %v814 = vrcp.pop %v798
  %v815 = vrcp.pop %v799
  %v816 = vrcp.pop %v800
  %v817 = vrcp.pop %v801
  %v818 = vrcp.pop %v802
  %v819 = vrcp.pop %v803
  %v820 = vrcp.pop %v804
  %v821 = vrcp.pop %v805
  %v822 = vrcp.pop %v806
  %v823 = vrcp.pop %v807
  %v824 = vrcp.pop %v808
  %v825 = vrcp.pop %v809
  %v826 = vmul.f32 %v810, %v661
  %v827 = vmul.f32 %v811, %v662
  %v828 = vmul.f32 %v812, %v663
  %v829 = vmul.f32 %v813, %v664
  %v830 = vmul.f32 %v814, %v665
  %v831 = vmul.f32 %v815, %v666
  %v832 = vmul.f32 %v816, %v667
  %v833 = vmul.f32 %v817, %v668
  %v834 = vmul.f32 %v818, %v669
  %v835 = vmul.f32 %v819, %v670
  %v836 = vmul.f32 %v820, %v671
  %v837 = vmul.f32 %v821, %v672
  %v838 = vmul.f32 %v822, %v673
  %v839 = vmul.f32 %v823, %v674
  %v840 = vmul.f32 %v824, %v675
  %v841 = vmul.f32 %v825, %v676
  %v842 = vsub.f32 1.0, %v810
  %v843 = vsub.f32 1.0, %v811
  %v844 = vsub.f32 1.0, %v812
  %v845 = vsub.f32 1.0, %v813
  %v846 = vsub.f32 1.0, %v814
  %v847 = vsub.f32 1.0, %v815
  %v848 = vsub.f32 1.0, %v816
  %v849 = vsub.f32 1.0, %v817
  %v850 = vsub.f32 1.0, %v818
  %v851 = vsub.f32 1.0, %v819
  %v852 = vsub.f32 1.0, %v820
  %v853 = vsub.f32 1.0, %v821
  %v854 = vsub.f32 1.0, %v822
  %v855 = vsub.f32 1.0, %v823
  %v856 = vsub.f32 1.0, %v824
  %v857 = vsub.f32 1.0, %v825
  %v858 = vmul.f32 %v842, %v543
  %v859 = vmul.f32 %v843, %v544
  %v860 = vmul.f32 %v844, %v545
  %v861 = vmul.f32 %v845, %v546
  %v862 = vmul.f32 %v846, %v547
  %v863 = vmul.f32 %v847, %v548
  %v864 = vmul.f32 %v848, %v549
  %v865 = vmul.f32 %v849, %v550
  %v866 = vmul.f32 %v850, %v551
  %v867 = vmul.f32 %v851, %v552
  %v868 = vmul.f32 %v852, %v553
  %v869 = vmul.f32 %v853, %v554
  %v870 = vmul.f32 %v854, %v555
  %v871 = vmul.f32 %v855, %v556
  %v872 = vmul.f32 %v856, %v557
  %v873 = vmul.f32 %v857, %v558
  %v874 = vadd.f32 %v826, %v858
  %v875 = vadd.f32 %v827, %v859
  %v876 = vadd.f32 %v828, %v860
  %v877 = vadd.f32 %v829, %v861
  %v878 = vadd.f32 %v830, %v862
  %v879 = vadd.f32 %v831, %v863
  %v880 = vadd.f32 %v832, %v864
  %v881 = vadd.f32 %v833, %v865
  %v882 = vadd.f32 %v834, %v866
  %v883 = vadd.f32 %v835, %v867
  %v884 = vadd.f32 %v836, %v868
  %v885 = vadd.f32 %v837, %v869
  %v886 = vadd.f32 %v838, %v870
  %v887 = vadd.f32 %v839, %v871
  %v888 = vadd.f32 %v840, %v872
  %v889 = vadd.f32 %v841, %v873
  %v890 = vpack.c.bf16 %v875, %v874
  %v891 = vpack.c.bf16 %v877, %v876
  %v892 = vpack.c.bf16 %v879, %v878
  %v893 = vpack.c.bf16 %v881, %v880
  %v894 = vpack.c.bf16 %v883, %v882
  %v895 = vpack.c.bf16 %v885, %v884
  %v896 = vpack.c.bf16 %v887, %v886
  %v897 = vpack.c.bf16 %v889, %v888
  %v898 = vld [vmem:[%s7] sm:$0xff]
  %v899 = vld [vmem:[%s7 + $0x8] sm:$0xff]
  %v900 = vld [vmem:[%s7 + $0x10] sm:$0xff]
  %v901 = vld [vmem:[%s7 + $0x18] sm:$0xff]
  %v906 = vunpack.c.l.b16 %v898
  %v907 = vunpack.c.h.b16 %v898
  %v908 = vunpack.c.l.b16 %v899
  %v909 = vunpack.c.h.b16 %v899
  %v910 = vunpack.c.l.b16 %v900
  %v911 = vunpack.c.h.b16 %v900
  %v912 = vunpack.c.l.b16 %v901
  %v913 = vunpack.c.h.b16 %v901
  %v914 = vpack.c.b16 %v908, %v906
  %v915 = vpack.c.b16 %v909, %v907
  %v916 = vpack.c.b16 %v912, %v910
  %v917 = vpack.c.b16 %v913, %v911
  %v923 = vsel %vm587, %v890, 0
  %v926 = vsel %vm587, %v891, 0
  %v929 = vsel %vm587, %v892, 0
  %v932 = vsel %vm587, %v893, 0
  %v935 = vsel %vm587, %v894, 0
  %v938 = vsel %vm587, %v895, 0
  %v941 = vsel %vm587, %v896, 0
  %v944 = vsel %vm587, %v897, 0
  %946 = vmatpush.bf16.msra.mxu0 0
  %947 = vmatpush.bf16.msra.mxu0 0
  %948 = vmatpush.bf16.msra.mxu0 0
  %949 = vmatpush.bf16.msra.mxu0 0
  %950 = vmatpush.bf16.msra.mxu0 0
  %951 = vmatpush.bf16.msra.mxu0 0
  %952 = vmatpush.bf16.msra.mxu0 %v916
  %953 = vmatpush.bf16.msra.mxu0 %v914
  %954 = vmatmul.bf16.gmra.mxu0 %v923
  %v955 = vpop.f32.mrf.mxu0
  %v956 = vadd.f32 0.0, %v955
  %v957 = vpop.f32.mrf.mxu0
  %v958 = vadd.f32 0.0, %v957
  %959 = vmatmul.bf16.gmra.mxu0 %v926
  %v960 = vpop.f32.mrf.mxu0
  %v961 = vadd.f32 0.0, %v960
  %v962 = vpop.f32.mrf.mxu0
  %v963 = vadd.f32 0.0, %v962
  %964 = vmatmul.bf16.gmra.mxu0 %v929
  %v965 = vpop.f32.mrf.mxu0
  %v966 = vadd.f32 0.0, %v965
  %v967 = vpop.f32.mrf.mxu0
  %v968 = vadd.f32 0.0, %v967
  %969 = vmatmul.bf16.gmra.mxu0 %v932
  %v970 = vpop.f32.mrf.mxu0
  %v971 = vadd.f32 0.0, %v970
  %v972 = vpop.f32.mrf.mxu0
  %v973 = vadd.f32 0.0, %v972
  %974 = vmatmul.bf16.gmra.mxu0 %v935
  %v975 = vpop.f32.mrf.mxu0
  %v976 = vadd.f32 0.0, %v975
  %v977 = vpop.f32.mrf.mxu0
  %v978 = vadd.f32 0.0, %v977
  %979 = vmatmul.bf16.gmra.mxu0 %v938
  %v980 = vpop.f32.mrf.mxu0
  %v981 = vadd.f32 0.0, %v980
  %v982 = vpop.f32.mrf.mxu0
  %v983 = vadd.f32 0.0, %v982
  %984 = vmatmul.bf16.gmra.mxu0 %v941
  %v985 = vpop.f32.mrf.mxu0
  %v986 = vadd.f32 0.0, %v985
  %v987 = vpop.f32.mrf.mxu0
  %v988 = vadd.f32 0.0, %v987
  %989 = vmatmul.bf16.gmra.mxu0 %v944
  %v990 = vpop.f32.mrf.mxu0
  %v991 = vadd.f32 0.0, %v990
  %v992 = vpop.f32.mrf.mxu0
  %v993 = vadd.f32 0.0, %v992
  %994 = vdwg.mxu0
  %995 = vmatpush.bf16.msra.mxu0 0
  %996 = vmatpush.bf16.msra.mxu0 0
  %997 = vmatpush.bf16.msra.mxu0 0
  %998 = vmatpush.bf16.msra.mxu0 0
  %999 = vmatpush.bf16.msra.mxu0 0
  %1000 = vmatpush.bf16.msra.mxu0 0
  %1001 = vmatpush.bf16.msra.mxu0 %v917
  %1002 = vmatpush.bf16.msra.mxu0 %v915
  %1003 = vmatmul.bf16.gmra.mxu0 %v923
  %v1004 = vpop.f32.mrf.mxu0
  %v1005 = vadd.f32 0.0, %v1004
  %v1006 = vpop.f32.mrf.mxu0
  %v1007 = vadd.f32 0.0, %v1006
  %1008 = vmatmul.bf16.gmra.mxu0 %v926
  %v1009 = vpop.f32.mrf.mxu0
  %v1010 = vadd.f32 0.0, %v1009
  %v1011 = vpop.f32.mrf.mxu0
  %v1012 = vadd.f32 0.0, %v1011
  %1013 = vmatmul.bf16.gmra.mxu0 %v929
  %v1014 = vpop.f32.mrf.mxu0
  %v1015 = vadd.f32 0.0, %v1014
  %v1016 = vpop.f32.mrf.mxu0
  %v1017 = vadd.f32 0.0, %v1016
  %1018 = vmatmul.bf16.gmra.mxu0 %v932
  %v1019 = vpop.f32.mrf.mxu0
  %v1020 = vadd.f32 0.0, %v1019
  %v1021 = vpop.f32.mrf.mxu0
  %v1022 = vadd.f32 0.0, %v1021
  %1023 = vmatmul.bf16.gmra.mxu0 %v935
  %v1024 = vpop.f32.mrf.mxu0
  %v1025 = vadd.f32 0.0, %v1024
  %v1026 = vpop.f32.mrf.mxu0
  %v1027 = vadd.f32 0.0, %v1026
  %1028 = vmatmul.bf16.gmra.mxu0 %v938
  %v1029 = vpop.f32.mrf.mxu0
  %v1030 = vadd.f32 0.0, %v1029
  %v1031 = vpop.f32.mrf.mxu0
  %v1032 = vadd.f32 0.0, %v1031
  %1033 = vmatmul.bf16.gmra.mxu0 %v941
  %v1034 = vpop.f32.mrf.mxu0
  %v1035 = vadd.f32 0.0, %v1034
  %v1036 = vpop.f32.mrf.mxu0
  %v1037 = vadd.f32 0.0, %v1036
  %1038 = vmatmul.bf16.gmra.mxu0 %v944
  %v1039 = vpop.f32.mrf.mxu0
  %v1040 = vadd.f32 0.0, %v1039
  %v1041 = vpop.f32.mrf.mxu0
  %v1042 = vadd.f32 0.0, %v1041
  %1043 = vdwg.mxu0
  %1044 = vst [vmem:[%s8] sm:$0xff] %v956
  %1045 = vst [vmem:[%s8 + $0x8] sm:$0xff] %v1005
  %1046 = vst [vmem:[%s8 + $0x10] sm:$0xff] %v958
  %1047 = vst [vmem:[%s8 + $0x18] sm:$0xff] %v1007
  %1048 = vst [vmem:[%s8 + $0x20] sm:$0xff] %v961
  %1049 = vst [vmem:[%s8 + $0x28] sm:$0xff] %v1010
  %1050 = vst [vmem:[%s8 + $0x30] sm:$0xff] %v963
  %1051 = vst [vmem:[%s8 + $0x38] sm:$0xff] %v1012
  %1052 = vst [vmem:[%s8 + $0x40] sm:$0xff] %v966
  %1053 = vst [vmem:[%s8 + $0x48] sm:$0xff] %v1015
  %1054 = vst [vmem:[%s8 + $0x50] sm:$0xff] %v968
  %1055 = vst [vmem:[%s8 + $0x58] sm:$0xff] %v1017
  %1056 = vst [vmem:[%s8 + $0x60] sm:$0xff] %v971
  %1057 = vst [vmem:[%s8 + $0x68] sm:$0xff] %v1020
  %1058 = vst [vmem:[%s8 + $0x70] sm:$0xff] %v973
  %1059 = vst [vmem:[%s8 + $0x78] sm:$0xff] %v1022
  %1060 = vst [vmem:[%s8 + $0x80] sm:$0xff] %v976
  %1061 = vst [vmem:[%s8 + $0x88] sm:$0xff] %v1025
  %1062 = vst [vmem:[%s8 + $0x90] sm:$0xff] %v978
  %1063 = vst [vmem:[%s8 + $0x98] sm:$0xff] %v1027
  %1064 = vst [vmem:[%s8 + $0xa0] sm:$0xff] %v981
  %1065 = vst [vmem:[%s8 + $0xa8] sm:$0xff] %v1030
  %1066 = vst [vmem:[%s8 + $0xb0] sm:$0xff] %v983
  %1067 = vst [vmem:[%s8 + $0xb8] sm:$0xff] %v1032
  %1068 = vst [vmem:[%s8 + $0xc0] sm:$0xff] %v986
  %1069 = vst [vmem:[%s8 + $0xc8] sm:$0xff] %v1035
  %1070 = vst [vmem:[%s8 + $0xd0] sm:$0xff] %v988
  %1071 = vst [vmem:[%s8 + $0xd8] sm:$0xff] %v1037
  %1072 = vst [vmem:[%s8 + $0xe0] sm:$0xff] %v991
  %1073 = vst [vmem:[%s8 + $0xe8] sm:$0xff] %v1040
  %1074 = vst [vmem:[%s8 + $0xf0] sm:$0xff] %v993
  %1075 = vst [vmem:[%s8 + $0xf8] sm:$0xff] %v1042
  // Predicated region
  $region34: #{nmt_forward.5} parent=0 // pred_check
    _
  $region35: #{nmt_forward.5} parent=0 // pred_check_branch
    %1077 = sbr.rel (0) target = $region37
  $region36: #{nmt_forward.5} parent=0 // pred_region
    _
  $region37: #{nmt_forward.5} parent=0 // pred_fallthru
    _
  // Predicated region
  $region38: #{nmt_forward.5} parent=0 // pred_check
    _
  $region39: #{nmt_forward.5} parent=0 // pred_check_branch
    %1079 = sbr.rel (0) target = $region41
  $region40: #{nmt_forward.5} parent=0 // pred_region
    _
  $region41: #{nmt_forward.5} parent=0 // pred_fallthru
    _

// kernel: nmt_forward.6
$region0: #{nmt_forward.6}
  #allocation0 [shape = 'u32[]', space=smem, size = 0x4, offset = 0x4, fixed_abs, tag = 'smem constant byte address 0x4 - core index']
  #allocation1 [shape = 'u32[72,128]{1,0:T(1,128)}', space=vmem, size = 0x9000, scoped, tag = 'internal scratch']
  #allocation2 [shape = 'f32[8,32]{1,0:T(8,128)}', space=vmem, size = 0x1000, scoped, tag = 'scratch operand']
  #allocation3 [shape = 'f32[8,32]{1,0:T(8,128)}', space=vmem, size = 0x1000, scoped, tag = 'scratch operand']
  #allocation4 [shape = 'f32[8,32]{1,0:T(8,128)}', space=vmem, size = 0x1000, scoped, tag = 'scratch operand']
  #allocation5 [shape = 'f32[8,32]{1,0:T(8,128)}', space=vmem, size = 0x1000, scoped, tag = 'scratch operand']
  %s0 = inlined_call_operand.vmem [shape: f32[8,8,256], index: 0, kind: input, shape index: {}, may-alias: {0,1}]
  %s1 = inlined_call_operand.vmem [shape: f32[8,8,256], index: 1, kind: input, shape index: {}, may-alias: {0,1}]
  %s2 = inlined_call_operand.vmem [shape: f32[8,8,1], index: 2, kind: input, shape index: {}, may-alias: {2,3}]
  %s3 = inlined_call_operand.vmem [shape: f32[8,8,1], index: 3, kind: input, shape index: {}, may-alias: {2,3}]
  %s4 = inlined_call_operand.vmem [shape: f32[32,128], index: 4, kind: input, shape index: {}]
  %s5 = inlined_call_operand.vmem [shape: f32[32,128], index: 5, kind: input, shape index: {}]
  %s6 = inlined_call_operand.vmem [shape: f32[1,128], index: 6, kind: input, shape index: {}]
  %s7 = inlined_call_operand.vmem [shape: f32[1,128], index: 7, kind: input, shape index: {}]
  %s8 = inlined_call_operand.vmem [shape: f32[32,32], index: 8, kind: input, shape index: {}]
  %s9 = inlined_call_operand.vmem [shape: f32[32,32], index: 9, kind: input, shape index: {}]
  %s10 = inlined_call_operand.vmem [shape: f32[32,32], index: 10, kind: input, shape index: {}]
  %s11 = inlined_call_operand.vmem [shape: f32[32,32], index: 11, kind: input, shape index: {}]
  %s12 = inlined_call_operand.vmem [shape: f32[8,8,32], index: 12, kind: output, shape index: {0}]
  %s13 = inlined_call_operand.vmem [shape: f32[8,8,32], index: 13, kind: output, shape index: {1}]
  %s14 = inlined_call_operand.vmem [shape: f32[8,32], index: 14, kind: output, shape index: {2}]
  %s15 = inlined_call_operand.vmem [shape: f32[8,32], index: 15, kind: output, shape index: {3}]
  %16 = xla_tuple %s12, %s13, %s14, %s15
  %s17 = sld [smem:[#allocation0]]
  $region113: #{nmt_forward.6} parent=0
    _
  %s19 = ssub.s32 1, %s17
  %s20 = scalar_select 0, %s19, %s17
  loop: start=0, step=1, limit=10
  $region2: #{nmt_forward.6} parent=0 // loop_pre_header
    _
  $region3: #{nmt_forward.6} parent=0 // loop_header
    %s22 = sphi 0, %s26
    %p23 = scmp.ge.s32.totalorder %s22, 10
    %s32 = sphi 0, %s34
    %s35 = sphi 0, %s32
    %s36 = sphi 0, %s35
    %s52 = sphi 0, %s36
    %s60 = sphi 0, %s62
    %s63 = sphi 0, %s60
    %s64 = sphi 0, %s63
    %s80 = sphi 0, %s64
    %s86 = sphi 0, %s88
    %s89 = sphi 0, %s86
    %s90 = sphi 0, %s89
    %s106 = sphi 0, %s90
    %s114 = sphi 0, %s116
    %s117 = sphi 0, %s114
    %s118 = sphi 0, %s117
    %s134 = sphi 0, %s118
    %s138 = sphi 0, %s138
    %s140 = sphi 0, %s138
    %s141 = sphi 0, %s140
    %s155 = sphi 0, %s141
    %s159 = sphi 0, %s159
    %s161 = sphi 0, %s159
    %s162 = sphi 0, %s161
    %s176 = sphi 0, %s162
    %s180 = sphi 0, %s180
    %s182 = sphi 0, %s180
    %s183 = sphi 0, %s182
    %s197 = sphi 0, %s183
    %s201 = sphi 0, %s201
    %s203 = sphi 0, %s201
    %s204 = sphi 0, %s203
    %s218 = sphi 0, %s204
    %s222 = sphi 0, %s222
    %s224 = sphi 0, %s222
    %s225 = sphi 0, %s224
    %s239 = sphi 0, %s225
    %s243 = sphi 0, %s243
    %s245 = sphi 0, %s243
    %s246 = sphi 0, %s245
    %s260 = sphi 0, %s246
    %s264 = sphi 0, %s264
    %s266 = sphi 0, %s264
    %s267 = sphi 0, %s266
    %s281 = sphi 0, %s267
    %s285 = sphi 0, %s285
    %s287 = sphi 0, %s285
    %s288 = sphi 0, %s287
    %s302 = sphi 0, %s288
    %s308 = sphi 0, %s310
    %s311 = sphi 0, %s308
    %s312 = sphi 0, %s311
    %s328 = sphi 0, %s312
    %s336 = sphi 0, %s338
    %s339 = sphi 0, %s336
    %s340 = sphi 0, %s339
    %s356 = sphi 0, %s340
    %s360 = sphi 0, %s360
    %s362 = sphi 0, %s360
    %s363 = sphi 0, %s362
    %s377 = sphi 0, %s363
    %s381 = sphi 0, %s381
    %s383 = sphi 0, %s381
    %s384 = sphi 0, %s383
    %s398 = sphi 0, %s384
  $region4: #{nmt_forward.6} parent=0 // loop_header_branch
    %25 = sbr.rel (%p23) target = $region8
  $region5: #{nmt_forward.6} parent=0 // loop_body
    %s27 = ssub.s32 %s22, 1
    %s28 = ssub.s32 %s22, 2
    %s29 = sadd.s32 %s22, 1
    %s30 = ssub.s32 %s22, %s29
    %p31 = scmp.eq.s32.totalorder %s30, 0
    %s33 = sadd.s32 %s32, 1
    %s34 = scalar_select %p31, %s32, %s33
    %p37 = pneg %p31
    %p38 = scmp.eq.s32.totalorder %s22, 7
    %p39 = por %p37, %p38
    %p40 = scmp.ne.s32.totalorder %s32, %s35
    %p41 = scmp.eq.s32.totalorder %s22, 0
    %p42 = por %p40, %p41
    %p43 = scmp.ne.s32.totalorder %s32, %s35
    %p44 = scmp.eq.s32.totalorder %s27, 7
    %p45 = por %p43, %p44
    %p46 = scmp.ne.s32.totalorder %s35, %s36
    %p47 = scmp.eq.s32.totalorder %s27, 0
    %p48 = por %p46, %p47
    %p49 = scmp.ne.s32.totalorder %s35, %s36
    %p50 = scmp.eq.s32.totalorder %s28, 7
    %p51 = por %p49, %p50
    %p53 = scmp.ne.s32.totalorder %s36, %s52
    %p54 = scmp.eq.s32.totalorder %s28, 0
    %p55 = por %p53, %p54
    %s56 = ssub.s32 7, %s22
    %s57 = ssub.s32 7, %s29
    %s58 = ssub.s32 %s56, %s57
    %p59 = scmp.eq.s32.totalorder %s58, 0
    %s61 = sadd.s32 %s60, 1
    %s62 = scalar_select %p59, %s60, %s61
    %p65 = pneg %p59
    %p66 = scmp.eq.s32.totalorder %s22, 7
    %p67 = por %p65, %p66
    %p68 = scmp.ne.s32.totalorder %s60, %s63
    %p69 = scmp.eq.s32.totalorder %s22, 0
    %p70 = por %p68, %p69
    %p71 = scmp.ne.s32.totalorder %s60, %s63
    %p72 = scmp.eq.s32.totalorder %s27, 7
    %p73 = por %p71, %p72
    %p74 = scmp.ne.s32.totalorder %s63, %s64
    %p75 = scmp.eq.s32.totalorder %s27, 0
    %p76 = por %p74, %p75
    %p77 = scmp.ne.s32.totalorder %s63, %s64
    %p78 = scmp.eq.s32.totalorder %s28, 7
    %p79 = por %p77, %p78
    %p81 = scmp.ne.s32.totalorder %s64, %s80
    %p82 = scmp.eq.s32.totalorder %s28, 0
    %p83 = por %p81, %p82
    %s84 = ssub.s32 %s22, %s29
    %p85 = scmp.eq.s32.totalorder %s84, 0
    %s87 = sadd.s32 %s86, 1
    %s88 = scalar_select %p85, %s86, %s87
    %p91 = pneg %p85
    %p92 = scmp.eq.s32.totalorder %s22, 7
    %p93 = por %p91, %p92
    %p94 = scmp.ne.s32.totalorder %s86, %s89
    %p95 = scmp.eq.s32.totalorder %s22, 0
    %p96 = por %p94, %p95
    %p97 = scmp.ne.s32.totalorder %s86, %s89
    %p98 = scmp.eq.s32.totalorder %s27, 7
    %p99 = por %p97, %p98
    %p100 = scmp.ne.s32.totalorder %s89, %s90
    %p101 = scmp.eq.s32.totalorder %s27, 0
    %p102 = por %p100, %p101
    %p103 = scmp.ne.s32.totalorder %s89, %s90
    %p104 = scmp.eq.s32.totalorder %s28, 7
    %p105 = por %p103, %p104
    %p107 = scmp.ne.s32.totalorder %s90, %s106
    %p108 = scmp.eq.s32.totalorder %s28, 0
    %p109 = por %p107, %p108
    %s110 = ssub.s32 7, %s22
    %s111 = ssub.s32 7, %s29
    %s112 = ssub.s32 %s110, %s111
    %p113 = scmp.eq.s32.totalorder %s112, 0
    %s115 = sadd.s32 %s114, 1
    %s116 = scalar_select %p113, %s114, %s115
    %p119 = pneg %p113
    %p120 = scmp.eq.s32.totalorder %s22, 7
    %p121 = por %p119, %p120
    %p122 = scmp.ne.s32.totalorder %s114, %s117
    %p123 = scmp.eq.s32.totalorder %s22, 0
    %p124 = por %p122, %p123
    %p125 = scmp.ne.s32.totalorder %s114, %s117
    %p126 = scmp.eq.s32.totalorder %s27, 7
    %p127 = por %p125, %p126
    %p128 = scmp.ne.s32.totalorder %s117, %s118
    %p129 = scmp.eq.s32.totalorder %s27, 0
    %p130 = por %p128, %p129
    %p131 = scmp.ne.s32.totalorder %s117, %s118
    %p132 = scmp.eq.s32.totalorder %s28, 7
    %p133 = por %p131, %p132
    %p135 = scmp.ne.s32.totalorder %s118, %s134
    %p136 = scmp.eq.s32.totalorder %s28, 0
    %p137 = por %p135, %p136
    %s139 = sadd.s32 %s138, 1
    %p142 = scmp.eq.s32.totalorder %s22, 7
    %p143 = scmp.ne.s32.totalorder %s138, %s140
    %p144 = scmp.eq.s32.totalorder %s22, 0
    %p145 = por %p143, %p144
    %p146 = scmp.ne.s32.totalorder %s138, %s140
    %p147 = scmp.eq.s32.totalorder %s27, 7
    %p148 = por %p146, %p147
    %p149 = scmp.ne.s32.totalorder %s140, %s141
    %p150 = scmp.eq.s32.totalorder %s27, 0
    %p151 = por %p149, %p150
    %p152 = scmp.ne.s32.totalorder %s140, %s141
    %p153 = scmp.eq.s32.totalorder %s28, 7
    %p154 = por %p152, %p153
    %p156 = scmp.ne.s32.totalorder %s141, %s155
    %p157 = scmp.eq.s32.totalorder %s28, 0
    %p158 = por %p156, %p157
    %s160 = sadd.s32 %s159, 1
    %p163 = scmp.eq.s32.totalorder %s22, 7
    %p164 = scmp.ne.s32.totalorder %s159, %s161
    %p165 = scmp.eq.s32.totalorder %s22, 0
    %p166 = por %p164, %p165
    %p167 = scmp.ne.s32.totalorder %s159, %s161
    %p168 = scmp.eq.s32.totalorder %s27, 7
    %p169 = por %p167, %p168
    %p170 = scmp.ne.s32.totalorder %s161, %s162
    %p171 = scmp.eq.s32.totalorder %s27, 0
    %p172 = por %p170, %p171
    %p173 = scmp.ne.s32.totalorder %s161, %s162
    %p174 = scmp.eq.s32.totalorder %s28, 7
    %p175 = por %p173, %p174
    %p177 = scmp.ne.s32.totalorder %s162, %s176
    %p178 = scmp.eq.s32.totalorder %s28, 0
    %p179 = por %p177, %p178
    %s181 = sadd.s32 %s180, 1
    %p184 = scmp.eq.s32.totalorder %s22, 7
    %p185 = scmp.ne.s32.totalorder %s180, %s182
    %p186 = scmp.eq.s32.totalorder %s22, 0
    %p187 = por %p185, %p186
    %p188 = scmp.ne.s32.totalorder %s180, %s182
    %p189 = scmp.eq.s32.totalorder %s27, 7
    %p190 = por %p188, %p189
    %p191 = scmp.ne.s32.totalorder %s182, %s183
    %p192 = scmp.eq.s32.totalorder %s27, 0
    %p193 = por %p191, %p192
    %p194 = scmp.ne.s32.totalorder %s182, %s183
    %p195 = scmp.eq.s32.totalorder %s28, 7
    %p196 = por %p194, %p195
    %p198 = scmp.ne.s32.totalorder %s183, %s197
    %p199 = scmp.eq.s32.totalorder %s28, 0
    %p200 = por %p198, %p199
    %s202 = sadd.s32 %s201, 1
    %p205 = scmp.eq.s32.totalorder %s22, 7
    %p206 = scmp.ne.s32.totalorder %s201, %s203
    %p207 = scmp.eq.s32.totalorder %s22, 0
    %p208 = por %p206, %p207
    %p209 = scmp.ne.s32.totalorder %s201, %s203
    %p210 = scmp.eq.s32.totalorder %s27, 7
    %p211 = por %p209, %p210
    %p212 = scmp.ne.s32.totalorder %s203, %s204
    %p213 = scmp.eq.s32.totalorder %s27, 0
    %p214 = por %p212, %p213
    %p215 = scmp.ne.s32.totalorder %s203, %s204
    %p216 = scmp.eq.s32.totalorder %s28, 7
    %p217 = por %p215, %p216
    %p219 = scmp.ne.s32.totalorder %s204, %s218
    %p220 = scmp.eq.s32.totalorder %s28, 0
    %p221 = por %p219, %p220
    %s223 = sadd.s32 %s222, 1
    %p226 = scmp.eq.s32.totalorder %s22, 7
    %p227 = scmp.ne.s32.totalorder %s222, %s224
    %p228 = scmp.eq.s32.totalorder %s22, 0
    %p229 = por %p227, %p228
    %p230 = scmp.ne.s32.totalorder %s222, %s224
    %p231 = scmp.eq.s32.totalorder %s27, 7
    %p232 = por %p230, %p231
    %p233 = scmp.ne.s32.totalorder %s224, %s225
    %p234 = scmp.eq.s32.totalorder %s27, 0
    %p235 = por %p233, %p234
    %p236 = scmp.ne.s32.totalorder %s224, %s225
    %p237 = scmp.eq.s32.totalorder %s28, 7
    %p238 = por %p236, %p237
    %p240 = scmp.ne.s32.totalorder %s225, %s239
    %p241 = scmp.eq.s32.totalorder %s28, 0
    %p242 = por %p240, %p241
    %s244 = sadd.s32 %s243, 1
    %p247 = scmp.eq.s32.totalorder %s22, 7
    %p248 = scmp.ne.s32.totalorder %s243, %s245
    %p249 = scmp.eq.s32.totalorder %s22, 0
    %p250 = por %p248, %p249
    %p251 = scmp.ne.s32.totalorder %s243, %s245
    %p252 = scmp.eq.s32.totalorder %s27, 7
    %p253 = por %p251, %p252
    %p254 = scmp.ne.s32.totalorder %s245, %s246
    %p255 = scmp.eq.s32.totalorder %s27, 0
    %p256 = por %p254, %p255
    %p257 = scmp.ne.s32.totalorder %s245, %s246
    %p258 = scmp.eq.s32.totalorder %s28, 7
    %p259 = por %p257, %p258
    %p261 = scmp.ne.s32.totalorder %s246, %s260
    %p262 = scmp.eq.s32.totalorder %s28, 0
    %p263 = por %p261, %p262
    %s265 = sadd.s32 %s264, 1
    %p268 = scmp.eq.s32.totalorder %s22, 7
    %p269 = scmp.ne.s32.totalorder %s264, %s266
    %p270 = scmp.eq.s32.totalorder %s22, 0
    %p271 = por %p269, %p270
    %p272 = scmp.ne.s32.totalorder %s264, %s266
    %p273 = scmp.eq.s32.totalorder %s27, 7
    %p274 = por %p272, %p273
    %p275 = scmp.ne.s32.totalorder %s266, %s267
    %p276 = scmp.eq.s32.totalorder %s27, 0
    %p277 = por %p275, %p276
    %p278 = scmp.ne.s32.totalorder %s266, %s267
    %p279 = scmp.eq.s32.totalorder %s28, 7
    %p280 = por %p278, %p279
    %p282 = scmp.ne.s32.totalorder %s267, %s281
    %p283 = scmp.eq.s32.totalorder %s28, 0
    %p284 = por %p282, %p283
    %s286 = sadd.s32 %s285, 1
    %p289 = scmp.eq.s32.totalorder %s22, 7
    %p290 = scmp.ne.s32.totalorder %s285, %s287
    %p291 = scmp.eq.s32.totalorder %s22, 0
    %p292 = por %p290, %p291
    %p293 = scmp.ne.s32.totalorder %s285, %s287
    %p294 = scmp.eq.s32.totalorder %s27, 7
    %p295 = por %p293, %p294
    %p296 = scmp.ne.s32.totalorder %s287, %s288
    %p297 = scmp.eq.s32.totalorder %s27, 0
    %p298 = por %p296, %p297
    %p299 = scmp.ne.s32.totalorder %s287, %s288
    %p300 = scmp.eq.s32.totalorder %s28, 7
    %p301 = por %p299, %p300
    %p303 = scmp.ne.s32.totalorder %s288, %s302
    %p304 = scmp.eq.s32.totalorder %s28, 0
    %p305 = por %p303, %p304
    %s306 = ssub.s32 %s22, %s29
    %p307 = scmp.eq.s32.totalorder %s306, 0
    %s309 = sadd.s32 %s308, 1
    %s310 = scalar_select %p307, %s308, %s309
    %p313 = pneg %p307
    %p314 = scmp.eq.s32.totalorder %s22, 7
    %p315 = por %p313, %p314
    %p316 = scmp.ne.s32.totalorder %s308, %s311
    %p317 = scmp.eq.s32.totalorder %s22, 0
    %p318 = por %p316, %p317
    %p319 = scmp.ne.s32.totalorder %s308, %s311
    %p320 = scmp.eq.s32.totalorder %s27, 7
    %p321 = por %p319, %p320
    %p322 = scmp.ne.s32.totalorder %s311, %s312
    %p323 = scmp.eq.s32.totalorder %s27, 0
    %p324 = por %p322, %p323
    %p325 = scmp.ne.s32.totalorder %s311, %s312
    %p326 = scmp.eq.s32.totalorder %s28, 7
    %p327 = por %p325, %p326
    %p329 = scmp.ne.s32.totalorder %s312, %s328
    %p330 = scmp.eq.s32.totalorder %s28, 0
    %p331 = por %p329, %p330
    %s332 = ssub.s32 7, %s22
    %s333 = ssub.s32 7, %s29
    %s334 = ssub.s32 %s332, %s333
    %p335 = scmp.eq.s32.totalorder %s334, 0
    %s337 = sadd.s32 %s336, 1
    %s338 = scalar_select %p335, %s336, %s337
    %p341 = pneg %p335
    %p342 = scmp.eq.s32.totalorder %s22, 7
    %p343 = por %p341, %p342
    %p344 = scmp.ne.s32.totalorder %s336, %s339
    %p345 = scmp.eq.s32.totalorder %s22, 0
    %p346 = por %p344, %p345
    %p347 = scmp.ne.s32.totalorder %s336, %s339
    %p348 = scmp.eq.s32.totalorder %s27, 7
    %p349 = por %p347, %p348
    %p350 = scmp.ne.s32.totalorder %s339, %s340
    %p351 = scmp.eq.s32.totalorder %s27, 0
    %p352 = por %p350, %p351
    %p353 = scmp.ne.s32.totalorder %s339, %s340
    %p354 = scmp.eq.s32.totalorder %s28, 7
    %p355 = por %p353, %p354
    %p357 = scmp.ne.s32.totalorder %s340, %s356
    %p358 = scmp.eq.s32.totalorder %s28, 0
    %p359 = por %p357, %p358
    %s361 = sadd.s32 %s360, 1
    %p364 = scmp.eq.s32.totalorder %s22, 7
    %p365 = scmp.ne.s32.totalorder %s360, %s362
    %p366 = scmp.eq.s32.totalorder %s22, 0
    %p367 = por %p365, %p366
    %p368 = scmp.ne.s32.totalorder %s360, %s362
    %p369 = scmp.eq.s32.totalorder %s27, 7
    %p370 = por %p368, %p369
    %p371 = scmp.ne.s32.totalorder %s362, %s363
    %p372 = scmp.eq.s32.totalorder %s27, 0
    %p373 = por %p371, %p372
    %p374 = scmp.ne.s32.totalorder %s362, %s363
    %p375 = scmp.eq.s32.totalorder %s28, 7
    %p376 = por %p374, %p375
    %p378 = scmp.ne.s32.totalorder %s363, %s377
    %p379 = scmp.eq.s32.totalorder %s28, 0
    %p380 = por %p378, %p379
    %s382 = sadd.s32 %s381, 1
    %p385 = scmp.eq.s32.totalorder %s22, 7
    %p386 = scmp.ne.s32.totalorder %s381, %s383
    %p387 = scmp.eq.s32.totalorder %s22, 0
    %p388 = por %p386, %p387
    %p389 = scmp.ne.s32.totalorder %s381, %s383
    %p390 = scmp.eq.s32.totalorder %s27, 7
    %p391 = por %p389, %p390
    %p392 = scmp.ne.s32.totalorder %s383, %s384
    %p393 = scmp.eq.s32.totalorder %s27, 0
    %p394 = por %p392, %p393
    %p395 = scmp.ne.s32.totalorder %s383, %s384
    %p396 = scmp.eq.s32.totalorder %s28, 7
    %p397 = por %p395, %p396
    %p399 = scmp.ne.s32.totalorder %s384, %s398
    %p400 = scmp.eq.s32.totalorder %s28, 0
    %p401 = por %p399, %p400
    %p402 = scmp.le.s32.totalorder 1, %s22
    %p403 = scmp.lt.s32.totalorder %s22, 9
    %p404 = pnand %p402, %p403
    %p405 = pneg %p404
    // Predicated region
    $region9: #{nmt_forward.6} parent=5 // pred_check
      _
    $region10: #{nmt_forward.6} parent=5 // pred_check_branch
      %407 = sbr.rel (%p404) target = $region12
    $region11: #{nmt_forward.6} parent=5 // pred_region
      %s408 = ssub.s32 %s22, 1
      // Predicated region
      $region13: #{nmt_forward.6} parent=11 // pred_check
        %p409 = pneg %p151
      $region14: #{nmt_forward.6} parent=11 // pred_check_branch
        %411 = sbr.rel (%p409) target = $region16
      $region15: #{nmt_forward.6} parent=11 // pred_region
        _
      $region16: #{nmt_forward.6} parent=11 // pred_fallthru
        _
      // Predicated region
      $region17: #{nmt_forward.6} parent=11 // pred_check
        %p412 = pneg %p172
      $region18: #{nmt_forward.6} parent=11 // pred_check_branch
        %414 = sbr.rel (%p412) target = $region20
      $region19: #{nmt_forward.6} parent=11 // pred_region
        _
      $region20: #{nmt_forward.6} parent=11 // pred_fallthru
        _
      // Predicated region
      $region21: #{nmt_forward.6} parent=11 // pred_check
        %p415 = pneg %p193
      $region22: #{nmt_forward.6} parent=11 // pred_check_branch
        %417 = sbr.rel (%p415) target = $region24
      $region23: #{nmt_forward.6} parent=11 // pred_region
        _
      $region24: #{nmt_forward.6} parent=11 // pred_fallthru
        _
      // Predicated region
      $region25: #{nmt_forward.6} parent=11 // pred_check
        %p418 = pneg %p214
      $region26: #{nmt_forward.6} parent=11 // pred_check_branch
        %420 = sbr.rel (%p418) target = $region28
      $region27: #{nmt_forward.6} parent=11 // pred_region
        _
      $region28: #{nmt_forward.6} parent=11 // pred_fallthru
        _
      // Predicated region
      $region29: #{nmt_forward.6} parent=11 // pred_check
        %p421 = pneg %p235
      $region30: #{nmt_forward.6} parent=11 // pred_check_branch
        %423 = sbr.rel (%p421) target = $region32
      $region31: #{nmt_forward.6} parent=11 // pred_region
        _
      $region32: #{nmt_forward.6} parent=11 // pred_fallthru
        _
      // Predicated region
      $region33: #{nmt_forward.6} parent=11 // pred_check
        %p424 = pneg %p256
      $region34: #{nmt_forward.6} parent=11 // pred_check_branch
        %426 = sbr.rel (%p424) target = $region36
      $region35: #{nmt_forward.6} parent=11 // pred_region
        _
      $region36: #{nmt_forward.6} parent=11 // pred_fallthru
        _
      // Predicated region
      $region37: #{nmt_forward.6} parent=11 // pred_check
        %p427 = pneg %p277
      $region38: #{nmt_forward.6} parent=11 // pred_check_branch
        %429 = sbr.rel (%p427) target = $region40
      $region39: #{nmt_forward.6} parent=11 // pred_region
        _
      $region40: #{nmt_forward.6} parent=11 // pred_fallthru
        _
      // Predicated region
      $region41: #{nmt_forward.6} parent=11 // pred_check
        %p430 = pneg %p298
      $region42: #{nmt_forward.6} parent=11 // pred_check_branch
        %432 = sbr.rel (%p430) target = $region44
      $region43: #{nmt_forward.6} parent=11 // pred_region
        _
      $region44: #{nmt_forward.6} parent=11 // pred_fallthru
        _
    $region12: #{nmt_forward.6} parent=5 // pred_fallthru
      _
    %p433 = scmp.lt.s32.totalorder %s22, 8
    // Predicated region
    $region45: #{nmt_forward.6} parent=5 // pred_check
      %p434 = pneg %p433
    $region46: #{nmt_forward.6} parent=5 // pred_check_branch
      %436 = sbr.rel (%p434) target = $region48
    $region47: #{nmt_forward.6} parent=5 // pred_region
      // Predicated region
      $region49: #{nmt_forward.6} parent=47 // pred_check
        %p437 = pneg %p42
      $region50: #{nmt_forward.6} parent=47 // pred_check_branch
        %439 = sbr.rel (%p437) target = $region52
      $region51: #{nmt_forward.6} parent=47 // pred_region
        %p440 = scmp.lt.s32.totalorder %s22, 7
        %s441 = scalar_select %p440, %s22, 7
        %s442 = smul.addr %s441, 2
        %s443 = smul.addr %s442, 8
        %s444 = scalar_lea.vmem %s0, %s443
      $region52: #{nmt_forward.6} parent=47 // pred_fallthru
        _
      // Predicated region
      $region53: #{nmt_forward.6} parent=47 // pred_check
        %p445 = pneg %p70
      $region54: #{nmt_forward.6} parent=47 // pred_check_branch
        %447 = sbr.rel (%p445) target = $region56
      $region55: #{nmt_forward.6} parent=47 // pred_region
        %s448 = ssub.s32 7, %s22
        %p449 = scmp.lt.s32.totalorder %s448, 7
        %s450 = scalar_select %p449, %s448, 7
        %s451 = smul.addr %s450, 2
        %s452 = sadd.s32 1, %s451
        %s453 = smul.addr %s452, 8
        %s454 = scalar_lea.vmem %s1, %s453
        %s455 = ssub.s32 7, %s22
      $region56: #{nmt_forward.6} parent=47 // pred_fallthru
        _
      // Predicated region
      $region57: #{nmt_forward.6} parent=47 // pred_check
        %p456 = pneg %p96
      $region58: #{nmt_forward.6} parent=47 // pred_check_branch
        %458 = sbr.rel (%p456) target = $region60
      $region59: #{nmt_forward.6} parent=47 // pred_region
        %p459 = scmp.lt.s32.totalorder %s22, 7
        %s460 = scalar_select %p459, %s22, 7
        %s461 = smul.addr %s460, 8
        %s462 = scalar_lea.vmem %s2, %s461
      $region60: #{nmt_forward.6} parent=47 // pred_fallthru
        _
      // Predicated region
      $region61: #{nmt_forward.6} parent=47 // pred_check
        %p463 = pneg %p124
      $region62: #{nmt_forward.6} parent=47 // pred_check_branch
        %465 = sbr.rel (%p463) target = $region64
      $region63: #{nmt_forward.6} parent=47 // pred_region
        %s466 = ssub.s32 7, %s22
        %p467 = scmp.lt.s32.totalorder %s466, 7
        %s468 = scalar_select %p467, %s466, 7
        %s469 = smul.addr %s468, 8
        %s470 = scalar_lea.vmem %s3, %s469
        %s471 = ssub.s32 7, %s22
      $region64: #{nmt_forward.6} parent=47 // pred_fallthru
        _
    $region48: #{nmt_forward.6} parent=5 // pred_fallthru
      _
    %p472 = scmp.le.s32.totalorder 1, %s22
    %p473 = scmp.lt.s32.totalorder %s22, 9
    %p474 = pnand %p472, %p473
    %p475 = pneg %p474
    // Predicated region
    $region65: #{nmt_forward.6} parent=5 // pred_check
      _
    $region66: #{nmt_forward.6} parent=5 // pred_check_branch
      %477 = sbr.rel (%p474) target = $region68
    $region67: #{nmt_forward.6} parent=5 // pred_region
      %s478 = ssub.s32 %s22, 1
      %p479 = scmp.lt.s32.totalorder %s27, 7
      %s480 = scalar_select %p479, %s27, 7
      %s481 = smul.addr %s480, 2
      %s482 = smul.addr %s481, 8
      %s483 = scalar_lea.vmem %s0, %s482
      %p484 = pneg %p48
      %p485 = pneg %p45
      %s486 = ssub.s32 7, %s27
      %p487 = scmp.lt.s32.totalorder %s486, 7
      %s488 = scalar_select %p487, %s486, 7
      %s489 = smul.addr %s488, 2
      %s490 = sadd.s32 1, %s489
      %s491 = smul.addr %s490, 8
      %s492 = scalar_lea.vmem %s1, %s491
      %p493 = pneg %p76
      %p494 = pneg %p73
      %p495 = scmp.lt.s32.totalorder %s27, 7
      %s496 = scalar_select %p495, %s27, 7
      %s497 = smul.addr %s496, 8
      %s498 = scalar_lea.vmem %s2, %s497
      %p499 = pneg %p102
      %p500 = pneg %p99
      %s501 = ssub.s32 7, %s27
      %p502 = scmp.lt.s32.totalorder %s501, 7
      %s503 = scalar_select %p502, %s501, 7
      %s504 = smul.addr %s503, 8
      %s505 = scalar_lea.vmem %s3, %s504
      %p506 = pneg %p130
      %p507 = pneg %p127
      %p508 = pneg %p151
      %p509 = pneg %p148
      %p510 = pneg %p172
      %p511 = pneg %p169
      %p512 = pneg %p193
      %p513 = pneg %p190
      %p514 = pneg %p214
      %p515 = pneg %p211
      %p516 = pneg %p235
      %p517 = pneg %p232
      %p518 = pneg %p256
      %p519 = pneg %p253
      %p520 = pneg %p277
      %p521 = pneg %p274
      %p522 = pneg %p298
      %p523 = pneg %p295
      %p524 = pneg %p324
      %p525 = pneg %p321
      %p526 = scmp.lt.s32.totalorder %s27, 7
      %s527 = scalar_select %p526, %s27, 7
      %s528 = smul.addr %s527, 8
      %s529 = scalar_lea.vmem %s12, %s528
      %p530 = pneg %p352
      %p531 = pneg %p349
      %s532 = ssub.s32 7, %s27
      %p533 = scmp.lt.s32.totalorder %s532, 7
      %s534 = scalar_select %p533, %s532, 7
      %s535 = smul.addr %s534, 8
      %s536 = scalar_lea.vmem %s13, %s535
      %p537 = pneg %p373
      %p538 = pneg %p370
      %p539 = pneg %p394
      %p540 = pneg %p391
      %p541 = scmp.lt.s32.totalorder %s27, 7
      %s542 = scalar_select %p541, %s27, 7
      %s543 = smul.addr %s542, 2
      %s544 = smul.addr %s543, 8
      %s545 = scalar_lea.vmem %s0, %s544
      %s546 = ssub.s32 7, %s27
      %p547 = scmp.lt.s32.totalorder %s546, 7
      %s548 = scalar_select %p547, %s546, 7
      %s549 = smul.addr %s548, 2
      %s550 = sadd.s32 1, %s549
      %s551 = smul.addr %s550, 8
      %s552 = scalar_lea.vmem %s1, %s551
      %s553 = ssub.s32 7, %s27
      %p554 = scmp.lt.s32.totalorder %s27, 7
      %s555 = scalar_select %p554, %s27, 7
      %s556 = smul.addr %s555, 8
      %s557 = scalar_lea.vmem %s2, %s556
      %s558 = ssub.s32 7, %s27
      %p559 = scmp.lt.s32.totalorder %s558, 7
      %s560 = scalar_select %p559, %s558, 7
      %s561 = smul.addr %s560, 8
      %s562 = scalar_lea.vmem %s3, %s561
      %s563 = ssub.s32 7, %s27
      %p564 = scmp.lt.s32.totalorder %s27, 7
      %s565 = scalar_select %p564, %s27, 7
      %s566 = smul.addr %s565, 8
      %s567 = scalar_lea.vmem %s12, %s566
      %s568 = ssub.s32 7, %s27
      %p569 = scmp.lt.s32.totalorder %s568, 7
      %s570 = scalar_select %p569, %s568, 7
      %s571 = smul.addr %s570, 8
      %s572 = scalar_lea.vmem %s13, %s571
      %s573 = ssub.s32 7, %s27
      %p574 = scmp.eq.s32.totalorder %s27, 0
      // Predicated region
      $region69: #{nmt_forward.6} parent=67 // pred_check
        %p575 = pneg %p574
      $region70: #{nmt_forward.6} parent=67 // pred_check_branch
        %577 = sbr.rel (%p575) target = $region72
      $region71: #{nmt_forward.6} parent=67 // pred_region
        %vm578 = vcmask 261120
        %579 = vst.msk [vmem:[#allocation2] sm:$0xff] %vm578, 0.0
        %580 = vst.msk [vmem:[#allocation3] sm:$0xff] %vm578, 0.0
        %581 = vst.msk [vmem:[#allocation4] sm:$0xff] %vm578, 0.0
        %582 = vst.msk [vmem:[#allocation5] sm:$0xff] %vm578, 0.0
      $region72: #{nmt_forward.6} parent=67 // pred_fallthru
        _
      %v583 = vld [vmem:[%s557] sm:$0xff]
      %v584 = vld [vmem:[%s562] sm:$0xff]
      %v585 = vld [vmem:[%s545] sm:$0xff]
      %v586 = vld [vmem:[#allocation2] sm:$0xff]
      %v587 = vld [vmem:[#allocation3] sm:$0xff]
      %v588 = vld [vmem:[%s4] sm:$0xff]
      %v589 = vld [vmem:[%s4 + $0x8] sm:$0xff]
      %v590 = vld [vmem:[%s4 + $0x10] sm:$0xff]
      %v591 = vld [vmem:[%s4 + $0x18] sm:$0xff]
      %v592 = vld [vmem:[%s6] sm:$0x1]
      %vm593 = vcmask 261120
      %v595 = vsel %vm593, %v586, 0
      %597 = vmatpush.msra.mxu0 0.0
      %598 = vmatpush.msra.mxu0 0.0
      %599 = vmatpush.msra.mxu0 0.0
      %600 = vmatpush.msra.mxu0 0.0
      %601 = vmatpush.msra.mxu0 0.0
      %602 = vmatpush.msra.mxu0 0.0
      %603 = vmatpush.msra.mxu0 0.0
      %604 = vmatpush.msra.mxu0 0.0
      %605 = vmatpush.msra.mxu0 0.0
      %606 = vmatpush.msra.mxu0 0.0
      %607 = vmatpush.msra.mxu0 0.0
      %608 = vmatpush.msra.mxu0 0.0
      %609 = vmatpush.msra.mxu0 %v591
      %610 = vmatpush.msra.mxu0 %v590
      %611 = vmatpush.msra.mxu0 %v589
      %612 = vmatpush.msra.mxu0 %v588
      %613 = vmatmul.f32.gmra.mxu0 %v595
      %v614 = vpop.f32.mrf.mxu0
      %v615 = vadd.f32 0.0, %v614
      %616 = vdwg.mxu0
      %v617 = vadd.f32 %v585, %v615
      %v619 = vperm.slane %v592, 0
      %v621 = vadd.f32 %v617, %v619
      %v622 = vsub.f32 0.0, %v621
      %v623 = vmul.f32 %v622, 1.442695
      %v624 = vpow.pop %v623
      %v625 = vadd.f32 %v624, 1.0
      %v626 = vrcp.pop %v625
      %v627 = vtanh.pop %v621
      %629 = vrot.lane.b32.xlu0 %v587, 32
      %v630 = vpop.permute.xlu0 %629
      %v632 = vmul.f32 %v626, %v630
      %634 = vrot.lane.b32.xlu0 %v627, 64
      %v635 = vpop.permute.xlu0 %634
      %v637 = vmul.f32 %v626, %v635
      %639 = vrot.lane.b32.xlu0 %v637, 32
      %v640 = vpop.permute.xlu0 %639
      %v642 = vadd.f32 %v632, %v640
      %v643 = vtanh.pop %v642
      %645 = vrot.lane.b32.xlu0 %v643, 64
      %v646 = vpop.permute.xlu0 %645
      %v648 = vmul.f32 %v626, %v646
      %v649 = vld [vmem:[%s552] sm:$0xff]
      %v650 = vld [vmem:[#allocation4] sm:$0xff]
      %v651 = vld [vmem:[#allocation5] sm:$0xff]
      %v652 = vld [vmem:[%s5] sm:$0xff]
      %v653 = vld [vmem:[%s5 + $0x8] sm:$0xff]
      %v654 = vld [vmem:[%s5 + $0x10] sm:$0xff]
      %v655 = vld [vmem:[%s5 + $0x18] sm:$0xff]
      %v656 = vld [vmem:[%s7] sm:$0x1]
      %v658 = vsel %vm593, %v650, 0
      %660 = vmatpush.msra.mxu0 0.0
      %661 = vmatpush.msra.mxu0 0.0
      %662 = vmatpush.msra.mxu0 0.0
      %663 = vmatpush.msra.mxu0 0.0
      %664 = vmatpush.msra.mxu0 0.0
      %665 = vmatpush.msra.mxu0 0.0
      %666 = vmatpush.msra.mxu0 0.0
      %667 = vmatpush.msra.mxu0 0.0
      %668 = vmatpush.msra.mxu0 0.0
      %669 = vmatpush.msra.mxu0 0.0
      %670 = vmatpush.msra.mxu0 0.0
      %671 = vmatpush.msra.mxu0 0.0
      %672 = vmatpush.msra.mxu0 %v655
      %673 = vmatpush.msra.mxu0 %v654
      %674 = vmatpush.msra.mxu0 %v653
      %675 = vmatpush.msra.mxu0 %v652
      %676 = vmatmul.f32.gmra.mxu0 %v658
      %v677 = vpop.f32.mrf.mxu0
      %v678 = vadd.f32 0.0, %v677
      %679 = vdwg.mxu0
      %v680 = vadd.f32 %v649, %v678
      %v682 = vperm.slane %v656, 0
      %v684 = vadd.f32 %v680, %v682
      %v685 = vsub.f32 0.0, %v684
      %v686 = vmul.f32 %v685, 1.442695
      %v687 = vpow.pop %v686
      %v688 = vadd.f32 %v687, 1.0
      %v689 = vrcp.pop %v688
      %v690 = vtanh.pop %v684
      %692 = vrot.lane.b32.xlu0 %v651, 32
      %v693 = vpop.permute.xlu0 %692
      %v695 = vmul.f32 %v689, %v693
      %697 = vrot.lane.b32.xlu0 %v690, 64
      %v698 = vpop.permute.xlu0 %697
      %v700 = vmul.f32 %v689, %v698
      %702 = vrot.lane.b32.xlu0 %v700, 32
      %v703 = vpop.permute.xlu0 %702
      %v705 = vadd.f32 %v695, %v703
      %v706 = vtanh.pop %v705
      %708 = vrot.lane.b32.xlu0 %v706, 64
      %v709 = vpop.permute.xlu0 %708
      %v711 = vmul.f32 %v689, %v709
      %vm712 = vcmp.gt.f32.partialorder %v583, 0.0
      %v713 = vsel %vm712, 1, 0
      %714 = vset.pattern.permute.xlu0 0
      %715 = vperm.xlu0 %714, %v713
      %v716 = vpop.permute.xlu0 %715
      %vm717 = vcmp.eq.s32.totalorder %v716, 1
      %718 = vrot.lane.b32.xlu0 %v586, 96
      %v719 = vpop.permute.xlu0 %718
      %v721 = vsel %vm717, %v648, %v719
      %723 = vrot.lane.b32.xlu0 %v721, 32
      %v724 = vpop.permute.xlu0 %723
      %726 = vst.msk [vmem:[#allocation2] sm:$0xff] %vm593, %v724
      %v727 = vld [vmem:[#allocation3] sm:$0xff]
      %729 = vrot.lane.b32.xlu0 %v727, 32
      %v730 = vpop.permute.xlu0 %729
      %v732 = vsel %vm717, %v642, %v730
      %734 = vrot.lane.b32.xlu0 %v732, 96
      %v735 = vpop.permute.xlu0 %734
      %737 = vst.msk [vmem:[#allocation3] sm:$0xff] %vm593, %v735
      %vm738 = vcmp.gt.f32.partialorder %v584, 0.0
      %v739 = vld [vmem:[#allocation4] sm:$0xff]
      %v740 = vsel %vm738, 1, 0
      %741 = vset.pattern.permute.xlu0 0
      %742 = vperm.xlu0 %741, %v740
      %v743 = vpop.permute.xlu0 %742
      %vm744 = vcmp.eq.s32.totalorder %v743, 1
      %746 = vrot.lane.b32.xlu0 %v739, 96
      %v747 = vpop.permute.xlu0 %746
      %v749 = vsel %vm744, %v711, %v747
      %751 = vrot.lane.b32.xlu0 %v749, 32
      %v752 = vpop.permute.xlu0 %751
      %754 = vst.msk [vmem:[#allocation4] sm:$0xff] %vm593, %v752
      %v755 = vld [vmem:[#allocation5] sm:$0xff]
      %757 = vrot.lane.b32.xlu0 %v755, 32
      %v758 = vpop.permute.xlu0 %757
      %v760 = vsel %vm744, %v705, %v758
      %762 = vrot.lane.b32.xlu0 %v760, 96
      %v763 = vpop.permute.xlu0 %762
      %765 = vst.msk [vmem:[#allocation5] sm:$0xff] %vm593, %v763
      %v766 = vsel %vm717, %v648, 0.0
      %768 = vrot.lane.b32.xlu0 %v766, 32
      %v769 = vpop.permute.xlu0 %768
      %771 = vst.msk [vmem:[%s567] sm:$0xff] %vm593, %v769
      %v772 = vsel %vm744, %v711, 0.0
      %774 = vrot.lane.b32.xlu0 %v772, 32
      %v775 = vpop.permute.xlu0 %774
      %777 = vst.msk [vmem:[%s572] sm:$0xff] %vm593, %v775
      %p778 = scmp.eq.s32.totalorder %s27, 7
      // Predicated region
      $region73: #{nmt_forward.6} parent=67 // pred_check
        %p779 = pneg %p778
      $region74: #{nmt_forward.6} parent=67 // pred_check_branch
        %781 = sbr.rel (%p779) target = $region76
      $region75: #{nmt_forward.6} parent=67 // pred_region
        %v782 = vld [vmem:[#allocation2] sm:$0xff]
        %v783 = vld [vmem:[%s8] sm:$0xff]
        %v784 = vld [vmem:[%s8 + $0x8] sm:$0xff]
        %v785 = vld [vmem:[%s8 + $0x10] sm:$0xff]
        %v786 = vld [vmem:[%s8 + $0x18] sm:$0xff]
        %v787 = vld [vmem:[#allocation4] sm:$0xff]
        %v788 = vld [vmem:[%s9] sm:$0xff]
        %v789 = vld [vmem:[%s9 + $0x8] sm:$0xff]
        %v790 = vld [vmem:[%s9 + $0x10] sm:$0xff]
        %v791 = vld [vmem:[%s9 + $0x18] sm:$0xff]
        %v793 = vsel %vm593, %v787, 0
        %795 = vmatpush.msra.mxu0 0.0
        %796 = vmatpush.msra.mxu0 0.0
        %797 = vmatpush.msra.mxu0 0.0
        %798 = vmatpush.msra.mxu0 0.0
        %799 = vmatpush.msra.mxu0 0.0
        %800 = vmatpush.msra.mxu0 0.0
        %801 = vmatpush.msra.mxu0 0.0
        %802 = vmatpush.msra.mxu0 0.0
        %803 = vmatpush.msra.mxu0 0.0
        %804 = vmatpush.msra.mxu0 0.0
        %805 = vmatpush.msra.mxu0 0.0
        %806 = vmatpush.msra.mxu0 0.0
        %807 = vmatpush.msra.mxu0 %v791
        %808 = vmatpush.msra.mxu0 %v790
        %809 = vmatpush.msra.mxu0 %v789
        %810 = vmatpush.msra.mxu0 %v788
        %811 = vmatmul.f32.gmra.mxu0 %v793
        %v812 = vpop.f32.mrf.mxu0
        %v813 = vadd.f32 0.0, %v812
        %814 = vdwg.mxu0
        %v816 = vsel %vm593, %v782, 0
        %818 = vmatpush.msra.mxu0 0.0
        %819 = vmatpush.msra.mxu0 0.0
        %820 = vmatpush.msra.mxu0 0.0
        %821 = vmatpush.msra.mxu0 0.0
        %822 = vmatpush.msra.mxu0 0.0
        %823 = vmatpush.msra.mxu0 0.0
        %824 = vmatpush.msra.mxu0 0.0
        %825 = vmatpush.msra.mxu0 0.0
        %826 = vmatpush.msra.mxu0 0.0
        %827 = vmatpush.msra.mxu0 0.0
        %828 = vmatpush.msra.mxu0 0.0
        %829 = vmatpush.msra.mxu0 0.0
        %830 = vmatpush.msra.mxu0 %v786
        %831 = vmatpush.msra.mxu0 %v785
        %832 = vmatpush.msra.mxu0 %v784
        %833 = vmatpush.msra.mxu0 %v783
        %834 = vmatmul.f32.gmra.mxu0 %v816
        %v835 = vpop.f32.mrf.mxu0
        %v836 = vadd.f32 %v813, %v835
        %837 = vdwg.mxu0
        %838 = vst.msk [vmem:[%s14] sm:$0xff] %vm593, %v836
        %v839 = vld [vmem:[#allocation3] sm:$0xff]
        %v840 = vld [vmem:[%s10] sm:$0xff]
        %v841 = vld [vmem:[%s10 + $0x8] sm:$0xff]
        %v842 = vld [vmem:[%s10 + $0x10] sm:$0xff]
        %v843 = vld [vmem:[%s10 + $0x18] sm:$0xff]
        %v844 = vld [vmem:[#allocation5] sm:$0xff]
        %v845 = vld [vmem:[%s11] sm:$0xff]
        %v846 = vld [vmem:[%s11 + $0x8] sm:$0xff]
        %v847 = vld [vmem:[%s11 + $0x10] sm:$0xff]
        %v848 = vld [vmem:[%s11 + $0x18] sm:$0xff]
        %v850 = vsel %vm593, %v844, 0
        %852 = vmatpush.msra.mxu0 0.0
        %853 = vmatpush.msra.mxu0 0.0
        %854 = vmatpush.msra.mxu0 0.0
        %855 = vmatpush.msra.mxu0 0.0
        %856 = vmatpush.msra.mxu0 0.0
        %857 = vmatpush.msra.mxu0 0.0
        %858 = vmatpush.msra.mxu0 0.0
        %859 = vmatpush.msra.mxu0 0.0
        %860 = vmatpush.msra.mxu0 0.0
        %861 = vmatpush.msra.mxu0 0.0
        %862 = vmatpush.msra.mxu0 0.0
        %863 = vmatpush.msra.mxu0 0.0
        %864 = vmatpush.msra.mxu0 %v848
        %865 = vmatpush.msra.mxu0 %v847
        %866 = vmatpush.msra.mxu0 %v846
        %867 = vmatpush.msra.mxu0 %v845
        %868 = vmatmul.f32.gmra.mxu0 %v850
        %v869 = vpop.f32.mrf.mxu0
        %v870 = vadd.f32 0.0, %v869
        %871 = vdwg.mxu0
        %v873 = vsel %vm593, %v839, 0
        %875 = vmatpush.msra.mxu0 0.0
        %876 = vmatpush.msra.mxu0 0.0
        %877 = vmatpush.msra.mxu0 0.0
        %878 = vmatpush.msra.mxu0 0.0
        %879 = vmatpush.msra.mxu0 0.0
        %880 = vmatpush.msra.mxu0 0.0
        %881 = vmatpush.msra.mxu0 0.0
        %882 = vmatpush.msra.mxu0 0.0
        %883 = vmatpush.msra.mxu0 0.0
        %884 = vmatpush.msra.mxu0 0.0
        %885 = vmatpush.msra.mxu0 0.0
        %886 = vmatpush.msra.mxu0 0.0
        %887 = vmatpush.msra.mxu0 %v843
        %888 = vmatpush.msra.mxu0 %v842
        %889 = vmatpush.msra.mxu0 %v841
        %890 = vmatpush.msra.mxu0 %v840
        %891 = vmatmul.f32.gmra.mxu0 %v873
        %v892 = vpop.f32.mrf.mxu0
        %v893 = vadd.f32 %v870, %v892
        %894 = vdwg.mxu0
        %895 = vst.msk [vmem:[%s15] sm:$0xff] %vm593, %v893
      $region76: #{nmt_forward.6} parent=67 // pred_fallthru
        _
      %p896 = scmp.lt.s32.totalorder %s27, 7
      %s897 = scalar_select %p896, %s27, 7
      %s898 = smul.addr %s897, 8
      %s899 = scalar_lea.vmem %s12, %s898
      %s900 = ssub.s32 7, %s27
      %p901 = scmp.lt.s32.totalorder %s900, 7
      %s902 = scalar_select %p901, %s900, 7
      %s903 = smul.addr %s902, 8
      %s904 = scalar_lea.vmem %s13, %s903
      // Predicated region
      $region77: #{nmt_forward.6} parent=67 // pred_check
        %p905 = pneg %p321
      $region78: #{nmt_forward.6} parent=67 // pred_check_branch
        %907 = sbr.rel (%p905) target = $region80
      $region79: #{nmt_forward.6} parent=67 // pred_region
        _
      $region80: #{nmt_forward.6} parent=67 // pred_fallthru
        _
      // Predicated region
      $region81: #{nmt_forward.6} parent=67 // pred_check
        %p908 = pneg %p349
      $region82: #{nmt_forward.6} parent=67 // pred_check_branch
        %910 = sbr.rel (%p908) target = $region84
      $region83: #{nmt_forward.6} parent=67 // pred_region
        %s911 = ssub.s32 7, %s27
      $region84: #{nmt_forward.6} parent=67 // pred_fallthru
        _
      // Predicated region
      $region85: #{nmt_forward.6} parent=67 // pred_check
        %p912 = pneg %p370
      $region86: #{nmt_forward.6} parent=67 // pred_check_branch
        %914 = sbr.rel (%p912) target = $region88
      $region87: #{nmt_forward.6} parent=67 // pred_region
        _
      $region88: #{nmt_forward.6} parent=67 // pred_fallthru
        _
      // Predicated region
      $region89: #{nmt_forward.6} parent=67 // pred_check
        %p915 = pneg %p391
      $region90: #{nmt_forward.6} parent=67 // pred_check_branch
        %917 = sbr.rel (%p915) target = $region92
      $region91: #{nmt_forward.6} parent=67 // pred_region
        _
      $region92: #{nmt_forward.6} parent=67 // pred_fallthru
        _
      // Predicated region
      $region93: #{nmt_forward.6} parent=67 // pred_check
        %p918 = pneg %p370
      $region94: #{nmt_forward.6} parent=67 // pred_check_branch
        %920 = sbr.rel (%p918) target = $region96
      $region95: #{nmt_forward.6} parent=67 // pred_region
        _
      $region96: #{nmt_forward.6} parent=67 // pred_fallthru
        _
      // Predicated region
      $region97: #{nmt_forward.6} parent=67 // pred_check
        %p921 = pneg %p391
      $region98: #{nmt_forward.6} parent=67 // pred_check_branch
        %923 = sbr.rel (%p921) target = $region100
      $region99: #{nmt_forward.6} parent=67 // pred_region
        _
      $region100: #{nmt_forward.6} parent=67 // pred_fallthru
        _
    $region68: #{nmt_forward.6} parent=5 // pred_fallthru
      _
    %p924 = scmp.le.s32.totalorder 2, %s22
    // Predicated region
    $region101: #{nmt_forward.6} parent=5 // pred_check
      %p925 = pneg %p924
    $region102: #{nmt_forward.6} parent=5 // pred_check_branch
      %927 = sbr.rel (%p925) target = $region104
    $region103: #{nmt_forward.6} parent=5 // pred_region
      %s928 = ssub.s32 %s22, 2
      // Predicated region
      $region105: #{nmt_forward.6} parent=103 // pred_check
        %p929 = pneg %p327
      $region106: #{nmt_forward.6} parent=103 // pred_check_branch
        %931 = sbr.rel (%p929) target = $region108
      $region107: #{nmt_forward.6} parent=103 // pred_region
        %p932 = scmp.lt.s32.totalorder %s28, 7
        %s933 = scalar_select %p932, %s28, 7
        %s934 = smul.addr %s933, 8
        %s935 = scalar_lea.vmem %s12, %s934
      $region108: #{nmt_forward.6} parent=103 // pred_fallthru
        _
      // Predicated region
      $region109: #{nmt_forward.6} parent=103 // pred_check
        %p936 = pneg %p355
      $region110: #{nmt_forward.6} parent=103 // pred_check_branch
        %938 = sbr.rel (%p936) target = $region112
      $region111: #{nmt_forward.6} parent=103 // pred_region
        %s939 = ssub.s32 7, %s28
        %p940 = scmp.lt.s32.totalorder %s939, 7
        %s941 = scalar_select %p940, %s939, 7
        %s942 = smul.addr %s941, 8
        %s943 = scalar_lea.vmem %s13, %s942
      $region112: #{nmt_forward.6} parent=103 // pred_fallthru
        _
    $region104: #{nmt_forward.6} parent=5 // pred_fallthru
      _
  $region6: #{nmt_forward.6} parent=0 // loop_footer
    %s26 = sadd.s32 1, %s22
  $region7: #{nmt_forward.6} parent=0 // loop_footer_branch
    %21 = sbr.rel target = $region3
  $region8: #{nmt_forward.6} parent=0 // loop_exit
    _

// kernel: nmt_forward.8
$region0: #{nmt_forward.8}
  #allocation0 [shape = 'u32[]', space=smem, size = 0x4, offset = 0x4, fixed_abs, tag = 'smem constant byte address 0x4 - core index']
  #allocation1 [shape = 'u32[72,128]{1,0:T(1,128)}', space=vmem, size = 0x9000, scoped, tag = 'internal scratch']
  #allocation2 [shape = 'f32[8,32]{1,0:T(8,128)}', space=vmem, size = 0x1000, scoped, tag = 'scratch operand']
  #allocation3 [shape = 'f32[8,32]{1,0:T(8,128)}', space=vmem, size = 0x1000, scoped, tag = 'scratch operand']
  #allocation4 [shape = 'f32[8,32]{1,0:T(8,128)}', space=vmem, size = 0x1000, scoped, tag = 'scratch operand']
  %s0 = inlined_call_operand.vmem [shape: f32[6,8,128], index: 0, kind: input, shape index: {}]
  %s1 = inlined_call_operand.vmem [shape: f32[8,8,32], index: 1, kind: input, shape index: {}]
  %s2 = inlined_call_operand.vmem [shape: f32[8,8,32], index: 2, kind: input, shape index: {}]
  %s3 = inlined_call_operand.vmem [shape: f32[8,8], index: 3, kind: input, shape index: {}]
  %s4 = inlined_call_operand.vmem [shape: f32[8,32], index: 4, kind: input, shape index: {}]
  %s5 = inlined_call_operand.vmem [shape: f32[8,32], index: 5, kind: input, shape index: {}]
  %s6 = inlined_call_operand.vmem [shape: f32[32,64], index: 6, kind: input, shape index: {}]
  %s7 = inlined_call_operand.vmem [shape: f32[32,128], index: 7, kind: input, shape index: {}]
  %s8 = inlined_call_operand.vmem [shape: f32[32,128], index: 8, kind: input, shape index: {}]
  %s9 = inlined_call_operand.vmem [shape: f32[1,128], index: 9, kind: input, shape index: {}]
  %s10 = inlined_call_operand.vmem [shape: f32[32,32], index: 10, kind: input, shape index: {}]
  %s11 = inlined_call_operand.vmem [shape: f32[32,32], index: 11, kind: input, shape index: {}]
  %s12 = inlined_call_operand.vmem [shape: f32[32,32], index: 12, kind: input, shape index: {}]
  %s13 = inlined_call_operand.vmem [shape: f32[6,8,32], index: 13, kind: output, shape index: {}]
  %s14 = sld [smem:[#allocation0]]
  $region89: #{nmt_forward.8} parent=0
    _
  %s16 = ssub.s32 1, %s14
  %s17 = scalar_select 0, %s16, %s14
  loop: start=0, step=1, limit=8
  $region2: #{nmt_forward.8} parent=0 // loop_pre_header
    _
  $region3: #{nmt_forward.8} parent=0 // loop_header
    %s19 = sphi 0, %s23
    %p20 = scmp.ge.s32.totalorder %s19, 8
    %s29 = sphi 0, %s31
    %s32 = sphi 0, %s29
    %s33 = sphi 0, %s32
    %s49 = sphi 0, %s33
    %s53 = sphi 0, %s53
    %s55 = sphi 0, %s53
    %s56 = sphi 0, %s55
    %s70 = sphi 0, %s56
    %s74 = sphi 0, %s74
    %s76 = sphi 0, %s74
    %s77 = sphi 0, %s76
    %s91 = sphi 0, %s77
    %s95 = sphi 0, %s95
    %s97 = sphi 0, %s95
    %s98 = sphi 0, %s97
    %s112 = sphi 0, %s98
    %s116 = sphi 0, %s116
    %s118 = sphi 0, %s116
    %s119 = sphi 0, %s118
    %s133 = sphi 0, %s119
    %s137 = sphi 0, %s137
    %s139 = sphi 0, %s137
    %s140 = sphi 0, %s139
    %s154 = sphi 0, %s140
    %s158 = sphi 0, %s158
    %s160 = sphi 0, %s158
    %s161 = sphi 0, %s160
    %s175 = sphi 0, %s161
    %s179 = sphi 0, %s179
    %s181 = sphi 0, %s179
    %s182 = sphi 0, %s181
    %s196 = sphi 0, %s182
    %s200 = sphi 0, %s200
    %s202 = sphi 0, %s200
    %s203 = sphi 0, %s202
    %s217 = sphi 0, %s203
    %s221 = sphi 0, %s221
    %s223 = sphi 0, %s221
    %s224 = sphi 0, %s223
    %s238 = sphi 0, %s224
    %s242 = sphi 0, %s242
    %s244 = sphi 0, %s242
    %s245 = sphi 0, %s244
    %s259 = sphi 0, %s245
    %s263 = sphi 0, %s263
    %s265 = sphi 0, %s263
    %s266 = sphi 0, %s265
    %s280 = sphi 0, %s266
    %s284 = sphi 0, %s284
    %s286 = sphi 0, %s284
    %s287 = sphi 0, %s286
    %s301 = sphi 0, %s287
    %s307 = sphi 0, %s309
    %s310 = sphi 0, %s307
    %s311 = sphi 0, %s310
    %s327 = sphi 0, %s311
  $region4: #{nmt_forward.8} parent=0 // loop_header_branch
    %22 = sbr.rel (%p20) target = $region8
  $region5: #{nmt_forward.8} parent=0 // loop_body
    %s24 = ssub.s32 %s19, 1
    %s25 = ssub.s32 %s19, 2
    %s26 = sadd.s32 %s19, 1
    %s27 = ssub.s32 %s19, %s26
    %p28 = scmp.eq.s32.totalorder %s27, 0
    %s30 = sadd.s32 %s29, 1
    %s31 = scalar_select %p28, %s29, %s30
    %p34 = pneg %p28
    %p35 = scmp.eq.s32.totalorder %s19, 5
    %p36 = por %p34, %p35
    %p37 = scmp.ne.s32.totalorder %s29, %s32
    %p38 = scmp.eq.s32.totalorder %s19, 0
    %p39 = por %p37, %p38
    %p40 = scmp.ne.s32.totalorder %s29, %s32
    %p41 = scmp.eq.s32.totalorder %s24, 5
    %p42 = por %p40, %p41
    %p43 = scmp.ne.s32.totalorder %s32, %s33
    %p44 = scmp.eq.s32.totalorder %s24, 0
    %p45 = por %p43, %p44
    %p46 = scmp.ne.s32.totalorder %s32, %s33
    %p47 = scmp.eq.s32.totalorder %s25, 5
    %p48 = por %p46, %p47
    %p50 = scmp.ne.s32.totalorder %s33, %s49
    %p51 = scmp.eq.s32.totalorder %s25, 0
    %p52 = por %p50, %p51
    %s54 = sadd.s32 %s53, 1
    %p57 = scmp.eq.s32.totalorder %s19, 5
    %p58 = scmp.ne.s32.totalorder %s53, %s55
    %p59 = scmp.eq.s32.totalorder %s19, 0
    %p60 = por %p58, %p59
    %p61 = scmp.ne.s32.totalorder %s53, %s55
    %p62 = scmp.eq.s32.totalorder %s24, 5
    %p63 = por %p61, %p62
    %p64 = scmp.ne.s32.totalorder %s55, %s56
    %p65 = scmp.eq.s32.totalorder %s24, 0
    %p66 = por %p64, %p65
    %p67 = scmp.ne.s32.totalorder %s55, %s56
    %p68 = scmp.eq.s32.totalorder %s25, 5
    %p69 = por %p67, %p68
    %p71 = scmp.ne.s32.totalorder %s56, %s70
    %p72 = scmp.eq.s32.totalorder %s25, 0
    %p73 = por %p71, %p72
    %s75 = sadd.s32 %s74, 1
    %p78 = scmp.eq.s32.totalorder %s19, 5
    %p79 = scmp.ne.s32.totalorder %s74, %s76
    %p80 = scmp.eq.s32.totalorder %s19, 0
    %p81 = por %p79, %p80
    %p82 = scmp.ne.s32.totalorder %s74, %s76
    %p83 = scmp.eq.s32.totalorder %s24, 5
    %p84 = por %p82, %p83
    %p85 = scmp.ne.s32.totalorder %s76, %s77
    %p86 = scmp.eq.s32.totalorder %s24, 0
    %p87 = por %p85, %p86
    %p88 = scmp.ne.s32.totalorder %s76, %s77
    %p89 = scmp.eq.s32.totalorder %s25, 5
    %p90 = por %p88, %p89
    %p92 = scmp.ne.s32.totalorder %s77, %s91
    %p93 = scmp.eq.s32.totalorder %s25, 0
    %p94 = por %p92, %p93
    %s96 = sadd.s32 %s95, 1
    %p99 = scmp.eq.s32.totalorder %s19, 5
    %p100 = scmp.ne.s32.totalorder %s95, %s97
    %p101 = scmp.eq.s32.totalorder %s19, 0
    %p102 = por %p100, %p101
    %p103 = scmp.ne.s32.totalorder %s95, %s97
    %p104 = scmp.eq.s32.totalorder %s24, 5
    %p105 = por %p103, %p104
    %p106 = scmp.ne.s32.totalorder %s97, %s98
    %p107 = scmp.eq.s32.totalorder %s24, 0
    %p108 = por %p106, %p107
    %p109 = scmp.ne.s32.totalorder %s97, %s98
    %p110 = scmp.eq.s32.totalorder %s25, 5
    %p111 = por %p109, %p110
    %p113 = scmp.ne.s32.totalorder %s98, %s112
    %p114 = scmp.eq.s32.totalorder %s25, 0
    %p115 = por %p113, %p114
    %s117 = sadd.s32 %s116, 1
    %p120 = scmp.eq.s32.totalorder %s19, 5
    %p121 = scmp.ne.s32.totalorder %s116, %s118
    %p122 = scmp.eq.s32.totalorder %s19, 0
    %p123 = por %p121, %p122
    %p124 = scmp.ne.s32.totalorder %s116, %s118
    %p125 = scmp.eq.s32.totalorder %s24, 5
    %p126 = por %p124, %p125
    %p127 = scmp.ne.s32.totalorder %s118, %s119
    %p128 = scmp.eq.s32.totalorder %s24, 0
    %p129 = por %p127, %p128
    %p130 = scmp.ne.s32.totalorder %s118, %s119
    %p131 = scmp.eq.s32.totalorder %s25, 5
    %p132 = por %p130, %p131
    %p134 = scmp.ne.s32.totalorder %s119, %s133
    %p135 = scmp.eq.s32.totalorder %s25, 0
    %p136 = por %p134, %p135
    %s138 = sadd.s32 %s137, 1
    %p141 = scmp.eq.s32.totalorder %s19, 5
    %p142 = scmp.ne.s32.totalorder %s137, %s139
    %p143 = scmp.eq.s32.totalorder %s19, 0
    %p144 = por %p142, %p143
    %p145 = scmp.ne.s32.totalorder %s137, %s139
    %p146 = scmp.eq.s32.totalorder %s24, 5
    %p147 = por %p145, %p146
    %p148 = scmp.ne.s32.totalorder %s139, %s140
    %p149 = scmp.eq.s32.totalorder %s24, 0
    %p150 = por %p148, %p149
    %p151 = scmp.ne.s32.totalorder %s139, %s140
    %p152 = scmp.eq.s32.totalorder %s25, 5
    %p153 = por %p151, %p152
    %p155 = scmp.ne.s32.totalorder %s140, %s154
    %p156 = scmp.eq.s32.totalorder %s25, 0
    %p157 = por %p155, %p156
    %s159 = sadd.s32 %s158, 1
    %p162 = scmp.eq.s32.totalorder %s19, 5
    %p163 = scmp.ne.s32.totalorder %s158, %s160
    %p164 = scmp.eq.s32.totalorder %s19, 0
    %p165 = por %p163, %p164
    %p166 = scmp.ne.s32.totalorder %s158, %s160
    %p167 = scmp.eq.s32.totalorder %s24, 5
    %p168 = por %p166, %p167
    %p169 = scmp.ne.s32.totalorder %s160, %s161
    %p170 = scmp.eq.s32.totalorder %s24, 0
    %p171 = por %p169, %p170
    %p172 = scmp.ne.s32.totalorder %s160, %s161
    %p173 = scmp.eq.s32.totalorder %s25, 5
    %p174 = por %p172, %p173
    %p176 = scmp.ne.s32.totalorder %s161, %s175
    %p177 = scmp.eq.s32.totalorder %s25, 0
    %p178 = por %p176, %p177
    %s180 = sadd.s32 %s179, 1
    %p183 = scmp.eq.s32.totalorder %s19, 5
    %p184 = scmp.ne.s32.totalorder %s179, %s181
    %p185 = scmp.eq.s32.totalorder %s19, 0
    %p186 = por %p184, %p185
    %p187 = scmp.ne.s32.totalorder %s179, %s181
    %p188 = scmp.eq.s32.totalorder %s24, 5
    %p189 = por %p187, %p188
    %p190 = scmp.ne.s32.totalorder %s181, %s182
    %p191 = scmp.eq.s32.totalorder %s24, 0
    %p192 = por %p190, %p191
    %p193 = scmp.ne.s32.totalorder %s181, %s182
    %p194 = scmp.eq.s32.totalorder %s25, 5
    %p195 = por %p193, %p194
    %p197 = scmp.ne.s32.totalorder %s182, %s196
    %p198 = scmp.eq.s32.totalorder %s25, 0
    %p199 = por %p197, %p198
    %s201 = sadd.s32 %s200, 1
    %p204 = scmp.eq.s32.totalorder %s19, 5
    %p205 = scmp.ne.s32.totalorder %s200, %s202
    %p206 = scmp.eq.s32.totalorder %s19, 0
    %p207 = por %p205, %p206
    %p208 = scmp.ne.s32.totalorder %s200, %s202
    %p209 = scmp.eq.s32.totalorder %s24, 5
    %p210 = por %p208, %p209
    %p211 = scmp.ne.s32.totalorder %s202, %s203
    %p212 = scmp.eq.s32.totalorder %s24, 0
    %p213 = por %p211, %p212
    %p214 = scmp.ne.s32.totalorder %s202, %s203
    %p215 = scmp.eq.s32.totalorder %s25, 5
    %p216 = por %p214, %p215
    %p218 = scmp.ne.s32.totalorder %s203, %s217
    %p219 = scmp.eq.s32.totalorder %s25, 0
    %p220 = por %p218, %p219
    %s222 = sadd.s32 %s221, 1
    %p225 = scmp.eq.s32.totalorder %s19, 5
    %p226 = scmp.ne.s32.totalorder %s221, %s223
    %p227 = scmp.eq.s32.totalorder %s19, 0
    %p228 = por %p226, %p227
    %p229 = scmp.ne.s32.totalorder %s221, %s223
    %p230 = scmp.eq.s32.totalorder %s24, 5
    %p231 = por %p229, %p230
    %p232 = scmp.ne.s32.totalorder %s223, %s224
    %p233 = scmp.eq.s32.totalorder %s24, 0
    %p234 = por %p232, %p233
    %p235 = scmp.ne.s32.totalorder %s223, %s224
    %p236 = scmp.eq.s32.totalorder %s25, 5
    %p237 = por %p235, %p236
    %p239 = scmp.ne.s32.totalorder %s224, %s238
    %p240 = scmp.eq.s32.totalorder %s25, 0
    %p241 = por %p239, %p240
    %s243 = sadd.s32 %s242, 1
    %p246 = scmp.eq.s32.totalorder %s19, 5
    %p247 = scmp.ne.s32.totalorder %s242, %s244
    %p248 = scmp.eq.s32.totalorder %s19, 0
    %p249 = por %p247, %p248
    %p250 = scmp.ne.s32.totalorder %s242, %s244
    %p251 = scmp.eq.s32.totalorder %s24, 5
    %p252 = por %p250, %p251
    %p253 = scmp.ne.s32.totalorder %s244, %s245
    %p254 = scmp.eq.s32.totalorder %s24, 0
    %p255 = por %p253, %p254
    %p256 = scmp.ne.s32.totalorder %s244, %s245
    %p257 = scmp.eq.s32.totalorder %s25, 5
    %p258 = por %p256, %p257
    %p260 = scmp.ne.s32.totalorder %s245, %s259
    %p261 = scmp.eq.s32.totalorder %s25, 0
    %p262 = por %p260, %p261
    %s264 = sadd.s32 %s263, 1
    %p267 = scmp.eq.s32.totalorder %s19, 5
    %p268 = scmp.ne.s32.totalorder %s263, %s265
    %p269 = scmp.eq.s32.totalorder %s19, 0
    %p270 = por %p268, %p269
    %p271 = scmp.ne.s32.totalorder %s263, %s265
    %p272 = scmp.eq.s32.totalorder %s24, 5
    %p273 = por %p271, %p272
    %p274 = scmp.ne.s32.totalorder %s265, %s266
    %p275 = scmp.eq.s32.totalorder %s24, 0
    %p276 = por %p274, %p275
    %p277 = scmp.ne.s32.totalorder %s265, %s266
    %p278 = scmp.eq.s32.totalorder %s25, 5
    %p279 = por %p277, %p278
    %p281 = scmp.ne.s32.totalorder %s266, %s280
    %p282 = scmp.eq.s32.totalorder %s25, 0
    %p283 = por %p281, %p282
    %s285 = sadd.s32 %s284, 1
    %p288 = scmp.eq.s32.totalorder %s19, 5
    %p289 = scmp.ne.s32.totalorder %s284, %s286
    %p290 = scmp.eq.s32.totalorder %s19, 0
    %p291 = por %p289, %p290
    %p292 = scmp.ne.s32.totalorder %s284, %s286
    %p293 = scmp.eq.s32.totalorder %s24, 5
    %p294 = por %p292, %p293
    %p295 = scmp.ne.s32.totalorder %s286, %s287
    %p296 = scmp.eq.s32.totalorder %s24, 0
    %p297 = por %p295, %p296
    %p298 = scmp.ne.s32.totalorder %s286, %s287
    %p299 = scmp.eq.s32.totalorder %s25, 5
    %p300 = por %p298, %p299
    %p302 = scmp.ne.s32.totalorder %s287, %s301
    %p303 = scmp.eq.s32.totalorder %s25, 0
    %p304 = por %p302, %p303
    %s305 = ssub.s32 %s19, %s26
    %p306 = scmp.eq.s32.totalorder %s305, 0
    %s308 = sadd.s32 %s307, 1
    %s309 = scalar_select %p306, %s307, %s308
    %p312 = pneg %p306
    %p313 = scmp.eq.s32.totalorder %s19, 5
    %p314 = por %p312, %p313
    %p315 = scmp.ne.s32.totalorder %s307, %s310
    %p316 = scmp.eq.s32.totalorder %s19, 0
    %p317 = por %p315, %p316
    %p318 = scmp.ne.s32.totalorder %s307, %s310
    %p319 = scmp.eq.s32.totalorder %s24, 5
    %p320 = por %p318, %p319
    %p321 = scmp.ne.s32.totalorder %s310, %s311
    %p322 = scmp.eq.s32.totalorder %s24, 0
    %p323 = por %p321, %p322
    %p324 = scmp.ne.s32.totalorder %s310, %s311
    %p325 = scmp.eq.s32.totalorder %s25, 5
    %p326 = por %p324, %p325
    %p328 = scmp.ne.s32.totalorder %s311, %s327
    %p329 = scmp.eq.s32.totalorder %s25, 0
    %p330 = por %p328, %p329
    %p331 = scmp.le.s32.totalorder 1, %s19
    %p332 = scmp.lt.s32.totalorder %s19, 7
    %p333 = pnand %p331, %p332
    %p334 = pneg %p333
    // Predicated region
    $region9: #{nmt_forward.8} parent=5 // pred_check
      _
    $region10: #{nmt_forward.8} parent=5 // pred_check_branch
      %336 = sbr.rel (%p333) target = $region12
    $region11: #{nmt_forward.8} parent=5 // pred_region
      %s337 = ssub.s32 %s19, 1
      // Predicated region
      $region13: #{nmt_forward.8} parent=11 // pred_check
        %p338 = pneg %p66
      $region14: #{nmt_forward.8} parent=11 // pred_check_branch
        %340 = sbr.rel (%p338) target = $region16
      $region15: #{nmt_forward.8} parent=11 // pred_region
        _
      $region16: #{nmt_forward.8} parent=11 // pred_fallthru
        _
      // Predicated region
      $region17: #{nmt_forward.8} parent=11 // pred_check
        %p341 = pneg %p87
      $region18: #{nmt_forward.8} parent=11 // pred_check_branch
        %343 = sbr.rel (%p341) target = $region20
      $region19: #{nmt_forward.8} parent=11 // pred_region
        _
      $region20: #{nmt_forward.8} parent=11 // pred_fallthru
        _
      // Predicated region
      $region21: #{nmt_forward.8} parent=11 // pred_check
        %p344 = pneg %p108
      $region22: #{nmt_forward.8} parent=11 // pred_check_branch
        %346 = sbr.rel (%p344) target = $region24
      $region23: #{nmt_forward.8} parent=11 // pred_region
        _
      $region24: #{nmt_forward.8} parent=11 // pred_fallthru
        _
      // Predicated region
      $region25: #{nmt_forward.8} parent=11 // pred_check
        %p347 = pneg %p129
      $region26: #{nmt_forward.8} parent=11 // pred_check_branch
        %349 = sbr.rel (%p347) target = $region28
      $region27: #{nmt_forward.8} parent=11 // pred_region
        _
      $region28: #{nmt_forward.8} parent=11 // pred_fallthru
        _
      // Predicated region
      $region29: #{nmt_forward.8} parent=11 // pred_check
        %p350 = pneg %p150
      $region30: #{nmt_forward.8} parent=11 // pred_check_branch
        %352 = sbr.rel (%p350) target = $region32
      $region31: #{nmt_forward.8} parent=11 // pred_region
        _
      $region32: #{nmt_forward.8} parent=11 // pred_fallthru
        _
      // Predicated region
      $region33: #{nmt_forward.8} parent=11 // pred_check
        %p353 = pneg %p171
      $region34: #{nmt_forward.8} parent=11 // pred_check_branch
        %355 = sbr.rel (%p353) target = $region36
      $region35: #{nmt_forward.8} parent=11 // pred_region
        _
      $region36: #{nmt_forward.8} parent=11 // pred_fallthru
        _
      // Predicated region
      $region37: #{nmt_forward.8} parent=11 // pred_check
        %p356 = pneg %p192
      $region38: #{nmt_forward.8} parent=11 // pred_check_branch
        %358 = sbr.rel (%p356) target = $region40
      $region39: #{nmt_forward.8} parent=11 // pred_region
        _
      $region40: #{nmt_forward.8} parent=11 // pred_fallthru
        _
      // Predicated region
      $region41: #{nmt_forward.8} parent=11 // pred_check
        %p359 = pneg %p213
      $region42: #{nmt_forward.8} parent=11 // pred_check_branch
        %361 = sbr.rel (%p359) target = $region44
      $region43: #{nmt_forward.8} parent=11 // pred_region
        _
      $region44: #{nmt_forward.8} parent=11 // pred_fallthru
        _
      // Predicated region
      $region45: #{nmt_forward.8} parent=11 // pred_check
        %p362 = pneg %p234
      $region46: #{nmt_forward.8} parent=11 // pred_check_branch
        %364 = sbr.rel (%p362) target = $region48
      $region47: #{nmt_forward.8} parent=11 // pred_region
        _
      $region48: #{nmt_forward.8} parent=11 // pred_fallthru
        _
      // Predicated region
      $region49: #{nmt_forward.8} parent=11 // pred_check
        %p365 = pneg %p255
      $region50: #{nmt_forward.8} parent=11 // pred_check_branch
        %367 = sbr.rel (%p365) target = $region52
      $region51: #{nmt_forward.8} parent=11 // pred_region
        _
      $region52: #{nmt_forward.8} parent=11 // pred_fallthru
        _
      // Predicated region
      $region53: #{nmt_forward.8} parent=11 // pred_check
        %p368 = pneg %p276
      $region54: #{nmt_forward.8} parent=11 // pred_check_branch
        %370 = sbr.rel (%p368) target = $region56
      $region55: #{nmt_forward.8} parent=11 // pred_region
        _
      $region56: #{nmt_forward.8} parent=11 // pred_fallthru
        _
      // Predicated region
      $region57: #{nmt_forward.8} parent=11 // pred_check
        %p371 = pneg %p297
      $region58: #{nmt_forward.8} parent=11 // pred_check_branch
        %373 = sbr.rel (%p371) target = $region60
      $region59: #{nmt_forward.8} parent=11 // pred_region
        _
      $region60: #{nmt_forward.8} parent=11 // pred_fallthru
        _
    $region12: #{nmt_forward.8} parent=5 // pred_fallthru
      _
    %p374 = scmp.lt.s32.totalorder %s19, 6
    // Predicated region
    $region61: #{nmt_forward.8} parent=5 // pred_check
      %p375 = pneg %p374
    $region62: #{nmt_forward.8} parent=5 // pred_check_branch
      %377 = sbr.rel (%p375) target = $region64
    $region63: #{nmt_forward.8} parent=5 // pred_region
      // Predicated region
      $region65: #{nmt_forward.8} parent=63 // pred_check
        %p378 = pneg %p39
      $region66: #{nmt_forward.8} parent=63 // pred_check_branch
        %380 = sbr.rel (%p378) target = $region68
      $region67: #{nmt_forward.8} parent=63 // pred_region
        %p381 = scmp.lt.s32.totalorder %s19, 5
        %s382 = scalar_select %p381, %s19, 5
        %s383 = smul.addr %s382, 8
        %s384 = scalar_lea.vmem %s0, %s383
      $region68: #{nmt_forward.8} parent=63 // pred_fallthru
        _
    $region64: #{nmt_forward.8} parent=5 // pred_fallthru
      _
    %p385 = scmp.le.s32.totalorder 1, %s19
    %p386 = scmp.lt.s32.totalorder %s19, 7
    %p387 = pnand %p385, %p386
    %p388 = pneg %p387
    // Predicated region
    $region69: #{nmt_forward.8} parent=5 // pred_check
      _
    $region70: #{nmt_forward.8} parent=5 // pred_check_branch
      %390 = sbr.rel (%p387) target = $region72
    $region71: #{nmt_forward.8} parent=5 // pred_region
      %s391 = ssub.s32 %s19, 1
      %p392 = scmp.lt.s32.totalorder %s24, 5
      %s393 = scalar_select %p392, %s24, 5
      %s394 = smul.addr %s393, 8
      %s395 = scalar_lea.vmem %s0, %s394
      %p396 = pneg %p45
      %p397 = pneg %p42
      %p398 = pneg %p66
      %p399 = pneg %p63
      %p400 = pneg %p87
      %p401 = pneg %p84
      %p402 = pneg %p108
      %p403 = pneg %p105
      %p404 = pneg %p129
      %p405 = pneg %p126
      %p406 = pneg %p150
      %p407 = pneg %p147
      %p408 = pneg %p171
      %p409 = pneg %p168
      %p410 = pneg %p192
      %p411 = pneg %p189
      %p412 = pneg %p213
      %p413 = pneg %p210
      %p414 = pneg %p234
      %p415 = pneg %p231
      %p416 = pneg %p255
      %p417 = pneg %p252
      %p418 = pneg %p276
      %p419 = pneg %p273
      %p420 = pneg %p297
      %p421 = pneg %p294
      %p422 = pneg %p323
      %p423 = pneg %p320
      %p424 = scmp.lt.s32.totalorder %s24, 5
      %s425 = scalar_select %p424, %s24, 5
      %s426 = smul.addr %s425, 8
      %s427 = scalar_lea.vmem %s13, %s426
      %p428 = scmp.lt.s32.totalorder %s24, 5
      %s429 = scalar_select %p428, %s24, 5
      %s430 = smul.addr %s429, 8
      %s431 = scalar_lea.vmem %s0, %s430
      %p432 = scmp.lt.s32.totalorder %s24, 5
      %s433 = scalar_select %p432, %s24, 5
      %s434 = smul.addr %s433, 8
      %s435 = scalar_lea.vmem %s13, %s434
      %p436 = scmp.eq.s32.totalorder %s24, 0
      // Predicated region
      $region73: #{nmt_forward.8} parent=71 // pred_check
        %p437 = pneg %p436
      $region74: #{nmt_forward.8} parent=71 // pred_check_branch
        %439 = sbr.rel (%p437) target = $region76
      $region75: #{nmt_forward.8} parent=71 // pred_region
        %v440 = vld [vmem:[%s4] sm:$0xff]
        %vm441 = vcmask 261120
        %442 = vst.msk [vmem:[#allocation2] sm:$0xff] %vm441, %v440
        %v443 = vld [vmem:[%s5] sm:$0xff]
        %444 = vst.msk [vmem:[#allocation3] sm:$0xff] %vm441, %v443
        %445 = vst.msk [vmem:[#allocation4] sm:$0xff] %vm441, 0.0
      $region76: #{nmt_forward.8} parent=71 // pred_fallthru
        _
      %v446 = vld [vmem:[%s431] sm:$0xff]
      %v447 = vld [vmem:[#allocation4] sm:$0xff]
      %v448 = vld [vmem:[%s7] sm:$0xff]
      %v449 = vld [vmem:[%s7 + $0x8] sm:$0xff]
      %v450 = vld [vmem:[%s7 + $0x10] sm:$0xff]
      %v451 = vld [vmem:[%s7 + $0x18] sm:$0xff]
      %vm452 = vcmask 261120
      %v454 = vsel %vm452, %v447, 0
      %456 = vmatpush.msra.mxu0 0.0
      %457 = vmatpush.msra.mxu0 0.0
      %458 = vmatpush.msra.mxu0 0.0
      %459 = vmatpush.msra.mxu0 0.0
      %460 = vmatpush.msra.mxu0 0.0
      %461 = vmatpush.msra.mxu0 0.0
      %462 = vmatpush.msra.mxu0 0.0
      %463 = vmatpush.msra.mxu0 0.0
      %464 = vmatpush.msra.mxu0 0.0
      %465 = vmatpush.msra.mxu0 0.0
      %466 = vmatpush.msra.mxu0 0.0
      %467 = vmatpush.msra.mxu0 0.0
      %468 = vmatpush.msra.mxu0 %v451
      %469 = vmatpush.msra.mxu0 %v450
      %470 = vmatpush.msra.mxu0 %v449
      %471 = vmatpush.msra.mxu0 %v448
      %472 = vmatmul.f32.gmra.mxu0 %v454
      %v473 = vpop.f32.mrf.mxu0
      %v474 = vadd.f32 0.0, %v473
      %475 = vdwg.mxu0
      %v476 = vadd.f32 %v446, %v474
      %v477 = vld [vmem:[#allocation2] sm:$0xff]
      %v478 = vld [vmem:[%s8] sm:$0xff]
      %v479 = vld [vmem:[%s8 + $0x8] sm:$0xff]
      %v480 = vld [vmem:[%s8 + $0x10] sm:$0xff]
      %v481 = vld [vmem:[%s8 + $0x18] sm:$0xff]
      %v483 = vsel %vm452, %v477, 0
      %485 = vmatpush.msra.mxu0 0.0
      %486 = vmatpush.msra.mxu0 0.0
      %487 = vmatpush.msra.mxu0 0.0
      %488 = vmatpush.msra.mxu0 0.0
      %489 = vmatpush.msra.mxu0 0.0
      %490 = vmatpush.msra.mxu0 0.0
      %491 = vmatpush.msra.mxu0 0.0
      %492 = vmatpush.msra.mxu0 0.0
      %493 = vmatpush.msra.mxu0 0.0
      %494 = vmatpush.msra.mxu0 0.0
      %495 = vmatpush.msra.mxu0 0.0
      %496 = vmatpush.msra.mxu0 0.0
      %497 = vmatpush.msra.mxu0 %v481
      %498 = vmatpush.msra.mxu0 %v480
      %499 = vmatpush.msra.mxu0 %v479
      %500 = vmatpush.msra.mxu0 %v478
      %501 = vmatmul.f32.gmra.mxu0 %v483
      %v502 = vpop.f32.mrf.mxu0
      %v503 = vadd.f32 0.0, %v502
      %504 = vdwg.mxu0
      %v505 = vadd.f32 %v476, %v503
      %v506 = vld [vmem:[%s9] sm:$0x1]
      %v508 = vperm.slane %v506, 0
      %v510 = vadd.f32 %v505, %v508
      %v511 = vsub.f32 0.0, %v510
      %v512 = vmul.f32 %v511, 1.442695
      %v513 = vpow.pop %v512
      %v514 = vadd.f32 %v513, 1.0
      %v515 = vrcp.pop %v514
      %v516 = vtanh.pop %v510
      %v517 = vld [vmem:[#allocation3] sm:$0xff]
      %519 = vrot.lane.b32.xlu0 %v517, 32
      %v520 = vpop.permute.xlu0 %519
      %v522 = vmul.f32 %v515, %v520
      %524 = vrot.lane.b32.xlu0 %v516, 64
      %v525 = vpop.permute.xlu0 %524
      %v527 = vmul.f32 %v515, %v525
      %529 = vrot.lane.b32.xlu0 %v527, 32
      %v530 = vpop.permute.xlu0 %529
      %v532 = vadd.f32 %v522, %v530
      %v533 = vtanh.pop %v532
      %535 = vrot.lane.b32.xlu0 %v533, 64
      %v536 = vpop.permute.xlu0 %535
      %v538 = vmul.f32 %v515, %v536
      %540 = vrot.lane.b32.xlu0 %v538, 32
      %v541 = vpop.permute.xlu0 %540
      %543 = vst.msk [vmem:[#allocation2] sm:$0xff] %vm452, %v541
      %545 = vrot.lane.b32.xlu0 %v532, 96
      %v546 = vpop.permute.xlu0 %545
      %548 = vst.msk [vmem:[#allocation3] sm:$0xff] %vm452, %v546
      %v549 = vld [vmem:[%s1] sm:$0xff]
      %v550 = vld [vmem:[%s1 + $0x8] sm:$0xff]
      %v551 = vld [vmem:[%s1 + $0x10] sm:$0xff]
      %v552 = vld [vmem:[%s1 + $0x18] sm:$0xff]
      %v553 = vld [vmem:[%s1 + $0x20] sm:$0xff]
      %v554 = vld [vmem:[%s1 + $0x28] sm:$0xff]
      %v555 = vld [vmem:[%s1 + $0x30] sm:$0xff]
      %v556 = vld [vmem:[%s1 + $0x38] sm:$0xff]
      %v557 = vld [vmem:[%s2] sm:$0xff]
      %v558 = vld [vmem:[%s2 + $0x8] sm:$0xff]
      %v559 = vld [vmem:[%s2 + $0x10] sm:$0xff]
      %v560 = vld [vmem:[%s2 + $0x18] sm:$0xff]
      %v561 = vld [vmem:[%s2 + $0x20] sm:$0xff]
      %v562 = vld [vmem:[%s2 + $0x28] sm:$0xff]
      %v563 = vld [vmem:[%s2 + $0x30] sm:$0xff]
      %v564 = vld [vmem:[%s2 + $0x38] sm:$0xff]
      %v565 = vld [vmem:[%s6] sm:$0xff]
      %v566 = vld [vmem:[%s6 + $0x8] sm:$0xff]
      %v567 = vld [vmem:[%s6 + $0x10] sm:$0xff]
      %v568 = vld [vmem:[%s6 + $0x18] sm:$0xff]
      %v569 = vsel %vm452, %v541, 0
      %571 = vmatpush.msra.mxu0 0.0
      %572 = vmatpush.msra.mxu0 0.0
      %573 = vmatpush.msra.mxu0 0.0
      %574 = vmatpush.msra.mxu0 0.0
      %575 = vmatpush.msra.mxu0 0.0
      %576 = vmatpush.msra.mxu0 0.0
      %577 = vmatpush.msra.mxu0 0.0
      %578 = vmatpush.msra.mxu0 0.0
      %579 = vmatpush.msra.mxu0 0.0
      %580 = vmatpush.msra.mxu0 0.0
      %581 = vmatpush.msra.mxu0 0.0
      %582 = vmatpush.msra.mxu0 0.0
      %583 = vmatpush.msra.mxu0 %v568
      %584 = vmatpush.msra.mxu0 %v567
      %585 = vmatpush.msra.mxu0 %v566
      %586 = vmatpush.msra.mxu0 %v565
      %587 = vmatmul.f32.gmra.mxu0 %v569
      %v588 = vpop.f32.mrf.mxu0
      %v589 = vadd.f32 0.0, %v588
      %590 = vdwg.mxu0
      %v592 = vrot.slane %v589, 1
      %v593 = vrot.slane %v589, 2
      %v594 = vrot.slane %v589, 3
      %v595 = vrot.slane %v589, 4
      %v596 = vrot.slane %v589, 5
      %v597 = vrot.slane %v589, 6
      %v598 = vrot.slane %v589, 7
      %v599 = vperm.slane %v589, 0
      %600 = vrot.lane.b32.xlu0 %v599, 96
      %v601 = vpop.permute.xlu0 %600
      %v602 = vsel %vm452, %v601, 0
      %v605 = vsel %vm452, %v557, 0
      %607 = vmatpush.xpose.msra.mxu0 0.0
      %608 = vmatpush.xpose.msra.mxu0 0.0
      %609 = vmatpush.xpose.msra.mxu0 0.0
      %610 = vmatpush.xpose.msra.mxu0 0.0
      %611 = vmatpush.xpose.msra.mxu0 0.0
      %612 = vmatpush.xpose.msra.mxu0 0.0
      %613 = vmatpush.xpose.msra.mxu0 0.0
      %614 = vmatpush.xpose.msra.mxu0 0.0
      %615 = vmatpush.xpose.msra.mxu0 0.0
      %616 = vmatpush.xpose.msra.mxu0 0.0
      %617 = vmatpush.xpose.msra.mxu0 0.0
      %618 = vmatpush.xpose.msra.mxu0 0.0
      %619 = vmatpush.xpose.msra.mxu0 0.0
      %620 = vmatpush.xpose.msra.mxu0 0.0
      %621 = vmatpush.xpose.msra.mxu0 0.0
      %622 = vmatpush.xpose.msra.mxu0 %v605
      %623 = vmatmul.f32.gmra.mxu0 %v602
      %v624 = vpop.f32.mrf.mxu0
      %v625 = vadd.f32 0.0, %v624
      %626 = vdwg.mxu0
      %v627 = vperm.slane %v592, 0
      %628 = vrot.lane.b32.xlu0 %v627, 96
      %v629 = vpop.permute.xlu0 %628
      %v630 = vsel %vm452, %v629, 0
      %v633 = vsel %vm452, %v558, 0
      %635 = vmatpush.xpose.msra.mxu0 0.0
      %636 = vmatpush.xpose.msra.mxu0 0.0
      %637 = vmatpush.xpose.msra.mxu0 0.0
      %638 = vmatpush.xpose.msra.mxu0 0.0
      %639 = vmatpush.xpose.msra.mxu0 0.0
      %640 = vmatpush.xpose.msra.mxu0 0.0
      %641 = vmatpush.xpose.msra.mxu0 0.0
      %642 = vmatpush.xpose.msra.mxu0 0.0
      %643 = vmatpush.xpose.msra.mxu0 0.0
      %644 = vmatpush.xpose.msra.mxu0 0.0
      %645 = vmatpush.xpose.msra.mxu0 0.0
      %646 = vmatpush.xpose.msra.mxu0 0.0
      %647 = vmatpush.xpose.msra.mxu0 0.0
      %648 = vmatpush.xpose.msra.mxu0 0.0
      %649 = vmatpush.xpose.msra.mxu0 0.0
      %650 = vmatpush.xpose.msra.mxu0 %v633
      %651 = vmatmul.f32.gmra.mxu0 %v630
      %v652 = vpop.f32.mrf.mxu0
      %v653 = vadd.f32 0.0, %v652
      %654 = vdwg.mxu0
      %v655 = vperm.slane %v593, 0
      %656 = vrot.lane.b32.xlu0 %v655, 96
      %v657 = vpop.permute.xlu0 %656
      %v658 = vsel %vm452, %v657, 0
      %v661 = vsel %vm452, %v559, 0
      %663 = vmatpush.xpose.msra.mxu0 0.0
      %664 = vmatpush.xpose.msra.mxu0 0.0
      %665 = vmatpush.xpose.msra.mxu0 0.0
      %666 = vmatpush.xpose.msra.mxu0 0.0
      %667 = vmatpush.xpose.msra.mxu0 0.0
      %668 = vmatpush.xpose.msra.mxu0 0.0
      %669 = vmatpush.xpose.msra.mxu0 0.0
      %670 = vmatpush.xpose.msra.mxu0 0.0
      %671 = vmatpush.xpose.msra.mxu0 0.0
      %672 = vmatpush.xpose.msra.mxu0 0.0
      %673 = vmatpush.xpose.msra.mxu0 0.0
      %674 = vmatpush.xpose.msra.mxu0 0.0
      %675 = vmatpush.xpose.msra.mxu0 0.0
      %676 = vmatpush.xpose.msra.mxu0 0.0
      %677 = vmatpush.xpose.msra.mxu0 0.0
      %678 = vmatpush.xpose.msra.mxu0 %v661
      %679 = vmatmul.f32.gmra.mxu0 %v658
      %v680 = vpop.f32.mrf.mxu0
      %v681 = vadd.f32 0.0, %v680
      %682 = vdwg.mxu0
      %v683 = vperm.slane %v594, 0
      %684 = vrot.lane.b32.xlu0 %v683, 96
      %v685 = vpop.permute.xlu0 %684
      %v686 = vsel %vm452, %v685, 0
      %v689 = vsel %vm452, %v560, 0
      %691 = vmatpush.xpose.msra.mxu0 0.0
      %692 = vmatpush.xpose.msra.mxu0 0.0
      %693 = vmatpush.xpose.msra.mxu0 0.0
      %694 = vmatpush.xpose.msra.mxu0 0.0
      %695 = vmatpush.xpose.msra.mxu0 0.0
      %696 = vmatpush.xpose.msra.mxu0 0.0
      %697 = vmatpush.xpose.msra.mxu0 0.0
      %698 = vmatpush.xpose.msra.mxu0 0.0
      %699 = vmatpush.xpose.msra.mxu0 0.0
      %700 = vmatpush.xpose.msra.mxu0 0.0
      %701 = vmatpush.xpose.msra.mxu0 0.0
      %702 = vmatpush.xpose.msra.mxu0 0.0
      %703 = vmatpush.xpose.msra.mxu0 0.0
      %704 = vmatpush.xpose.msra.mxu0 0.0
      %705 = vmatpush.xpose.msra.mxu0 0.0
      %706 = vmatpush.xpose.msra.mxu0 %v689
      %707 = vmatmul.f32.gmra.mxu0 %v686
      %v708 = vpop.f32.mrf.mxu0
      %v709 = vadd.f32 0.0, %v708
      %710 = vdwg.mxu0
      %v711 = vperm.slane %v595, 0
      %712 = vrot.lane.b32.xlu0 %v711, 96
      %v713 = vpop.permute.xlu0 %712
      %v714 = vsel %vm452, %v713, 0
      %v717 = vsel %vm452, %v561, 0
      %719 = vmatpush.xpose.msra.mxu0 0.0
      %720 = vmatpush.xpose.msra.mxu0 0.0
      %721 = vmatpush.xpose.msra.mxu0 0.0
      %722 = vmatpush.xpose.msra.mxu0 0.0
      %723 = vmatpush.xpose.msra.mxu0 0.0
      %724 = vmatpush.xpose.msra.mxu0 0.0
      %725 = vmatpush.xpose.msra.mxu0 0.0
      %726 = vmatpush.xpose.msra.mxu0 0.0
      %727 = vmatpush.xpose.msra.mxu0 0.0
      %728 = vmatpush.xpose.msra.mxu0 0.0
      %729 = vmatpush.xpose.msra.mxu0 0.0
      %730 = vmatpush.xpose.msra.mxu0 0.0
      %731 = vmatpush.xpose.msra.mxu0 0.0
      %732 = vmatpush.xpose.msra.mxu0 0.0
      %733 = vmatpush.xpose.msra.mxu0 0.0
      %734 = vmatpush.xpose.msra.mxu0 %v717
      %735 = vmatmul.f32.gmra.mxu0 %v714
      %v736 = vpop.f32.mrf.mxu0
      %v737 = vadd.f32 0.0, %v736
      %738 = vdwg.mxu0
      %v739 = vperm.slane %v596, 0
      %740 = vrot.lane.b32.xlu0 %v739, 96
      %v741 = vpop.permute.xlu0 %740
      %v742 = vsel %vm452, %v741, 0
      %v745 = vsel %vm452, %v562, 0
      %747 = vmatpush.xpose.msra.mxu0 0.0
      %748 = vmatpush.xpose.msra.mxu0 0.0
      %749 = vmatpush.xpose.msra.mxu0 0.0
      %750 = vmatpush.xpose.msra.mxu0 0.0
      %751 = vmatpush.xpose.msra.mxu0 0.0
      %752 = vmatpush.xpose.msra.mxu0 0.0
      %753 = vmatpush.xpose.msra.mxu0 0.0
      %754 = vmatpush.xpose.msra.mxu0 0.0
      %755 = vmatpush.xpose.msra.mxu0 0.0
      %756 = vmatpush.xpose.msra.mxu0 0.0
      %757 = vmatpush.xpose.msra.mxu0 0.0
      %758 = vmatpush.xpose.msra.mxu0 0.0
      %759 = vmatpush.xpose.msra.mxu0 0.0
      %760 = vmatpush.xpose.msra.mxu0 0.0
      %761 = vmatpush.xpose.msra.mxu0 0.0
      %762 = vmatpush.xpose.msra.mxu0 %v745
      %763 = vmatmul.f32.gmra.mxu0 %v742
      %v764 = vpop.f32.mrf.mxu0
      %v765 = vadd.f32 0.0, %v764
      %766 = vdwg.mxu0
      %v767 = vperm.slane %v597, 0
      %768 = vrot.lane.b32.xlu0 %v767, 96
      %v769 = vpop.permute.xlu0 %768
      %v770 = vsel %vm452, %v769, 0
      %v773 = vsel %vm452, %v563, 0
      %775 = vmatpush.xpose.msra.mxu0 0.0
      %776 = vmatpush.xpose.msra.mxu0 0.0
      %777 = vmatpush.xpose.msra.mxu0 0.0
      %778 = vmatpush.xpose.msra.mxu0 0.0
      %779 = vmatpush.xpose.msra.mxu0 0.0
      %780 = vmatpush.xpose.msra.mxu0 0.0
      %781 = vmatpush.xpose.msra.mxu0 0.0
      %782 = vmatpush.xpose.msra.mxu0 0.0
      %783 = vmatpush.xpose.msra.mxu0 0.0
      %784 = vmatpush.xpose.msra.mxu0 0.0
      %785 = vmatpush.xpose.msra.mxu0 0.0
      %786 = vmatpush.xpose.msra.mxu0 0.0
      %787 = vmatpush.xpose.msra.mxu0 0.0
      %788 = vmatpush.xpose.msra.mxu0 0.0
      %789 = vmatpush.xpose.msra.mxu0 0.0
      %790 = vmatpush.xpose.msra.mxu0 %v773
      %791 = vmatmul.f32.gmra.mxu0 %v770
      %v792 = vpop.f32.mrf.mxu0
      %v793 = vadd.f32 0.0, %v792
      %794 = vdwg.mxu0
      %v795 = vperm.slane %v598, 0
      %796 = vrot.lane.b32.xlu0 %v795, 96
      %v797 = vpop.permute.xlu0 %796
      %v798 = vsel %vm452, %v797, 0
      %v801 = vsel %vm452, %v564, 0
      %803 = vmatpush.xpose.msra.mxu0 0.0
      %804 = vmatpush.xpose.msra.mxu0 0.0
      %805 = vmatpush.xpose.msra.mxu0 0.0
      %806 = vmatpush.xpose.msra.mxu0 0.0
      %807 = vmatpush.xpose.msra.mxu0 0.0
      %808 = vmatpush.xpose.msra.mxu0 0.0
      %809 = vmatpush.xpose.msra.mxu0 0.0
      %810 = vmatpush.xpose.msra.mxu0 0.0
      %811 = vmatpush.xpose.msra.mxu0 0.0
      %812 = vmatpush.xpose.msra.mxu0 0.0
      %813 = vmatpush.xpose.msra.mxu0 0.0
      %814 = vmatpush.xpose.msra.mxu0 0.0
      %815 = vmatpush.xpose.msra.mxu0 0.0
      %816 = vmatpush.xpose.msra.mxu0 0.0
      %817 = vmatpush.xpose.msra.mxu0 0.0
      %818 = vmatpush.xpose.msra.mxu0 %v801
      %819 = vmatmul.f32.gmra.mxu0 %v798
      %v820 = vpop.f32.mrf.mxu0
      %v821 = vadd.f32 0.0, %v820
      %822 = vdwg.mxu0
      %v823 = vsel %vm452, %v589, 0
      %v826 = vsel %vm452, %v549, 0
      %828 = vmatpush.xpose.msra.mxu0 0.0
      %829 = vmatpush.xpose.msra.mxu0 0.0
      %830 = vmatpush.xpose.msra.mxu0 0.0
      %831 = vmatpush.xpose.msra.mxu0 0.0
      %832 = vmatpush.xpose.msra.mxu0 0.0
      %833 = vmatpush.xpose.msra.mxu0 0.0
      %834 = vmatpush.xpose.msra.mxu0 0.0
      %835 = vmatpush.xpose.msra.mxu0 0.0
      %836 = vmatpush.xpose.msra.mxu0 0.0
      %837 = vmatpush.xpose.msra.mxu0 0.0
      %838 = vmatpush.xpose.msra.mxu0 0.0
      %839 = vmatpush.xpose.msra.mxu0 0.0
      %840 = vmatpush.xpose.msra.mxu0 0.0
      %841 = vmatpush.xpose.msra.mxu0 0.0
      %842 = vmatpush.xpose.msra.mxu0 0.0
      %843 = vmatpush.xpose.msra.mxu0 %v826
      %844 = vmatmul.f32.gmra.mxu0 %v823
      %v845 = vpop.f32.mrf.mxu0
      %v846 = vadd.f32 %v625, %v845
      %847 = vdwg.mxu0
      %v848 = vsel %vm452, %v592, 0
      %v851 = vsel %vm452, %v550, 0
      %853 = vmatpush.xpose.msra.mxu0 0.0
      %854 = vmatpush.xpose.msra.mxu0 0.0
      %855 = vmatpush.xpose.msra.mxu0 0.0
      %856 = vmatpush.xpose.msra.mxu0 0.0
      %857 = vmatpush.xpose.msra.mxu0 0.0
      %858 = vmatpush.xpose.msra.mxu0 0.0
      %859 = vmatpush.xpose.msra.mxu0 0.0
      %860 = vmatpush.xpose.msra.mxu0 0.0
      %861 = vmatpush.xpose.msra.mxu0 0.0
      %862 = vmatpush.xpose.msra.mxu0 0.0
      %863 = vmatpush.xpose.msra.mxu0 0.0
      %864 = vmatpush.xpose.msra.mxu0 0.0
      %865 = vmatpush.xpose.msra.mxu0 0.0
      %866 = vmatpush.xpose.msra.mxu0 0.0
      %867 = vmatpush.xpose.msra.mxu0 0.0
      %868 = vmatpush.xpose.msra.mxu0 %v851
      %869 = vmatmul.f32.gmra.mxu0 %v848
      %v870 = vpop.f32.mrf.mxu0
      %v871 = vadd.f32 %v653, %v870
      %872 = vdwg.mxu0
      %v873 = vsel %vm452, %v593, 0
      %v876 = vsel %vm452, %v551, 0
      %878 = vmatpush.xpose.msra.mxu0 0.0
      %879 = vmatpush.xpose.msra.mxu0 0.0
      %880 = vmatpush.xpose.msra.mxu0 0.0
      %881 = vmatpush.xpose.msra.mxu0 0.0
      %882 = vmatpush.xpose.msra.mxu0 0.0
      %883 = vmatpush.xpose.msra.mxu0 0.0
      %884 = vmatpush.xpose.msra.mxu0 0.0
      %885 = vmatpush.xpose.msra.mxu0 0.0
      %886 = vmatpush.xpose.msra.mxu0 0.0
      %887 = vmatpush.xpose.msra.mxu0 0.0
      %888 = vmatpush.xpose.msra.mxu0 0.0
      %889 = vmatpush.xpose.msra.mxu0 0.0
      %890 = vmatpush.xpose.msra.mxu0 0.0
      %891 = vmatpush.xpose.msra.mxu0 0.0
      %892 = vmatpush.xpose.msra.mxu0 0.0
      %893 = vmatpush.xpose.msra.mxu0 %v876
      %894 = vmatmul.f32.gmra.mxu0 %v873
      %v895 = vpop.f32.mrf.mxu0
      %v896 = vadd.f32 %v681, %v895
      %897 = vdwg.mxu0
      %v898 = vsel %vm452, %v594, 0
      %v901 = vsel %vm452, %v552, 0
      %903 = vmatpush.xpose.msra.mxu0 0.0
      %904 = vmatpush.xpose.msra.mxu0 0.0
      %905 = vmatpush.xpose.msra.mxu0 0.0
      %906 = vmatpush.xpose.msra.mxu0 0.0
      %907 = vmatpush.xpose.msra.mxu0 0.0
      %908 = vmatpush.xpose.msra.mxu0 0.0
      %909 = vmatpush.xpose.msra.mxu0 0.0
      %910 = vmatpush.xpose.msra.mxu0 0.0
      %911 = vmatpush.xpose.msra.mxu0 0.0
      %912 = vmatpush.xpose.msra.mxu0 0.0
      %913 = vmatpush.xpose.msra.mxu0 0.0
      %914 = vmatpush.xpose.msra.mxu0 0.0
      %915 = vmatpush.xpose.msra.mxu0 0.0
      %916 = vmatpush.xpose.msra.mxu0 0.0
      %917 = vmatpush.xpose.msra.mxu0 0.0
      %918 = vmatpush.xpose.msra.mxu0 %v901
      %919 = vmatmul.f32.gmra.mxu0 %v898
      %v920 = vpop.f32.mrf.mxu0
      %v921 = vadd.f32 %v709, %v920
      %922 = vdwg.mxu0
      %v923 = vsel %vm452, %v595, 0
      %v926 = vsel %vm452, %v553, 0
      %928 = vmatpush.xpose.msra.mxu0 0.0
      %929 = vmatpush.xpose.msra.mxu0 0.0
      %930 = vmatpush.xpose.msra.mxu0 0.0
      %931 = vmatpush.xpose.msra.mxu0 0.0
      %932 = vmatpush.xpose.msra.mxu0 0.0
      %933 = vmatpush.xpose.msra.mxu0 0.0
      %934 = vmatpush.xpose.msra.mxu0 0.0
      %935 = vmatpush.xpose.msra.mxu0 0.0
      %936 = vmatpush.xpose.msra.mxu0 0.0
      %937 = vmatpush.xpose.msra.mxu0 0.0
      %938 = vmatpush.xpose.msra.mxu0 0.0
      %939 = vmatpush.xpose.msra.mxu0 0.0
      %940 = vmatpush.xpose.msra.mxu0 0.0
      %941 = vmatpush.xpose.msra.mxu0 0.0
      %942 = vmatpush.xpose.msra.mxu0 0.0
      %943 = vmatpush.xpose.msra.mxu0 %v926
      %944 = vmatmul.f32.gmra.mxu0 %v923
      %v945 = vpop.f32.mrf.mxu0
      %v946 = vadd.f32 %v737, %v945
      %947 = vdwg.mxu0
      %v948 = vsel %vm452, %v596, 0
      %v951 = vsel %vm452, %v554, 0
      %953 = vmatpush.xpose.msra.mxu0 0.0
      %954 = vmatpush.xpose.msra.mxu0 0.0
      %955 = vmatpush.xpose.msra.mxu0 0.0
      %956 = vmatpush.xpose.msra.mxu0 0.0
      %957 = vmatpush.xpose.msra.mxu0 0.0
      %958 = vmatpush.xpose.msra.mxu0 0.0
      %959 = vmatpush.xpose.msra.mxu0 0.0
      %960 = vmatpush.xpose.msra.mxu0 0.0
      %961 = vmatpush.xpose.msra.mxu0 0.0
      %962 = vmatpush.xpose.msra.mxu0 0.0
      %963 = vmatpush.xpose.msra.mxu0 0.0
      %964 = vmatpush.xpose.msra.mxu0 0.0
      %965 = vmatpush.xpose.msra.mxu0 0.0
      %966 = vmatpush.xpose.msra.mxu0 0.0
      %967 = vmatpush.xpose.msra.mxu0 0.0
      %968 = vmatpush.xpose.msra.mxu0 %v951
      %969 = vmatmul.f32.gmra.mxu0 %v948
      %v970 = vpop.f32.mrf.mxu0
      %v971 = vadd.f32 %v765, %v970
      %972 = vdwg.mxu0
      %v973 = vsel %vm452, %v597, 0
      %v976 = vsel %vm452, %v555, 0
      %978 = vmatpush.xpose.msra.mxu0 0.0
      %979 = vmatpush.xpose.msra.mxu0 0.0
      %980 = vmatpush.xpose.msra.mxu0 0.0
      %981 = vmatpush.xpose.msra.mxu0 0.0
      %982 = vmatpush.xpose.msra.mxu0 0.0
      %983 = vmatpush.xpose.msra.mxu0 0.0
      %984 = vmatpush.xpose.msra.mxu0 0.0
      %985 = vmatpush.xpose.msra.mxu0 0.0
      %986 = vmatpush.xpose.msra.mxu0 0.0
      %987 = vmatpush.xpose.msra.mxu0 0.0
      %988 = vmatpush.xpose.msra.mxu0 0.0
      %989 = vmatpush.xpose.msra.mxu0 0.0
      %990 = vmatpush.xpose.msra.mxu0 0.0
      %991 = vmatpush.xpose.msra.mxu0 0.0
      %992 = vmatpush.xpose.msra.mxu0 0.0
      %993 = vmatpush.xpose.msra.mxu0 %v976
      %994 = vmatmul.f32.gmra.mxu0 %v973
      %v995 = vpop.f32.mrf.mxu0
      %v996 = vadd.f32 %v793, %v995
      %997 = vdwg.mxu0
      %v998 = vsel %vm452, %v598, 0
      %v1001 = vsel %vm452, %v556, 0
      %1003 = vmatpush.xpose.msra.mxu0 0.0
      %1004 = vmatpush.xpose.msra.mxu0 0.0
      %1005 = vmatpush.xpose.msra.mxu0 0.0
      %1006 = vmatpush.xpose.msra.mxu0 0.0
      %1007 = vmatpush.xpose.msra.mxu0 0.0
      %1008 = vmatpush.xpose.msra.mxu0 0.0
      %1009 = vmatpush.xpose.msra.mxu0 0.0
      %1010 = vmatpush.xpose.msra.mxu0 0.0
      %1011 = vmatpush.xpose.msra.mxu0 0.0
      %1012 = vmatpush.xpose.msra.mxu0 0.0
      %1013 = vmatpush.xpose.msra.mxu0 0.0
      %1014 = vmatpush.xpose.msra.mxu0 0.0
      %1015 = vmatpush.xpose.msra.mxu0 0.0
      %1016 = vmatpush.xpose.msra.mxu0 0.0
      %1017 = vmatpush.xpose.msra.mxu0 0.0
      %1018 = vmatpush.xpose.msra.mxu0 %v1001
      %1019 = vmatmul.f32.gmra.mxu0 %v998
      %v1020 = vpop.f32.mrf.mxu0
      %v1021 = vadd.f32 %v821, %v1020
      %1022 = vdwg.mxu0
      %v1023 = vld [vmem:[%s3] sm:$0xff]
      %v1025 = vrot.slane %v1023, 1
      %v1026 = vrot.slane %v1023, 2
      %v1027 = vrot.slane %v1023, 3
      %v1028 = vrot.slane %v1023, 4
      %v1029 = vrot.slane %v1023, 5
      %v1030 = vrot.slane %v1023, 6
      %v1031 = vrot.slane %v1023, 7
      %vm1039 = vcmp.gt.f32.partialorder %v1023, 0.0
      %vm1040 = vcmp.gt.f32.partialorder %v1025, 0.0
      %vm1041 = vcmp.gt.f32.partialorder %v1026, 0.0
      %vm1042 = vcmp.gt.f32.partialorder %v1027, 0.0
      %vm1043 = vcmp.gt.f32.partialorder %v1028, 0.0
      %vm1044 = vcmp.gt.f32.partialorder %v1029, 0.0
      %vm1045 = vcmp.gt.f32.partialorder %v1030, 0.0
      %vm1046 = vcmp.gt.f32.partialorder %v1031, 0.0
      %v1047 = vsel %vm1039, -1e+09, %v846
      %v1048 = vsel %vm1040, -1e+09, %v871
      %v1049 = vsel %vm1041, -1e+09, %v896
      %v1050 = vsel %vm1042, -1e+09, %v921
      %v1051 = vsel %vm1043, -1e+09, %v946
      %v1052 = vsel %vm1044, -1e+09, %v971
      %v1053 = vsel %vm1045, -1e+09, %v996
      %v1054 = vsel %vm1046, -1e+09, %v1021
      %vm1055 = vcmask 57344
      %v1056 = vsel %vm1055, %v1047, -inf
      %1057 = vmax.xlane.f32.xlu0 %v1056
      %v1058 = vpop.xlane.xlu0 %1057
      %v1059 = vsel %vm1055, %v1048, -inf
      %1060 = vmax.xlane.f32.xlu0 %v1059
      %v1061 = vpop.xlane.xlu0 %1060
      %v1062 = vsel %vm1055, %v1049, -inf
      %1063 = vmax.xlane.f32.xlu0 %v1062
      %v1064 = vpop.xlane.xlu0 %1063
      %v1065 = vsel %vm1055, %v1050, -inf
      %1066 = vmax.xlane.f32.xlu0 %v1065
      %v1067 = vpop.xlane.xlu0 %1066
      %v1068 = vsel %vm1055, %v1051, -inf
      %1069 = vmax.xlane.f32.xlu0 %v1068
      %v1070 = vpop.xlane.xlu0 %1069
      %v1071 = vsel %vm1055, %v1052, -inf
      %1072 = vmax.xlane.f32.xlu0 %v1071
      %v1073 = vpop.xlane.xlu0 %1072
      %v1074 = vsel %vm1055, %v1053, -inf
      %1075 = vmax.xlane.f32.xlu0 %v1074
      %v1076 = vpop.xlane.xlu0 %1075
      %v1077 = vsel %vm1055, %v1054, -inf
      %1078 = vmax.xlane.f32.xlu0 %v1077
      %v1079 = vpop.xlane.xlu0 %1078
      %v1080 = vsub.f32 %v1047, %v1058
      %v1081 = vsub.f32 %v1048, %v1061
      %v1082 = vsub.f32 %v1049, %v1064
      %v1083 = vsub.f32 %v1050, %v1067
      %v1084 = vsub.f32 %v1051, %v1070
      %v1085 = vsub.f32 %v1052, %v1073
      %v1086 = vsub.f32 %v1053, %v1076
      %v1087 = vsub.f32 %v1054, %v1079
      %v1088 = vmul.f32 %v1080, 1.442695
      %v1089 = vpow.pop %v1088
      %v1090 = vmul.f32 %v1081, 1.442695
      %v1091 = vpow.pop %v1090
      %v1092 = vmul.f32 %v1082, 1.442695
      %v1093 = vpow.pop %v1092
      %v1094 = vmul.f32 %v1083, 1.442695
      %v1095 = vpow.pop %v1094
      %v1096 = vmul.f32 %v1084, 1.442695
      %v1097 = vpow.pop %v1096
      %v1098 = vmul.f32 %v1085, 1.442695
      %v1099 = vpow.pop %v1098
      %v1100 = vmul.f32 %v1086, 1.442695
      %v1101 = vpow.pop %v1100
      %v1102 = vmul.f32 %v1087, 1.442695
      %v1103 = vpow.pop %v1102
      %v1104 = vsel %vm1055, %v1089, 0.0
      %1105 = vadd.xlane.f32.xlu0 %v1104
      %v1106 = vpop.xlane.xlu0 %1105
      %v1107 = vsel %vm1055, %v1091, 0.0
      %1108 = vadd.xlane.f32.xlu0 %v1107
      %v1109 = vpop.xlane.xlu0 %1108
      %v1110 = vsel %vm1055, %v1093, 0.0
      %1111 = vadd.xlane.f32.xlu0 %v1110
      %v1112 = vpop.xlane.xlu0 %1111
      %v1113 = vsel %vm1055, %v1095, 0.0
      %1114 = vadd.xlane.f32.xlu0 %v1113
      %v1115 = vpop.xlane.xlu0 %1114
      %v1116 = vsel %vm1055, %v1097, 0.0
      %1117 = vadd.xlane.f32.xlu0 %v1116
      %v1118 = vpop.xlane.xlu0 %1117
      %v1119 = vsel %vm1055, %v1099, 0.0
      %1120 = vadd.xlane.f32.xlu0 %v1119
      %v1121 = vpop.xlane.xlu0 %1120
      %v1122 = vsel %vm1055, %v1101, 0.0
      %1123 = vadd.xlane.f32.xlu0 %v1122
      %v1124 = vpop.xlane.xlu0 %1123
      %v1125 = vsel %vm1055, %v1103, 0.0
      %1126 = vadd.xlane.f32.xlu0 %v1125
      %v1127 = vpop.xlane.xlu0 %1126
      %v1128 = vrcp.pop %v1106
      %v1129 = vrcp.pop %v1109
      %v1130 = vrcp.pop %v1112
      %v1131 = vrcp.pop %v1115
      %v1132 = vrcp.pop %v1118
      %v1133 = vrcp.pop %v1121
      %v1134 = vrcp.pop %v1124
      %v1135 = vrcp.pop %v1127
      %v1136 = vmul.f32 %v1089, %v1128
      %v1137 = vmul.f32 %v1091, %v1129
      %v1138 = vmul.f32 %v1093, %v1130
      %v1139 = vmul.f32 %v1095, %v1131
      %v1140 = vmul.f32 %v1097, %v1132
      %v1141 = vmul.f32 %v1099, %v1133
      %v1142 = vmul.f32 %v1101, %v1134
      %v1143 = vmul.f32 %v1103, %v1135
      %vm1144 = vcmask 64512
      %v1146 = vsel %vm1144, %v1136, 0
      %1148 = vmatpush.msra.mxu0 0.0
      %1149 = vmatpush.msra.mxu0 0.0
      %1150 = vmatpush.msra.mxu0 0.0
      %1151 = vmatpush.msra.mxu0 0.0
      %1152 = vmatpush.msra.mxu0 0.0
      %1153 = vmatpush.msra.mxu0 0.0
      %1154 = vmatpush.msra.mxu0 0.0
      %1155 = vmatpush.msra.mxu0 0.0
      %1156 = vmatpush.msra.mxu0 0.0
      %1157 = vmatpush.msra.mxu0 0.0
      %1158 = vmatpush.msra.mxu0 0.0
      %1159 = vmatpush.msra.mxu0 0.0
      %1160 = vmatpush.msra.mxu0 0.0
      %1161 = vmatpush.msra.mxu0 0.0
      %1162 = vmatpush.msra.mxu0 0.0
      %1163 = vmatpush.msra.mxu0 %v549
      %1164 = vmatmul.f32.gmra.mxu0 %v1146
      %v1165 = vpop.f32.mrf.mxu0
      %v1166 = vadd.f32 0.0, %v1165
      %1167 = vdwg.mxu0
      %v1169 = vsel %vm1144, %v1137, 0
      %1171 = vmatpush.msra.mxu0 0.0
      %1172 = vmatpush.msra.mxu0 0.0
      %1173 = vmatpush.msra.mxu0 0.0
      %1174 = vmatpush.msra.mxu0 0.0
      %1175 = vmatpush.msra.mxu0 0.0
      %1176 = vmatpush.msra.mxu0 0.0
      %1177 = vmatpush.msra.mxu0 0.0
      %1178 = vmatpush.msra.mxu0 0.0
      %1179 = vmatpush.msra.mxu0 0.0
      %1180 = vmatpush.msra.mxu0 0.0
      %1181 = vmatpush.msra.mxu0 0.0
      %1182 = vmatpush.msra.mxu0 0.0
      %1183 = vmatpush.msra.mxu0 0.0
      %1184 = vmatpush.msra.mxu0 0.0
      %1185 = vmatpush.msra.mxu0 0.0
      %1186 = vmatpush.msra.mxu0 %v550
      %1187 = vmatmul.f32.gmra.mxu0 %v1169
      %v1188 = vpop.f32.mrf.mxu0
      %v1189 = vadd.f32 0.0, %v1188
      %1190 = vdwg.mxu0
      %v1192 = vsel %vm1144, %v1138, 0
      %1194 = vmatpush.msra.mxu0 0.0
      %1195 = vmatpush.msra.mxu0 0.0
      %1196 = vmatpush.msra.mxu0 0.0
      %1197 = vmatpush.msra.mxu0 0.0
      %1198 = vmatpush.msra.mxu0 0.0
      %1199 = vmatpush.msra.mxu0 0.0
      %1200 = vmatpush.msra.mxu0 0.0
      %1201 = vmatpush.msra.mxu0 0.0
      %1202 = vmatpush.msra.mxu0 0.0
      %1203 = vmatpush.msra.mxu0 0.0
      %1204 = vmatpush.msra.mxu0 0.0
      %1205 = vmatpush.msra.mxu0 0.0
      %1206 = vmatpush.msra.mxu0 0.0
      %1207 = vmatpush.msra.mxu0 0.0
      %1208 = vmatpush.msra.mxu0 0.0
      %1209 = vmatpush.msra.mxu0 %v551
      %1210 = vmatmul.f32.gmra.mxu0 %v1192
      %v1211 = vpop.f32.mrf.mxu0
      %v1212 = vadd.f32 0.0, %v1211
      %1213 = vdwg.mxu0
      %v1215 = vsel %vm1144, %v1139, 0
      %1217 = vmatpush.msra.mxu0 0.0
      %1218 = vmatpush.msra.mxu0 0.0
      %1219 = vmatpush.msra.mxu0 0.0
      %1220 = vmatpush.msra.mxu0 0.0
      %1221 = vmatpush.msra.mxu0 0.0
      %1222 = vmatpush.msra.mxu0 0.0
      %1223 = vmatpush.msra.mxu0 0.0
      %1224 = vmatpush.msra.mxu0 0.0
      %1225 = vmatpush.msra.mxu0 0.0
      %1226 = vmatpush.msra.mxu0 0.0
      %1227 = vmatpush.msra.mxu0 0.0
      %1228 = vmatpush.msra.mxu0 0.0
      %1229 = vmatpush.msra.mxu0 0.0
      %1230 = vmatpush.msra.mxu0 0.0
      %1231 = vmatpush.msra.mxu0 0.0
      %1232 = vmatpush.msra.mxu0 %v552
      %1233 = vmatmul.f32.gmra.mxu0 %v1215
      %v1234 = vpop.f32.mrf.mxu0
      %v1235 = vadd.f32 0.0, %v1234
      %1236 = vdwg.mxu0
      %v1238 = vsel %vm1144, %v1140, 0
      %1240 = vmatpush.msra.mxu0 0.0
      %1241 = vmatpush.msra.mxu0 0.0
      %1242 = vmatpush.msra.mxu0 0.0
      %1243 = vmatpush.msra.mxu0 0.0
      %1244 = vmatpush.msra.mxu0 0.0
      %1245 = vmatpush.msra.mxu0 0.0
      %1246 = vmatpush.msra.mxu0 0.0
      %1247 = vmatpush.msra.mxu0 0.0
      %1248 = vmatpush.msra.mxu0 0.0
      %1249 = vmatpush.msra.mxu0 0.0
      %1250 = vmatpush.msra.mxu0 0.0
      %1251 = vmatpush.msra.mxu0 0.0
      %1252 = vmatpush.msra.mxu0 0.0
      %1253 = vmatpush.msra.mxu0 0.0
      %1254 = vmatpush.msra.mxu0 0.0
      %1255 = vmatpush.msra.mxu0 %v553
      %1256 = vmatmul.f32.gmra.mxu0 %v1238
      %v1257 = vpop.f32.mrf.mxu0
      %v1258 = vadd.f32 0.0, %v1257
      %1259 = vdwg.mxu0
      %v1261 = vsel %vm1144, %v1141, 0
      %1263 = vmatpush.msra.mxu0 0.0
      %1264 = vmatpush.msra.mxu0 0.0
      %1265 = vmatpush.msra.mxu0 0.0
      %1266 = vmatpush.msra.mxu0 0.0
      %1267 = vmatpush.msra.mxu0 0.0
      %1268 = vmatpush.msra.mxu0 0.0
      %1269 = vmatpush.msra.mxu0 0.0
      %1270 = vmatpush.msra.mxu0 0.0
      %1271 = vmatpush.msra.mxu0 0.0
      %1272 = vmatpush.msra.mxu0 0.0
      %1273 = vmatpush.msra.mxu0 0.0
      %1274 = vmatpush.msra.mxu0 0.0
      %1275 = vmatpush.msra.mxu0 0.0
      %1276 = vmatpush.msra.mxu0 0.0
      %1277 = vmatpush.msra.mxu0 0.0
      %1278 = vmatpush.msra.mxu0 %v554
      %1279 = vmatmul.f32.gmra.mxu0 %v1261
      %v1280 = vpop.f32.mrf.mxu0
      %v1281 = vadd.f32 0.0, %v1280
      %1282 = vdwg.mxu0
      %v1284 = vsel %vm1144, %v1142, 0
      %1286 = vmatpush.msra.mxu0 0.0
      %1287 = vmatpush.msra.mxu0 0.0
      %1288 = vmatpush.msra.mxu0 0.0
      %1289 = vmatpush.msra.mxu0 0.0
      %1290 = vmatpush.msra.mxu0 0.0
      %1291 = vmatpush.msra.mxu0 0.0
      %1292 = vmatpush.msra.mxu0 0.0
      %1293 = vmatpush.msra.mxu0 0.0
      %1294 = vmatpush.msra.mxu0 0.0
      %1295 = vmatpush.msra.mxu0 0.0
      %1296 = vmatpush.msra.mxu0 0.0
      %1297 = vmatpush.msra.mxu0 0.0
      %1298 = vmatpush.msra.mxu0 0.0
      %1299 = vmatpush.msra.mxu0 0.0
      %1300 = vmatpush.msra.mxu0 0.0
      %1301 = vmatpush.msra.mxu0 %v555
      %1302 = vmatmul.f32.gmra.mxu0 %v1284
      %v1303 = vpop.f32.mrf.mxu0
      %v1304 = vadd.f32 0.0, %v1303
      %1305 = vdwg.mxu0
      %v1307 = vsel %vm1144, %v1143, 0
      %1309 = vmatpush.msra.mxu0 0.0
      %1310 = vmatpush.msra.mxu0 0.0
      %1311 = vmatpush.msra.mxu0 0.0
      %1312 = vmatpush.msra.mxu0 0.0
      %1313 = vmatpush.msra.mxu0 0.0
      %1314 = vmatpush.msra.mxu0 0.0
      %1315 = vmatpush.msra.mxu0 0.0
      %1316 = vmatpush.msra.mxu0 0.0
      %1317 = vmatpush.msra.mxu0 0.0
      %1318 = vmatpush.msra.mxu0 0.0
      %1319 = vmatpush.msra.mxu0 0.0
      %1320 = vmatpush.msra.mxu0 0.0
      %1321 = vmatpush.msra.mxu0 0.0
      %1322 = vmatpush.msra.mxu0 0.0
      %1323 = vmatpush.msra.mxu0 0.0
      %1324 = vmatpush.msra.mxu0 %v556
      %1325 = vmatmul.f32.gmra.mxu0 %v1307
      %v1326 = vpop.f32.mrf.mxu0
      %v1327 = vadd.f32 0.0, %v1326
      %1328 = vdwg.mxu0
      %1329 = vmatpush.msra.mxu0 0.0
      %1330 = vmatpush.msra.mxu0 0.0
      %1331 = vmatpush.msra.mxu0 0.0
      %1332 = vmatpush.msra.mxu0 0.0
      %1333 = vmatpush.msra.mxu0 0.0
      %1334 = vmatpush.msra.mxu0 0.0
      %1335 = vmatpush.msra.mxu0 0.0
      %1336 = vmatpush.msra.mxu0 0.0
      %1337 = vmatpush.msra.mxu0 0.0
      %1338 = vmatpush.msra.mxu0 0.0
      %1339 = vmatpush.msra.mxu0 0.0
      %1340 = vmatpush.msra.mxu0 0.0
      %1341 = vmatpush.msra.mxu0 0.0
      %1342 = vmatpush.msra.mxu0 0.0
      %1343 = vmatpush.msra.mxu0 0.0
      %1344 = vmatpush.msra.mxu0 %v557
      %1345 = vmatmul.f32.gmra.mxu0 %v1146
      %v1346 = vpop.f32.mrf.mxu0
      %v1347 = vadd.f32 0.0, %v1346
      %1348 = vdwg.mxu0
      %1349 = vmatpush.msra.mxu0 0.0
      %1350 = vmatpush.msra.mxu0 0.0
      %1351 = vmatpush.msra.mxu0 0.0
      %1352 = vmatpush.msra.mxu0 0.0
      %1353 = vmatpush.msra.mxu0 0.0
      %1354 = vmatpush.msra.mxu0 0.0
      %1355 = vmatpush.msra.mxu0 0.0
      %1356 = vmatpush.msra.mxu0 0.0
      %1357 = vmatpush.msra.mxu0 0.0
      %1358 = vmatpush.msra.mxu0 0.0
      %1359 = vmatpush.msra.mxu0 0.0
      %1360 = vmatpush.msra.mxu0 0.0
      %1361 = vmatpush.msra.mxu0 0.0
      %1362 = vmatpush.msra.mxu0 0.0
      %1363 = vmatpush.msra.mxu0 0.0
      %1364 = vmatpush.msra.mxu0 %v558
      %1365 = vmatmul.f32.gmra.mxu0 %v1169
      %v1366 = vpop.f32.mrf.mxu0
      %v1367 = vadd.f32 0.0, %v1366
      %1368 = vdwg.mxu0
      %1369 = vmatpush.msra.mxu0 0.0
      %1370 = vmatpush.msra.mxu0 0.0
      %1371 = vmatpush.msra.mxu0 0.0
      %1372 = vmatpush.msra.mxu0 0.0
      %1373 = vmatpush.msra.mxu0 0.0
      %1374 = vmatpush.msra.mxu0 0.0
      %1375 = vmatpush.msra.mxu0 0.0
      %1376 = vmatpush.msra.mxu0 0.0
      %1377 = vmatpush.msra.mxu0 0.0
      %1378 = vmatpush.msra.mxu0 0.0
      %1379 = vmatpush.msra.mxu0 0.0
      %1380 = vmatpush.msra.mxu0 0.0
      %1381 = vmatpush.msra.mxu0 0.0
      %1382 = vmatpush.msra.mxu0 0.0
      %1383 = vmatpush.msra.mxu0 0.0
      %1384 = vmatpush.msra.mxu0 %v559
      %1385 = vmatmul.f32.gmra.mxu0 %v1192
      %v1386 = vpop.f32.mrf.mxu0
      %v1387 = vadd.f32 0.0, %v1386
      %1388 = vdwg.mxu0
      %1389 = vmatpush.msra.mxu0 0.0
      %1390 = vmatpush.msra.mxu0 0.0
      %1391 = vmatpush.msra.mxu0 0.0
      %1392 = vmatpush.msra.mxu0 0.0
      %1393 = vmatpush.msra.mxu0 0.0
      %1394 = vmatpush.msra.mxu0 0.0
      %1395 = vmatpush.msra.mxu0 0.0
      %1396 = vmatpush.msra.mxu0 0.0
      %1397 = vmatpush.msra.mxu0 0.0
      %1398 = vmatpush.msra.mxu0 0.0
      %1399 = vmatpush.msra.mxu0 0.0
      %1400 = vmatpush.msra.mxu0 0.0
      %1401 = vmatpush.msra.mxu0 0.0
      %1402 = vmatpush.msra.mxu0 0.0
      %1403 = vmatpush.msra.mxu0 0.0
      %1404 = vmatpush.msra.mxu0 %v560
      %1405 = vmatmul.f32.gmra.mxu0 %v1215
      %v1406 = vpop.f32.mrf.mxu0
      %v1407 = vadd.f32 0.0, %v1406
      %1408 = vdwg.mxu0
      %1409 = vmatpush.msra.mxu0 0.0
      %1410 = vmatpush.msra.mxu0 0.0
      %1411 = vmatpush.msra.mxu0 0.0
      %1412 = vmatpush.msra.mxu0 0.0
      %1413 = vmatpush.msra.mxu0 0.0
      %1414 = vmatpush.msra.mxu0 0.0
      %1415 = vmatpush.msra.mxu0 0.0
      %1416 = vmatpush.msra.mxu0 0.0
      %1417 = vmatpush.msra.mxu0 0.0
      %1418 = vmatpush.msra.mxu0 0.0
      %1419 = vmatpush.msra.mxu0 0.0
      %1420 = vmatpush.msra.mxu0 0.0
      %1421 = vmatpush.msra.mxu0 0.0
      %1422 = vmatpush.msra.mxu0 0.0
      %1423 = vmatpush.msra.mxu0 0.0
      %1424 = vmatpush.msra.mxu0 %v561
      %1425 = vmatmul.f32.gmra.mxu0 %v1238
      %v1426 = vpop.f32.mrf.mxu0
      %v1427 = vadd.f32 0.0, %v1426
      %1428 = vdwg.mxu0
      %1429 = vmatpush.msra.mxu0 0.0
      %1430 = vmatpush.msra.mxu0 0.0
      %1431 = vmatpush.msra.mxu0 0.0
      %1432 = vmatpush.msra.mxu0 0.0
      %1433 = vmatpush.msra.mxu0 0.0
      %1434 = vmatpush.msra.mxu0 0.0
      %1435 = vmatpush.msra.mxu0 0.0
      %1436 = vmatpush.msra.mxu0 0.0
      %1437 = vmatpush.msra.mxu0 0.0
      %1438 = vmatpush.msra.mxu0 0.0
      %1439 = vmatpush.msra.mxu0 0.0
      %1440 = vmatpush.msra.mxu0 0.0
      %1441 = vmatpush.msra.mxu0 0.0
      %1442 = vmatpush.msra.mxu0 0.0
      %1443 = vmatpush.msra.mxu0 0.0
      %1444 = vmatpush.msra.mxu0 %v562
      %1445 = vmatmul.f32.gmra.mxu0 %v1261
      %v1446 = vpop.f32.mrf.mxu0
      %v1447 = vadd.f32 0.0, %v1446
      %1448 = vdwg.mxu0
      %1449 = vmatpush.msra.mxu0 0.0
      %1450 = vmatpush.msra.mxu0 0.0
      %1451 = vmatpush.msra.mxu0 0.0
      %1452 = vmatpush.msra.mxu0 0.0
      %1453 = vmatpush.msra.mxu0 0.0
      %1454 = vmatpush.msra.mxu0 0.0
      %1455 = vmatpush.msra.mxu0 0.0
      %1456 = vmatpush.msra.mxu0 0.0
      %1457 = vmatpush.msra.mxu0 0.0
      %1458 = vmatpush.msra.mxu0 0.0
      %1459 = vmatpush.msra.mxu0 0.0
      %1460 = vmatpush.msra.mxu0 0.0
      %1461 = vmatpush.msra.mxu0 0.0
      %1462 = vmatpush.msra.mxu0 0.0
      %1463 = vmatpush.msra.mxu0 0.0
      %1464 = vmatpush.msra.mxu0 %v563
      %1465 = vmatmul.f32.gmra.mxu0 %v1284
      %v1466 = vpop.f32.mrf.mxu0
      %v1467 = vadd.f32 0.0, %v1466
      %1468 = vdwg.mxu0
      %1469 = vmatpush.msra.mxu0 0.0
      %1470 = vmatpush.msra.mxu0 0.0
      %1471 = vmatpush.msra.mxu0 0.0
      %1472 = vmatpush.msra.mxu0 0.0
      %1473 = vmatpush.msra.mxu0 0.0
      %1474 = vmatpush.msra.mxu0 0.0
      %1475 = vmatpush.msra.mxu0 0.0
      %1476 = vmatpush.msra.mxu0 0.0
      %1477 = vmatpush.msra.mxu0 0.0
      %1478 = vmatpush.msra.mxu0 0.0
      %1479 = vmatpush.msra.mxu0 0.0
      %1480 = vmatpush.msra.mxu0 0.0
      %1481 = vmatpush.msra.mxu0 0.0
      %1482 = vmatpush.msra.mxu0 0.0
      %1483 = vmatpush.msra.mxu0 0.0
      %1484 = vmatpush.msra.mxu0 %v564
      %1485 = vmatmul.f32.gmra.mxu0 %v1307
      %v1486 = vpop.f32.mrf.mxu0
      %v1487 = vadd.f32 0.0, %v1486
      %1488 = vdwg.mxu0
      %v1489 = vld [vmem:[%s10] sm:$0xff]
      %v1490 = vld [vmem:[%s10 + $0x8] sm:$0xff]
      %v1491 = vld [vmem:[%s10 + $0x10] sm:$0xff]
      %v1492 = vld [vmem:[%s10 + $0x18] sm:$0xff]
      %v1493 = vld [vmem:[%s11] sm:$0xff]
      %v1494 = vld [vmem:[%s11 + $0x8] sm:$0xff]
      %v1495 = vld [vmem:[%s11 + $0x10] sm:$0xff]
      %v1496 = vld [vmem:[%s11 + $0x18] sm:$0xff]
      %v1505 = vrot.slane %v1367, 7
      %vm1506 = vcmask 1041409
      %v1507 = vsel %vm1506, %v1505, %v1347
      %v1508 = vrot.slane %v1387, 6
      %vm1509 = vcmask 1042434
      %v1510 = vsel %vm1509, %v1508, %v1507
      %v1511 = vrot.slane %v1407, 5
      %vm1512 = vcmask 1043459
      %v1513 = vsel %vm1512, %v1511, %v1510
      %v1514 = vrot.slane %v1427, 4
      %vm1515 = vcmask 1044484
      %v1516 = vsel %vm1515, %v1514, %v1513
      %v1517 = vrot.slane %v1447, 3
      %vm1518 = vcmask 1045509
      %v1519 = vsel %vm1518, %v1517, %v1516
      %v1520 = vrot.slane %v1467, 2
      %vm1521 = vcmask 1046534
      %v1522 = vsel %vm1521, %v1520, %v1519
      %v1523 = vrot.slane %v1487, 1
      %vm1524 = vcmask 1047559
      %v1525 = vsel %vm1524, %v1523, %v1522
      %v1526 = vsel %vm452, %v1525, 0
      %1528 = vmatpush.msra.mxu0 0.0
      %1529 = vmatpush.msra.mxu0 0.0
      %1530 = vmatpush.msra.mxu0 0.0
      %1531 = vmatpush.msra.mxu0 0.0
      %1532 = vmatpush.msra.mxu0 0.0
      %1533 = vmatpush.msra.mxu0 0.0
      %1534 = vmatpush.msra.mxu0 0.0
      %1535 = vmatpush.msra.mxu0 0.0
      %1536 = vmatpush.msra.mxu0 0.0
      %1537 = vmatpush.msra.mxu0 0.0
      %1538 = vmatpush.msra.mxu0 0.0
      %1539 = vmatpush.msra.mxu0 0.0
      %1540 = vmatpush.msra.mxu0 %v1496
      %1541 = vmatpush.msra.mxu0 %v1495
      %1542 = vmatpush.msra.mxu0 %v1494
      %1543 = vmatpush.msra.mxu0 %v1493
      %1544 = vmatmul.f32.gmra.mxu0 %v1526
      %v1545 = vpop.f32.mrf.mxu0
      %v1546 = vadd.f32 0.0, %v1545
      %1547 = vdwg.mxu0
      %v1556 = vrot.slane %v1189, 7
      %v1557 = vsel %vm1506, %v1556, %v1166
      %v1558 = vrot.slane %v1212, 6
      %v1559 = vsel %vm1509, %v1558, %v1557
      %v1560 = vrot.slane %v1235, 5
      %v1561 = vsel %vm1512, %v1560, %v1559
      %v1562 = vrot.slane %v1258, 4
      %v1563 = vsel %vm1515, %v1562, %v1561
      %v1564 = vrot.slane %v1281, 3
      %v1565 = vsel %vm1518, %v1564, %v1563
      %v1566 = vrot.slane %v1304, 2
      %v1567 = vsel %vm1521, %v1566, %v1565
      %v1568 = vrot.slane %v1327, 1
      %v1569 = vsel %vm1524, %v1568, %v1567
      %v1570 = vsel %vm452, %v1569, 0
      %1572 = vmatpush.msra.mxu0 0.0
      %1573 = vmatpush.msra.mxu0 0.0
      %1574 = vmatpush.msra.mxu0 0.0
      %1575 = vmatpush.msra.mxu0 0.0
      %1576 = vmatpush.msra.mxu0 0.0
      %1577 = vmatpush.msra.mxu0 0.0
      %1578 = vmatpush.msra.mxu0 0.0
      %1579 = vmatpush.msra.mxu0 0.0
      %1580 = vmatpush.msra.mxu0 0.0
      %1581 = vmatpush.msra.mxu0 0.0
      %1582 = vmatpush.msra.mxu0 0.0
      %1583 = vmatpush.msra.mxu0 0.0
      %1584 = vmatpush.msra.mxu0 %v1492
      %1585 = vmatpush.msra.mxu0 %v1491
      %1586 = vmatpush.msra.mxu0 %v1490
      %1587 = vmatpush.msra.mxu0 %v1489
      %1588 = vmatmul.f32.gmra.mxu0 %v1570
      %v1589 = vpop.f32.mrf.mxu0
      %v1590 = vadd.f32 %v1546, %v1589
      %1591 = vdwg.mxu0
      %v1592 = vld [vmem:[%s12] sm:$0xff]
      %v1593 = vld [vmem:[%s12 + $0x8] sm:$0xff]
      %v1594 = vld [vmem:[%s12 + $0x10] sm:$0xff]
      %v1595 = vld [vmem:[%s12 + $0x18] sm:$0xff]
      %1596 = vmatpush.msra.mxu0 0.0
      %1597 = vmatpush.msra.mxu0 0.0
      %1598 = vmatpush.msra.mxu0 0.0
      %1599 = vmatpush.msra.mxu0 0.0
      %1600 = vmatpush.msra.mxu0 0.0
      %1601 = vmatpush.msra.mxu0 0.0
      %1602 = vmatpush.msra.mxu0 0.0
      %1603 = vmatpush.msra.mxu0 0.0
      %1604 = vmatpush.msra.mxu0 0.0
      %1605 = vmatpush.msra.mxu0 0.0
      %1606 = vmatpush.msra.mxu0 0.0
      %1607 = vmatpush.msra.mxu0 0.0
      %1608 = vmatpush.msra.mxu0 %v1595
      %1609 = vmatpush.msra.mxu0 %v1594
      %1610 = vmatpush.msra.mxu0 %v1593
      %1611 = vmatpush.msra.mxu0 %v1592
      %1612 = vmatmul.f32.gmra.mxu0 %v569
      %v1613 = vpop.f32.mrf.mxu0
      %v1614 = vadd.f32 0.0, %v1613
      %1615 = vdwg.mxu0
      %v1616 = vadd.f32 %v1590, %v1614
      %v1617 = vtanh.pop %v1616
      %1618 = vst.msk [vmem:[#allocation4] sm:$0xff] %vm452, %v1617
      %1619 = vst.msk [vmem:[%s435] sm:$0xff] %vm452, %v1617
      %p1620 = scmp.lt.s32.totalorder %s24, 5
      %s1621 = scalar_select %p1620, %s24, 5
      %s1622 = smul.addr %s1621, 8
      %s1623 = scalar_lea.vmem %s13, %s1622
      // Predicated region
      $region77: #{nmt_forward.8} parent=71 // pred_check
        %p1624 = pneg %p320
      $region78: #{nmt_forward.8} parent=71 // pred_check_branch
        %1626 = sbr.rel (%p1624) target = $region80
      $region79: #{nmt_forward.8} parent=71 // pred_region
        _
      $region80: #{nmt_forward.8} parent=71 // pred_fallthru
        _
    $region72: #{nmt_forward.8} parent=5 // pred_fallthru
      _
    %p1627 = scmp.le.s32.totalorder 2, %s19
    // Predicated region
    $region81: #{nmt_forward.8} parent=5 // pred_check
      %p1628 = pneg %p1627
    $region82: #{nmt_forward.8} parent=5 // pred_check_branch
      %1630 = sbr.rel (%p1628) target = $region84
    $region83: #{nmt_forward.8} parent=5 // pred_region
      %s1631 = ssub.s32 %s19, 2
      // Predicated region
      $region85: #{nmt_forward.8} parent=83 // pred_check
        %p1632 = pneg %p326
      $region86: #{nmt_forward.8} parent=83 // pred_check_branch
        %1634 = sbr.rel (%p1632) target = $region88
      $region87: #{nmt_forward.8} parent=83 // pred_region
        %p1635 = scmp.lt.s32.totalorder %s25, 5
        %s1636 = scalar_select %p1635, %s25, 5
        %s1637 = smul.addr %s1636, 8
        %s1638 = scalar_lea.vmem %s13, %s1637
      $region88: #{nmt_forward.8} parent=83 // pred_fallthru
        _
    $region84: #{nmt_forward.8} parent=5 // pred_fallthru
      _
  $region6: #{nmt_forward.8} parent=0 // loop_footer
    %s23 = sadd.s32 1, %s19
  $region7: #{nmt_forward.8} parent=0 // loop_footer_branch
    %18 = sbr.rel target = $region3
  $region8: #{nmt_forward.8} parent=0 // loop_exit
    _

// kernel: nmt_forward.9
$region0: #{nmt_forward.9}
  #allocation0 [shape = 'u32[]', space=smem, size = 0x4, offset = 0x4, fixed_abs, tag = 'smem constant byte address 0x4 - core index']
  #allocation1 [shape = 'u32[72,128]{1,0:T(1,128)}', space=vmem, size = 0x9000, scoped, tag = 'internal scratch']
  #allocation2 [shape = 'f32[128,1]{1,0:T(8,128)}', space=vmem, size = 0x10000, scoped, tag = 'scratch operand']
  #allocation3 [shape = 'f32[128,1]{1,0:T(8,128)}', space=vmem, size = 0x10000, scoped, tag = 'scratch operand']
  #allocation4 [shape = 'f32[128,1]{1,0:T(8,128)}', space=vmem, size = 0x10000, scoped, tag = 'scratch operand']
  %s0 = inlined_call_operand.vmem [shape: f32[128,32], index: 0, kind: input, shape index: {}]
  %s1 = inlined_call_operand.vmem [shape: bf16[32,128], index: 1, kind: input, shape index: {}]
  %s2 = inlined_call_operand.vmem [shape: s32[128,1], index: 2, kind: input, shape index: {}]
  %s3 = inlined_call_operand.vmem [shape: f32[128,1], index: 3, kind: input, shape index: {}]
  %s4 = inlined_call_operand.vmem [shape: f32[128,1], index: 4, kind: output, shape index: {}]
  %s5 = sld [smem:[#allocation0]]
  $region34: #{nmt_forward.9} parent=0
    _
  %s7 = ssub.s32 1, %s5
  %s8 = scalar_select 0, %s7, %s5
  // Predicated region
  $region2: #{nmt_forward.9} parent=0 // pred_check
    _
  $region3: #{nmt_forward.9} parent=0 // pred_check_branch
    %10 = sbr.rel (0) target = $region5
  $region4: #{nmt_forward.9} parent=0 // pred_region
    _
  $region5: #{nmt_forward.9} parent=0 // pred_fallthru
    _
  // Predicated region
  $region6: #{nmt_forward.9} parent=0 // pred_check
    _
  $region7: #{nmt_forward.9} parent=0 // pred_check_branch
    %12 = sbr.rel (0) target = $region9
  $region8: #{nmt_forward.9} parent=0 // pred_region
    _
  $region9: #{nmt_forward.9} parent=0 // pred_fallthru
    _
  // Predicated region
  $region10: #{nmt_forward.9} parent=0 // pred_check
    _
  $region11: #{nmt_forward.9} parent=0 // pred_check_branch
    %14 = sbr.rel (0) target = $region13
  $region12: #{nmt_forward.9} parent=0 // pred_region
    _
  $region13: #{nmt_forward.9} parent=0 // pred_fallthru
    _
  // Predicated region
  $region14: #{nmt_forward.9} parent=0 // pred_check
    _
  $region15: #{nmt_forward.9} parent=0 // pred_check_branch
    %16 = sbr.rel (0) target = $region17
  $region16: #{nmt_forward.9} parent=0 // pred_region
    _
  $region17: #{nmt_forward.9} parent=0 // pred_fallthru
    _
  %p18 = scmp.eq.s32.totalorder 0, 0
  // Predicated region
  $region18: #{nmt_forward.9} parent=0 // pred_check
    %p19 = pneg %p18
  $region19: #{nmt_forward.9} parent=0 // pred_check_branch
    %21 = sbr.rel (%p19) target = $region21
  $region20: #{nmt_forward.9} parent=0 // pred_region
    %vm22 = vcmask 7168
    %23 = vst.msk [vmem:[#allocation2] sm:$0xff] %vm22, -1e+30
    %24 = vst.msk [vmem:[#allocation2 + $0x8] sm:$0xff] %vm22, -1e+30
    %25 = vst.msk [vmem:[#allocation2 + $0x10] sm:$0xff] %vm22, -1e+30
    %26 = vst.msk [vmem:[#allocation2 + $0x18] sm:$0xff] %vm22, -1e+30
    %27 = vst.msk [vmem:[#allocation2 + $0x20] sm:$0xff] %vm22, -1e+30
    %28 = vst.msk [vmem:[#allocation2 + $0x28] sm:$0xff] %vm22, -1e+30
    %29 = vst.msk [vmem:[#allocation2 + $0x30] sm:$0xff] %vm22, -1e+30
    %30 = vst.msk [vmem:[#allocation2 + $0x38] sm:$0xff] %vm22, -1e+30
    %31 = vst.msk [vmem:[#allocation2 + $0x40] sm:$0xff] %vm22, -1e+30
    %32 = vst.msk [vmem:[#allocation2 + $0x48] sm:$0xff] %vm22, -1e+30
    %33 = vst.msk [vmem:[#allocation2 + $0x50] sm:$0xff] %vm22, -1e+30
    %34 = vst.msk [vmem:[#allocation2 + $0x58] sm:$0xff] %vm22, -1e+30
    %35 = vst.msk [vmem:[#allocation2 + $0x60] sm:$0xff] %vm22, -1e+30
    %36 = vst.msk [vmem:[#allocation2 + $0x68] sm:$0xff] %vm22, -1e+30
    %37 = vst.msk [vmem:[#allocation2 + $0x70] sm:$0xff] %vm22, -1e+30
    %38 = vst.msk [vmem:[#allocation2 + $0x78] sm:$0xff] %vm22, -1e+30
    %39 = vst.msk [vmem:[#allocation3] sm:$0xff] %vm22, 0.0
    %40 = vst.msk [vmem:[#allocation3 + $0x8] sm:$0xff] %vm22, 0.0
    %41 = vst.msk [vmem:[#allocation3 + $0x10] sm:$0xff] %vm22, 0.0
    %42 = vst.msk [vmem:[#allocation3 + $0x18] sm:$0xff] %vm22, 0.0
    %43 = vst.msk [vmem:[#allocation3 + $0x20] sm:$0xff] %vm22, 0.0
    %44 = vst.msk [vmem:[#allocation3 + $0x28] sm:$0xff] %vm22, 0.0
    %45 = vst.msk [vmem:[#allocation3 + $0x30] sm:$0xff] %vm22, 0.0
    %46 = vst.msk [vmem:[#allocation3 + $0x38] sm:$0xff] %vm22, 0.0
    %47 = vst.msk [vmem:[#allocation3 + $0x40] sm:$0xff] %vm22, 0.0
    %48 = vst.msk [vmem:[#allocation3 + $0x48] sm:$0xff] %vm22, 0.0
    %49 = vst.msk [vmem:[#allocation3 + $0x50] sm:$0xff] %vm22, 0.0
    %50 = vst.msk [vmem:[#allocation3 + $0x58] sm:$0xff] %vm22, 0.0
    %51 = vst.msk [vmem:[#allocation3 + $0x60] sm:$0xff] %vm22, 0.0
    %52 = vst.msk [vmem:[#allocation3 + $0x68] sm:$0xff] %vm22, 0.0
    %53 = vst.msk [vmem:[#allocation3 + $0x70] sm:$0xff] %vm22, 0.0
    %54 = vst.msk [vmem:[#allocation3 + $0x78] sm:$0xff] %vm22, 0.0
    %55 = vst.msk [vmem:[#allocation4] sm:$0xff] %vm22, 0.0
    %56 = vst.msk [vmem:[#allocation4 + $0x8] sm:$0xff] %vm22, 0.0
    %57 = vst.msk [vmem:[#allocation4 + $0x10] sm:$0xff] %vm22, 0.0
    %58 = vst.msk [vmem:[#allocation4 + $0x18] sm:$0xff] %vm22, 0.0
    %59 = vst.msk [vmem:[#allocation4 + $0x20] sm:$0xff] %vm22, 0.0
    %60 = vst.msk [vmem:[#allocation4 + $0x28] sm:$0xff] %vm22, 0.0
    %61 = vst.msk [vmem:[#allocation4 + $0x30] sm:$0xff] %vm22, 0.0
    %62 = vst.msk [vmem:[#allocation4 + $0x38] sm:$0xff] %vm22, 0.0
    %63 = vst.msk [vmem:[#allocation4 + $0x40] sm:$0xff] %vm22, 0.0
    %64 = vst.msk [vmem:[#allocation4 + $0x48] sm:$0xff] %vm22, 0.0
    %65 = vst.msk [vmem:[#allocation4 + $0x50] sm:$0xff] %vm22, 0.0
    %66 = vst.msk [vmem:[#allocation4 + $0x58] sm:$0xff] %vm22, 0.0
    %67 = vst.msk [vmem:[#allocation4 + $0x60] sm:$0xff] %vm22, 0.0
    %68 = vst.msk [vmem:[#allocation4 + $0x68] sm:$0xff] %vm22, 0.0
    %69 = vst.msk [vmem:[#allocation4 + $0x70] sm:$0xff] %vm22, 0.0
    %70 = vst.msk [vmem:[#allocation4 + $0x78] sm:$0xff] %vm22, 0.0
  $region21: #{nmt_forward.9} parent=0 // pred_fallthru
    _
  %v71 = vld [vmem:[%s0] sm:$0xff]
  %v72 = vld [vmem:[%s0 + $0x8] sm:$0xff]
  %v73 = vld [vmem:[%s0 + $0x10] sm:$0xff]
  %v74 = vld [vmem:[%s0 + $0x18] sm:$0xff]
  %v75 = vld [vmem:[%s0 + $0x20] sm:$0xff]
  %v76 = vld [vmem:[%s0 + $0x28] sm:$0xff]
  %v77 = vld [vmem:[%s0 + $0x30] sm:$0xff]
  %v78 = vld [vmem:[%s0 + $0x38] sm:$0xff]
  %v79 = vld [vmem:[%s0 + $0x40] sm:$0xff]
  %v80 = vld [vmem:[%s0 + $0x48] sm:$0xff]
  %v81 = vld [vmem:[%s0 + $0x50] sm:$0xff]
  %v82 = vld [vmem:[%s0 + $0x58] sm:$0xff]
  %v83 = vld [vmem:[%s0 + $0x60] sm:$0xff]
  %v84 = vld [vmem:[%s0 + $0x68] sm:$0xff]
  %v85 = vld [vmem:[%s0 + $0x70] sm:$0xff]
  %v86 = vld [vmem:[%s0 + $0x78] sm:$0xff]
  %v87 = vpack.c.bf16 %v72, %v71
  %v88 = vpack.c.bf16 %v74, %v73
  %v89 = vpack.c.bf16 %v76, %v75
  %v90 = vpack.c.bf16 %v78, %v77
  %v91 = vpack.c.bf16 %v80, %v79
  %v92 = vpack.c.bf16 %v82, %v81
  %v93 = vpack.c.bf16 %v84, %v83
  %v94 = vpack.c.bf16 %v86, %v85
  %v95 = vld [vmem:[%s1] sm:$0xf]
  %v96 = vld [vmem:[%s1 + $0x4] sm:$0xf]
  %v97 = vld [vmem:[%s1 + $0x8] sm:$0xf]
  %v98 = vld [vmem:[%s1 + $0xc] sm:$0xf]
  %v103 = vunpack.c.l.b16 %v95
  %v104 = vunpack.c.l.b16 %v96
  %v105 = vunpack.c.l.b16 %v97
  %v106 = vunpack.c.l.b16 %v98
  %v107 = vpack.c.b16 %v104, %v103
  %v108 = vpack.c.b16 %v106, %v105
  %vm111 = vcmask 261120
  %v113 = vsel %vm111, %v87, 0
  %v116 = vsel %vm111, %v88, 0
  %v119 = vsel %vm111, %v89, 0
  %v122 = vsel %vm111, %v90, 0
  %v125 = vsel %vm111, %v91, 0
  %v128 = vsel %vm111, %v92, 0
  %v131 = vsel %vm111, %v93, 0
  %v134 = vsel %vm111, %v94, 0
  %136 = vmatpush.bf16.msra.mxu0 0
  %137 = vmatpush.bf16.msra.mxu0 0
  %138 = vmatpush.bf16.msra.mxu0 0
  %139 = vmatpush.bf16.msra.mxu0 0
  %140 = vmatpush.bf16.msra.mxu0 0
  %141 = vmatpush.bf16.msra.mxu0 0
  %142 = vmatpush.bf16.msra.mxu0 %v108
  %143 = vmatpush.bf16.msra.mxu0 %v107
  %144 = vmatmul.bf16.gmra.mxu0 %v113
  %v145 = vpop.f32.mrf.mxu0
  %v146 = vadd.f32 0.0, %v145
  %v147 = vpop.f32.mrf.mxu0
  %v148 = vadd.f32 0.0, %v147
  %149 = vmatmul.bf16.gmra.mxu0 %v116
  %v150 = vpop.f32.mrf.mxu0
  %v151 = vadd.f32 0.0, %v150
  %v152 = vpop.f32.mrf.mxu0
  %v153 = vadd.f32 0.0, %v152
  %154 = vmatmul.bf16.gmra.mxu0 %v119
  %v155 = vpop.f32.mrf.mxu0
  %v156 = vadd.f32 0.0, %v155
  %v157 = vpop.f32.mrf.mxu0
  %v158 = vadd.f32 0.0, %v157
  %159 = vmatmul.bf16.gmra.mxu0 %v122
  %v160 = vpop.f32.mrf.mxu0
  %v161 = vadd.f32 0.0, %v160
  %v162 = vpop.f32.mrf.mxu0
  %v163 = vadd.f32 0.0, %v162
  %164 = vmatmul.bf16.gmra.mxu0 %v125
  %v165 = vpop.f32.mrf.mxu0
  %v166 = vadd.f32 0.0, %v165
  %v167 = vpop.f32.mrf.mxu0
  %v168 = vadd.f32 0.0, %v167
  %169 = vmatmul.bf16.gmra.mxu0 %v128
  %v170 = vpop.f32.mrf.mxu0
  %v171 = vadd.f32 0.0, %v170
  %v172 = vpop.f32.mrf.mxu0
  %v173 = vadd.f32 0.0, %v172
  %174 = vmatmul.bf16.gmra.mxu0 %v131
  %v175 = vpop.f32.mrf.mxu0
  %v176 = vadd.f32 0.0, %v175
  %v177 = vpop.f32.mrf.mxu0
  %v178 = vadd.f32 0.0, %v177
  %179 = vmatmul.bf16.gmra.mxu0 %v134
  %v180 = vpop.f32.mrf.mxu0
  %v181 = vadd.f32 0.0, %v180
  %v182 = vpop.f32.mrf.mxu0
  %v183 = vadd.f32 0.0, %v182
  %184 = vdwg.mxu0
  %v185 = vlaneseq
  %v186 = vand.u32 %v185, 127
  %s187 = smul.u32 0, 128
  %v188 = vstv %s187
  %v189 = vadd.s32 %v186, %v188
  %vm190 = vcmp.lt.s32.totalorder %v189, 40
  %v191 = vsel %vm190, %v146, -1e+30
  %v192 = vsel %vm190, %v148, -1e+30
  %v193 = vsel %vm190, %v151, -1e+30
  %v194 = vsel %vm190, %v153, -1e+30
  %v195 = vsel %vm190, %v156, -1e+30
  %v196 = vsel %vm190, %v158, -1e+30
  %v197 = vsel %vm190, %v161, -1e+30
  %v198 = vsel %vm190, %v163, -1e+30
  %v199 = vsel %vm190, %v166, -1e+30
  %v200 = vsel %vm190, %v168, -1e+30
  %v201 = vsel %vm190, %v171, -1e+30
  %v202 = vsel %vm190, %v173, -1e+30
  %v203 = vsel %vm190, %v176, -1e+30
  %v204 = vsel %vm190, %v178, -1e+30
  %v205 = vsel %vm190, %v181, -1e+30
  %v206 = vsel %vm190, %v183, -1e+30
  %v207 = vld [vmem:[%s2] sm:$0xff]
  %v208 = vld [vmem:[%s2 + $0x8] sm:$0xff]
  %v209 = vld [vmem:[%s2 + $0x10] sm:$0xff]
  %v210 = vld [vmem:[%s2 + $0x18] sm:$0xff]
  %v211 = vld [vmem:[%s2 + $0x20] sm:$0xff]
  %v212 = vld [vmem:[%s2 + $0x28] sm:$0xff]
  %v213 = vld [vmem:[%s2 + $0x30] sm:$0xff]
  %v214 = vld [vmem:[%s2 + $0x38] sm:$0xff]
  %v215 = vld [vmem:[%s2 + $0x40] sm:$0xff]
  %v216 = vld [vmem:[%s2 + $0x48] sm:$0xff]
  %v217 = vld [vmem:[%s2 + $0x50] sm:$0xff]
  %v218 = vld [vmem:[%s2 + $0x58] sm:$0xff]
  %v219 = vld [vmem:[%s2 + $0x60] sm:$0xff]
  %v220 = vld [vmem:[%s2 + $0x68] sm:$0xff]
  %v221 = vld [vmem:[%s2 + $0x70] sm:$0xff]
  %v222 = vld [vmem:[%s2 + $0x78] sm:$0xff]
  %223 = vset.pattern.permute.xlu0 0
  %224 = vperm.xlu0 %223, %v207
  %v225 = vpop.permute.xlu0 %224
  %226 = vset.pattern.permute.xlu0 0
  %227 = vperm.xlu0 %226, %v208
  %v228 = vpop.permute.xlu0 %227
  %229 = vset.pattern.permute.xlu0 0
  %230 = vperm.xlu0 %229, %v209
  %v231 = vpop.permute.xlu0 %230
  %232 = vset.pattern.permute.xlu0 0
  %233 = vperm.xlu0 %232, %v210
  %v234 = vpop.permute.xlu0 %233
  %235 = vset.pattern.permute.xlu0 0
  %236 = vperm.xlu0 %235, %v211
  %v237 = vpop.permute.xlu0 %236
  %238 = vset.pattern.permute.xlu0 0
  %239 = vperm.xlu0 %238, %v212
  %v240 = vpop.permute.xlu0 %239
  %241 = vset.pattern.permute.xlu0 0
  %242 = vperm.xlu0 %241, %v213
  %v243 = vpop.permute.xlu0 %242
  %244 = vset.pattern.permute.xlu0 0
  %245 = vperm.xlu0 %244, %v214
  %v246 = vpop.permute.xlu0 %245
  %247 = vset.pattern.permute.xlu0 0
  %248 = vperm.xlu0 %247, %v215
  %v249 = vpop.permute.xlu0 %248
  %250 = vset.pattern.permute.xlu0 0
  %251 = vperm.xlu0 %250, %v216
  %v252 = vpop.permute.xlu0 %251
  %253 = vset.pattern.permute.xlu0 0
  %254 = vperm.xlu0 %253, %v217
  %v255 = vpop.permute.xlu0 %254
  %256 = vset.pattern.permute.xlu0 0
  %257 = vperm.xlu0 %256, %v218
  %v258 = vpop.permute.xlu0 %257
  %259 = vset.pattern.permute.xlu0 0
  %260 = vperm.xlu0 %259, %v219
  %v261 = vpop.permute.xlu0 %260
  %262 = vset.pattern.permute.xlu0 0
  %263 = vperm.xlu0 %262, %v220
  %v264 = vpop.permute.xlu0 %263
  %265 = vset.pattern.permute.xlu0 0
  %266 = vperm.xlu0 %265, %v221
  %v267 = vpop.permute.xlu0 %266
  %268 = vset.pattern.permute.xlu0 0
  %269 = vperm.xlu0 %268, %v222
  %v270 = vpop.permute.xlu0 %269
  %vm271 = vcmp.eq.s32.totalorder %v189, %v225
  %vm272 = vcmp.eq.s32.totalorder %v189, %v228
  %vm273 = vcmp.eq.s32.totalorder %v189, %v231
  %vm274 = vcmp.eq.s32.totalorder %v189, %v234
  %vm275 = vcmp.eq.s32.totalorder %v189, %v237
  %vm276 = vcmp.eq.s32.totalorder %v189, %v240
  %vm277 = vcmp.eq.s32.totalorder %v189, %v243
  %vm278 = vcmp.eq.s32.totalorder %v189, %v246
  %vm279 = vcmp.eq.s32.totalorder %v189, %v249
  %vm280 = vcmp.eq.s32.totalorder %v189, %v252
  %vm281 = vcmp.eq.s32.totalorder %v189, %v255
  %vm282 = vcmp.eq.s32.totalorder %v189, %v258
  %vm283 = vcmp.eq.s32.totalorder %v189, %v261
  %vm284 = vcmp.eq.s32.totalorder %v189, %v264
  %vm285 = vcmp.eq.s32.totalorder %v189, %v267
  %vm286 = vcmp.eq.s32.totalorder %v189, %v270
  %v287 = vsel %vm271, 1, 0
  %v288 = vsel %vm272, 1, 0
  %v289 = vsel %vm273, 1, 0
  %v290 = vsel %vm274, 1, 0
  %v291 = vsel %vm275, 1, 0
  %v292 = vsel %vm276, 1, 0
  %v293 = vsel %vm277, 1, 0
  %v294 = vsel %vm278, 1, 0
  %v295 = vsel %vm279, 1, 0
  %v296 = vsel %vm280, 1, 0
  %v297 = vsel %vm281, 1, 0
  %v298 = vsel %vm282, 1, 0
  %v299 = vsel %vm283, 1, 0
  %v300 = vsel %vm284, 1, 0
  %v301 = vsel %vm285, 1, 0
  %v302 = vsel %vm286, 1, 0
  %v303 = vcvt.s32.f32 %v287
  %v304 = vcvt.s32.f32 %v288
  %v305 = vcvt.s32.f32 %v289
  %v306 = vcvt.s32.f32 %v290
  %v307 = vcvt.s32.f32 %v291
  %v308 = vcvt.s32.f32 %v292
  %v309 = vcvt.s32.f32 %v293
  %v310 = vcvt.s32.f32 %v294
  %v311 = vcvt.s32.f32 %v295
  %v312 = vcvt.s32.f32 %v296
  %v313 = vcvt.s32.f32 %v297
  %v314 = vcvt.s32.f32 %v298
  %v315 = vcvt.s32.f32 %v299
  %v316 = vcvt.s32.f32 %v300
  %v317 = vcvt.s32.f32 %v301
  %v318 = vcvt.s32.f32 %v302
  %v319 = vld [vmem:[#allocation4] sm:$0xff]
  %v320 = vld [vmem:[#allocation4 + $0x8] sm:$0xff]
  %v321 = vld [vmem:[#allocation4 + $0x10] sm:$0xff]
  %v322 = vld [vmem:[#allocation4 + $0x18] sm:$0xff]
  %v323 = vld [vmem:[#allocation4 + $0x20] sm:$0xff]
  %v324 = vld [vmem:[#allocation4 + $0x28] sm:$0xff]
  %v325 = vld [vmem:[#allocation4 + $0x30] sm:$0xff]
  %v326 = vld [vmem:[#allocation4 + $0x38] sm:$0xff]
  %v327 = vld [vmem:[#allocation4 + $0x40] sm:$0xff]
  %v328 = vld [vmem:[#allocation4 + $0x48] sm:$0xff]
  %v329 = vld [vmem:[#allocation4 + $0x50] sm:$0xff]
  %v330 = vld [vmem:[#allocation4 + $0x58] sm:$0xff]
  %v331 = vld [vmem:[#allocation4 + $0x60] sm:$0xff]
  %v332 = vld [vmem:[#allocation4 + $0x68] sm:$0xff]
  %v333 = vld [vmem:[#allocation4 + $0x70] sm:$0xff]
  %v334 = vld [vmem:[#allocation4 + $0x78] sm:$0xff]
  %v335 = vmul.f32 %v191, %v303
  %v336 = vmul.f32 %v192, %v304
  %v337 = vmul.f32 %v193, %v305
  %v338 = vmul.f32 %v194, %v306
  %v339 = vmul.f32 %v195, %v307
  %v340 = vmul.f32 %v196, %v308
  %v341 = vmul.f32 %v197, %v309
  %v342 = vmul.f32 %v198, %v310
  %v343 = vmul.f32 %v199, %v311
  %v344 = vmul.f32 %v200, %v312
  %v345 = vmul.f32 %v201, %v313
  %v346 = vmul.f32 %v202, %v314
  %v347 = vmul.f32 %v203, %v315
  %v348 = vmul.f32 %v204, %v316
  %v349 = vmul.f32 %v205, %v317
  %v350 = vmul.f32 %v206, %v318
  %351 = vadd.xlane.f32.xlu0 %v335
  %v352 = vpop.xlane.xlu0 %351
  %353 = vadd.xlane.f32.xlu0 %v336
  %v354 = vpop.xlane.xlu0 %353
  %355 = vadd.xlane.f32.xlu0 %v337
  %v356 = vpop.xlane.xlu0 %355
  %357 = vadd.xlane.f32.xlu0 %v338
  %v358 = vpop.xlane.xlu0 %357
  %359 = vadd.xlane.f32.xlu0 %v339
  %v360 = vpop.xlane.xlu0 %359
  %361 = vadd.xlane.f32.xlu0 %v340
  %v362 = vpop.xlane.xlu0 %361
  %363 = vadd.xlane.f32.xlu0 %v341
  %v364 = vpop.xlane.xlu0 %363
  %365 = vadd.xlane.f32.xlu0 %v342
  %v366 = vpop.xlane.xlu0 %365
  %367 = vadd.xlane.f32.xlu0 %v343
  %v368 = vpop.xlane.xlu0 %367
  %369 = vadd.xlane.f32.xlu0 %v344
  %v370 = vpop.xlane.xlu0 %369
  %371 = vadd.xlane.f32.xlu0 %v345
  %v372 = vpop.xlane.xlu0 %371
  %373 = vadd.xlane.f32.xlu0 %v346
  %v374 = vpop.xlane.xlu0 %373
  %375 = vadd.xlane.f32.xlu0 %v347
  %v376 = vpop.xlane.xlu0 %375
  %377 = vadd.xlane.f32.xlu0 %v348
  %v378 = vpop.xlane.xlu0 %377
  %379 = vadd.xlane.f32.xlu0 %v349
  %v380 = vpop.xlane.xlu0 %379
  %381 = vadd.xlane.f32.xlu0 %v350
  %v382 = vpop.xlane.xlu0 %381
  %v383 = vadd.f32 %v319, %v352
  %v384 = vadd.f32 %v320, %v354
  %v385 = vadd.f32 %v321, %v356
  %v386 = vadd.f32 %v322, %v358
  %v387 = vadd.f32 %v323, %v360
  %v388 = vadd.f32 %v324, %v362
  %v389 = vadd.f32 %v325, %v364
  %v390 = vadd.f32 %v326, %v366
  %v391 = vadd.f32 %v327, %v368
  %v392 = vadd.f32 %v328, %v370
  %v393 = vadd.f32 %v329, %v372
  %v394 = vadd.f32 %v330, %v374
  %v395 = vadd.f32 %v331, %v376
  %v396 = vadd.f32 %v332, %v378
  %v397 = vadd.f32 %v333, %v380
  %v398 = vadd.f32 %v334, %v382
  %vm399 = vcmask 7168
  %400 = vst.msk [vmem:[#allocation4] sm:$0xff] %vm399, %v383
  %401 = vst.msk [vmem:[#allocation4 + $0x8] sm:$0xff] %vm399, %v384
  %402 = vst.msk [vmem:[#allocation4 + $0x10] sm:$0xff] %vm399, %v385
  %403 = vst.msk [vmem:[#allocation4 + $0x18] sm:$0xff] %vm399, %v386
  %404 = vst.msk [vmem:[#allocation4 + $0x20] sm:$0xff] %vm399, %v387
  %405 = vst.msk [vmem:[#allocation4 + $0x28] sm:$0xff] %vm399, %v388
  %406 = vst.msk [vmem:[#allocation4 + $0x30] sm:$0xff] %vm399, %v389
  %407 = vst.msk [vmem:[#allocation4 + $0x38] sm:$0xff] %vm399, %v390
  %408 = vst.msk [vmem:[#allocation4 + $0x40] sm:$0xff] %vm399, %v391
  %409 = vst.msk [vmem:[#allocation4 + $0x48] sm:$0xff] %vm399, %v392
  %410 = vst.msk [vmem:[#allocation4 + $0x50] sm:$0xff] %vm399, %v393
  %411 = vst.msk [vmem:[#allocation4 + $0x58] sm:$0xff] %vm399, %v394
  %412 = vst.msk [vmem:[#allocation4 + $0x60] sm:$0xff] %vm399, %v395
  %413 = vst.msk [vmem:[#allocation4 + $0x68] sm:$0xff] %vm399, %v396
  %414 = vst.msk [vmem:[#allocation4 + $0x70] sm:$0xff] %vm399, %v397
  %415 = vst.msk [vmem:[#allocation4 + $0x78] sm:$0xff] %vm399, %v398
  %v416 = vld [vmem:[#allocation2] sm:$0xff]
  %v417 = vld [vmem:[#allocation2 + $0x8] sm:$0xff]
  %v418 = vld [vmem:[#allocation2 + $0x10] sm:$0xff]
  %v419 = vld [vmem:[#allocation2 + $0x18] sm:$0xff]
  %v420 = vld [vmem:[#allocation2 + $0x20] sm:$0xff]
  %v421 = vld [vmem:[#allocation2 + $0x28] sm:$0xff]
  %v422 = vld [vmem:[#allocation2 + $0x30] sm:$0xff]
  %v423 = vld [vmem:[#allocation2 + $0x38] sm:$0xff]
  %v424 = vld [vmem:[#allocation2 + $0x40] sm:$0xff]
  %v425 = vld [vmem:[#allocation2 + $0x48] sm:$0xff]
  %v426 = vld [vmem:[#allocation2 + $0x50] sm:$0xff]
  %v427 = vld [vmem:[#allocation2 + $0x58] sm:$0xff]
  %v428 = vld [vmem:[#allocation2 + $0x60] sm:$0xff]
  %v429 = vld [vmem:[#allocation2 + $0x68] sm:$0xff]
  %v430 = vld [vmem:[#allocation2 + $0x70] sm:$0xff]
  %v431 = vld [vmem:[#allocation2 + $0x78] sm:$0xff]
  %432 = vmax.xlane.f32.xlu0 %v191
  %v433 = vpop.xlane.xlu0 %432
  %434 = vmax.xlane.f32.xlu0 %v192
  %v435 = vpop.xlane.xlu0 %434
  %436 = vmax.xlane.f32.xlu0 %v193
  %v437 = vpop.xlane.xlu0 %436
  %438 = vmax.xlane.f32.xlu0 %v194
  %v439 = vpop.xlane.xlu0 %438
  %440 = vmax.xlane.f32.xlu0 %v195
  %v441 = vpop.xlane.xlu0 %440
  %442 = vmax.xlane.f32.xlu0 %v196
  %v443 = vpop.xlane.xlu0 %442
  %444 = vmax.xlane.f32.xlu0 %v197
  %v445 = vpop.xlane.xlu0 %444
  %446 = vmax.xlane.f32.xlu0 %v198
  %v447 = vpop.xlane.xlu0 %446
  %448 = vmax.xlane.f32.xlu0 %v199
  %v449 = vpop.xlane.xlu0 %448
  %450 = vmax.xlane.f32.xlu0 %v200
  %v451 = vpop.xlane.xlu0 %450
  %452 = vmax.xlane.f32.xlu0 %v201
  %v453 = vpop.xlane.xlu0 %452
  %454 = vmax.xlane.f32.xlu0 %v202
  %v455 = vpop.xlane.xlu0 %454
  %456 = vmax.xlane.f32.xlu0 %v203
  %v457 = vpop.xlane.xlu0 %456
  %458 = vmax.xlane.f32.xlu0 %v204
  %v459 = vpop.xlane.xlu0 %458
  %460 = vmax.xlane.f32.xlu0 %v205
  %v461 = vpop.xlane.xlu0 %460
  %462 = vmax.xlane.f32.xlu0 %v206
  %v463 = vpop.xlane.xlu0 %462
  %v464 = vmax.f32 %v416, %v433
  %v465 = vmax.f32 %v417, %v435
  %v466 = vmax.f32 %v418, %v437
  %v467 = vmax.f32 %v419, %v439
  %v468 = vmax.f32 %v420, %v441
  %v469 = vmax.f32 %v421, %v443
  %v470 = vmax.f32 %v422, %v445
  %v471 = vmax.f32 %v423, %v447
  %v472 = vmax.f32 %v424, %v449
  %v473 = vmax.f32 %v425, %v451
  %v474 = vmax.f32 %v426, %v453
  %v475 = vmax.f32 %v427, %v455
  %v476 = vmax.f32 %v428, %v457
  %v477 = vmax.f32 %v429, %v459
  %v478 = vmax.f32 %v430, %v461
  %v479 = vmax.f32 %v431, %v463
  %v480 = vld [vmem:[#allocation3] sm:$0xff]
  %v481 = vld [vmem:[#allocation3 + $0x8] sm:$0xff]
  %v482 = vld [vmem:[#allocation3 + $0x10] sm:$0xff]
  %v483 = vld [vmem:[#allocation3 + $0x18] sm:$0xff]
  %v484 = vld [vmem:[#allocation3 + $0x20] sm:$0xff]
  %v485 = vld [vmem:[#allocation3 + $0x28] sm:$0xff]
  %v486 = vld [vmem:[#allocation3 + $0x30] sm:$0xff]
  %v487 = vld [vmem:[#allocation3 + $0x38] sm:$0xff]
  %v488 = vld [vmem:[#allocation3 + $0x40] sm:$0xff]
  %v489 = vld [vmem:[#allocation3 + $0x48] sm:$0xff]
  %v490 = vld [vmem:[#allocation3 + $0x50] sm:$0xff]
  %v491 = vld [vmem:[#allocation3 + $0x58] sm:$0xff]
  %v492 = vld [vmem:[#allocation3 + $0x60] sm:$0xff]
  %v493 = vld [vmem:[#allocation3 + $0x68] sm:$0xff]
  %v494 = vld [vmem:[#allocation3 + $0x70] sm:$0xff]
  %v495 = vld [vmem:[#allocation3 + $0x78] sm:$0xff]
  %v496 = vsub.f32 %v416, %v464
  %v497 = vsub.f32 %v417, %v465
  %v498 = vsub.f32 %v418, %v466
  %v499 = vsub.f32 %v419, %v467
  %v500 = vsub.f32 %v420, %v468
  %v501 = vsub.f32 %v421, %v469
  %v502 = vsub.f32 %v422, %v470
  %v503 = vsub.f32 %v423, %v471
  %v504 = vsub.f32 %v424, %v472
  %v505 = vsub.f32 %v425, %v473
  %v506 = vsub.f32 %v426, %v474
  %v507 = vsub.f32 %v427, %v475
  %v508 = vsub.f32 %v428, %v476
  %v509 = vsub.f32 %v429, %v477
  %v510 = vsub.f32 %v430, %v478
  %v511 = vsub.f32 %v431, %v479
  %v512 = vmul.f32 %v496, 1.442695
  %v513 = vpow.pop %v512
  %v514 = vmul.f32 %v497, 1.442695
  %v515 = vpow.pop %v514
  %v516 = vmul.f32 %v498, 1.442695
  %v517 = vpow.pop %v516
  %v518 = vmul.f32 %v499, 1.442695
  %v519 = vpow.pop %v518
  %v520 = vmul.f32 %v500, 1.442695
  %v521 = vpow.pop %v520
  %v522 = vmul.f32 %v501, 1.442695
  %v523 = vpow.pop %v522
  %v524 = vmul.f32 %v502, 1.442695
  %v525 = vpow.pop %v524
  %v526 = vmul.f32 %v503, 1.442695
  %v527 = vpow.pop %v526
  %v528 = vmul.f32 %v504, 1.442695
  %v529 = vpow.pop %v528
  %v530 = vmul.f32 %v505, 1.442695
  %v531 = vpow.pop %v530
  %v532 = vmul.f32 %v506, 1.442695
  %v533 = vpow.pop %v532
  %v534 = vmul.f32 %v507, 1.442695
  %v535 = vpow.pop %v534
  %v536 = vmul.f32 %v508, 1.442695
  %v537 = vpow.pop %v536
  %v538 = vmul.f32 %v509, 1.442695
  %v539 = vpow.pop %v538
  %v540 = vmul.f32 %v510, 1.442695
  %v541 = vpow.pop %v540
  %v542 = vmul.f32 %v511, 1.442695
  %v543 = vpow.pop %v542
  %v544 = vmul.f32 %v480, %v513
  %v545 = vmul.f32 %v481, %v515
  %v546 = vmul.f32 %v482, %v517
  %v547 = vmul.f32 %v483, %v519
  %v548 = vmul.f32 %v484, %v521
  %v549 = vmul.f32 %v485, %v523
  %v550 = vmul.f32 %v486, %v525
  %v551 = vmul.f32 %v487, %v527
  %v552 = vmul.f32 %v488, %v529
  %v553 = vmul.f32 %v489, %v531
  %v554 = vmul.f32 %v490, %v533
  %v555 = vmul.f32 %v491, %v535
  %v556 = vmul.f32 %v492, %v537
  %v557 = vmul.f32 %v493, %v539
  %v558 = vmul.f32 %v494, %v541
  %v559 = vmul.f32 %v495, %v543
  %561 = vset.pattern.permute.xlu0 0
  %562 = vperm.xlu0 %561, %v464
  %v563 = vpop.permute.xlu0 %562
  %566 = vset.pattern.permute.xlu0 0
  %567 = vperm.xlu0 %566, %v465
  %v568 = vpop.permute.xlu0 %567
  %571 = vset.pattern.permute.xlu0 0
  %572 = vperm.xlu0 %571, %v466
  %v573 = vpop.permute.xlu0 %572
  %576 = vset.pattern.permute.xlu0 0
  %577 = vperm.xlu0 %576, %v467
  %v578 = vpop.permute.xlu0 %577
  %581 = vset.pattern.permute.xlu0 0
  %582 = vperm.xlu0 %581, %v468
  %v583 = vpop.permute.xlu0 %582
  %586 = vset.pattern.permute.xlu0 0
  %587 = vperm.xlu0 %586, %v469
  %v588 = vpop.permute.xlu0 %587
  %591 = vset.pattern.permute.xlu0 0
  %592 = vperm.xlu0 %591, %v470
  %v593 = vpop.permute.xlu0 %592
  %596 = vset.pattern.permute.xlu0 0
  %597 = vperm.xlu0 %596, %v471
  %v598 = vpop.permute.xlu0 %597
  %601 = vset.pattern.permute.xlu0 0
  %602 = vperm.xlu0 %601, %v472
  %v603 = vpop.permute.xlu0 %602
  %606 = vset.pattern.permute.xlu0 0
  %607 = vperm.xlu0 %606, %v473
  %v608 = vpop.permute.xlu0 %607
  %611 = vset.pattern.permute.xlu0 0
  %612 = vperm.xlu0 %611, %v474
  %v613 = vpop.permute.xlu0 %612
  %616 = vset.pattern.permute.xlu0 0
  %617 = vperm.xlu0 %616, %v475
  %v618 = vpop.permute.xlu0 %617
  %621 = vset.pattern.permute.xlu0 0
  %622 = vperm.xlu0 %621, %v476
  %v623 = vpop.permute.xlu0 %622
  %626 = vset.pattern.permute.xlu0 0
  %627 = vperm.xlu0 %626, %v477
  %v628 = vpop.permute.xlu0 %627
  %631 = vset.pattern.permute.xlu0 0
  %632 = vperm.xlu0 %631, %v478
  %v633 = vpop.permute.xlu0 %632
  %636 = vset.pattern.permute.xlu0 0
  %637 = vperm.xlu0 %636, %v479
  %v638 = vpop.permute.xlu0 %637
  %v640 = vsub.f32 %v191, %v563
  %v641 = vsub.f32 %v192, %v568
  %v642 = vsub.f32 %v193, %v573
  %v643 = vsub.f32 %v194, %v578
  %v644 = vsub.f32 %v195, %v583
  %v645 = vsub.f32 %v196, %v588
  %v646 = vsub.f32 %v197, %v593
  %v647 = vsub.f32 %v198, %v598
  %v648 = vsub.f32 %v199, %v603
  %v649 = vsub.f32 %v200, %v608
  %v650 = vsub.f32 %v201, %v613
  %v651 = vsub.f32 %v202, %v618
  %v652 = vsub.f32 %v203, %v623
  %v653 = vsub.f32 %v204, %v628
  %v654 = vsub.f32 %v205, %v633
  %v655 = vsub.f32 %v206, %v638
  %v656 = vmul.f32 %v640, 1.442695
  %v657 = vpow.pop %v656
  %v658 = vmul.f32 %v641, 1.442695
  %v659 = vpow.pop %v658
  %v660 = vmul.f32 %v642, 1.442695
  %v661 = vpow.pop %v660
  %v662 = vmul.f32 %v643, 1.442695
  %v663 = vpow.pop %v662
  %v664 = vmul.f32 %v644, 1.442695
  %v665 = vpow.pop %v664
  %v666 = vmul.f32 %v645, 1.442695
  %v667 = vpow.pop %v666
  %v668 = vmul.f32 %v646, 1.442695
  %v669 = vpow.pop %v668
  %v670 = vmul.f32 %v647, 1.442695
  %v671 = vpow.pop %v670
  %v672 = vmul.f32 %v648, 1.442695
  %v673 = vpow.pop %v672
  %v674 = vmul.f32 %v649, 1.442695
  %v675 = vpow.pop %v674
  %v676 = vmul.f32 %v650, 1.442695
  %v677 = vpow.pop %v676
  %v678 = vmul.f32 %v651, 1.442695
  %v679 = vpow.pop %v678
  %v680 = vmul.f32 %v652, 1.442695
  %v681 = vpow.pop %v680
  %v682 = vmul.f32 %v653, 1.442695
  %v683 = vpow.pop %v682
  %v684 = vmul.f32 %v654, 1.442695
  %v685 = vpow.pop %v684
  %v686 = vmul.f32 %v655, 1.442695
  %v687 = vpow.pop %v686
  %688 = vadd.xlane.f32.xlu0 %v657
  %v689 = vpop.xlane.xlu0 %688
  %690 = vadd.xlane.f32.xlu0 %v659
  %v691 = vpop.xlane.xlu0 %690
  %692 = vadd.xlane.f32.xlu0 %v661
  %v693 = vpop.xlane.xlu0 %692
  %694 = vadd.xlane.f32.xlu0 %v663
  %v695 = vpop.xlane.xlu0 %694
  %696 = vadd.xlane.f32.xlu0 %v665
  %v697 = vpop.xlane.xlu0 %696
  %698 = vadd.xlane.f32.xlu0 %v667
  %v699 = vpop.xlane.xlu0 %698
  %700 = vadd.xlane.f32.xlu0 %v669
  %v701 = vpop.xlane.xlu0 %700
  %702 = vadd.xlane.f32.xlu0 %v671
  %v703 = vpop.xlane.xlu0 %702
  %704 = vadd.xlane.f32.xlu0 %v673
  %v705 = vpop.xlane.xlu0 %704
  %706 = vadd.xlane.f32.xlu0 %v675
  %v707 = vpop.xlane.xlu0 %706
  %708 = vadd.xlane.f32.xlu0 %v677
  %v709 = vpop.xlane.xlu0 %708
  %710 = vadd.xlane.f32.xlu0 %v679
  %v711 = vpop.xlane.xlu0 %710
  %712 = vadd.xlane.f32.xlu0 %v681
  %v713 = vpop.xlane.xlu0 %712
  %714 = vadd.xlane.f32.xlu0 %v683
  %v715 = vpop.xlane.xlu0 %714
  %716 = vadd.xlane.f32.xlu0 %v685
  %v717 = vpop.xlane.xlu0 %716
  %718 = vadd.xlane.f32.xlu0 %v687
  %v719 = vpop.xlane.xlu0 %718
  %v720 = vadd.f32 %v544, %v689
  %v721 = vadd.f32 %v545, %v691
  %v722 = vadd.f32 %v546, %v693
  %v723 = vadd.f32 %v547, %v695
  %v724 = vadd.f32 %v548, %v697
  %v725 = vadd.f32 %v549, %v699
  %v726 = vadd.f32 %v550, %v701
  %v727 = vadd.f32 %v551, %v703
  %v728 = vadd.f32 %v552, %v705
  %v729 = vadd.f32 %v553, %v707
  %v730 = vadd.f32 %v554, %v709
  %v731 = vadd.f32 %v555, %v711
  %v732 = vadd.f32 %v556, %v713
  %v733 = vadd.f32 %v557, %v715
  %v734 = vadd.f32 %v558, %v717
  %v735 = vadd.f32 %v559, %v719
  %736 = vst.msk [vmem:[#allocation3] sm:$0xff] %vm399, %v720
  %737 = vst.msk [vmem:[#allocation3 + $0x8] sm:$0xff] %vm399, %v721
  %738 = vst.msk [vmem:[#allocation3 + $0x10] sm:$0xff] %vm399, %v722
  %739 = vst.msk [vmem:[#allocation3 + $0x18] sm:$0xff] %vm399, %v723
  %740 = vst.msk [vmem:[#allocation3 + $0x20] sm:$0xff] %vm399, %v724
  %741 = vst.msk [vmem:[#allocation3 + $0x28] sm:$0xff] %vm399, %v725
  %742 = vst.msk [vmem:[#allocation3 + $0x30] sm:$0xff] %vm399, %v726
  %743 = vst.msk [vmem:[#allocation3 + $0x38] sm:$0xff] %vm399, %v727
  %744 = vst.msk [vmem:[#allocation3 + $0x40] sm:$0xff] %vm399, %v728
  %745 = vst.msk [vmem:[#allocation3 + $0x48] sm:$0xff] %vm399, %v729
  %746 = vst.msk [vmem:[#allocation3 + $0x50] sm:$0xff] %vm399, %v730
  %747 = vst.msk [vmem:[#allocation3 + $0x58] sm:$0xff] %vm399, %v731
  %748 = vst.msk [vmem:[#allocation3 + $0x60] sm:$0xff] %vm399, %v732
  %749 = vst.msk [vmem:[#allocation3 + $0x68] sm:$0xff] %vm399, %v733
  %750 = vst.msk [vmem:[#allocation3 + $0x70] sm:$0xff] %vm399, %v734
  %751 = vst.msk [vmem:[#allocation3 + $0x78] sm:$0xff] %vm399, %v735
  %752 = vst.msk [vmem:[#allocation2] sm:$0xff] %vm399, %v464
  %753 = vst.msk [vmem:[#allocation2 + $0x8] sm:$0xff] %vm399, %v465
  %754 = vst.msk [vmem:[#allocation2 + $0x10] sm:$0xff] %vm399, %v466
  %755 = vst.msk [vmem:[#allocation2 + $0x18] sm:$0xff] %vm399, %v467
  %756 = vst.msk [vmem:[#allocation2 + $0x20] sm:$0xff] %vm399, %v468
  %757 = vst.msk [vmem:[#allocation2 + $0x28] sm:$0xff] %vm399, %v469
  %758 = vst.msk [vmem:[#allocation2 + $0x30] sm:$0xff] %vm399, %v470
  %759 = vst.msk [vmem:[#allocation2 + $0x38] sm:$0xff] %vm399, %v471
  %760 = vst.msk [vmem:[#allocation2 + $0x40] sm:$0xff] %vm399, %v472
  %761 = vst.msk [vmem:[#allocation2 + $0x48] sm:$0xff] %vm399, %v473
  %762 = vst.msk [vmem:[#allocation2 + $0x50] sm:$0xff] %vm399, %v474
  %763 = vst.msk [vmem:[#allocation2 + $0x58] sm:$0xff] %vm399, %v475
  %764 = vst.msk [vmem:[#allocation2 + $0x60] sm:$0xff] %vm399, %v476
  %765 = vst.msk [vmem:[#allocation2 + $0x68] sm:$0xff] %vm399, %v477
  %766 = vst.msk [vmem:[#allocation2 + $0x70] sm:$0xff] %vm399, %v478
  %767 = vst.msk [vmem:[#allocation2 + $0x78] sm:$0xff] %vm399, %v479
  // Predicated region
  $region22: #{nmt_forward.9} parent=0 // pred_check
    %p768 = pneg %p18
  $region23: #{nmt_forward.9} parent=0 // pred_check_branch
    %770 = sbr.rel (%p768) target = $region25
  $region24: #{nmt_forward.9} parent=0 // pred_region
    %v771 = vld [vmem:[#allocation4] sm:$0xff]
    %v772 = vld [vmem:[#allocation4 + $0x8] sm:$0xff]
    %v773 = vld [vmem:[#allocation4 + $0x10] sm:$0xff]
    %v774 = vld [vmem:[#allocation4 + $0x18] sm:$0xff]
    %v775 = vld [vmem:[#allocation4 + $0x20] sm:$0xff]
    %v776 = vld [vmem:[#allocation4 + $0x28] sm:$0xff]
    %v777 = vld [vmem:[#allocation4 + $0x30] sm:$0xff]
    %v778 = vld [vmem:[#allocation4 + $0x38] sm:$0xff]
    %v779 = vld [vmem:[#allocation4 + $0x40] sm:$0xff]
    %v780 = vld [vmem:[#allocation4 + $0x48] sm:$0xff]
    %v781 = vld [vmem:[#allocation4 + $0x50] sm:$0xff]
    %v782 = vld [vmem:[#allocation4 + $0x58] sm:$0xff]
    %v783 = vld [vmem:[#allocation4 + $0x60] sm:$0xff]
    %v784 = vld [vmem:[#allocation4 + $0x68] sm:$0xff]
    %v785 = vld [vmem:[#allocation4 + $0x70] sm:$0xff]
    %v786 = vld [vmem:[#allocation4 + $0x78] sm:$0xff]
    %v787 = vld [vmem:[#allocation2] sm:$0xff]
    %v788 = vld [vmem:[#allocation2 + $0x8] sm:$0xff]
    %v789 = vld [vmem:[#allocation2 + $0x10] sm:$0xff]
    %v790 = vld [vmem:[#allocation2 + $0x18] sm:$0xff]
    %v791 = vld [vmem:[#allocation2 + $0x20] sm:$0xff]
    %v792 = vld [vmem:[#allocation2 + $0x28] sm:$0xff]
    %v793 = vld [vmem:[#allocation2 + $0x30] sm:$0xff]
    %v794 = vld [vmem:[#allocation2 + $0x38] sm:$0xff]
    %v795 = vld [vmem:[#allocation2 + $0x40] sm:$0xff]
    %v796 = vld [vmem:[#allocation2 + $0x48] sm:$0xff]
    %v797 = vld [vmem:[#allocation2 + $0x50] sm:$0xff]
    %v798 = vld [vmem:[#allocation2 + $0x58] sm:$0xff]
    %v799 = vld [vmem:[#allocation2 + $0x60] sm:$0xff]
    %v800 = vld [vmem:[#allocation2 + $0x68] sm:$0xff]
    %v801 = vld [vmem:[#allocation2 + $0x70] sm:$0xff]
    %v802 = vld [vmem:[#allocation2 + $0x78] sm:$0xff]
    %v803 = vld [vmem:[#allocation3] sm:$0xff]
    %v804 = vld [vmem:[#allocation3 + $0x8] sm:$0xff]
    %v805 = vld [vmem:[#allocation3 + $0x10] sm:$0xff]
    %v806 = vld [vmem:[#allocation3 + $0x18] sm:$0xff]
    %v807 = vld [vmem:[#allocation3 + $0x20] sm:$0xff]
    %v808 = vld [vmem:[#allocation3 + $0x28] sm:$0xff]
    %v809 = vld [vmem:[#allocation3 + $0x30] sm:$0xff]
    %v810 = vld [vmem:[#allocation3 + $0x38] sm:$0xff]
    %v811 = vld [vmem:[#allocation3 + $0x40] sm:$0xff]
    %v812 = vld [vmem:[#allocation3 + $0x48] sm:$0xff]
    %v813 = vld [vmem:[#allocation3 + $0x50] sm:$0xff]
    %v814 = vld [vmem:[#allocation3 + $0x58] sm:$0xff]
    %v815 = vld [vmem:[#allocation3 + $0x60] sm:$0xff]
    %v816 = vld [vmem:[#allocation3 + $0x68] sm:$0xff]
    %v817 = vld [vmem:[#allocation3 + $0x70] sm:$0xff]
    %v818 = vld [vmem:[#allocation3 + $0x78] sm:$0xff]
    %v819 = vlog2.pop %v803
    %v820 = vmul.f32 %v819, 0.6931472
    %v821 = vlog2.pop %v804
    %v822 = vmul.f32 %v821, 0.6931472
    %v823 = vlog2.pop %v805
    %v824 = vmul.f32 %v823, 0.6931472
    %v825 = vlog2.pop %v806
    %v826 = vmul.f32 %v825, 0.6931472
    %v827 = vlog2.pop %v807
    %v828 = vmul.f32 %v827, 0.6931472
    %v829 = vlog2.pop %v808
    %v830 = vmul.f32 %v829, 0.6931472
    %v831 = vlog2.pop %v809
    %v832 = vmul.f32 %v831, 0.6931472
    %v833 = vlog2.pop %v810
    %v834 = vmul.f32 %v833, 0.6931472
    %v835 = vlog2.pop %v811
    %v836 = vmul.f32 %v835, 0.6931472
    %v837 = vlog2.pop %v812
    %v838 = vmul.f32 %v837, 0.6931472
    %v839 = vlog2.pop %v813
    %v840 = vmul.f32 %v839, 0.6931472
    %v841 = vlog2.pop %v814
    %v842 = vmul.f32 %v841, 0.6931472
    %v843 = vlog2.pop %v815
    %v844 = vmul.f32 %v843, 0.6931472
    %v845 = vlog2.pop %v816
    %v846 = vmul.f32 %v845, 0.6931472
    %v847 = vlog2.pop %v817
    %v848 = vmul.f32 %v847, 0.6931472
    %v849 = vlog2.pop %v818
    %v850 = vmul.f32 %v849, 0.6931472
    %v851 = vadd.f32 %v787, %v820
    %v852 = vadd.f32 %v788, %v822
    %v853 = vadd.f32 %v789, %v824
    %v854 = vadd.f32 %v790, %v826
    %v855 = vadd.f32 %v791, %v828
    %v856 = vadd.f32 %v792, %v830
    %v857 = vadd.f32 %v793, %v832
    %v858 = vadd.f32 %v794, %v834
    %v859 = vadd.f32 %v795, %v836
    %v860 = vadd.f32 %v796, %v838
    %v861 = vadd.f32 %v797, %v840
    %v862 = vadd.f32 %v798, %v842
    %v863 = vadd.f32 %v799, %v844
    %v864 = vadd.f32 %v800, %v846
    %v865 = vadd.f32 %v801, %v848
    %v866 = vadd.f32 %v802, %v850
    %v867 = vsub.f32 %v771, %v851
    %v868 = vsub.f32 %v772, %v852
    %v869 = vsub.f32 %v773, %v853
    %v870 = vsub.f32 %v774, %v854
    %v871 = vsub.f32 %v775, %v855
    %v872 = vsub.f32 %v776, %v856
    %v873 = vsub.f32 %v777, %v857
    %v874 = vsub.f32 %v778, %v858
    %v875 = vsub.f32 %v779, %v859
    %v876 = vsub.f32 %v780, %v860
    %v877 = vsub.f32 %v781, %v861
    %v878 = vsub.f32 %v782, %v862
    %v879 = vsub.f32 %v783, %v863
    %v880 = vsub.f32 %v784, %v864
    %v881 = vsub.f32 %v785, %v865
    %v882 = vsub.f32 %v786, %v866
    %v883 = vld [vmem:[%s3] sm:$0xff]
    %v884 = vld [vmem:[%s3 + $0x8] sm:$0xff]
    %v885 = vld [vmem:[%s3 + $0x10] sm:$0xff]
    %v886 = vld [vmem:[%s3 + $0x18] sm:$0xff]
    %v887 = vld [vmem:[%s3 + $0x20] sm:$0xff]
    %v888 = vld [vmem:[%s3 + $0x28] sm:$0xff]
    %v889 = vld [vmem:[%s3 + $0x30] sm:$0xff]
    %v890 = vld [vmem:[%s3 + $0x38] sm:$0xff]
    %v891 = vld [vmem:[%s3 + $0x40] sm:$0xff]
    %v892 = vld [vmem:[%s3 + $0x48] sm:$0xff]
    %v893 = vld [vmem:[%s3 + $0x50] sm:$0xff]
    %v894 = vld [vmem:[%s3 + $0x58] sm:$0xff]
    %v895 = vld [vmem:[%s3 + $0x60] sm:$0xff]
    %v896 = vld [vmem:[%s3 + $0x68] sm:$0xff]
    %v897 = vld [vmem:[%s3 + $0x70] sm:$0xff]
    %v898 = vld [vmem:[%s3 + $0x78] sm:$0xff]
    %v899 = vmul.f32 %v867, %v883
    %v900 = vmul.f32 %v868, %v884
    %v901 = vmul.f32 %v869, %v885
    %v902 = vmul.f32 %v870, %v886
    %v903 = vmul.f32 %v871, %v887
    %v904 = vmul.f32 %v872, %v888
    %v905 = vmul.f32 %v873, %v889
    %v906 = vmul.f32 %v874, %v890
    %v907 = vmul.f32 %v875, %v891
    %v908 = vmul.f32 %v876, %v892
    %v909 = vmul.f32 %v877, %v893
    %v910 = vmul.f32 %v878, %v894
    %v911 = vmul.f32 %v879, %v895
    %v912 = vmul.f32 %v880, %v896
    %v913 = vmul.f32 %v881, %v897
    %v914 = vmul.f32 %v882, %v898
    %915 = vst.msk [vmem:[%s4] sm:$0xff] %vm399, %v899
    %916 = vst.msk [vmem:[%s4 + $0x8] sm:$0xff] %vm399, %v900
    %917 = vst.msk [vmem:[%s4 + $0x10] sm:$0xff] %vm399, %v901
    %918 = vst.msk [vmem:[%s4 + $0x18] sm:$0xff] %vm399, %v902
    %919 = vst.msk [vmem:[%s4 + $0x20] sm:$0xff] %vm399, %v903
    %920 = vst.msk [vmem:[%s4 + $0x28] sm:$0xff] %vm399, %v904
    %921 = vst.msk [vmem:[%s4 + $0x30] sm:$0xff] %vm399, %v905
    %922 = vst.msk [vmem:[%s4 + $0x38] sm:$0xff] %vm399, %v906
    %923 = vst.msk [vmem:[%s4 + $0x40] sm:$0xff] %vm399, %v907
    %924 = vst.msk [vmem:[%s4 + $0x48] sm:$0xff] %vm399, %v908
    %925 = vst.msk [vmem:[%s4 + $0x50] sm:$0xff] %vm399, %v909
    %926 = vst.msk [vmem:[%s4 + $0x58] sm:$0xff] %vm399, %v910
    %927 = vst.msk [vmem:[%s4 + $0x60] sm:$0xff] %vm399, %v911
    %928 = vst.msk [vmem:[%s4 + $0x68] sm:$0xff] %vm399, %v912
    %929 = vst.msk [vmem:[%s4 + $0x70] sm:$0xff] %vm399, %v913
    %930 = vst.msk [vmem:[%s4 + $0x78] sm:$0xff] %vm399, %v914
  $region25: #{nmt_forward.9} parent=0 // pred_fallthru
    _
  // Predicated region
  $region26: #{nmt_forward.9} parent=0 // pred_check
    _
  $region27: #{nmt_forward.9} parent=0 // pred_check_branch
    %932 = sbr.rel (0) target = $region29
  $region28: #{nmt_forward.9} parent=0 // pred_region
    _
  $region29: #{nmt_forward.9} parent=0 // pred_fallthru
    _
  // Predicated region
  $region30: #{nmt_forward.9} parent=0 // pred_check
    _
  $region31: #{nmt_forward.9} parent=0 // pred_check_branch
    %934 = sbr.rel (0) target = $region33
  $region32: #{nmt_forward.9} parent=0 // pred_region
    _
  $region33: #{nmt_forward.9} parent=0 // pred_fallthru
    _

</llo_original>
